<compile_context>
chip_gen: v7x
topology: tpu7x:2x2x1
jax: 0.10.0
libtpu: 0.0.40
codegen_flags: <defaults>
</compile_context>

<pallas_src>
import jax
import jax.numpy as jnp
from jax import lax
from jax.experimental import pallas as pl
from jax.experimental.pallas import tpu as pltpu

BN_EPS = 1e-5


# ------------------------------ kernel helpers ---------------------------------
def _conv3x3_shift_acc(src_ref, wf_ref, b_ref):
    """3x3 conv as 9 shifted-accumulate matmuls (K = cin).  src_ref is padded."""
    tn, hp, wp, cin = src_ref.shape
    hh, ww = hp - 2, wp - 2
    cout = wf_ref.shape[-1]
    m = tn * hh * ww
    acc = jnp.zeros((m, cout), jnp.float32)
    for k, (dy, dx) in enumerate((a, b) for a in range(3) for b in range(3)):
        patch = src_ref[:, dy:dy + hh, dx:dx + ww, :]
        patch = patch.astype(jnp.bfloat16).reshape(m, cin)
        acc = acc + jnp.dot(patch, wf_ref[k * cin:(k + 1) * cin, :],
                            preferred_element_type=jnp.float32)
    return jnp.maximum(acc + b_ref[...], 0.0)                     # (m, cout) f32


def _conv3x3_im2col(src_ref, wf_ref, b_ref):
    """3x3 conv as one im2col matmul (K = 9*cin).  src_ref is padded."""
    tn, hp, wp, cin = src_ref.shape
    hh, ww = hp - 2, wp - 2
    m = tn * hh * ww
    cols = [src_ref[:, dy:dy + hh, dx:dx + ww, :]
            for dy in range(3) for dx in range(3)]
    patches = jnp.concatenate(cols, axis=-1)
    patches = patches.astype(jnp.bfloat16).reshape(m, 9 * cin)
    y = jnp.dot(patches, wf_ref[...], preferred_element_type=jnp.float32)
    return jnp.maximum(y + b_ref[...], 0.0)                       # (m, cout) f32


def _pool2x2(y_flat, tn, hh, ww):
    """2x2 maxpool, stride 2, on flat (tn*hh*ww, cout) rows (hh, ww even)."""
    cout = y_flat.shape[-1]
    y = y_flat.reshape(tn * hh // 2, 2, ww, cout)
    y = jnp.maximum(y[:, 0], y[:, 1])                             # pool rows
    y = y.reshape(tn * hh // 2, ww // 2, 2, cout)
    y = jnp.maximum(y[:, :, 0], y[:, :, 1])                       # pool cols
    return y.reshape(tn, hh // 2, ww // 2, cout)                  # f32


def _fill_padded(pad_ref, act):
    """Zero only the 1-pixel halo, then write the interior activation."""
    tn, hp, wp, cin = pad_ref.shape
    z_row = jnp.zeros((tn, 1, wp, cin), jnp.float32)
    z_col = jnp.zeros((tn, hp, 1, cin), jnp.float32)
    pad_ref[:, 0:1, :, :] = z_row
    pad_ref[:, hp - 1:hp, :, :] = z_row
    pad_ref[:, :, 0:1, :] = z_col
    pad_ref[:, :, wp - 1:wp, :] = z_col
    pad_ref[:, 1:hp - 1, 1:wp - 1, :] = act


# --------------------------------- kernel --------------------------------------
def _smallcnn_kernel(x_ref, w1_ref, b1_ref, w2_ref, b2_ref, w3_ref, b3_ref,
                     w4_ref, b4_ref, fcw_ref, fcb_ref,
                     o_ref, p2_ref, p3_ref, p4_ref):
    tn, hp, wp, _ = x_ref.shape                                   # padded input tile
    h, w = hp - 2, wp - 2

    # conv1 (+ReLU) straight from the pre-padded, pre-normalized bf16 input.
    a = _conv3x3_shift_acc(x_ref, w1_ref, b1_ref)                 # (tn*h*w, 16)
    a = _pool2x2(a, tn, h, w)                                     # (tn, h/2, w/2, 16)

    _fill_padded(p2_ref, a)
    a = _conv3x3_shift_acc(p2_ref, w2_ref, b2_ref)                # (tn*h/2*w/2, 32)
    a = _pool2x2(a, tn, h // 2, w // 2)

    _fill_padded(p3_ref, a)
    a = _conv3x3_im2col(p3_ref, w3_ref, b3_ref)                   # (tn*h/4*w/4, 64)
    a = _pool2x2(a, tn, h // 4, w // 4)

    _fill_padded(p4_ref, a)
    a = _conv3x3_im2col(p4_ref, w4_ref, b4_ref)                   # (tn*h/8*w/8, 128)

    # AdaptiveAvgPool2d(1) + Linear head (output padded to 128 lanes).
    hf, wf = h // 8, w // 8
    pooled = jnp.mean(a.reshape(tn, hf * wf, 128), axis=1)        # (tn, 128) f32
    out = jnp.dot(pooled.astype(jnp.bfloat16), fcw_ref[...],
                  preferred_element_type=jnp.float32) + fcb_ref[...]
    o_ref[...] = out.reshape(tn, 1, 128)


# --------------------------------- wrapper --------------------------------------
def small_cnn_forward(x_nchw, p, *, tile_n=1):
    x = jnp.transpose(x_nchw, (0, 2, 3, 1)).astype(jnp.float32)   # NCHW -> NHWC
    n, h, w, c = x.shape
    assert h % 8 == 0 and w % 8 == 0, "three 2x2 maxpools need H, W divisible by 8"
    assert n % tile_n == 0
    n_classes = p["fc_w"].shape[-1]

    # Hoisted BatchNorm2d (training-mode batch stats, biased variance) + 1-pixel
    # zero pad, done in XLA on the (small) network input.  Kernel sees a
    # pre-padded, pre-normalized bf16 tensor -> no p1 scratch, no in-kernel BN
    # reduction, batch tiling becomes possible.
    mean = jnp.mean(x, axis=(0, 1, 2), keepdims=True)
    var = jnp.mean((x - mean) ** 2, axis=(0, 1, 2), keepdims=True)
    scale = p["bn_gamma"] * lax.rsqrt(var + BN_EPS)
    shift = p["bn_beta"] - mean * scale
    xp = jnp.pad(x * scale + shift,
                 ((0, 0), (1, 1), (1, 1), (0, 0))).astype(jnp.bfloat16)

    def flat_w(wk):                                               # (3,3,cin,cout) -> (9*cin,cout) bf16
        kh, kw, cin, cout = wk.shape
        return wk.reshape(kh * kw * cin, cout).astype(jnp.bfloat16)

    # Lane-dense FC head: pad the output columns to 128, slice after the call.
    fcw = jnp.zeros((128, 128), jnp.bfloat16)
    fcw = fcw.at[:, :n_classes].set(p["fc_w"].astype(jnp.bfloat16))
    fcb = jnp.zeros((1, 128), jnp.float32)
    fcb = fcb.at[:, :n_classes].set(p["fc_b"].reshape(1, -1))

    args = (
        xp,
        flat_w(p["w1"]), p["b1"].reshape(1, -1).astype(jnp.float32),
        flat_w(p["w2"]), p["b2"].reshape(1, -1).astype(jnp.float32),
        flat_w(p["w3"]), p["b3"].reshape(1, -1).astype(jnp.float32),
        flat_w(p["w4"]), p["b4"].reshape(1, -1).astype(jnp.float32),
        fcw, fcb,
    )

    in_specs = [pl.BlockSpec((tile_n, h + 2, w + 2, c), lambda i: (i, 0, 0, 0))]
    in_specs += [pl.BlockSpec(a.shape, lambda i: (0, 0)) for a in args[1:]]

    out = pl.pallas_call(
        _smallcnn_kernel,
        out_shape=jax.ShapeDtypeStruct((n, 1, 128), jnp.float32),
        grid=(n // tile_n,),
        in_specs=in_specs,
        out_specs=pl.BlockSpec((tile_n, 1, 128), lambda i: (i, 0, 0)),
        scratch_shapes=[                                          # padded conv2/3/4 inputs
            pltpu.VMEM((tile_n, h // 2 + 2, w // 2 + 2, 16), jnp.float32),
            pltpu.VMEM((tile_n, h // 4 + 2, w // 4 + 2, 32), jnp.float32),
            pltpu.VMEM((tile_n, h // 8 + 2, w // 8 + 2, 64), jnp.float32),
        ],
        compiler_params=pltpu.CompilerParams(
            dimension_semantics=("parallel",),
            vmem_limit_bytes=32 * 1024 * 1024),
    )(*args)
    return out.reshape(n, 128)[:, :n_classes]


# ------------------------------- param init -------------------------------------
def init_params(key, n_channels=3, n_classes=10):
    ks = jax.random.split(key, 10)

    def conv_init(kw, kb, cin, cout):
        std = (2.0 / (cout * 9)) ** 0.5                           # kaiming_normal_, fan_out, relu
        w = std * jax.random.normal(kw, (3, 3, cin, cout), jnp.float32)
        bound = 1.0 / (cin * 9) ** 0.5                            # default conv bias init
        b = jax.random.uniform(kb, (cout,), jnp.float32, -bound, bound)
        return w, b

    w1, b1 = conv_init(ks[0], ks[1], n_channels, 16)
    w2, b2 = conv_init(ks[2], ks[3], 16, 32)
    w3, b3 = conv_init(ks[4], ks[5], 32, 64)
    w4, b4 = conv_init(ks[6], ks[7], 64, 128)
    fbound = 1.0 / 128 ** 0.5
    fc_w = jax.random.uniform(ks[8], (128, n_classes), jnp.float32, -fbound, fbound)
    fc_b = jax.random.uniform(ks[9], (n_classes,), jnp.float32, -fbound, fbound)
    return dict(
        bn_gamma=jnp.ones((n_channels,), jnp.float32),
        bn_beta=jnp.zeros((n_channels,), jnp.float32),
        w1=w1, b1=b1, w2=w2, b2=b2, w3=w3, b3=b3, w4=w4, b4=b4,
        fc_w=fc_w, fc_b=fc_b,
    )


# ------------------------ pure-JAX reference (f32 sanity check) ------------------
def ref_forward(x_nchw, p):
    x = jnp.transpose(x_nchw, (0, 2, 3, 1))
    mean = jnp.mean(x, axis=(0, 1, 2), keepdims=True)
    var = jnp.mean((x - mean) ** 2, axis=(0, 1, 2), keepdims=True)
    x = (x - mean) / jnp.sqrt(var + BN_EPS) * p["bn_gamma"] + p["bn_beta"]

    def conv(x, w, b):
        y = lax.conv_general_dilated(x, w, (1, 1), "SAME",
                                     dimension_numbers=("NHWC", "HWIO", "NHWC"))
        return jnp.maximum(y + b, 0.0)

    def pool(x):
        n, h, w, c = x.shape
        return x.reshape(n, h // 2, 2, w // 2, 2, c).max(axis=(2, 4))

    x = pool(conv(x, p["w1"], p["b1"]))
    x = pool(conv(x, p["w2"], p["b2"]))
    x = pool(conv(x, p["w3"], p["b3"]))
    x = conv(x, p["w4"], p["b4"])
    x = jnp.mean(x, axis=(1, 2))
    return x @ p["fc_w"] + p["fc_b"]


if __name__ == "__main__":
    key = jax.random.PRNGKey(0)
    kx, kp = jax.random.split(key)
    N, C, H, W = 2, 3, 16, 16                                     # BatchNorm2d(3) => n_channels = 3
    n_classes = 10
    x = jax.random.normal(kx, (N, C, H, W), jnp.float32)          # NCHW, like the PyTorch module
    params = init_params(kp, n_channels=C, n_classes=n_classes)

    fwd = jax.jit(small_cnn_forward)
    out = jax.block_until_ready(fwd(x, params))
    ref = jax.block_until_ready(ref_forward(x, params))
    assert out.shape == (N, n_classes)
    # bf16 MXU operands with f32 accumulation => modest tolerance vs. f32 reference.
    assert jnp.allclose(out, ref, atol=5e-2, rtol=5e-2)
    print("KERNEL_OK")
</pallas_src>

<mosaic_0001>
module attributes {stable_mosaic.version = 11 : i64} {
  func.func @_smallcnn_kernel(%arg0: i32, %arg1: memref<1x18x18x3xbf16, #tpu.memory_space<vmem>>, %arg2: memref<27x16xbf16, #tpu.memory_space<vmem>>, %arg3: memref<1x16xf32, #tpu.memory_space<vmem>>, %arg4: memref<144x32xbf16, #tpu.memory_space<vmem>>, %arg5: memref<1x32xf32, #tpu.memory_space<vmem>>, %arg6: memref<288x64xbf16, #tpu.memory_space<vmem>>, %arg7: memref<1x64xf32, #tpu.memory_space<vmem>>, %arg8: memref<576x128xbf16, #tpu.memory_space<vmem>>, %arg9: memref<1x128xf32, #tpu.memory_space<vmem>>, %arg10: memref<128x128xbf16, #tpu.memory_space<vmem>>, %arg11: memref<1x128xf32, #tpu.memory_space<vmem>>, %arg12: memref<1x1x128xf32, #tpu.memory_space<vmem>>, %arg13: memref<1x10x10x16xf32, #tpu.memory_space<vmem>>, %arg14: memref<1x6x6x32xf32, #tpu.memory_space<vmem>>, %arg15: memref<1x4x4x64xf32, #tpu.memory_space<vmem>>) attributes {dimension_semantics = [#tpu.dimension_semantics<parallel>], iteration_bounds = array<i64: 2>, scalar_prefetch = 0 : i64, scratch_operands = 3 : i64, tpu.core_type = #tpu.core_type<tc>, window_params = [{transform_indices = @transform_0, window_bounds = array<i64: 1, 18, 18, 3>}, {pipeline_mode = #tpu.pipeline_mode<synchronous>, transform_indices = @transform_1, window_bounds = array<i64: 27, 16>}, {pipeline_mode = #tpu.pipeline_mode<synchronous>, transform_indices = @transform_2, window_bounds = array<i64: 1, 16>}, {pipeline_mode = #tpu.pipeline_mode<synchronous>, transform_indices = @transform_3, window_bounds = array<i64: 144, 32>}, {pipeline_mode = #tpu.pipeline_mode<synchronous>, transform_indices = @transform_4, window_bounds = array<i64: 1, 32>}, {pipeline_mode = #tpu.pipeline_mode<synchronous>, transform_indices = @transform_5, window_bounds = array<i64: 288, 64>}, {pipeline_mode = #tpu.pipeline_mode<synchronous>, transform_indices = @transform_6, window_bounds = array<i64: 1, 64>}, {pipeline_mode = #tpu.pipeline_mode<synchronous>, transform_indices = @transform_7, window_bounds = array<i64: 576, 128>}, {pipeline_mode = #tpu.pipeline_mode<synchronous>, transform_indices = @transform_8, window_bounds = array<i64: 1, 128>}, {pipeline_mode = #tpu.pipeline_mode<synchronous>, transform_indices = @transform_9, window_bounds = array<i64: 128, 128>}, {pipeline_mode = #tpu.pipeline_mode<synchronous>, transform_indices = @transform_10, window_bounds = array<i64: 1, 128>}, {transform_indices = @transform_11, window_bounds = array<i64: 1, 1, 128>}]} {
    %cst = arith.constant 0.000000e+00 : f32
    %0 = vector.broadcast %cst : f32 to vector<256x16xf32>
    %c0 = arith.constant 0 : index
    %c0_0 = arith.constant 0 : index
    %c0_1 = arith.constant 0 : index
    %c0_2 = arith.constant 0 : index
    %1 = vector.load %arg1[%c0, %c0_0, %c0_1, %c0_2] : memref<1x18x18x3xbf16, #tpu.memory_space<vmem>>, vector<1x16x16x3xbf16>
    %2 = vector.shape_cast %1 : vector<1x16x16x3xbf16> to vector<256x3xbf16>
    %c0_3 = arith.constant 0 : index
    %c0_4 = arith.constant 0 : index
    %3 = vector.load %arg2[%c0_3, %c0_4] : memref<27x16xbf16, #tpu.memory_space<vmem>>, vector<3x16xbf16>
    %cst_5 = arith.constant dense<0.000000e+00> : vector<256x16xf32>
    %4 = tpu.matmul %2, %3, %cst_5 {dimension_numbers = #tpu.dot_dimension_numbers<[1], [0], [0], [1], [0, 0, 1, 1], [], []>} : vector<256x3xbf16>, vector<3x16xbf16>, vector<256x16xf32> -> vector<256x16xf32>
    %5 = arith.addf %0, %4 : vector<256x16xf32>
    %c0_6 = arith.constant 0 : index
    %c0_7 = arith.constant 0 : index
    %c1 = arith.constant 1 : index
    %c0_8 = arith.constant 0 : index
    %6 = vector.load %arg1[%c0_6, %c0_7, %c1, %c0_8] : memref<1x18x18x3xbf16, #tpu.memory_space<vmem>>, vector<1x16x16x3xbf16>
    %7 = vector.shape_cast %6 : vector<1x16x16x3xbf16> to vector<256x3xbf16>
    %c3 = arith.constant 3 : index
    %c0_9 = arith.constant 0 : index
    %8 = vector.load %arg2[%c3, %c0_9] : memref<27x16xbf16, #tpu.memory_space<vmem>>, vector<3x16xbf16>
    %cst_10 = arith.constant dense<0.000000e+00> : vector<256x16xf32>
    %9 = tpu.matmul %7, %8, %cst_10 {dimension_numbers = #tpu.dot_dimension_numbers<[1], [0], [0], [1], [0, 0, 1, 1], [], []>} : vector<256x3xbf16>, vector<3x16xbf16>, vector<256x16xf32> -> vector<256x16xf32>
    %10 = arith.addf %5, %9 : vector<256x16xf32>
    %c0_11 = arith.constant 0 : index
    %c0_12 = arith.constant 0 : index
    %c2 = arith.constant 2 : index
    %c0_13 = arith.constant 0 : index
    %11 = vector.load %arg1[%c0_11, %c0_12, %c2, %c0_13] : memref<1x18x18x3xbf16, #tpu.memory_space<vmem>>, vector<1x16x16x3xbf16>
    %12 = vector.shape_cast %11 : vector<1x16x16x3xbf16> to vector<256x3xbf16>
    %c6 = arith.constant 6 : index
    %c0_14 = arith.constant 0 : index
    %13 = vector.load %arg2[%c6, %c0_14] : memref<27x16xbf16, #tpu.memory_space<vmem>>, vector<3x16xbf16>
    %cst_15 = arith.constant dense<0.000000e+00> : vector<256x16xf32>
    %14 = tpu.matmul %12, %13, %cst_15 {dimension_numbers = #tpu.dot_dimension_numbers<[1], [0], [0], [1], [0, 0, 1, 1], [], []>} : vector<256x3xbf16>, vector<3x16xbf16>, vector<256x16xf32> -> vector<256x16xf32>
    %15 = arith.addf %10, %14 : vector<256x16xf32>
    %c0_16 = arith.constant 0 : index
    %c1_17 = arith.constant 1 : index
    %c0_18 = arith.constant 0 : index
    %c0_19 = arith.constant 0 : index
    %16 = vector.load %arg1[%c0_16, %c1_17, %c0_18, %c0_19] : memref<1x18x18x3xbf16, #tpu.memory_space<vmem>>, vector<1x16x16x3xbf16>
    %17 = vector.shape_cast %16 : vector<1x16x16x3xbf16> to vector<256x3xbf16>
    %c9 = arith.constant 9 : index
    %c0_20 = arith.constant 0 : index
    %18 = vector.load %arg2[%c9, %c0_20] : memref<27x16xbf16, #tpu.memory_space<vmem>>, vector<3x16xbf16>
    %cst_21 = arith.constant dense<0.000000e+00> : vector<256x16xf32>
    %19 = tpu.matmul %17, %18, %cst_21 {dimension_numbers = #tpu.dot_dimension_numbers<[1], [0], [0], [1], [0, 0, 1, 1], [], []>} : vector<256x3xbf16>, vector<3x16xbf16>, vector<256x16xf32> -> vector<256x16xf32>
    %20 = arith.addf %15, %19 : vector<256x16xf32>
    %c0_22 = arith.constant 0 : index
    %c1_23 = arith.constant 1 : index
    %c1_24 = arith.constant 1 : index
    %c0_25 = arith.constant 0 : index
    %21 = vector.load %arg1[%c0_22, %c1_23, %c1_24, %c0_25] : memref<1x18x18x3xbf16, #tpu.memory_space<vmem>>, vector<1x16x16x3xbf16>
    %22 = vector.shape_cast %21 : vector<1x16x16x3xbf16> to vector<256x3xbf16>
    %c12 = arith.constant 12 : index
    %c0_26 = arith.constant 0 : index
    %23 = vector.load %arg2[%c12, %c0_26] : memref<27x16xbf16, #tpu.memory_space<vmem>>, vector<3x16xbf16>
    %cst_27 = arith.constant dense<0.000000e+00> : vector<256x16xf32>
    %24 = tpu.matmul %22, %23, %cst_27 {dimension_numbers = #tpu.dot_dimension_numbers<[1], [0], [0], [1], [0, 0, 1, 1], [], []>} : vector<256x3xbf16>, vector<3x16xbf16>, vector<256x16xf32> -> vector<256x16xf32>
    %25 = arith.addf %20, %24 : vector<256x16xf32>
    %c0_28 = arith.constant 0 : index
    %c1_29 = arith.constant 1 : index
    %c2_30 = arith.constant 2 : index
    %c0_31 = arith.constant 0 : index
    %26 = vector.load %arg1[%c0_28, %c1_29, %c2_30, %c0_31] : memref<1x18x18x3xbf16, #tpu.memory_space<vmem>>, vector<1x16x16x3xbf16>
    %27 = vector.shape_cast %26 : vector<1x16x16x3xbf16> to vector<256x3xbf16>
    %c15 = arith.constant 15 : index
    %c0_32 = arith.constant 0 : index
    %28 = vector.load %arg2[%c15, %c0_32] : memref<27x16xbf16, #tpu.memory_space<vmem>>, vector<3x16xbf16>
    %cst_33 = arith.constant dense<0.000000e+00> : vector<256x16xf32>
    %29 = tpu.matmul %27, %28, %cst_33 {dimension_numbers = #tpu.dot_dimension_numbers<[1], [0], [0], [1], [0, 0, 1, 1], [], []>} : vector<256x3xbf16>, vector<3x16xbf16>, vector<256x16xf32> -> vector<256x16xf32>
    %30 = arith.addf %25, %29 : vector<256x16xf32>
    %c0_34 = arith.constant 0 : index
    %c2_35 = arith.constant 2 : index
    %c0_36 = arith.constant 0 : index
    %c0_37 = arith.constant 0 : index
    %31 = vector.load %arg1[%c0_34, %c2_35, %c0_36, %c0_37] : memref<1x18x18x3xbf16, #tpu.memory_space<vmem>>, vector<1x16x16x3xbf16>
    %32 = vector.shape_cast %31 : vector<1x16x16x3xbf16> to vector<256x3xbf16>
    %c18 = arith.constant 18 : index
    %c0_38 = arith.constant 0 : index
    %33 = vector.load %arg2[%c18, %c0_38] : memref<27x16xbf16, #tpu.memory_space<vmem>>, vector<3x16xbf16>
    %cst_39 = arith.constant dense<0.000000e+00> : vector<256x16xf32>
    %34 = tpu.matmul %32, %33, %cst_39 {dimension_numbers = #tpu.dot_dimension_numbers<[1], [0], [0], [1], [0, 0, 1, 1], [], []>} : vector<256x3xbf16>, vector<3x16xbf16>, vector<256x16xf32> -> vector<256x16xf32>
    %35 = arith.addf %30, %34 : vector<256x16xf32>
    %c0_40 = arith.constant 0 : index
    %c2_41 = arith.constant 2 : index
    %c1_42 = arith.constant 1 : index
    %c0_43 = arith.constant 0 : index
    %36 = vector.load %arg1[%c0_40, %c2_41, %c1_42, %c0_43] : memref<1x18x18x3xbf16, #tpu.memory_space<vmem>>, vector<1x16x16x3xbf16>
    %37 = vector.shape_cast %36 : vector<1x16x16x3xbf16> to vector<256x3xbf16>
    %c21 = arith.constant 21 : index
    %c0_44 = arith.constant 0 : index
    %38 = vector.load %arg2[%c21, %c0_44] : memref<27x16xbf16, #tpu.memory_space<vmem>>, vector<3x16xbf16>
    %cst_45 = arith.constant dense<0.000000e+00> : vector<256x16xf32>
    %39 = tpu.matmul %37, %38, %cst_45 {dimension_numbers = #tpu.dot_dimension_numbers<[1], [0], [0], [1], [0, 0, 1, 1], [], []>} : vector<256x3xbf16>, vector<3x16xbf16>, vector<256x16xf32> -> vector<256x16xf32>
    %40 = arith.addf %35, %39 : vector<256x16xf32>
    %c0_46 = arith.constant 0 : index
    %c2_47 = arith.constant 2 : index
    %c2_48 = arith.constant 2 : index
    %c0_49 = arith.constant 0 : index
    %41 = vector.load %arg1[%c0_46, %c2_47, %c2_48, %c0_49] : memref<1x18x18x3xbf16, #tpu.memory_space<vmem>>, vector<1x16x16x3xbf16>
    %42 = vector.shape_cast %41 : vector<1x16x16x3xbf16> to vector<256x3xbf16>
    %c24 = arith.constant 24 : index
    %c0_50 = arith.constant 0 : index
    %43 = vector.load %arg2[%c24, %c0_50] : memref<27x16xbf16, #tpu.memory_space<vmem>>, vector<3x16xbf16>
    %cst_51 = arith.constant dense<0.000000e+00> : vector<256x16xf32>
    %44 = tpu.matmul %42, %43, %cst_51 {dimension_numbers = #tpu.dot_dimension_numbers<[1], [0], [0], [1], [0, 0, 1, 1], [], []>} : vector<256x3xbf16>, vector<3x16xbf16>, vector<256x16xf32> -> vector<256x16xf32>
    %45 = arith.addf %40, %44 : vector<256x16xf32>
    %c0_52 = arith.constant 0 : index
    %c0_53 = arith.constant 0 : index
    %46 = vector.load %arg3[%c0_52, %c0_53] : memref<1x16xf32, #tpu.memory_space<vmem>>, vector<1x16xf32>
    %47 = vector.broadcast %46 : vector<1x16xf32> to vector<256x16xf32>
    %48 = arith.addf %45, %47 : vector<256x16xf32>
    %cst_54 = arith.constant 0.000000e+00 : f32
    %49 = vector.broadcast %cst_54 : f32 to vector<256x16xf32>
    %50 = arith.maximumf %48, %49 : vector<256x16xf32>
    %51 = vector.shape_cast %50 : vector<256x16xf32> to vector<8x2x16x16xf32>
    %52 = vector.extract_strided_slice %51 {offsets = [0, 0, 0, 0], sizes = [8, 1, 16, 16], strides = [1, 1, 1, 1]} : vector<8x2x16x16xf32> to vector<8x1x16x16xf32>
    %53 = vector.shape_cast %52 : vector<8x1x16x16xf32> to vector<8x16x16xf32>
    %54 = vector.extract_strided_slice %51 {offsets = [0, 1, 0, 0], sizes = [8, 1, 16, 16], strides = [1, 1, 1, 1]} : vector<8x2x16x16xf32> to vector<8x1x16x16xf32>
    %55 = vector.shape_cast %54 : vector<8x1x16x16xf32> to vector<8x16x16xf32>
    %56 = arith.maximumf %53, %55 : vector<8x16x16xf32>
    %57 = vector.shape_cast %56 : vector<8x16x16xf32> to vector<8x8x2x16xf32>
    %58 = vector.extract_strided_slice %57 {offsets = [0, 0, 0, 0], sizes = [8, 8, 1, 16], strides = [1, 1, 1, 1]} : vector<8x8x2x16xf32> to vector<8x8x1x16xf32>
    %59 = vector.shape_cast %58 : vector<8x8x1x16xf32> to vector<8x8x16xf32>
    %60 = vector.extract_strided_slice %57 {offsets = [0, 0, 1, 0], sizes = [8, 8, 1, 16], strides = [1, 1, 1, 1]} : vector<8x8x2x16xf32> to vector<8x8x1x16xf32>
    %61 = vector.shape_cast %60 : vector<8x8x1x16xf32> to vector<8x8x16xf32>
    %62 = arith.maximumf %59, %61 : vector<8x8x16xf32>
    %63 = vector.shape_cast %62 : vector<8x8x16xf32> to vector<1x8x8x16xf32>
    %cst_55 = arith.constant 0.000000e+00 : f32
    %64 = vector.broadcast %cst_55 : f32 to vector<1x1x10x16xf32>
    %cst_56 = arith.constant 0.000000e+00 : f32
    %65 = vector.broadcast %cst_56 : f32 to vector<1x10x1x16xf32>
    %c0_57 = arith.constant 0 : index
    %c0_58 = arith.constant 0 : index
    %c0_59 = arith.constant 0 : index
    %c0_60 = arith.constant 0 : index
    %66 = vector.load %arg13[%c0_57, %c0_58, %c0_59, %c0_60] : memref<1x10x10x16xf32, #tpu.memory_space<vmem>>, vector<1x1x10x16xf32>
    tpu.vector_store %arg13[%c0_57, %c0_58, %c0_59, %c0_60], %64 {strides = array<i32>} : memref<1x10x10x16xf32, #tpu.memory_space<vmem>>, vector<1x1x10x16xf32>,
    %c0_61 = arith.constant 0 : index
    %c9_62 = arith.constant 9 : index
    %c0_63 = arith.constant 0 : index
    %c0_64 = arith.constant 0 : index
    %67 = vector.load %arg13[%c0_61, %c9_62, %c0_63, %c0_64] : memref<1x10x10x16xf32, #tpu.memory_space<vmem>>, vector<1x1x10x16xf32>
    tpu.vector_store %arg13[%c0_61, %c9_62, %c0_63, %c0_64], %64 {strides = array<i32>} : memref<1x10x10x16xf32, #tpu.memory_space<vmem>>, vector<1x1x10x16xf32>,
    %c0_65 = arith.constant 0 : index
    %c0_66 = arith.constant 0 : index
    %c0_67 = arith.constant 0 : index
    %c0_68 = arith.constant 0 : index
    %68 = vector.load %arg13[%c0_65, %c0_66, %c0_67, %c0_68] : memref<1x10x10x16xf32, #tpu.memory_space<vmem>>, vector<1x10x1x16xf32>
    tpu.vector_store %arg13[%c0_65, %c0_66, %c0_67, %c0_68], %65 {strides = array<i32>} : memref<1x10x10x16xf32, #tpu.memory_space<vmem>>, vector<1x10x1x16xf32>,
    %c0_69 = arith.constant 0 : index
    %c0_70 = arith.constant 0 : index
    %c9_71 = arith.constant 9 : index
    %c0_72 = arith.constant 0 : index
    %69 = vector.load %arg13[%c0_69, %c0_70, %c9_71, %c0_72] : memref<1x10x10x16xf32, #tpu.memory_space<vmem>>, vector<1x10x1x16xf32>
    tpu.vector_store %arg13[%c0_69, %c0_70, %c9_71, %c0_72], %65 {strides = array<i32>} : memref<1x10x10x16xf32, #tpu.memory_space<vmem>>, vector<1x10x1x16xf32>,
    %c0_73 = arith.constant 0 : index
    %c1_74 = arith.constant 1 : index
    %c1_75 = arith.constant 1 : index
    %c0_76 = arith.constant 0 : index
    %70 = vector.load %arg13[%c0_73, %c1_74, %c1_75, %c0_76] : memref<1x10x10x16xf32, #tpu.memory_space<vmem>>, vector<1x8x8x16xf32>
    tpu.vector_store %arg13[%c0_73, %c1_74, %c1_75, %c0_76], %63 {strides = array<i32>} : memref<1x10x10x16xf32, #tpu.memory_space<vmem>>, vector<1x8x8x16xf32>,
    %cst_77 = arith.constant 0.000000e+00 : f32
    %71 = vector.broadcast %cst_77 : f32 to vector<64x32xf32>
    %c0_78 = arith.constant 0 : index
    %c0_79 = arith.constant 0 : index
    %c0_80 = arith.constant 0 : index
    %c0_81 = arith.constant 0 : index
    %72 = vector.load %arg13[%c0_78, %c0_79, %c0_80, %c0_81] : memref<1x10x10x16xf32, #tpu.memory_space<vmem>>, vector<1x8x8x16xf32>
    %73 = arith.truncf %72 : vector<1x8x8x16xf32> to vector<1x8x8x16xbf16>
    %74 = vector.shape_cast %73 : vector<1x8x8x16xbf16> to vector<64x16xbf16>
    %c0_82 = arith.constant 0 : index
    %c0_83 = arith.constant 0 : index
    %75 = vector.load %arg4[%c0_82, %c0_83] : memref<144x32xbf16, #tpu.memory_space<vmem>>, vector<16x32xbf16>
    %cst_84 = arith.constant dense<0.000000e+00> : vector<64x32xf32>
    %76 = tpu.matmul %74, %75, %cst_84 {dimension_numbers = #tpu.dot_dimension_numbers<[1], [0], [0], [1], [0, 0, 1, 1], [], []>} : vector<64x16xbf16>, vector<16x32xbf16>, vector<64x32xf32> -> vector<64x32xf32>
    %77 = arith.addf %71, %76 : vector<64x32xf32>
    %c0_85 = arith.constant 0 : index
    %c0_86 = arith.constant 0 : index
    %c1_87 = arith.constant 1 : index
    %c0_88 = arith.constant 0 : index
    %78 = vector.load %arg13[%c0_85, %c0_86, %c1_87, %c0_88] : memref<1x10x10x16xf32, #tpu.memory_space<vmem>>, vector<1x8x8x16xf32>
    %79 = arith.truncf %78 : vector<1x8x8x16xf32> to vector<1x8x8x16xbf16>
    %80 = vector.shape_cast %79 : vector<1x8x8x16xbf16> to vector<64x16xbf16>
    %c16 = arith.constant 16 : index
    %c0_89 = arith.constant 0 : index
    %81 = vector.load %arg4[%c16, %c0_89] : memref<144x32xbf16, #tpu.memory_space<vmem>>, vector<16x32xbf16>
    %cst_90 = arith.constant dense<0.000000e+00> : vector<64x32xf32>
    %82 = tpu.matmul %80, %81, %cst_90 {dimension_numbers = #tpu.dot_dimension_numbers<[1], [0], [0], [1], [0, 0, 1, 1], [], []>} : vector<64x16xbf16>, vector<16x32xbf16>, vector<64x32xf32> -> vector<64x32xf32>
    %83 = arith.addf %77, %82 : vector<64x32xf32>
    %c0_91 = arith.constant 0 : index
    %c0_92 = arith.constant 0 : index
    %c2_93 = arith.constant 2 : index
    %c0_94 = arith.constant 0 : index
    %84 = vector.load %arg13[%c0_91, %c0_92, %c2_93, %c0_94] : memref<1x10x10x16xf32, #tpu.memory_space<vmem>>, vector<1x8x8x16xf32>
    %85 = arith.truncf %84 : vector<1x8x8x16xf32> to vector<1x8x8x16xbf16>
    %86 = vector.shape_cast %85 : vector<1x8x8x16xbf16> to vector<64x16xbf16>
    %c32 = arith.constant 32 : index
    %c0_95 = arith.constant 0 : index
    %87 = vector.load %arg4[%c32, %c0_95] : memref<144x32xbf16, #tpu.memory_space<vmem>>, vector<16x32xbf16>
    %cst_96 = arith.constant dense<0.000000e+00> : vector<64x32xf32>
    %88 = tpu.matmul %86, %87, %cst_96 {dimension_numbers = #tpu.dot_dimension_numbers<[1], [0], [0], [1], [0, 0, 1, 1], [], []>} : vector<64x16xbf16>, vector<16x32xbf16>, vector<64x32xf32> -> vector<64x32xf32>
    %89 = arith.addf %83, %88 : vector<64x32xf32>
    %c0_97 = arith.constant 0 : index
    %c1_98 = arith.constant 1 : index
    %c0_99 = arith.constant 0 : index
    %c0_100 = arith.constant 0 : index
    %90 = vector.load %arg13[%c0_97, %c1_98, %c0_99, %c0_100] : memref<1x10x10x16xf32, #tpu.memory_space<vmem>>, vector<1x8x8x16xf32>
    %91 = arith.truncf %90 : vector<1x8x8x16xf32> to vector<1x8x8x16xbf16>
    %92 = vector.shape_cast %91 : vector<1x8x8x16xbf16> to vector<64x16xbf16>
    %c48 = arith.constant 48 : index
    %c0_101 = arith.constant 0 : index
    %93 = vector.load %arg4[%c48, %c0_101] : memref<144x32xbf16, #tpu.memory_space<vmem>>, vector<16x32xbf16>
    %cst_102 = arith.constant dense<0.000000e+00> : vector<64x32xf32>
    %94 = tpu.matmul %92, %93, %cst_102 {dimension_numbers = #tpu.dot_dimension_numbers<[1], [0], [0], [1], [0, 0, 1, 1], [], []>} : vector<64x16xbf16>, vector<16x32xbf16>, vector<64x32xf32> -> vector<64x32xf32>
    %95 = arith.addf %89, %94 : vector<64x32xf32>
    %c0_103 = arith.constant 0 : index
    %c1_104 = arith.constant 1 : index
    %c1_105 = arith.constant 1 : index
    %c0_106 = arith.constant 0 : index
    %96 = vector.load %arg13[%c0_103, %c1_104, %c1_105, %c0_106] : memref<1x10x10x16xf32, #tpu.memory_space<vmem>>, vector<1x8x8x16xf32>
    %97 = arith.truncf %96 : vector<1x8x8x16xf32> to vector<1x8x8x16xbf16>
    %98 = vector.shape_cast %97 : vector<1x8x8x16xbf16> to vector<64x16xbf16>
    %c64 = arith.constant 64 : index
    %c0_107 = arith.constant 0 : index
    %99 = vector.load %arg4[%c64, %c0_107] : memref<144x32xbf16, #tpu.memory_space<vmem>>, vector<16x32xbf16>
    %cst_108 = arith.constant dense<0.000000e+00> : vector<64x32xf32>
    %100 = tpu.matmul %98, %99, %cst_108 {dimension_numbers = #tpu.dot_dimension_numbers<[1], [0], [0], [1], [0, 0, 1, 1], [], []>} : vector<64x16xbf16>, vector<16x32xbf16>, vector<64x32xf32> -> vector<64x32xf32>
    %101 = arith.addf %95, %100 : vector<64x32xf32>
    %c0_109 = arith.constant 0 : index
    %c1_110 = arith.constant 1 : index
    %c2_111 = arith.constant 2 : index
    %c0_112 = arith.constant 0 : index
    %102 = vector.load %arg13[%c0_109, %c1_110, %c2_111, %c0_112] : memref<1x10x10x16xf32, #tpu.memory_space<vmem>>, vector<1x8x8x16xf32>
    %103 = arith.truncf %102 : vector<1x8x8x16xf32> to vector<1x8x8x16xbf16>
    %104 = vector.shape_cast %103 : vector<1x8x8x16xbf16> to vector<64x16xbf16>
    %c80 = arith.constant 80 : index
    %c0_113 = arith.constant 0 : index
    %105 = vector.load %arg4[%c80, %c0_113] : memref<144x32xbf16, #tpu.memory_space<vmem>>, vector<16x32xbf16>
    %cst_114 = arith.constant dense<0.000000e+00> : vector<64x32xf32>
    %106 = tpu.matmul %104, %105, %cst_114 {dimension_numbers = #tpu.dot_dimension_numbers<[1], [0], [0], [1], [0, 0, 1, 1], [], []>} : vector<64x16xbf16>, vector<16x32xbf16>, vector<64x32xf32> -> vector<64x32xf32>
    %107 = arith.addf %101, %106 : vector<64x32xf32>
    %c0_115 = arith.constant 0 : index
    %c2_116 = arith.constant 2 : index
    %c0_117 = arith.constant 0 : index
    %c0_118 = arith.constant 0 : index
    %108 = vector.load %arg13[%c0_115, %c2_116, %c0_117, %c0_118] : memref<1x10x10x16xf32, #tpu.memory_space<vmem>>, vector<1x8x8x16xf32>
    %109 = arith.truncf %108 : vector<1x8x8x16xf32> to vector<1x8x8x16xbf16>
    %110 = vector.shape_cast %109 : vector<1x8x8x16xbf16> to vector<64x16xbf16>
    %c96 = arith.constant 96 : index
    %c0_119 = arith.constant 0 : index
    %111 = vector.load %arg4[%c96, %c0_119] : memref<144x32xbf16, #tpu.memory_space<vmem>>, vector<16x32xbf16>
    %cst_120 = arith.constant dense<0.000000e+00> : vector<64x32xf32>
    %112 = tpu.matmul %110, %111, %cst_120 {dimension_numbers = #tpu.dot_dimension_numbers<[1], [0], [0], [1], [0, 0, 1, 1], [], []>} : vector<64x16xbf16>, vector<16x32xbf16>, vector<64x32xf32> -> vector<64x32xf32>
    %113 = arith.addf %107, %112 : vector<64x32xf32>
    %c0_121 = arith.constant 0 : index
    %c2_122 = arith.constant 2 : index
    %c1_123 = arith.constant 1 : index
    %c0_124 = arith.constant 0 : index
    %114 = vector.load %arg13[%c0_121, %c2_122, %c1_123, %c0_124] : memref<1x10x10x16xf32, #tpu.memory_space<vmem>>, vector<1x8x8x16xf32>
    %115 = arith.truncf %114 : vector<1x8x8x16xf32> to vector<1x8x8x16xbf16>
    %116 = vector.shape_cast %115 : vector<1x8x8x16xbf16> to vector<64x16xbf16>
    %c112 = arith.constant 112 : index
    %c0_125 = arith.constant 0 : index
    %117 = vector.load %arg4[%c112, %c0_125] : memref<144x32xbf16, #tpu.memory_space<vmem>>, vector<16x32xbf16>
    %cst_126 = arith.constant dense<0.000000e+00> : vector<64x32xf32>
    %118 = tpu.matmul %116, %117, %cst_126 {dimension_numbers = #tpu.dot_dimension_numbers<[1], [0], [0], [1], [0, 0, 1, 1], [], []>} : vector<64x16xbf16>, vector<16x32xbf16>, vector<64x32xf32> -> vector<64x32xf32>
    %119 = arith.addf %113, %118 : vector<64x32xf32>
    %c0_127 = arith.constant 0 : index
    %c2_128 = arith.constant 2 : index
    %c2_129 = arith.constant 2 : index
    %c0_130 = arith.constant 0 : index
    %120 = vector.load %arg13[%c0_127, %c2_128, %c2_129, %c0_130] : memref<1x10x10x16xf32, #tpu.memory_space<vmem>>, vector<1x8x8x16xf32>
    %121 = arith.truncf %120 : vector<1x8x8x16xf32> to vector<1x8x8x16xbf16>
    %122 = vector.shape_cast %121 : vector<1x8x8x16xbf16> to vector<64x16xbf16>
    %c128 = arith.constant 128 : index
    %c0_131 = arith.constant 0 : index
    %123 = vector.load %arg4[%c128, %c0_131] : memref<144x32xbf16, #tpu.memory_space<vmem>>, vector<16x32xbf16>
    %cst_132 = arith.constant dense<0.000000e+00> : vector<64x32xf32>
    %124 = tpu.matmul %122, %123, %cst_132 {dimension_numbers = #tpu.dot_dimension_numbers<[1], [0], [0], [1], [0, 0, 1, 1], [], []>} : vector<64x16xbf16>, vector<16x32xbf16>, vector<64x32xf32> -> vector<64x32xf32>
    %125 = arith.addf %119, %124 : vector<64x32xf32>
    %c0_133 = arith.constant 0 : index
    %c0_134 = arith.constant 0 : index
    %126 = vector.load %arg5[%c0_133, %c0_134] : memref<1x32xf32, #tpu.memory_space<vmem>>, vector<1x32xf32>
    %127 = vector.broadcast %126 : vector<1x32xf32> to vector<64x32xf32>
    %128 = arith.addf %125, %127 : vector<64x32xf32>
    %cst_135 = arith.constant 0.000000e+00 : f32
    %129 = vector.broadcast %cst_135 : f32 to vector<64x32xf32>
    %130 = arith.maximumf %128, %129 : vector<64x32xf32>
    %131 = vector.shape_cast %130 : vector<64x32xf32> to vector<4x2x8x32xf32>
    %132 = vector.extract_strided_slice %131 {offsets = [0, 0, 0, 0], sizes = [4, 1, 8, 32], strides = [1, 1, 1, 1]} : vector<4x2x8x32xf32> to vector<4x1x8x32xf32>
    %133 = vector.shape_cast %132 : vector<4x1x8x32xf32> to vector<4x8x32xf32>
    %134 = vector.extract_strided_slice %131 {offsets = [0, 1, 0, 0], sizes = [4, 1, 8, 32], strides = [1, 1, 1, 1]} : vector<4x2x8x32xf32> to vector<4x1x8x32xf32>
    %135 = vector.shape_cast %134 : vector<4x1x8x32xf32> to vector<4x8x32xf32>
    %136 = arith.maximumf %133, %135 : vector<4x8x32xf32>
    %137 = vector.shape_cast %136 : vector<4x8x32xf32> to vector<4x4x2x32xf32>
    %138 = vector.extract_strided_slice %137 {offsets = [0, 0, 0, 0], sizes = [4, 4, 1, 32], strides = [1, 1, 1, 1]} : vector<4x4x2x32xf32> to vector<4x4x1x32xf32>
    %139 = vector.shape_cast %138 : vector<4x4x1x32xf32> to vector<4x4x32xf32>
    %140 = vector.extract_strided_slice %137 {offsets = [0, 0, 1, 0], sizes = [4, 4, 1, 32], strides = [1, 1, 1, 1]} : vector<4x4x2x32xf32> to vector<4x4x1x32xf32>
    %141 = vector.shape_cast %140 : vector<4x4x1x32xf32> to vector<4x4x32xf32>
    %142 = arith.maximumf %139, %141 : vector<4x4x32xf32>
    %143 = vector.shape_cast %142 : vector<4x4x32xf32> to vector<1x4x4x32xf32>
    %cst_136 = arith.constant 0.000000e+00 : f32
    %144 = vector.broadcast %cst_136 : f32 to vector<1x1x6x32xf32>
    %cst_137 = arith.constant 0.000000e+00 : f32
    %145 = vector.broadcast %cst_137 : f32 to vector<1x6x1x32xf32>
    %c0_138 = arith.constant 0 : index
    %c0_139 = arith.constant 0 : index
    %c0_140 = arith.constant 0 : index
    %c0_141 = arith.constant 0 : index
    %146 = vector.load %arg14[%c0_138, %c0_139, %c0_140, %c0_141] : memref<1x6x6x32xf32, #tpu.memory_space<vmem>>, vector<1x1x6x32xf32>
    tpu.vector_store %arg14[%c0_138, %c0_139, %c0_140, %c0_141], %144 {strides = array<i32>} : memref<1x6x6x32xf32, #tpu.memory_space<vmem>>, vector<1x1x6x32xf32>,
    %c0_142 = arith.constant 0 : index
    %c5 = arith.constant 5 : index
    %c0_143 = arith.constant 0 : index
    %c0_144 = arith.constant 0 : index
    %147 = vector.load %arg14[%c0_142, %c5, %c0_143, %c0_144] : memref<1x6x6x32xf32, #tpu.memory_space<vmem>>, vector<1x1x6x32xf32>
    tpu.vector_store %arg14[%c0_142, %c5, %c0_143, %c0_144], %144 {strides = array<i32>} : memref<1x6x6x32xf32, #tpu.memory_space<vmem>>, vector<1x1x6x32xf32>,
    %c0_145 = arith.constant 0 : index
    %c0_146 = arith.constant 0 : index
    %c0_147 = arith.constant 0 : index
    %c0_148 = arith.constant 0 : index
    %148 = vector.load %arg14[%c0_145, %c0_146, %c0_147, %c0_148] : memref<1x6x6x32xf32, #tpu.memory_space<vmem>>, vector<1x6x1x32xf32>
    tpu.vector_store %arg14[%c0_145, %c0_146, %c0_147, %c0_148], %145 {strides = array<i32>} : memref<1x6x6x32xf32, #tpu.memory_space<vmem>>, vector<1x6x1x32xf32>,
    %c0_149 = arith.constant 0 : index
    %c0_150 = arith.constant 0 : index
    %c5_151 = arith.constant 5 : index
    %c0_152 = arith.constant 0 : index
    %149 = vector.load %arg14[%c0_149, %c0_150, %c5_151, %c0_152] : memref<1x6x6x32xf32, #tpu.memory_space<vmem>>, vector<1x6x1x32xf32>
    tpu.vector_store %arg14[%c0_149, %c0_150, %c5_151, %c0_152], %145 {strides = array<i32>} : memref<1x6x6x32xf32, #tpu.memory_space<vmem>>, vector<1x6x1x32xf32>,
    %c0_153 = arith.constant 0 : index
    %c1_154 = arith.constant 1 : index
    %c1_155 = arith.constant 1 : index
    %c0_156 = arith.constant 0 : index
    %150 = vector.load %arg14[%c0_153, %c1_154, %c1_155, %c0_156] : memref<1x6x6x32xf32, #tpu.memory_space<vmem>>, vector<1x4x4x32xf32>
    tpu.vector_store %arg14[%c0_153, %c1_154, %c1_155, %c0_156], %143 {strides = array<i32>} : memref<1x6x6x32xf32, #tpu.memory_space<vmem>>, vector<1x4x4x32xf32>,
    %c0_157 = arith.constant 0 : index
    %c0_158 = arith.constant 0 : index
    %c0_159 = arith.constant 0 : index
    %c0_160 = arith.constant 0 : index
    %151 = vector.load %arg14[%c0_157, %c0_158, %c0_159, %c0_160] : memref<1x6x6x32xf32, #tpu.memory_space<vmem>>, vector<1x4x4x32xf32>
    %c0_161 = arith.constant 0 : index
    %c0_162 = arith.constant 0 : index
    %c1_163 = arith.constant 1 : index
    %c0_164 = arith.constant 0 : index
    %152 = vector.load %arg14[%c0_161, %c0_162, %c1_163, %c0_164] : memref<1x6x6x32xf32, #tpu.memory_space<vmem>>, vector<1x4x4x32xf32>
    %c0_165 = arith.constant 0 : index
    %c0_166 = arith.constant 0 : index
    %c2_167 = arith.constant 2 : index
    %c0_168 = arith.constant 0 : index
    %153 = vector.load %arg14[%c0_165, %c0_166, %c2_167, %c0_168] : memref<1x6x6x32xf32, #tpu.memory_space<vmem>>, vector<1x4x4x32xf32>
    %c0_169 = arith.constant 0 : index
    %c1_170 = arith.constant 1 : index
    %c0_171 = arith.constant 0 : index
    %c0_172 = arith.constant 0 : index
    %154 = vector.load %arg14[%c0_169, %c1_170, %c0_171, %c0_172] : memref<1x6x6x32xf32, #tpu.memory_space<vmem>>, vector<1x4x4x32xf32>
    %c0_173 = arith.constant 0 : index
    %c1_174 = arith.constant 1 : index
    %c1_175 = arith.constant 1 : index
    %c0_176 = arith.constant 0 : index
    %155 = vector.load %arg14[%c0_173, %c1_174, %c1_175, %c0_176] : memref<1x6x6x32xf32, #tpu.memory_space<vmem>>, vector<1x4x4x32xf32>
    %c0_177 = arith.constant 0 : index
    %c1_178 = arith.constant 1 : index
    %c2_179 = arith.constant 2 : index
    %c0_180 = arith.constant 0 : index
    %156 = vector.load %arg14[%c0_177, %c1_178, %c2_179, %c0_180] : memref<1x6x6x32xf32, #tpu.memory_space<vmem>>, vector<1x4x4x32xf32>
    %c0_181 = arith.constant 0 : index
    %c2_182 = arith.constant 2 : index
    %c0_183 = arith.constant 0 : index
    %c0_184 = arith.constant 0 : index
    %157 = vector.load %arg14[%c0_181, %c2_182, %c0_183, %c0_184] : memref<1x6x6x32xf32, #tpu.memory_space<vmem>>, vector<1x4x4x32xf32>
    %c0_185 = arith.constant 0 : index
    %c2_186 = arith.constant 2 : index
    %c1_187 = arith.constant 1 : index
    %c0_188 = arith.constant 0 : index
    %158 = vector.load %arg14[%c0_185, %c2_186, %c1_187, %c0_188] : memref<1x6x6x32xf32, #tpu.memory_space<vmem>>, vector<1x4x4x32xf32>
    %c0_189 = arith.constant 0 : index
    %c2_190 = arith.constant 2 : index
    %c2_191 = arith.constant 2 : index
    %c0_192 = arith.constant 0 : index
    %159 = vector.load %arg14[%c0_189, %c2_190, %c2_191, %c0_192] : memref<1x6x6x32xf32, #tpu.memory_space<vmem>>, vector<1x4x4x32xf32>
    %160 = tpu.concatenate %151, %152, %153, %154, %155, %156, %157, %158, %159 in 3 : vector<1x4x4x32xf32>, vector<1x4x4x32xf32>, vector<1x4x4x32xf32>, vector<1x4x4x32xf32>, vector<1x4x4x32xf32>, vector<1x4x4x32xf32>, vector<1x4x4x32xf32>, vector<1x4x4x32xf32>, vector<1x4x4x32xf32> -> vector<1x4x4x288xf32>
    %161 = arith.truncf %160 : vector<1x4x4x288xf32> to vector<1x4x4x288xbf16>
    %162 = vector.shape_cast %161 : vector<1x4x4x288xbf16> to vector<16x288xbf16>
    %c0_193 = arith.constant 0 : index
    %c0_194 = arith.constant 0 : index
    %163 = vector.load %arg6[%c0_193, %c0_194] : memref<288x64xbf16, #tpu.memory_space<vmem>>, vector<288x64xbf16>
    %cst_195 = arith.constant dense<0.000000e+00> : vector<16x64xf32>
    %164 = tpu.matmul %162, %163, %cst_195 {dimension_numbers = #tpu.dot_dimension_numbers<[1], [0], [0], [1], [0, 0, 1, 1], [], []>} : vector<16x288xbf16>, vector<288x64xbf16>, vector<16x64xf32> -> vector<16x64xf32>
    %c0_196 = arith.constant 0 : index
    %c0_197 = arith.constant 0 : index
    %165 = vector.load %arg7[%c0_196, %c0_197] : memref<1x64xf32, #tpu.memory_space<vmem>>, vector<1x64xf32>
    %166 = vector.broadcast %165 : vector<1x64xf32> to vector<16x64xf32>
    %167 = arith.addf %164, %166 : vector<16x64xf32>
    %cst_198 = arith.constant 0.000000e+00 : f32
    %168 = vector.broadcast %cst_198 : f32 to vector<16x64xf32>
    %169 = arith.maximumf %167, %168 : vector<16x64xf32>
    %170 = vector.shape_cast %169 : vector<16x64xf32> to vector<2x2x4x64xf32>
    %171 = vector.extract_strided_slice %170 {offsets = [0, 0, 0, 0], sizes = [2, 1, 4, 64], strides = [1, 1, 1, 1]} : vector<2x2x4x64xf32> to vector<2x1x4x64xf32>
    %172 = vector.shape_cast %171 : vector<2x1x4x64xf32> to vector<2x4x64xf32>
    %173 = vector.extract_strided_slice %170 {offsets = [0, 1, 0, 0], sizes = [2, 1, 4, 64], strides = [1, 1, 1, 1]} : vector<2x2x4x64xf32> to vector<2x1x4x64xf32>
    %174 = vector.shape_cast %173 : vector<2x1x4x64xf32> to vector<2x4x64xf32>
    %175 = arith.maximumf %172, %174 : vector<2x4x64xf32>
    %176 = vector.shape_cast %175 : vector<2x4x64xf32> to vector<2x2x2x64xf32>
    %177 = vector.extract_strided_slice %176 {offsets = [0, 0, 0, 0], sizes = [2, 2, 1, 64], strides = [1, 1, 1, 1]} : vector<2x2x2x64xf32> to vector<2x2x1x64xf32>
    %178 = vector.shape_cast %177 : vector<2x2x1x64xf32> to vector<2x2x64xf32>
    %179 = vector.extract_strided_slice %176 {offsets = [0, 0, 1, 0], sizes = [2, 2, 1, 64], strides = [1, 1, 1, 1]} : vector<2x2x2x64xf32> to vector<2x2x1x64xf32>
    %180 = vector.shape_cast %179 : vector<2x2x1x64xf32> to vector<2x2x64xf32>
    %181 = arith.maximumf %178, %180 : vector<2x2x64xf32>
    %182 = vector.shape_cast %181 : vector<2x2x64xf32> to vector<1x2x2x64xf32>
    %cst_199 = arith.constant 0.000000e+00 : f32
    %183 = vector.broadcast %cst_199 : f32 to vector<1x1x4x64xf32>
    %cst_200 = arith.constant 0.000000e+00 : f32
    %184 = vector.broadcast %cst_200 : f32 to vector<1x4x1x64xf32>
    %c0_201 = arith.constant 0 : index
    %c0_202 = arith.constant 0 : index
    %c0_203 = arith.constant 0 : index
    %c0_204 = arith.constant 0 : index
    %185 = vector.load %arg15[%c0_201, %c0_202, %c0_203, %c0_204] : memref<1x4x4x64xf32, #tpu.memory_space<vmem>>, vector<1x1x4x64xf32>
    tpu.vector_store %arg15[%c0_201, %c0_202, %c0_203, %c0_204], %183 {strides = array<i32>} : memref<1x4x4x64xf32, #tpu.memory_space<vmem>>, vector<1x1x4x64xf32>,
    %c0_205 = arith.constant 0 : index
    %c3_206 = arith.constant 3 : index
    %c0_207 = arith.constant 0 : index
    %c0_208 = arith.constant 0 : index
    %186 = vector.load %arg15[%c0_205, %c3_206, %c0_207, %c0_208] : memref<1x4x4x64xf32, #tpu.memory_space<vmem>>, vector<1x1x4x64xf32>
    tpu.vector_store %arg15[%c0_205, %c3_206, %c0_207, %c0_208], %183 {strides = array<i32>} : memref<1x4x4x64xf32, #tpu.memory_space<vmem>>, vector<1x1x4x64xf32>,
    %c0_209 = arith.constant 0 : index
    %c0_210 = arith.constant 0 : index
    %c0_211 = arith.constant 0 : index
    %c0_212 = arith.constant 0 : index
    %187 = vector.load %arg15[%c0_209, %c0_210, %c0_211, %c0_212] : memref<1x4x4x64xf32, #tpu.memory_space<vmem>>, vector<1x4x1x64xf32>
    tpu.vector_store %arg15[%c0_209, %c0_210, %c0_211, %c0_212], %184 {strides = array<i32>} : memref<1x4x4x64xf32, #tpu.memory_space<vmem>>, vector<1x4x1x64xf32>,
    %c0_213 = arith.constant 0 : index
    %c0_214 = arith.constant 0 : index
    %c3_215 = arith.constant 3 : index
    %c0_216 = arith.constant 0 : index
    %188 = vector.load %arg15[%c0_213, %c0_214, %c3_215, %c0_216] : memref<1x4x4x64xf32, #tpu.memory_space<vmem>>, vector<1x4x1x64xf32>
    tpu.vector_store %arg15[%c0_213, %c0_214, %c3_215, %c0_216], %184 {strides = array<i32>} : memref<1x4x4x64xf32, #tpu.memory_space<vmem>>, vector<1x4x1x64xf32>,
    %c0_217 = arith.constant 0 : index
    %c1_218 = arith.constant 1 : index
    %c1_219 = arith.constant 1 : index
    %c0_220 = arith.constant 0 : index
    %189 = vector.load %arg15[%c0_217, %c1_218, %c1_219, %c0_220] : memref<1x4x4x64xf32, #tpu.memory_space<vmem>>, vector<1x2x2x64xf32>
    tpu.vector_store %arg15[%c0_217, %c1_218, %c1_219, %c0_220], %182 {strides = array<i32>} : memref<1x4x4x64xf32, #tpu.memory_space<vmem>>, vector<1x2x2x64xf32>,
    %c0_221 = arith.constant 0 : index
    %c0_222 = arith.constant 0 : index
    %c0_223 = arith.constant 0 : index
    %c0_224 = arith.constant 0 : index
    %190 = vector.load %arg15[%c0_221, %c0_222, %c0_223, %c0_224] : memref<1x4x4x64xf32, #tpu.memory_space<vmem>>, vector<1x2x2x64xf32>
    %c0_225 = arith.constant 0 : index
    %c0_226 = arith.constant 0 : index
    %c1_227 = arith.constant 1 : index
    %c0_228 = arith.constant 0 : index
    %191 = vector.load %arg15[%c0_225, %c0_226, %c1_227, %c0_228] : memref<1x4x4x64xf32, #tpu.memory_space<vmem>>, vector<1x2x2x64xf32>
    %c0_229 = arith.constant 0 : index
    %c0_230 = arith.constant 0 : index
    %c2_231 = arith.constant 2 : index
    %c0_232 = arith.constant 0 : index
    %192 = vector.load %arg15[%c0_229, %c0_230, %c2_231, %c0_232] : memref<1x4x4x64xf32, #tpu.memory_space<vmem>>, vector<1x2x2x64xf32>
    %c0_233 = arith.constant 0 : index
    %c1_234 = arith.constant 1 : index
    %c0_235 = arith.constant 0 : index
    %c0_236 = arith.constant 0 : index
    %193 = vector.load %arg15[%c0_233, %c1_234, %c0_235, %c0_236] : memref<1x4x4x64xf32, #tpu.memory_space<vmem>>, vector<1x2x2x64xf32>
    %c0_237 = arith.constant 0 : index
    %c1_238 = arith.constant 1 : index
    %c1_239 = arith.constant 1 : index
    %c0_240 = arith.constant 0 : index
    %194 = vector.load %arg15[%c0_237, %c1_238, %c1_239, %c0_240] : memref<1x4x4x64xf32, #tpu.memory_space<vmem>>, vector<1x2x2x64xf32>
    %c0_241 = arith.constant 0 : index
    %c1_242 = arith.constant 1 : index
    %c2_243 = arith.constant 2 : index
    %c0_244 = arith.constant 0 : index
    %195 = vector.load %arg15[%c0_241, %c1_242, %c2_243, %c0_244] : memref<1x4x4x64xf32, #tpu.memory_space<vmem>>, vector<1x2x2x64xf32>
    %c0_245 = arith.constant 0 : index
    %c2_246 = arith.constant 2 : index
    %c0_247 = arith.constant 0 : index
    %c0_248 = arith.constant 0 : index
    %196 = vector.load %arg15[%c0_245, %c2_246, %c0_247, %c0_248] : memref<1x4x4x64xf32, #tpu.memory_space<vmem>>, vector<1x2x2x64xf32>
    %c0_249 = arith.constant 0 : index
    %c2_250 = arith.constant 2 : index
    %c1_251 = arith.constant 1 : index
    %c0_252 = arith.constant 0 : index
    %197 = vector.load %arg15[%c0_249, %c2_250, %c1_251, %c0_252] : memref<1x4x4x64xf32, #tpu.memory_space<vmem>>, vector<1x2x2x64xf32>
    %c0_253 = arith.constant 0 : index
    %c2_254 = arith.constant 2 : index
    %c2_255 = arith.constant 2 : index
    %c0_256 = arith.constant 0 : index
    %198 = vector.load %arg15[%c0_253, %c2_254, %c2_255, %c0_256] : memref<1x4x4x64xf32, #tpu.memory_space<vmem>>, vector<1x2x2x64xf32>
    %199 = tpu.concatenate %190, %191, %192, %193, %194, %195, %196, %197, %198 in 3 : vector<1x2x2x64xf32>, vector<1x2x2x64xf32>, vector<1x2x2x64xf32>, vector<1x2x2x64xf32>, vector<1x2x2x64xf32>, vector<1x2x2x64xf32>, vector<1x2x2x64xf32>, vector<1x2x2x64xf32>, vector<1x2x2x64xf32> -> vector<1x2x2x576xf32>
    %200 = arith.truncf %199 : vector<1x2x2x576xf32> to vector<1x2x2x576xbf16>
    %201 = vector.shape_cast %200 : vector<1x2x2x576xbf16> to vector<4x576xbf16>
    %c0_257 = arith.constant 0 : index
    %c0_258 = arith.constant 0 : index
    %202 = vector.load %arg8[%c0_257, %c0_258] : memref<576x128xbf16, #tpu.memory_space<vmem>>, vector<576x128xbf16>
    %cst_259 = arith.constant dense<0.000000e+00> : vector<4x128xf32>
    %203 = tpu.matmul %201, %202, %cst_259 {dimension_numbers = #tpu.dot_dimension_numbers<[1], [0], [0], [1], [0, 0, 1, 1], [], []>} : vector<4x576xbf16>, vector<576x128xbf16>, vector<4x128xf32> -> vector<4x128xf32>
    %c0_260 = arith.constant 0 : index
    %c0_261 = arith.constant 0 : index
    %204 = vector.load %arg9[%c0_260, %c0_261] : memref<1x128xf32, #tpu.memory_space<vmem>>, vector<1x128xf32>
    %205 = vector.broadcast %204 : vector<1x128xf32> to vector<4x128xf32>
    %206 = arith.addf %203, %205 : vector<4x128xf32>
    %cst_262 = arith.constant 0.000000e+00 : f32
    %207 = vector.broadcast %cst_262 : f32 to vector<4x128xf32>
    %208 = arith.maximumf %206, %207 : vector<4x128xf32>
    %209 = vector.shape_cast %208 : vector<4x128xf32> to vector<1x4x128xf32>
    %cst_263 = arith.constant dense<0.000000e+00> : vector<1x128xf32>
    %210 = vector.multi_reduction <add>, %209, %cst_263 [1] : vector<1x4x128xf32> to vector<1x128xf32>
    %cst_264 = arith.constant 4.000000e+00 : f32
    %211 = vector.broadcast %cst_264 : f32 to vector<1x128xf32>
    %212 = arith.divf %210, %211 : vector<1x128xf32>
    %213 = arith.truncf %212 : vector<1x128xf32> to vector<1x128xbf16>
    %c0_265 = arith.constant 0 : index
    %c0_266 = arith.constant 0 : index
    %214 = vector.load %arg10[%c0_265, %c0_266] : memref<128x128xbf16, #tpu.memory_space<vmem>>, vector<128x128xbf16>
    %cst_267 = arith.constant dense<0.000000e+00> : vector<1x128xf32>
    %215 = tpu.matmul %213, %214, %cst_267 {dimension_numbers = #tpu.dot_dimension_numbers<[1], [0], [0], [1], [0, 0, 1, 1], [], []>} : vector<1x128xbf16>, vector<128x128xbf16>, vector<1x128xf32> -> vector<1x128xf32>
    %c0_268 = arith.constant 0 : index
    %c0_269 = arith.constant 0 : index
    %216 = vector.load %arg11[%c0_268, %c0_269] : memref<1x128xf32, #tpu.memory_space<vmem>>, vector<1x128xf32>
    %217 = arith.addf %215, %216 : vector<1x128xf32>
    %218 = vector.shape_cast %217 : vector<1x128xf32> to vector<1x1x128xf32>
    %c0_270 = arith.constant 0 : index
    %c0_271 = arith.constant 0 : index
    %c0_272 = arith.constant 0 : index
    %219 = vector.load %arg12[%c0_270, %c0_271, %c0_272] : memref<1x1x128xf32, #tpu.memory_space<vmem>>, vector<1x1x128xf32>
    tpu.vector_store %arg12[%c0_270, %c0_271, %c0_272], %218 {strides = array<i32>} : memref<1x1x128xf32, #tpu.memory_space<vmem>>, vector<1x1x128xf32>,
    return
  }
  func.func @transform_0(%arg0: i32) -> (i32, i32, i32, i32) {
    %c0_i32 = arith.constant 0 : i32
    %c0_i32_0 = arith.constant 0 : i32
    %c0_i32_1 = arith.constant 0 : i32
    %c0_i32_2 = arith.constant 0 : i32
    return %arg0, %c0_i32, %c0_i32_0, %c0_i32_1 : i32, i32, i32, i32
  }
  func.func @transform_1(%arg0: i32) -> (i32, i32) {
    %c0_i32 = arith.constant 0 : i32
    %c0_i32_0 = arith.constant 0 : i32
    %c0_i32_1 = arith.constant 0 : i32
    return %c0_i32, %c0_i32_0 : i32, i32
  }
  func.func @transform_2(%arg0: i32) -> (i32, i32) {
    %c0_i32 = arith.constant 0 : i32
    %c0_i32_0 = arith.constant 0 : i32
    %c0_i32_1 = arith.constant 0 : i32
    return %c0_i32, %c0_i32_0 : i32, i32
  }
  func.func @transform_3(%arg0: i32) -> (i32, i32) {
    %c0_i32 = arith.constant 0 : i32
    %c0_i32_0 = arith.constant 0 : i32
    %c0_i32_1 = arith.constant 0 : i32
    return %c0_i32, %c0_i32_0 : i32, i32
  }
  func.func @transform_4(%arg0: i32) -> (i32, i32) {
    %c0_i32 = arith.constant 0 : i32
    %c0_i32_0 = arith.constant 0 : i32
    %c0_i32_1 = arith.constant 0 : i32
    return %c0_i32, %c0_i32_0 : i32, i32
  }
  func.func @transform_5(%arg0: i32) -> (i32, i32) {
    %c0_i32 = arith.constant 0 : i32
    %c0_i32_0 = arith.constant 0 : i32
    %c0_i32_1 = arith.constant 0 : i32
    return %c0_i32, %c0_i32_0 : i32, i32
  }
  func.func @transform_6(%arg0: i32) -> (i32, i32) {
    %c0_i32 = arith.constant 0 : i32
    %c0_i32_0 = arith.constant 0 : i32
    %c0_i32_1 = arith.constant 0 : i32
    return %c0_i32, %c0_i32_0 : i32, i32
  }
  func.func @transform_7(%arg0: i32) -> (i32, i32) {
    %c0_i32 = arith.constant 0 : i32
    %c0_i32_0 = arith.constant 0 : i32
    %c0_i32_1 = arith.constant 0 : i32
    return %c0_i32, %c0_i32_0 : i32, i32
  }
  func.func @transform_8(%arg0: i32) -> (i32, i32) {
    %c0_i32 = arith.constant 0 : i32
    %c0_i32_0 = arith.constant 0 : i32
    %c0_i32_1 = arith.constant 0 : i32
    return %c0_i32, %c0_i32_0 : i32, i32
  }
  func.func @transform_9(%arg0: i32) -> (i32, i32) {
    %c0_i32 = arith.constant 0 : i32
    %c0_i32_0 = arith.constant 0 : i32
    %c0_i32_1 = arith.constant 0 : i32
    return %c0_i32, %c0_i32_0 : i32, i32
  }
  func.func @transform_10(%arg0: i32) -> (i32, i32) {
    %c0_i32 = arith.constant 0 : i32
    %c0_i32_0 = arith.constant 0 : i32
    %c0_i32_1 = arith.constant 0 : i32
    return %c0_i32, %c0_i32_0 : i32, i32
  }
  func.func @transform_11(%arg0: i32) -> (i32, i32, i32) {
    %c0_i32 = arith.constant 0 : i32
    %c0_i32_0 = arith.constant 0 : i32
    %c0_i32_1 = arith.constant 0 : i32
    return %arg0, %c0_i32, %c0_i32_0 : i32, i32, i32
  }
}

</mosaic_0001>

<llo_original>
// kernel: small_cnn_forward.1
$region0: #{small_cnn_forward.1}
  #allocation0 [shape = 'u32[]', space=smem, size = 0x4, offset = 0x4, fixed_abs, tag = 'smem constant byte address 0x4 - core index']
  #allocation1 [shape = 'u32[144,128]{1,0:T(1,128)}', space=vmem, size = 0x12000, scoped, tag = 'internal scratch']
  #allocation2 [shape = 'f32[1,10,10,16]{3,2,1,0:T(8,128)}', space=vmem, size = 0x14000, scoped, tag = 'scratch operand']
  #allocation3 [shape = 'f32[1,6,6,32]{3,2,1,0:T(8,128)}', space=vmem, size = 0x6000, scoped, tag = 'scratch operand']
  #allocation4 [shape = 'f32[1,4,4,64]{3,2,1,0:T(4,128)}', space=vmem, size = 0x2000, scoped, tag = 'scratch operand']
  %s0 = inlined_call_operand.vmem [shape: bf16[2,18,18,3], index: 0, kind: input, shape index: {}]
  %s1 = inlined_call_operand.vmem [shape: bf16[27,16], index: 1, kind: input, shape index: {}]
  %s2 = inlined_call_operand.vmem [shape: f32[1,16], index: 2, kind: input, shape index: {}]
  %s3 = inlined_call_operand.vmem [shape: bf16[144,32], index: 3, kind: input, shape index: {}]
  %s4 = inlined_call_operand.vmem [shape: f32[1,32], index: 4, kind: input, shape index: {}]
  %s5 = inlined_call_operand.vmem [shape: bf16[288,64], index: 5, kind: input, shape index: {}]
  %s6 = inlined_call_operand.vmem [shape: f32[1,64], index: 6, kind: input, shape index: {}]
  %s7 = inlined_call_operand.vmem [shape: bf16[576,128], index: 7, kind: input, shape index: {}]
  %s8 = inlined_call_operand.vmem [shape: f32[1,128], index: 8, kind: input, shape index: {}]
  %s9 = inlined_call_operand.vmem [shape: bf16[128,128], index: 9, kind: input, shape index: {}]
  %s10 = inlined_call_operand.vmem [shape: f32[1,128], index: 10, kind: input, shape index: {}]
  %s11 = inlined_call_operand.hbm [shape: f32[2,1,128], index: 11, kind: output, shape index: {}]
  %s12 = sld [smem:[#allocation0]]
  $region77: #{small_cnn_forward.1} parent=0
    _
  %s14 = ssub.s32 1, %s12
  %s15 = scalar_select 0, %s14, %s12
  $region1: #{small_cnn_forward.1} parent=0
    #allocation5 [shape = 'u8[1024]{0}', space=vmem, size = 0x400, scoped, tag = 'output window, operand 0']
    #allocation6 [shape = 's32[2]{0}', space=sflag, size = 0x8, scoped, tag = 'scoped memory for small_cnn_forward.1']
    %16 = vsyncpa [#allocation6], 0
    %s17 = scalar_lea.sflag [#allocation6], 1
    %18 = vsyncpa %s17, 0
    loop: start=0, step=1, limit=4
    $region2: #{small_cnn_forward.1} parent=1 // loop_pre_header
      _
    $region3: #{small_cnn_forward.1} parent=1 // loop_header
      %s20 = sphi 0, %s24
      %p21 = scmp.ge.s32.totalorder %s20, 4
      %s30 = sphi 0, %s32
      %s33 = sphi 0, %s30
      %s34 = sphi 0, %s33
      %s50 = sphi 0, %s34
      %s54 = sphi 0, %s54
      %s56 = sphi 0, %s54
      %s57 = sphi 0, %s56
      %s71 = sphi 0, %s57
      %s75 = sphi 0, %s75
      %s77 = sphi 0, %s75
      %s78 = sphi 0, %s77
      %s92 = sphi 0, %s78
      %s96 = sphi 0, %s96
      %s98 = sphi 0, %s96
      %s99 = sphi 0, %s98
      %s113 = sphi 0, %s99
      %s117 = sphi 0, %s117
      %s119 = sphi 0, %s117
      %s120 = sphi 0, %s119
      %s134 = sphi 0, %s120
      %s138 = sphi 0, %s138
      %s140 = sphi 0, %s138
      %s141 = sphi 0, %s140
      %s155 = sphi 0, %s141
      %s159 = sphi 0, %s159
      %s161 = sphi 0, %s159
      %s162 = sphi 0, %s161
      %s176 = sphi 0, %s162
      %s180 = sphi 0, %s180
      %s182 = sphi 0, %s180
      %s183 = sphi 0, %s182
      %s197 = sphi 0, %s183
      %s201 = sphi 0, %s201
      %s203 = sphi 0, %s201
      %s204 = sphi 0, %s203
      %s218 = sphi 0, %s204
      %s222 = sphi 0, %s222
      %s224 = sphi 0, %s222
      %s225 = sphi 0, %s224
      %s239 = sphi 0, %s225
      %s243 = sphi 0, %s243
      %s245 = sphi 0, %s243
      %s246 = sphi 0, %s245
      %s260 = sphi 0, %s246
      %s266 = sphi 0, %s268
      %s269 = sphi 0, %s266
      %s270 = sphi 0, %s269
      %s286 = sphi 0, %s270
    $region4: #{small_cnn_forward.1} parent=1 // loop_header_branch
      %23 = sbr.rel (%p21) target = $region8
    $region5: #{small_cnn_forward.1} parent=1 // loop_body
      %s25 = ssub.s32 %s20, 1
      %s26 = ssub.s32 %s20, 2
      %s27 = sadd.s32 %s20, 1
      %s28 = ssub.s32 %s20, %s27
      %p29 = scmp.eq.s32.totalorder %s28, 0
      %s31 = sadd.s32 %s30, 1
      %s32 = scalar_select %p29, %s30, %s31
      %p35 = pneg %p29
      %p36 = scmp.eq.s32.totalorder %s20, 1
      %p37 = por %p35, %p36
      %p38 = scmp.ne.s32.totalorder %s30, %s33
      %p39 = scmp.eq.s32.totalorder %s20, 0
      %p40 = por %p38, %p39
      %p41 = scmp.ne.s32.totalorder %s30, %s33
      %p42 = scmp.eq.s32.totalorder %s25, 1
      %p43 = por %p41, %p42
      %p44 = scmp.ne.s32.totalorder %s33, %s34
      %p45 = scmp.eq.s32.totalorder %s25, 0
      %p46 = por %p44, %p45
      %p47 = scmp.ne.s32.totalorder %s33, %s34
      %p48 = scmp.eq.s32.totalorder %s26, 1
      %p49 = por %p47, %p48
      %p51 = scmp.ne.s32.totalorder %s34, %s50
      %p52 = scmp.eq.s32.totalorder %s26, 0
      %p53 = por %p51, %p52
      %s55 = sadd.s32 %s54, 1
      %p58 = scmp.eq.s32.totalorder %s20, 1
      %p59 = scmp.ne.s32.totalorder %s54, %s56
      %p60 = scmp.eq.s32.totalorder %s20, 0
      %p61 = por %p59, %p60
      %p62 = scmp.ne.s32.totalorder %s54, %s56
      %p63 = scmp.eq.s32.totalorder %s25, 1
      %p64 = por %p62, %p63
      %p65 = scmp.ne.s32.totalorder %s56, %s57
      %p66 = scmp.eq.s32.totalorder %s25, 0
      %p67 = por %p65, %p66
      %p68 = scmp.ne.s32.totalorder %s56, %s57
      %p69 = scmp.eq.s32.totalorder %s26, 1
      %p70 = por %p68, %p69
      %p72 = scmp.ne.s32.totalorder %s57, %s71
      %p73 = scmp.eq.s32.totalorder %s26, 0
      %p74 = por %p72, %p73
      %s76 = sadd.s32 %s75, 1
      %p79 = scmp.eq.s32.totalorder %s20, 1
      %p80 = scmp.ne.s32.totalorder %s75, %s77
      %p81 = scmp.eq.s32.totalorder %s20, 0
      %p82 = por %p80, %p81
      %p83 = scmp.ne.s32.totalorder %s75, %s77
      %p84 = scmp.eq.s32.totalorder %s25, 1
      %p85 = por %p83, %p84
      %p86 = scmp.ne.s32.totalorder %s77, %s78
      %p87 = scmp.eq.s32.totalorder %s25, 0
      %p88 = por %p86, %p87
      %p89 = scmp.ne.s32.totalorder %s77, %s78
      %p90 = scmp.eq.s32.totalorder %s26, 1
      %p91 = por %p89, %p90
      %p93 = scmp.ne.s32.totalorder %s78, %s92
      %p94 = scmp.eq.s32.totalorder %s26, 0
      %p95 = por %p93, %p94
      %s97 = sadd.s32 %s96, 1
      %p100 = scmp.eq.s32.totalorder %s20, 1
      %p101 = scmp.ne.s32.totalorder %s96, %s98
      %p102 = scmp.eq.s32.totalorder %s20, 0
      %p103 = por %p101, %p102
      %p104 = scmp.ne.s32.totalorder %s96, %s98
      %p105 = scmp.eq.s32.totalorder %s25, 1
      %p106 = por %p104, %p105
      %p107 = scmp.ne.s32.totalorder %s98, %s99
      %p108 = scmp.eq.s32.totalorder %s25, 0
      %p109 = por %p107, %p108
      %p110 = scmp.ne.s32.totalorder %s98, %s99
      %p111 = scmp.eq.s32.totalorder %s26, 1
      %p112 = por %p110, %p111
      %p114 = scmp.ne.s32.totalorder %s99, %s113
      %p115 = scmp.eq.s32.totalorder %s26, 0
      %p116 = por %p114, %p115
      %s118 = sadd.s32 %s117, 1
      %p121 = scmp.eq.s32.totalorder %s20, 1
      %p122 = scmp.ne.s32.totalorder %s117, %s119
      %p123 = scmp.eq.s32.totalorder %s20, 0
      %p124 = por %p122, %p123
      %p125 = scmp.ne.s32.totalorder %s117, %s119
      %p126 = scmp.eq.s32.totalorder %s25, 1
      %p127 = por %p125, %p126
      %p128 = scmp.ne.s32.totalorder %s119, %s120
      %p129 = scmp.eq.s32.totalorder %s25, 0
      %p130 = por %p128, %p129
      %p131 = scmp.ne.s32.totalorder %s119, %s120
      %p132 = scmp.eq.s32.totalorder %s26, 1
      %p133 = por %p131, %p132
      %p135 = scmp.ne.s32.totalorder %s120, %s134
      %p136 = scmp.eq.s32.totalorder %s26, 0
      %p137 = por %p135, %p136
      %s139 = sadd.s32 %s138, 1
      %p142 = scmp.eq.s32.totalorder %s20, 1
      %p143 = scmp.ne.s32.totalorder %s138, %s140
      %p144 = scmp.eq.s32.totalorder %s20, 0
      %p145 = por %p143, %p144
      %p146 = scmp.ne.s32.totalorder %s138, %s140
      %p147 = scmp.eq.s32.totalorder %s25, 1
      %p148 = por %p146, %p147
      %p149 = scmp.ne.s32.totalorder %s140, %s141
      %p150 = scmp.eq.s32.totalorder %s25, 0
      %p151 = por %p149, %p150
      %p152 = scmp.ne.s32.totalorder %s140, %s141
      %p153 = scmp.eq.s32.totalorder %s26, 1
      %p154 = por %p152, %p153
      %p156 = scmp.ne.s32.totalorder %s141, %s155
      %p157 = scmp.eq.s32.totalorder %s26, 0
      %p158 = por %p156, %p157
      %s160 = sadd.s32 %s159, 1
      %p163 = scmp.eq.s32.totalorder %s20, 1
      %p164 = scmp.ne.s32.totalorder %s159, %s161
      %p165 = scmp.eq.s32.totalorder %s20, 0
      %p166 = por %p164, %p165
      %p167 = scmp.ne.s32.totalorder %s159, %s161
      %p168 = scmp.eq.s32.totalorder %s25, 1
      %p169 = por %p167, %p168
      %p170 = scmp.ne.s32.totalorder %s161, %s162
      %p171 = scmp.eq.s32.totalorder %s25, 0
      %p172 = por %p170, %p171
      %p173 = scmp.ne.s32.totalorder %s161, %s162
      %p174 = scmp.eq.s32.totalorder %s26, 1
      %p175 = por %p173, %p174
      %p177 = scmp.ne.s32.totalorder %s162, %s176
      %p178 = scmp.eq.s32.totalorder %s26, 0
      %p179 = por %p177, %p178
      %s181 = sadd.s32 %s180, 1
      %p184 = scmp.eq.s32.totalorder %s20, 1
      %p185 = scmp.ne.s32.totalorder %s180, %s182
      %p186 = scmp.eq.s32.totalorder %s20, 0
      %p187 = por %p185, %p186
      %p188 = scmp.ne.s32.totalorder %s180, %s182
      %p189 = scmp.eq.s32.totalorder %s25, 1
      %p190 = por %p188, %p189
      %p191 = scmp.ne.s32.totalorder %s182, %s183
      %p192 = scmp.eq.s32.totalorder %s25, 0
      %p193 = por %p191, %p192
      %p194 = scmp.ne.s32.totalorder %s182, %s183
      %p195 = scmp.eq.s32.totalorder %s26, 1
      %p196 = por %p194, %p195
      %p198 = scmp.ne.s32.totalorder %s183, %s197
      %p199 = scmp.eq.s32.totalorder %s26, 0
      %p200 = por %p198, %p199
      %s202 = sadd.s32 %s201, 1
      %p205 = scmp.eq.s32.totalorder %s20, 1
      %p206 = scmp.ne.s32.totalorder %s201, %s203
      %p207 = scmp.eq.s32.totalorder %s20, 0
      %p208 = por %p206, %p207
      %p209 = scmp.ne.s32.totalorder %s201, %s203
      %p210 = scmp.eq.s32.totalorder %s25, 1
      %p211 = por %p209, %p210
      %p212 = scmp.ne.s32.totalorder %s203, %s204
      %p213 = scmp.eq.s32.totalorder %s25, 0
      %p214 = por %p212, %p213
      %p215 = scmp.ne.s32.totalorder %s203, %s204
      %p216 = scmp.eq.s32.totalorder %s26, 1
      %p217 = por %p215, %p216
      %p219 = scmp.ne.s32.totalorder %s204, %s218
      %p220 = scmp.eq.s32.totalorder %s26, 0
      %p221 = por %p219, %p220
      %s223 = sadd.s32 %s222, 1
      %p226 = scmp.eq.s32.totalorder %s20, 1
      %p227 = scmp.ne.s32.totalorder %s222, %s224
      %p228 = scmp.eq.s32.totalorder %s20, 0
      %p229 = por %p227, %p228
      %p230 = scmp.ne.s32.totalorder %s222, %s224
      %p231 = scmp.eq.s32.totalorder %s25, 1
      %p232 = por %p230, %p231
      %p233 = scmp.ne.s32.totalorder %s224, %s225
      %p234 = scmp.eq.s32.totalorder %s25, 0
      %p235 = por %p233, %p234
      %p236 = scmp.ne.s32.totalorder %s224, %s225
      %p237 = scmp.eq.s32.totalorder %s26, 1
      %p238 = por %p236, %p237
      %p240 = scmp.ne.s32.totalorder %s225, %s239
      %p241 = scmp.eq.s32.totalorder %s26, 0
      %p242 = por %p240, %p241
      %s244 = sadd.s32 %s243, 1
      %p247 = scmp.eq.s32.totalorder %s20, 1
      %p248 = scmp.ne.s32.totalorder %s243, %s245
      %p249 = scmp.eq.s32.totalorder %s20, 0
      %p250 = por %p248, %p249
      %p251 = scmp.ne.s32.totalorder %s243, %s245
      %p252 = scmp.eq.s32.totalorder %s25, 1
      %p253 = por %p251, %p252
      %p254 = scmp.ne.s32.totalorder %s245, %s246
      %p255 = scmp.eq.s32.totalorder %s25, 0
      %p256 = por %p254, %p255
      %p257 = scmp.ne.s32.totalorder %s245, %s246
      %p258 = scmp.eq.s32.totalorder %s26, 1
      %p259 = por %p257, %p258
      %p261 = scmp.ne.s32.totalorder %s246, %s260
      %p262 = scmp.eq.s32.totalorder %s26, 0
      %p263 = por %p261, %p262
      %s264 = ssub.s32 %s20, %s27
      %p265 = scmp.eq.s32.totalorder %s264, 0
      %s267 = sadd.s32 %s266, 1
      %s268 = scalar_select %p265, %s266, %s267
      %p271 = pneg %p265
      %p272 = scmp.eq.s32.totalorder %s20, 1
      %p273 = por %p271, %p272
      %p274 = scmp.ne.s32.totalorder %s266, %s269
      %p275 = scmp.eq.s32.totalorder %s20, 0
      %p276 = por %p274, %p275
      %p277 = scmp.ne.s32.totalorder %s266, %s269
      %p278 = scmp.eq.s32.totalorder %s25, 1
      %p279 = por %p277, %p278
      %p280 = scmp.ne.s32.totalorder %s269, %s270
      %p281 = scmp.eq.s32.totalorder %s25, 0
      %p282 = por %p280, %p281
      %p283 = scmp.ne.s32.totalorder %s269, %s270
      %p284 = scmp.eq.s32.totalorder %s26, 1
      %p285 = por %p283, %p284
      %p287 = scmp.ne.s32.totalorder %s270, %s286
      %p288 = scmp.eq.s32.totalorder %s26, 0
      %p289 = por %p287, %p288
      %p290 = scmp.le.s32.totalorder 1, %s20
      %p291 = scmp.lt.s32.totalorder %s20, 3
      %p292 = pnand %p290, %p291
      %p293 = pneg %p292
      // Predicated region
      $region9: #{small_cnn_forward.1} parent=5 // pred_check
        _
      $region10: #{small_cnn_forward.1} parent=5 // pred_check_branch
        %295 = sbr.rel (%p292) target = $region12
      $region11: #{small_cnn_forward.1} parent=5 // pred_region
        %s296 = ssub.s32 %s20, 1
        // Predicated region
        $region13: #{small_cnn_forward.1} parent=11 // pred_check
          %p297 = pneg %p67
        $region14: #{small_cnn_forward.1} parent=11 // pred_check_branch
          %299 = sbr.rel (%p297) target = $region16
        $region15: #{small_cnn_forward.1} parent=11 // pred_region
          _
        $region16: #{small_cnn_forward.1} parent=11 // pred_fallthru
          _
        // Predicated region
        $region17: #{small_cnn_forward.1} parent=11 // pred_check
          %p300 = pneg %p88
        $region18: #{small_cnn_forward.1} parent=11 // pred_check_branch
          %302 = sbr.rel (%p300) target = $region20
        $region19: #{small_cnn_forward.1} parent=11 // pred_region
          _
        $region20: #{small_cnn_forward.1} parent=11 // pred_fallthru
          _
        // Predicated region
        $region21: #{small_cnn_forward.1} parent=11 // pred_check
          %p303 = pneg %p109
        $region22: #{small_cnn_forward.1} parent=11 // pred_check_branch
          %305 = sbr.rel (%p303) target = $region24
        $region23: #{small_cnn_forward.1} parent=11 // pred_region
          _
        $region24: #{small_cnn_forward.1} parent=11 // pred_fallthru
          _
        // Predicated region
        $region25: #{small_cnn_forward.1} parent=11 // pred_check
          %p306 = pneg %p130
        $region26: #{small_cnn_forward.1} parent=11 // pred_check_branch
          %308 = sbr.rel (%p306) target = $region28
        $region27: #{small_cnn_forward.1} parent=11 // pred_region
          _
        $region28: #{small_cnn_forward.1} parent=11 // pred_fallthru
          _
        // Predicated region
        $region29: #{small_cnn_forward.1} parent=11 // pred_check
          %p309 = pneg %p151
        $region30: #{small_cnn_forward.1} parent=11 // pred_check_branch
          %311 = sbr.rel (%p309) target = $region32
        $region31: #{small_cnn_forward.1} parent=11 // pred_region
          _
        $region32: #{small_cnn_forward.1} parent=11 // pred_fallthru
          _
        // Predicated region
        $region33: #{small_cnn_forward.1} parent=11 // pred_check
          %p312 = pneg %p172
        $region34: #{small_cnn_forward.1} parent=11 // pred_check_branch
          %314 = sbr.rel (%p312) target = $region36
        $region35: #{small_cnn_forward.1} parent=11 // pred_region
          _
        $region36: #{small_cnn_forward.1} parent=11 // pred_fallthru
          _
        // Predicated region
        $region37: #{small_cnn_forward.1} parent=11 // pred_check
          %p315 = pneg %p193
        $region38: #{small_cnn_forward.1} parent=11 // pred_check_branch
          %317 = sbr.rel (%p315) target = $region40
        $region39: #{small_cnn_forward.1} parent=11 // pred_region
          _
        $region40: #{small_cnn_forward.1} parent=11 // pred_fallthru
          _
        // Predicated region
        $region41: #{small_cnn_forward.1} parent=11 // pred_check
          %p318 = pneg %p214
        $region42: #{small_cnn_forward.1} parent=11 // pred_check_branch
          %320 = sbr.rel (%p318) target = $region44
        $region43: #{small_cnn_forward.1} parent=11 // pred_region
          _
        $region44: #{small_cnn_forward.1} parent=11 // pred_fallthru
          _
        // Predicated region
        $region45: #{small_cnn_forward.1} parent=11 // pred_check
          %p321 = pneg %p235
        $region46: #{small_cnn_forward.1} parent=11 // pred_check_branch
          %323 = sbr.rel (%p321) target = $region48
        $region47: #{small_cnn_forward.1} parent=11 // pred_region
          _
        $region48: #{small_cnn_forward.1} parent=11 // pred_fallthru
          _
        // Predicated region
        $region49: #{small_cnn_forward.1} parent=11 // pred_check
          %p324 = pneg %p256
        $region50: #{small_cnn_forward.1} parent=11 // pred_check_branch
          %326 = sbr.rel (%p324) target = $region52
        $region51: #{small_cnn_forward.1} parent=11 // pred_region
          _
        $region52: #{small_cnn_forward.1} parent=11 // pred_fallthru
          _
      $region12: #{small_cnn_forward.1} parent=5 // pred_fallthru
        _
      %p327 = scmp.lt.s32.totalorder %s20, 2
      // Predicated region
      $region53: #{small_cnn_forward.1} parent=5 // pred_check
        %p328 = pneg %p327
      $region54: #{small_cnn_forward.1} parent=5 // pred_check_branch
        %330 = sbr.rel (%p328) target = $region56
      $region55: #{small_cnn_forward.1} parent=5 // pred_region
        // Predicated region
        $region57: #{small_cnn_forward.1} parent=55 // pred_check
          %p331 = pneg %p40
        $region58: #{small_cnn_forward.1} parent=55 // pred_check_branch
          %333 = sbr.rel (%p331) target = $region60
        $region59: #{small_cnn_forward.1} parent=55 // pred_region
          %p334 = scmp.lt.s32.totalorder %s20, 1
          %s335 = scalar_select %p334, %s20, 1
          %s336 = smul.addr %s335, 54
          %s337 = smul.addr %s336, 4
          %s338 = scalar_lea.vmem %s0, %s337
        $region60: #{small_cnn_forward.1} parent=55 // pred_fallthru
          _
      $region56: #{small_cnn_forward.1} parent=5 // pred_fallthru
        _
      %p339 = scmp.le.s32.totalorder 1, %s20
      %p340 = scmp.lt.s32.totalorder %s20, 3
      %p341 = pnand %p339, %p340
      %p342 = pneg %p341
      // Predicated region
      $region61: #{small_cnn_forward.1} parent=5 // pred_check
        _
      $region62: #{small_cnn_forward.1} parent=5 // pred_check_branch
        %344 = sbr.rel (%p341) target = $region64
      $region63: #{small_cnn_forward.1} parent=5 // pred_region
        %s345 = ssub.s32 %s20, 1
        %p346 = scmp.lt.s32.totalorder %s25, 1
        %s347 = scalar_select %p346, %s25, 1
        %s348 = smul.addr %s347, 54
        %s349 = smul.addr %s348, 4
        %s350 = scalar_lea.vmem %s0, %s349
        %p351 = pneg %p46
        %p352 = pneg %p43
        %p353 = pneg %p67
        %p354 = pneg %p64
        %p355 = pneg %p88
        %p356 = pneg %p85
        %p357 = pneg %p109
        %p358 = pneg %p106
        %p359 = pneg %p130
        %p360 = pneg %p127
        %p361 = pneg %p151
        %p362 = pneg %p148
        %p363 = pneg %p172
        %p364 = pneg %p169
        %p365 = pneg %p193
        %p366 = pneg %p190
        %p367 = pneg %p214
        %p368 = pneg %p211
        %p369 = pneg %p235
        %p370 = pneg %p232
        %p371 = pneg %p256
        %p372 = pneg %p253
        %p373 = pneg %p282
        %p374 = pneg %p279
        %s375 = sand.u32 %s269, 1
        %s376 = scalar_lea.sflag [#allocation6], %s375
        %s377 = sand.u32 %s269, 1
        %s378 = scalar_lea.vmem [#allocation5], %s377
        %p379 = scmp.lt.s32.totalorder %s25, 1
        %s380 = scalar_select %p379, %s25, 1
        %s381 = smul.addr %s380, 54
        %s382 = smul.addr %s381, 4
        %s383 = scalar_lea.vmem %s0, %s382
        %v385 = vld [vmem:[%s383] sm:$0xf]
        %v386 = vld [vmem:[%s383 + $0x4] sm:$0xf]
        %v387 = vld [vmem:[%s383 + $0xc] sm:$0xf]
        %v388 = vld [vmem:[%s383 + $0x10] sm:$0xf]
        %v389 = vld [vmem:[%s383 + $0x18] sm:$0xf]
        %v390 = vld [vmem:[%s383 + $0x1c] sm:$0xf]
        %v391 = vld [vmem:[%s383 + $0x24] sm:$0xf]
        %v392 = vld [vmem:[%s383 + $0x28] sm:$0xf]
        %v393 = vld [vmem:[%s383 + $0x30] sm:$0xf]
        %v394 = vld [vmem:[%s383 + $0x34] sm:$0xf]
        %v395 = vld [vmem:[%s383 + $0x3c] sm:$0xf]
        %v396 = vld [vmem:[%s383 + $0x40] sm:$0xf]
        %v397 = vld [vmem:[%s383 + $0x48] sm:$0xf]
        %v398 = vld [vmem:[%s383 + $0x4c] sm:$0xf]
        %v399 = vld [vmem:[%s383 + $0x54] sm:$0xf]
        %v400 = vld [vmem:[%s383 + $0x58] sm:$0xf]
        %v401 = vld [vmem:[%s383 + $0x60] sm:$0xf]
        %v402 = vld [vmem:[%s383 + $0x64] sm:$0xf]
        %v403 = vld [vmem:[%s383 + $0x6c] sm:$0xf]
        %v404 = vld [vmem:[%s383 + $0x70] sm:$0xf]
        %v405 = vld [vmem:[%s383 + $0x78] sm:$0xf]
        %v406 = vld [vmem:[%s383 + $0x7c] sm:$0xf]
        %v407 = vld [vmem:[%s383 + $0x84] sm:$0xf]
        %v408 = vld [vmem:[%s383 + $0x88] sm:$0xf]
        %v409 = vld [vmem:[%s383 + $0x90] sm:$0xf]
        %v410 = vld [vmem:[%s383 + $0x94] sm:$0xf]
        %v411 = vld [vmem:[%s383 + $0x9c] sm:$0xf]
        %v412 = vld [vmem:[%s383 + $0xa0] sm:$0xf]
        %v413 = vld [vmem:[%s383 + $0xa8] sm:$0xf]
        %v414 = vld [vmem:[%s383 + $0xac] sm:$0xf]
        %v415 = vld [vmem:[%s383 + $0xb4] sm:$0xf]
        %v416 = vld [vmem:[%s383 + $0xb8] sm:$0xf]
        %v417 = vld [vmem:[%s1] sm:$0x3]
        %v418 = vld [vmem:[%s383 + $0x8] sm:$0x1]
        %v419 = vld [vmem:[%s383 + $0x14] sm:$0x1]
        %v420 = vld [vmem:[%s383 + $0x20] sm:$0x1]
        %v421 = vld [vmem:[%s383 + $0x2c] sm:$0x1]
        %v422 = vld [vmem:[%s383 + $0x38] sm:$0x1]
        %v423 = vld [vmem:[%s383 + $0x44] sm:$0x1]
        %v424 = vld [vmem:[%s383 + $0x50] sm:$0x1]
        %v425 = vld [vmem:[%s383 + $0x5c] sm:$0x1]
        %v426 = vld [vmem:[%s383 + $0x68] sm:$0x1]
        %v427 = vld [vmem:[%s383 + $0x74] sm:$0x1]
        %v428 = vld [vmem:[%s383 + $0x80] sm:$0x1]
        %v429 = vld [vmem:[%s383 + $0x8c] sm:$0x1]
        %v430 = vld [vmem:[%s383 + $0x98] sm:$0x1]
        %v431 = vld [vmem:[%s383 + $0xa4] sm:$0x1]
        %v432 = vld [vmem:[%s383 + $0xb0] sm:$0x1]
        %v433 = vld [vmem:[%s383 + $0xbc] sm:$0x1]
        %vm434 = vsmask.f32 3328
        %vm435 = vsmask.f32 7440
        %vm436 = vmor %vm434, %vm435
        %v438 = vshrl.u32 %v385, 16
        %v440 = vrot.slane %v438, 4
        %v441 = vshll.u32 %v385, 16
        %v443 = vrot.slane %v441, 5
        %v444 = vor.u32 %v440, %v443
        %v445 = vrot.slane %v444, 4
        %v447 = vshll.u32 %v386, 16
        %v449 = vrot.slane %v447, 5
        %v450 = vsel %vm436, %v445, %v449
        %v451 = vshrl.u32 %v386, 16
        %v453 = vrot.slane %v451, 4
        %v454 = vor.u32 %v453, %v449
        %v455 = vrot.slane %v454, 4
        %v457 = vshll.u32 %v418, 16
        %v459 = vrot.slane %v457, 5
        %v460 = vsel %vm436, %v455, %v459
        %v462 = vshrl.u32 %v387, 16
        %v464 = vrot.slane %v462, 4
        %v465 = vshll.u32 %v387, 16
        %v467 = vrot.slane %v465, 5
        %v468 = vor.u32 %v464, %v467
        %v469 = vrot.slane %v468, 4
        %v471 = vshll.u32 %v388, 16
        %v473 = vrot.slane %v471, 5
        %v474 = vsel %vm436, %v469, %v473
        %v475 = vshrl.u32 %v388, 16
        %v477 = vrot.slane %v475, 4
        %v478 = vor.u32 %v477, %v473
        %v479 = vrot.slane %v478, 4
        %v481 = vshll.u32 %v419, 16
        %v483 = vrot.slane %v481, 5
        %v484 = vsel %vm436, %v479, %v483
        %v486 = vshrl.u32 %v389, 16
        %v488 = vrot.slane %v486, 4
        %v489 = vshll.u32 %v389, 16
        %v491 = vrot.slane %v489, 5
        %v492 = vor.u32 %v488, %v491
        %v493 = vrot.slane %v492, 4
        %v495 = vshll.u32 %v390, 16
        %v497 = vrot.slane %v495, 5
        %v498 = vsel %vm436, %v493, %v497
        %v499 = vshrl.u32 %v390, 16
        %v501 = vrot.slane %v499, 4
        %v502 = vor.u32 %v501, %v497
        %v503 = vrot.slane %v502, 4
        %v505 = vshll.u32 %v420, 16
        %v507 = vrot.slane %v505, 5
        %v508 = vsel %vm436, %v503, %v507
        %v510 = vshrl.u32 %v391, 16
        %v512 = vrot.slane %v510, 4
        %v513 = vshll.u32 %v391, 16
        %v515 = vrot.slane %v513, 5
        %v516 = vor.u32 %v512, %v515
        %v517 = vrot.slane %v516, 4
        %v519 = vshll.u32 %v392, 16
        %v521 = vrot.slane %v519, 5
        %v522 = vsel %vm436, %v517, %v521
        %v523 = vshrl.u32 %v392, 16
        %v525 = vrot.slane %v523, 4
        %v526 = vor.u32 %v525, %v521
        %v527 = vrot.slane %v526, 4
        %v529 = vshll.u32 %v421, 16
        %v531 = vrot.slane %v529, 5
        %v532 = vsel %vm436, %v527, %v531
        %v534 = vshrl.u32 %v393, 16
        %v536 = vrot.slane %v534, 4
        %v537 = vshll.u32 %v393, 16
        %v539 = vrot.slane %v537, 5
        %v540 = vor.u32 %v536, %v539
        %v541 = vrot.slane %v540, 4
        %v543 = vshll.u32 %v394, 16
        %v545 = vrot.slane %v543, 5
        %v546 = vsel %vm436, %v541, %v545
        %v547 = vshrl.u32 %v394, 16
        %v549 = vrot.slane %v547, 4
        %v550 = vor.u32 %v549, %v545
        %v551 = vrot.slane %v550, 4
        %v553 = vshll.u32 %v422, 16
        %v555 = vrot.slane %v553, 5
        %v556 = vsel %vm436, %v551, %v555
        %v558 = vshrl.u32 %v395, 16
        %v560 = vrot.slane %v558, 4
        %v561 = vshll.u32 %v395, 16
        %v563 = vrot.slane %v561, 5
        %v564 = vor.u32 %v560, %v563
        %v565 = vrot.slane %v564, 4
        %v567 = vshll.u32 %v396, 16
        %v569 = vrot.slane %v567, 5
        %v570 = vsel %vm436, %v565, %v569
        %v571 = vshrl.u32 %v396, 16
        %v573 = vrot.slane %v571, 4
        %v574 = vor.u32 %v573, %v569
        %v575 = vrot.slane %v574, 4
        %v577 = vshll.u32 %v423, 16
        %v579 = vrot.slane %v577, 5
        %v580 = vsel %vm436, %v575, %v579
        %v582 = vshrl.u32 %v397, 16
        %v584 = vrot.slane %v582, 4
        %v585 = vshll.u32 %v397, 16
        %v587 = vrot.slane %v585, 5
        %v588 = vor.u32 %v584, %v587
        %v589 = vrot.slane %v588, 4
        %v591 = vshll.u32 %v398, 16
        %v593 = vrot.slane %v591, 5
        %v594 = vsel %vm436, %v589, %v593
        %v595 = vshrl.u32 %v398, 16
        %v597 = vrot.slane %v595, 4
        %v598 = vor.u32 %v597, %v593
        %v599 = vrot.slane %v598, 4
        %v601 = vshll.u32 %v424, 16
        %v603 = vrot.slane %v601, 5
        %v604 = vsel %vm436, %v599, %v603
        %v606 = vshrl.u32 %v399, 16
        %v608 = vrot.slane %v606, 4
        %v609 = vshll.u32 %v399, 16
        %v611 = vrot.slane %v609, 5
        %v612 = vor.u32 %v608, %v611
        %v613 = vrot.slane %v612, 4
        %v615 = vshll.u32 %v400, 16
        %v617 = vrot.slane %v615, 5
        %v618 = vsel %vm436, %v613, %v617
        %v619 = vshrl.u32 %v400, 16
        %v621 = vrot.slane %v619, 4
        %v622 = vor.u32 %v621, %v617
        %v623 = vrot.slane %v622, 4
        %v625 = vshll.u32 %v425, 16
        %v627 = vrot.slane %v625, 5
        %v628 = vsel %vm436, %v623, %v627
        %v630 = vshrl.u32 %v401, 16
        %v632 = vrot.slane %v630, 4
        %v633 = vshll.u32 %v401, 16
        %v635 = vrot.slane %v633, 5
        %v636 = vor.u32 %v632, %v635
        %v637 = vrot.slane %v636, 4
        %v639 = vshll.u32 %v402, 16
        %v641 = vrot.slane %v639, 5
        %v642 = vsel %vm436, %v637, %v641
        %v643 = vshrl.u32 %v402, 16
        %v645 = vrot.slane %v643, 4
        %v646 = vor.u32 %v645, %v641
        %v647 = vrot.slane %v646, 4
        %v649 = vshll.u32 %v426, 16
        %v651 = vrot.slane %v649, 5
        %v652 = vsel %vm436, %v647, %v651
        %v654 = vshrl.u32 %v403, 16
        %v656 = vrot.slane %v654, 4
        %v657 = vshll.u32 %v403, 16
        %v659 = vrot.slane %v657, 5
        %v660 = vor.u32 %v656, %v659
        %v661 = vrot.slane %v660, 4
        %v663 = vshll.u32 %v404, 16
        %v665 = vrot.slane %v663, 5
        %v666 = vsel %vm436, %v661, %v665
        %v667 = vshrl.u32 %v404, 16
        %v669 = vrot.slane %v667, 4
        %v670 = vor.u32 %v669, %v665
        %v671 = vrot.slane %v670, 4
        %v673 = vshll.u32 %v427, 16
        %v675 = vrot.slane %v673, 5
        %v676 = vsel %vm436, %v671, %v675
        %v678 = vshrl.u32 %v405, 16
        %v680 = vrot.slane %v678, 4
        %v681 = vshll.u32 %v405, 16
        %v683 = vrot.slane %v681, 5
        %v684 = vor.u32 %v680, %v683
        %v685 = vrot.slane %v684, 4
        %v687 = vshll.u32 %v406, 16
        %v689 = vrot.slane %v687, 5
        %v690 = vsel %vm436, %v685, %v689
        %v691 = vshrl.u32 %v406, 16
        %v693 = vrot.slane %v691, 4
        %v694 = vor.u32 %v693, %v689
        %v695 = vrot.slane %v694, 4
        %v697 = vshll.u32 %v428, 16
        %v699 = vrot.slane %v697, 5
        %v700 = vsel %vm436, %v695, %v699
        %v702 = vshrl.u32 %v407, 16
        %v704 = vrot.slane %v702, 4
        %v705 = vshll.u32 %v407, 16
        %v707 = vrot.slane %v705, 5
        %v708 = vor.u32 %v704, %v707
        %v709 = vrot.slane %v708, 4
        %v711 = vshll.u32 %v408, 16
        %v713 = vrot.slane %v711, 5
        %v714 = vsel %vm436, %v709, %v713
        %v715 = vshrl.u32 %v408, 16
        %v717 = vrot.slane %v715, 4
        %v718 = vor.u32 %v717, %v713
        %v719 = vrot.slane %v718, 4
        %v721 = vshll.u32 %v429, 16
        %v723 = vrot.slane %v721, 5
        %v724 = vsel %vm436, %v719, %v723
        %v726 = vshrl.u32 %v409, 16
        %v728 = vrot.slane %v726, 4
        %v729 = vshll.u32 %v409, 16
        %v731 = vrot.slane %v729, 5
        %v732 = vor.u32 %v728, %v731
        %v733 = vrot.slane %v732, 4
        %v735 = vshll.u32 %v410, 16
        %v737 = vrot.slane %v735, 5
        %v738 = vsel %vm436, %v733, %v737
        %v739 = vshrl.u32 %v410, 16
        %v741 = vrot.slane %v739, 4
        %v742 = vor.u32 %v741, %v737
        %v743 = vrot.slane %v742, 4
        %v745 = vshll.u32 %v430, 16
        %v747 = vrot.slane %v745, 5
        %v748 = vsel %vm436, %v743, %v747
        %v750 = vshrl.u32 %v411, 16
        %v752 = vrot.slane %v750, 4
        %v753 = vshll.u32 %v411, 16
        %v755 = vrot.slane %v753, 5
        %v756 = vor.u32 %v752, %v755
        %v757 = vrot.slane %v756, 4
        %v759 = vshll.u32 %v412, 16
        %v761 = vrot.slane %v759, 5
        %v762 = vsel %vm436, %v757, %v761
        %v763 = vshrl.u32 %v412, 16
        %v765 = vrot.slane %v763, 4
        %v766 = vor.u32 %v765, %v761
        %v767 = vrot.slane %v766, 4
        %v769 = vshll.u32 %v431, 16
        %v771 = vrot.slane %v769, 5
        %v772 = vsel %vm436, %v767, %v771
        %v774 = vshrl.u32 %v413, 16
        %v776 = vrot.slane %v774, 4
        %v777 = vshll.u32 %v413, 16
        %v779 = vrot.slane %v777, 5
        %v780 = vor.u32 %v776, %v779
        %v781 = vrot.slane %v780, 4
        %v783 = vshll.u32 %v414, 16
        %v785 = vrot.slane %v783, 5
        %v786 = vsel %vm436, %v781, %v785
        %v787 = vshrl.u32 %v414, 16
        %v789 = vrot.slane %v787, 4
        %v790 = vor.u32 %v789, %v785
        %v791 = vrot.slane %v790, 4
        %v793 = vshll.u32 %v432, 16
        %v795 = vrot.slane %v793, 5
        %v796 = vsel %vm436, %v791, %v795
        %v798 = vshrl.u32 %v415, 16
        %v800 = vrot.slane %v798, 4
        %v801 = vshll.u32 %v415, 16
        %v803 = vrot.slane %v801, 5
        %v804 = vor.u32 %v800, %v803
        %v805 = vrot.slane %v804, 4
        %v807 = vshll.u32 %v416, 16
        %v809 = vrot.slane %v807, 5
        %v810 = vsel %vm436, %v805, %v809
        %v811 = vshrl.u32 %v416, 16
        %v813 = vrot.slane %v811, 4
        %v814 = vor.u32 %v813, %v809
        %v815 = vrot.slane %v814, 4
        %v817 = vshll.u32 %v433, 16
        %v819 = vrot.slane %v817, 5
        %v820 = vsel %vm436, %v815, %v819
        %v821 = vld [vmem:[%s1] sm:$0x6]
        %v822 = vunpack.c.l.b16 %v450
        %v823 = vunpack.c.l.b16 %v460
        %v824 = vunpack.c.l.b16 %v474
        %v825 = vunpack.c.l.b16 %v484
        %v826 = vunpack.c.l.b16 %v498
        %v827 = vunpack.c.l.b16 %v508
        %v828 = vunpack.c.l.b16 %v522
        %v829 = vunpack.c.l.b16 %v532
        %v830 = vunpack.c.l.b16 %v546
        %v831 = vunpack.c.l.b16 %v556
        %v832 = vunpack.c.l.b16 %v570
        %v833 = vunpack.c.l.b16 %v580
        %v834 = vunpack.c.l.b16 %v594
        %v835 = vunpack.c.l.b16 %v604
        %v836 = vunpack.c.l.b16 %v618
        %v837 = vunpack.c.l.b16 %v628
        %v838 = vunpack.c.l.b16 %v642
        %v839 = vunpack.c.l.b16 %v652
        %v840 = vunpack.c.l.b16 %v666
        %v841 = vunpack.c.l.b16 %v676
        %v842 = vunpack.c.l.b16 %v690
        %v843 = vunpack.c.l.b16 %v700
        %v844 = vunpack.c.l.b16 %v714
        %v845 = vunpack.c.l.b16 %v724
        %v846 = vunpack.c.l.b16 %v738
        %v847 = vunpack.c.l.b16 %v748
        %v848 = vunpack.c.l.b16 %v762
        %v849 = vunpack.c.l.b16 %v772
        %v850 = vunpack.c.l.b16 %v786
        %v851 = vunpack.c.l.b16 %v796
        %v852 = vunpack.c.l.b16 %v810
        %v853 = vunpack.c.l.b16 %v820
        %v854 = vpack.c.b16 %v823, %v822
        %v855 = vpack.c.b16 %v825, %v824
        %v856 = vpack.c.b16 %v827, %v826
        %v857 = vpack.c.b16 %v829, %v828
        %v858 = vpack.c.b16 %v831, %v830
        %v859 = vpack.c.b16 %v833, %v832
        %v860 = vpack.c.b16 %v835, %v834
        %v861 = vpack.c.b16 %v837, %v836
        %v862 = vpack.c.b16 %v839, %v838
        %v863 = vpack.c.b16 %v841, %v840
        %v864 = vpack.c.b16 %v843, %v842
        %v865 = vpack.c.b16 %v845, %v844
        %v866 = vpack.c.b16 %v847, %v846
        %v867 = vpack.c.b16 %v849, %v848
        %v868 = vpack.c.b16 %v851, %v850
        %v869 = vpack.c.b16 %v853, %v852
        %v871 = vunpack.c.l.b16 %v821
        %v872 = vpack.c.b16 %v871, %v871
        %v874 = vshrl.u32 %v872, 16
        %v876 = vrot.slane %v874, 1
        %v877 = vshll.u32 %v872, 16
        %v879 = vrot.slane %v877, 2
        %v880 = vor.u32 %v876, %v879
        %vm881 = vcmask 23552
        %v883 = vsel %vm881, %v854, 0
        %v886 = vsel %vm881, %v855, 0
        %v889 = vsel %vm881, %v856, 0
        %v892 = vsel %vm881, %v857, 0
        %v895 = vsel %vm881, %v858, 0
        %v898 = vsel %vm881, %v859, 0
        %v901 = vsel %vm881, %v860, 0
        %v904 = vsel %vm881, %v861, 0
        %v907 = vsel %vm881, %v862, 0
        %v910 = vsel %vm881, %v863, 0
        %v913 = vsel %vm881, %v864, 0
        %v916 = vsel %vm881, %v865, 0
        %v919 = vsel %vm881, %v866, 0
        %v922 = vsel %vm881, %v867, 0
        %v925 = vsel %vm881, %v868, 0
        %v928 = vsel %vm881, %v869, 0
        %vm930 = vcmask 1040384
        %vm931 = vcmask 1041408
        %v932 = vsel %vm930, 4294967295, 65535
        %v933 = vsel %vm931, %v932, 0
        %v935 = vand.u32 %v880, %v933
        %937 = vmatprep.subr.bf16.mxu0 0
        %938 = vmatpush1.bf16.msra.mxu0 %v935
        %939 = vmatprep.subr.bf16.mxu0 0
        %940 = vmatpush1.bf16.msra.mxu0 0
        %941 = vmatprep.subr.bf16.mxu0 0
        %942 = vmatpush1.bf16.msra.mxu0 0
        %943 = vmatprep.subr.bf16.mxu0 0
        %944 = vmatpush1.bf16.msra.mxu0 0
        %945 = vmatprep.subr.bf16.mxu0 0
        %946 = vmatpush1.bf16.msra.mxu0 0
        %947 = vmatprep.subr.bf16.mxu0 0
        %948 = vmatpush1.bf16.msra.mxu0 0
        %949 = vmatprep.subr.bf16.mxu0 0
        %950 = vmatpush1.bf16.msra.mxu0 0
        %951 = vmatprep.subr.bf16.mxu0 0
        %952 = vmatpush1.bf16.msra.mxu0 0
        %953 = vmatprep.subr.bf16.mxu0 0
        %954 = vmatpush1.bf16.msra.mxu0 0
        %955 = vmatprep.subr.bf16.mxu0 0
        %956 = vmatpush1.bf16.msra.mxu0 0
        %957 = vmatprep.subr.bf16.mxu0 0
        %958 = vmatpush1.bf16.msra.mxu0 0
        %959 = vmatprep.subr.bf16.mxu0 0
        %960 = vmatpush1.bf16.msra.mxu0 0
        %961 = vmatprep.subr.bf16.mxu0 0
        %962 = vmatpush1.bf16.msra.mxu0 0
        %963 = vmatprep.subr.bf16.mxu0 0
        %964 = vmatpush1.bf16.msra.mxu0 0
        %965 = vmatprep.subr.bf16.mxu0 0
        %966 = vmatpush1.bf16.msra.mxu0 0
        %967 = vmatprep.subr.bf16.mxu0 0
        %968 = vmatpush1.bf16.msra.mxu0 0
        %969 = vmatprep.mubr.bf16.mxu0 0
        %970 = vmatmul.mubr.bf16.gmra.mrb[0].mxu0 %v883
        %v971 = vpop.f32.mrb[0].mxu0
        %v972 = vadd.f32 0.0, %v971
        %v973 = vpop.f32.mrb[0].mxu0
        %v974 = vpop.f32.mrb[0].mxu0
        %v975 = vadd.f32 0.0, %v974
        %v976 = vpop.f32.mrb[0].mxu0
        %977 = vmatprep.mubr.bf16.mxu0 0
        %978 = vmatmul.mubr.bf16.gmra.mrb[0].mxu0 %v886
        %v979 = vpop.f32.mrb[0].mxu0
        %v980 = vadd.f32 0.0, %v979
        %v981 = vpop.f32.mrb[0].mxu0
        %v982 = vpop.f32.mrb[0].mxu0
        %v983 = vadd.f32 0.0, %v982
        %v984 = vpop.f32.mrb[0].mxu0
        %985 = vmatprep.mubr.bf16.mxu0 0
        %986 = vmatmul.mubr.bf16.gmra.mrb[0].mxu0 %v889
        %v987 = vpop.f32.mrb[0].mxu0
        %v988 = vadd.f32 0.0, %v987
        %v989 = vpop.f32.mrb[0].mxu0
        %v990 = vpop.f32.mrb[0].mxu0
        %v991 = vadd.f32 0.0, %v990
        %v992 = vpop.f32.mrb[0].mxu0
        %993 = vmatprep.mubr.bf16.mxu0 0
        %994 = vmatmul.mubr.bf16.gmra.mrb[0].mxu0 %v892
        %v995 = vpop.f32.mrb[0].mxu0
        %v996 = vadd.f32 0.0, %v995
        %v997 = vpop.f32.mrb[0].mxu0
        %v998 = vpop.f32.mrb[0].mxu0
        %v999 = vadd.f32 0.0, %v998
        %v1000 = vpop.f32.mrb[0].mxu0
        %1001 = vmatprep.mubr.bf16.mxu0 0
        %1002 = vmatmul.mubr.bf16.gmra.mrb[0].mxu0 %v895
        %v1003 = vpop.f32.mrb[0].mxu0
        %v1004 = vadd.f32 0.0, %v1003
        %v1005 = vpop.f32.mrb[0].mxu0
        %v1006 = vpop.f32.mrb[0].mxu0
        %v1007 = vadd.f32 0.0, %v1006
        %v1008 = vpop.f32.mrb[0].mxu0
        %1009 = vmatprep.mubr.bf16.mxu0 0
        %1010 = vmatmul.mubr.bf16.gmra.mrb[0].mxu0 %v898
        %v1011 = vpop.f32.mrb[0].mxu0
        %v1012 = vadd.f32 0.0, %v1011
        %v1013 = vpop.f32.mrb[0].mxu0
        %v1014 = vpop.f32.mrb[0].mxu0
        %v1015 = vadd.f32 0.0, %v1014
        %v1016 = vpop.f32.mrb[0].mxu0
        %1017 = vmatprep.mubr.bf16.mxu0 0
        %1018 = vmatmul.mubr.bf16.gmra.mrb[0].mxu0 %v901
        %v1019 = vpop.f32.mrb[0].mxu0
        %v1020 = vadd.f32 0.0, %v1019
        %v1021 = vpop.f32.mrb[0].mxu0
        %v1022 = vpop.f32.mrb[0].mxu0
        %v1023 = vadd.f32 0.0, %v1022
        %v1024 = vpop.f32.mrb[0].mxu0
        %1025 = vmatprep.mubr.bf16.mxu0 0
        %1026 = vmatmul.mubr.bf16.gmra.mrb[0].mxu0 %v904
        %v1027 = vpop.f32.mrb[0].mxu0
        %v1028 = vadd.f32 0.0, %v1027
        %v1029 = vpop.f32.mrb[0].mxu0
        %v1030 = vpop.f32.mrb[0].mxu0
        %v1031 = vadd.f32 0.0, %v1030
        %v1032 = vpop.f32.mrb[0].mxu0
        %1033 = vmatprep.mubr.bf16.mxu0 0
        %1034 = vmatmul.mubr.bf16.gmra.mrb[0].mxu0 %v907
        %v1035 = vpop.f32.mrb[0].mxu0
        %v1036 = vadd.f32 0.0, %v1035
        %v1037 = vpop.f32.mrb[0].mxu0
        %v1038 = vpop.f32.mrb[0].mxu0
        %v1039 = vadd.f32 0.0, %v1038
        %v1040 = vpop.f32.mrb[0].mxu0
        %1041 = vmatprep.mubr.bf16.mxu0 0
        %1042 = vmatmul.mubr.bf16.gmra.mrb[0].mxu0 %v910
        %v1043 = vpop.f32.mrb[0].mxu0
        %v1044 = vadd.f32 0.0, %v1043
        %v1045 = vpop.f32.mrb[0].mxu0
        %v1046 = vpop.f32.mrb[0].mxu0
        %v1047 = vadd.f32 0.0, %v1046
        %v1048 = vpop.f32.mrb[0].mxu0
        %1049 = vmatprep.mubr.bf16.mxu0 0
        %1050 = vmatmul.mubr.bf16.gmra.mrb[0].mxu0 %v913
        %v1051 = vpop.f32.mrb[0].mxu0
        %v1052 = vadd.f32 0.0, %v1051
        %v1053 = vpop.f32.mrb[0].mxu0
        %v1054 = vpop.f32.mrb[0].mxu0
        %v1055 = vadd.f32 0.0, %v1054
        %v1056 = vpop.f32.mrb[0].mxu0
        %1057 = vmatprep.mubr.bf16.mxu0 0
        %1058 = vmatmul.mubr.bf16.gmra.mrb[0].mxu0 %v916
        %v1059 = vpop.f32.mrb[0].mxu0
        %v1060 = vadd.f32 0.0, %v1059
        %v1061 = vpop.f32.mrb[0].mxu0
        %v1062 = vpop.f32.mrb[0].mxu0
        %v1063 = vadd.f32 0.0, %v1062
        %v1064 = vpop.f32.mrb[0].mxu0
        %1065 = vmatprep.mubr.bf16.mxu0 0
        %1066 = vmatmul.mubr.bf16.gmra.mrb[0].mxu0 %v919
        %v1067 = vpop.f32.mrb[0].mxu0
        %v1068 = vadd.f32 0.0, %v1067
        %v1069 = vpop.f32.mrb[0].mxu0
        %v1070 = vpop.f32.mrb[0].mxu0
        %v1071 = vadd.f32 0.0, %v1070
        %v1072 = vpop.f32.mrb[0].mxu0
        %1073 = vmatprep.mubr.bf16.mxu0 0
        %1074 = vmatmul.mubr.bf16.gmra.mrb[0].mxu0 %v922
        %v1075 = vpop.f32.mrb[0].mxu0
        %v1076 = vadd.f32 0.0, %v1075
        %v1077 = vpop.f32.mrb[0].mxu0
        %v1078 = vpop.f32.mrb[0].mxu0
        %v1079 = vadd.f32 0.0, %v1078
        %v1080 = vpop.f32.mrb[0].mxu0
        %1081 = vmatprep.mubr.bf16.mxu0 0
        %1082 = vmatmul.mubr.bf16.gmra.mrb[0].mxu0 %v925
        %v1083 = vpop.f32.mrb[0].mxu0
        %v1084 = vadd.f32 0.0, %v1083
        %v1085 = vpop.f32.mrb[0].mxu0
        %v1086 = vpop.f32.mrb[0].mxu0
        %v1087 = vadd.f32 0.0, %v1086
        %v1088 = vpop.f32.mrb[0].mxu0
        %1089 = vmatprep.mubr.bf16.mxu0 0
        %1090 = vmatmul.mubr.bf16.gmra.mrb[0].mxu0 %v928
        %v1091 = vpop.f32.mrb[0].mxu0
        %v1092 = vadd.f32 0.0, %v1091
        %v1093 = vpop.f32.mrb[0].mxu0
        %v1094 = vpop.f32.mrb[0].mxu0
        %v1095 = vadd.f32 0.0, %v1094
        %v1096 = vpop.f32.mrb[0].mxu0
        %1097 = vdwg.mxu0
        %v1130 = vunpack.c.l.b16 %v385
        %v1131 = vunpack.c.l.b16 %v386
        %v1132 = vunpack.c.l.b16 %v387
        %v1133 = vunpack.c.l.b16 %v388
        %v1134 = vunpack.c.l.b16 %v389
        %v1135 = vunpack.c.l.b16 %v390
        %v1136 = vunpack.c.l.b16 %v391
        %v1137 = vunpack.c.l.b16 %v392
        %v1138 = vunpack.c.l.b16 %v393
        %v1139 = vunpack.c.l.b16 %v394
        %v1140 = vunpack.c.l.b16 %v395
        %v1141 = vunpack.c.l.b16 %v396
        %v1142 = vunpack.c.l.b16 %v397
        %v1143 = vunpack.c.l.b16 %v398
        %v1144 = vunpack.c.l.b16 %v399
        %v1145 = vunpack.c.l.b16 %v400
        %v1146 = vunpack.c.l.b16 %v401
        %v1147 = vunpack.c.l.b16 %v402
        %v1148 = vunpack.c.l.b16 %v403
        %v1149 = vunpack.c.l.b16 %v404
        %v1150 = vunpack.c.l.b16 %v405
        %v1151 = vunpack.c.l.b16 %v406
        %v1152 = vunpack.c.l.b16 %v407
        %v1153 = vunpack.c.l.b16 %v408
        %v1154 = vunpack.c.l.b16 %v409
        %v1155 = vunpack.c.l.b16 %v410
        %v1156 = vunpack.c.l.b16 %v411
        %v1157 = vunpack.c.l.b16 %v412
        %v1158 = vunpack.c.l.b16 %v413
        %v1159 = vunpack.c.l.b16 %v414
        %v1160 = vunpack.c.l.b16 %v415
        %v1161 = vunpack.c.l.b16 %v416
        %v1162 = vpack.c.b16 %v1131, %v1130
        %v1163 = vpack.c.b16 %v1133, %v1132
        %v1164 = vpack.c.b16 %v1135, %v1134
        %v1165 = vpack.c.b16 %v1137, %v1136
        %v1166 = vpack.c.b16 %v1139, %v1138
        %v1167 = vpack.c.b16 %v1141, %v1140
        %v1168 = vpack.c.b16 %v1143, %v1142
        %v1169 = vpack.c.b16 %v1145, %v1144
        %v1170 = vpack.c.b16 %v1147, %v1146
        %v1171 = vpack.c.b16 %v1149, %v1148
        %v1172 = vpack.c.b16 %v1151, %v1150
        %v1173 = vpack.c.b16 %v1153, %v1152
        %v1174 = vpack.c.b16 %v1155, %v1154
        %v1175 = vpack.c.b16 %v1157, %v1156
        %v1176 = vpack.c.b16 %v1159, %v1158
        %v1177 = vpack.c.b16 %v1161, %v1160
        %v1179 = vsel %vm881, %v1162, 0
        %v1182 = vsel %vm881, %v1163, 0
        %v1185 = vsel %vm881, %v1164, 0
        %v1188 = vsel %vm881, %v1165, 0
        %v1191 = vsel %vm881, %v1166, 0
        %v1194 = vsel %vm881, %v1167, 0
        %v1197 = vsel %vm881, %v1168, 0
        %v1200 = vsel %vm881, %v1169, 0
        %v1203 = vsel %vm881, %v1170, 0
        %v1206 = vsel %vm881, %v1171, 0
        %v1209 = vsel %vm881, %v1172, 0
        %v1212 = vsel %vm881, %v1173, 0
        %v1215 = vsel %vm881, %v1174, 0
        %v1218 = vsel %vm881, %v1175, 0
        %v1221 = vsel %vm881, %v1176, 0
        %v1224 = vsel %vm881, %v1177, 0
        %v1227 = vand.u32 %v417, %v933
        %1229 = vmatprep.subr.bf16.mxu0 0
        %1230 = vmatpush1.bf16.msra.mxu0 %v1227
        %1231 = vmatprep.subr.bf16.mxu0 0
        %1232 = vmatpush1.bf16.msra.mxu0 0
        %1233 = vmatprep.subr.bf16.mxu0 0
        %1234 = vmatpush1.bf16.msra.mxu0 0
        %1235 = vmatprep.subr.bf16.mxu0 0
        %1236 = vmatpush1.bf16.msra.mxu0 0
        %1237 = vmatprep.subr.bf16.mxu0 0
        %1238 = vmatpush1.bf16.msra.mxu0 0
        %1239 = vmatprep.subr.bf16.mxu0 0
        %1240 = vmatpush1.bf16.msra.mxu0 0
        %1241 = vmatprep.subr.bf16.mxu0 0
        %1242 = vmatpush1.bf16.msra.mxu0 0
        %1243 = vmatprep.subr.bf16.mxu0 0
        %1244 = vmatpush1.bf16.msra.mxu0 0
        %1245 = vmatprep.subr.bf16.mxu0 0
        %1246 = vmatpush1.bf16.msra.mxu0 0
        %1247 = vmatprep.subr.bf16.mxu0 0
        %1248 = vmatpush1.bf16.msra.mxu0 0
        %1249 = vmatprep.subr.bf16.mxu0 0
        %1250 = vmatpush1.bf16.msra.mxu0 0
        %1251 = vmatprep.subr.bf16.mxu0 0
        %1252 = vmatpush1.bf16.msra.mxu0 0
        %1253 = vmatprep.subr.bf16.mxu0 0
        %1254 = vmatpush1.bf16.msra.mxu0 0
        %1255 = vmatprep.subr.bf16.mxu0 0
        %1256 = vmatpush1.bf16.msra.mxu0 0
        %1257 = vmatprep.subr.bf16.mxu0 0
        %1258 = vmatpush1.bf16.msra.mxu0 0
        %1259 = vmatprep.subr.bf16.mxu0 0
        %1260 = vmatpush1.bf16.msra.mxu0 0
        %1261 = vmatprep.mubr.bf16.mxu0 0
        %1262 = vmatmul.mubr.bf16.gmra.mrb[0].mxu0 %v1179
        %v1263 = vpop.f32.mrb[0].mxu0
        %v1264 = vadd.f32 %v972, %v1263
        %v1265 = vpop.f32.mrb[0].mxu0
        %v1266 = vpop.f32.mrb[0].mxu0
        %v1267 = vadd.f32 %v975, %v1266
        %v1268 = vpop.f32.mrb[0].mxu0
        %1269 = vmatprep.mubr.bf16.mxu0 0
        %1270 = vmatmul.mubr.bf16.gmra.mrb[0].mxu0 %v1182
        %v1271 = vpop.f32.mrb[0].mxu0
        %v1272 = vadd.f32 %v980, %v1271
        %v1273 = vpop.f32.mrb[0].mxu0
        %v1274 = vpop.f32.mrb[0].mxu0
        %v1275 = vadd.f32 %v983, %v1274
        %v1276 = vpop.f32.mrb[0].mxu0
        %1277 = vmatprep.mubr.bf16.mxu0 0
        %1278 = vmatmul.mubr.bf16.gmra.mrb[0].mxu0 %v1185
        %v1279 = vpop.f32.mrb[0].mxu0
        %v1280 = vadd.f32 %v988, %v1279
        %v1281 = vpop.f32.mrb[0].mxu0
        %v1282 = vpop.f32.mrb[0].mxu0
        %v1283 = vadd.f32 %v991, %v1282
        %v1284 = vpop.f32.mrb[0].mxu0
        %1285 = vmatprep.mubr.bf16.mxu0 0
        %1286 = vmatmul.mubr.bf16.gmra.mrb[0].mxu0 %v1188
        %v1287 = vpop.f32.mrb[0].mxu0
        %v1288 = vadd.f32 %v996, %v1287
        %v1289 = vpop.f32.mrb[0].mxu0
        %v1290 = vpop.f32.mrb[0].mxu0
        %v1291 = vadd.f32 %v999, %v1290
        %v1292 = vpop.f32.mrb[0].mxu0
        %1293 = vmatprep.mubr.bf16.mxu0 0
        %1294 = vmatmul.mubr.bf16.gmra.mrb[0].mxu0 %v1191
        %v1295 = vpop.f32.mrb[0].mxu0
        %v1296 = vadd.f32 %v1004, %v1295
        %v1297 = vpop.f32.mrb[0].mxu0
        %v1298 = vpop.f32.mrb[0].mxu0
        %v1299 = vadd.f32 %v1007, %v1298
        %v1300 = vpop.f32.mrb[0].mxu0
        %1301 = vmatprep.mubr.bf16.mxu0 0
        %1302 = vmatmul.mubr.bf16.gmra.mrb[0].mxu0 %v1194
        %v1303 = vpop.f32.mrb[0].mxu0
        %v1304 = vadd.f32 %v1012, %v1303
        %v1305 = vpop.f32.mrb[0].mxu0
        %v1306 = vpop.f32.mrb[0].mxu0
        %v1307 = vadd.f32 %v1015, %v1306
        %v1308 = vpop.f32.mrb[0].mxu0
        %1309 = vmatprep.mubr.bf16.mxu0 0
        %1310 = vmatmul.mubr.bf16.gmra.mrb[0].mxu0 %v1197
        %v1311 = vpop.f32.mrb[0].mxu0
        %v1312 = vadd.f32 %v1020, %v1311
        %v1313 = vpop.f32.mrb[0].mxu0
        %v1314 = vpop.f32.mrb[0].mxu0
        %v1315 = vadd.f32 %v1023, %v1314
        %v1316 = vpop.f32.mrb[0].mxu0
        %1317 = vmatprep.mubr.bf16.mxu0 0
        %1318 = vmatmul.mubr.bf16.gmra.mrb[0].mxu0 %v1200
        %v1319 = vpop.f32.mrb[0].mxu0
        %v1320 = vadd.f32 %v1028, %v1319
        %v1321 = vpop.f32.mrb[0].mxu0
        %v1322 = vpop.f32.mrb[0].mxu0
        %v1323 = vadd.f32 %v1031, %v1322
        %v1324 = vpop.f32.mrb[0].mxu0
        %1325 = vmatprep.mubr.bf16.mxu0 0
        %1326 = vmatmul.mubr.bf16.gmra.mrb[0].mxu0 %v1203
        %v1327 = vpop.f32.mrb[0].mxu0
        %v1328 = vadd.f32 %v1036, %v1327
        %v1329 = vpop.f32.mrb[0].mxu0
        %v1330 = vpop.f32.mrb[0].mxu0
        %v1331 = vadd.f32 %v1039, %v1330
        %v1332 = vpop.f32.mrb[0].mxu0
        %1333 = vmatprep.mubr.bf16.mxu0 0
        %1334 = vmatmul.mubr.bf16.gmra.mrb[0].mxu0 %v1206
        %v1335 = vpop.f32.mrb[0].mxu0
        %v1336 = vadd.f32 %v1044, %v1335
        %v1337 = vpop.f32.mrb[0].mxu0
        %v1338 = vpop.f32.mrb[0].mxu0
        %v1339 = vadd.f32 %v1047, %v1338
        %v1340 = vpop.f32.mrb[0].mxu0
        %1341 = vmatprep.mubr.bf16.mxu0 0
        %1342 = vmatmul.mubr.bf16.gmra.mrb[0].mxu0 %v1209
        %v1343 = vpop.f32.mrb[0].mxu0
        %v1344 = vadd.f32 %v1052, %v1343
        %v1345 = vpop.f32.mrb[0].mxu0
        %v1346 = vpop.f32.mrb[0].mxu0
        %v1347 = vadd.f32 %v1055, %v1346
        %v1348 = vpop.f32.mrb[0].mxu0
        %1349 = vmatprep.mubr.bf16.mxu0 0
        %1350 = vmatmul.mubr.bf16.gmra.mrb[0].mxu0 %v1212
        %v1351 = vpop.f32.mrb[0].mxu0
        %v1352 = vadd.f32 %v1060, %v1351
        %v1353 = vpop.f32.mrb[0].mxu0
        %v1354 = vpop.f32.mrb[0].mxu0
        %v1355 = vadd.f32 %v1063, %v1354
        %v1356 = vpop.f32.mrb[0].mxu0
        %1357 = vmatprep.mubr.bf16.mxu0 0
        %1358 = vmatmul.mubr.bf16.gmra.mrb[0].mxu0 %v1215
        %v1359 = vpop.f32.mrb[0].mxu0
        %v1360 = vadd.f32 %v1068, %v1359
        %v1361 = vpop.f32.mrb[0].mxu0
        %v1362 = vpop.f32.mrb[0].mxu0
        %v1363 = vadd.f32 %v1071, %v1362
        %v1364 = vpop.f32.mrb[0].mxu0
        %1365 = vmatprep.mubr.bf16.mxu0 0
        %1366 = vmatmul.mubr.bf16.gmra.mrb[0].mxu0 %v1218
        %v1367 = vpop.f32.mrb[0].mxu0
        %v1368 = vadd.f32 %v1076, %v1367
        %v1369 = vpop.f32.mrb[0].mxu0
        %v1370 = vpop.f32.mrb[0].mxu0
        %v1371 = vadd.f32 %v1079, %v1370
        %v1372 = vpop.f32.mrb[0].mxu0
        %1373 = vmatprep.mubr.bf16.mxu0 0
        %1374 = vmatmul.mubr.bf16.gmra.mrb[0].mxu0 %v1221
        %v1375 = vpop.f32.mrb[0].mxu0
        %v1376 = vadd.f32 %v1084, %v1375
        %v1377 = vpop.f32.mrb[0].mxu0
        %v1378 = vpop.f32.mrb[0].mxu0
        %v1379 = vadd.f32 %v1087, %v1378
        %v1380 = vpop.f32.mrb[0].mxu0
        %1381 = vmatprep.mubr.bf16.mxu0 0
        %1382 = vmatmul.mubr.bf16.gmra.mrb[0].mxu0 %v1224
        %v1383 = vpop.f32.mrb[0].mxu0
        %v1384 = vadd.f32 %v1092, %v1383
        %v1385 = vpop.f32.mrb[0].mxu0
        %v1386 = vpop.f32.mrb[0].mxu0
        %v1387 = vadd.f32 %v1095, %v1386
        %v1388 = vpop.f32.mrb[0].mxu0
        %1389 = vdwg.mxu0
        %v1390 = vld [vmem:[%s383] sm:$0xe]
        %v1391 = vld [vmem:[%s383 + $0xc] sm:$0xe]
        %v1392 = vld [vmem:[%s383 + $0x18] sm:$0xe]
        %v1393 = vld [vmem:[%s383 + $0x24] sm:$0xe]
        %v1394 = vld [vmem:[%s383 + $0x30] sm:$0xe]
        %v1395 = vld [vmem:[%s383 + $0x3c] sm:$0xe]
        %v1396 = vld [vmem:[%s383 + $0x48] sm:$0xe]
        %v1397 = vld [vmem:[%s383 + $0x54] sm:$0xe]
        %v1398 = vld [vmem:[%s383 + $0x60] sm:$0xe]
        %v1399 = vld [vmem:[%s383 + $0x6c] sm:$0xe]
        %v1400 = vld [vmem:[%s383 + $0x78] sm:$0xe]
        %v1401 = vld [vmem:[%s383 + $0x84] sm:$0xe]
        %v1402 = vld [vmem:[%s383 + $0x90] sm:$0xe]
        %v1403 = vld [vmem:[%s383 + $0x9c] sm:$0xe]
        %v1404 = vld [vmem:[%s383 + $0xa8] sm:$0xe]
        %v1405 = vld [vmem:[%s383 + $0xb4] sm:$0xe]
        %vm1438 = vcmask 1042432
        %vm1439 = vcmask 1046532
        %vm1440 = vmor %vm1438, %vm1439
        %v1441 = vrot.slane %v1390, 5
        %v1442 = vrot.slane %v1441, 4
        %v1443 = vrot.slane %v386, 5
        %v1444 = vsel %vm1440, %v1442, %v1443
        %v1445 = vrot.slane %v1443, 4
        %v1446 = vrot.slane %v418, 5
        %v1447 = vsel %vm1440, %v1445, %v1446
        %v1448 = vrot.slane %v1391, 5
        %v1449 = vrot.slane %v1448, 4
        %v1450 = vrot.slane %v388, 5
        %v1451 = vsel %vm1440, %v1449, %v1450
        %v1452 = vrot.slane %v1450, 4
        %v1453 = vrot.slane %v419, 5
        %v1454 = vsel %vm1440, %v1452, %v1453
        %v1455 = vrot.slane %v1392, 5
        %v1456 = vrot.slane %v1455, 4
        %v1457 = vrot.slane %v390, 5
        %v1458 = vsel %vm1440, %v1456, %v1457
        %v1459 = vrot.slane %v1457, 4
        %v1460 = vrot.slane %v420, 5
        %v1461 = vsel %vm1440, %v1459, %v1460
        %v1462 = vrot.slane %v1393, 5
        %v1463 = vrot.slane %v1462, 4
        %v1464 = vrot.slane %v392, 5
        %v1465 = vsel %vm1440, %v1463, %v1464
        %v1466 = vrot.slane %v1464, 4
        %v1467 = vrot.slane %v421, 5
        %v1468 = vsel %vm1440, %v1466, %v1467
        %v1469 = vrot.slane %v1394, 5
        %v1470 = vrot.slane %v1469, 4
        %v1471 = vrot.slane %v394, 5
        %v1472 = vsel %vm1440, %v1470, %v1471
        %v1473 = vrot.slane %v1471, 4
        %v1474 = vrot.slane %v422, 5
        %v1475 = vsel %vm1440, %v1473, %v1474
        %v1476 = vrot.slane %v1395, 5
        %v1477 = vrot.slane %v1476, 4
        %v1478 = vrot.slane %v396, 5
        %v1479 = vsel %vm1440, %v1477, %v1478
        %v1480 = vrot.slane %v1478, 4
        %v1481 = vrot.slane %v423, 5
        %v1482 = vsel %vm1440, %v1480, %v1481
        %v1483 = vrot.slane %v1396, 5
        %v1484 = vrot.slane %v1483, 4
        %v1485 = vrot.slane %v398, 5
        %v1486 = vsel %vm1440, %v1484, %v1485
        %v1487 = vrot.slane %v1485, 4
        %v1488 = vrot.slane %v424, 5
        %v1489 = vsel %vm1440, %v1487, %v1488
        %v1490 = vrot.slane %v1397, 5
        %v1491 = vrot.slane %v1490, 4
        %v1492 = vrot.slane %v400, 5
        %v1493 = vsel %vm1440, %v1491, %v1492
        %v1494 = vrot.slane %v1492, 4
        %v1495 = vrot.slane %v425, 5
        %v1496 = vsel %vm1440, %v1494, %v1495
        %v1497 = vrot.slane %v1398, 5
        %v1498 = vrot.slane %v1497, 4
        %v1499 = vrot.slane %v402, 5
        %v1500 = vsel %vm1440, %v1498, %v1499
        %v1501 = vrot.slane %v1499, 4
        %v1502 = vrot.slane %v426, 5
        %v1503 = vsel %vm1440, %v1501, %v1502
        %v1504 = vrot.slane %v1399, 5
        %v1505 = vrot.slane %v1504, 4
        %v1506 = vrot.slane %v404, 5
        %v1507 = vsel %vm1440, %v1505, %v1506
        %v1508 = vrot.slane %v1506, 4
        %v1509 = vrot.slane %v427, 5
        %v1510 = vsel %vm1440, %v1508, %v1509
        %v1511 = vrot.slane %v1400, 5
        %v1512 = vrot.slane %v1511, 4
        %v1513 = vrot.slane %v406, 5
        %v1514 = vsel %vm1440, %v1512, %v1513
        %v1515 = vrot.slane %v1513, 4
        %v1516 = vrot.slane %v428, 5
        %v1517 = vsel %vm1440, %v1515, %v1516
        %v1518 = vrot.slane %v1401, 5
        %v1519 = vrot.slane %v1518, 4
        %v1520 = vrot.slane %v408, 5
        %v1521 = vsel %vm1440, %v1519, %v1520
        %v1522 = vrot.slane %v1520, 4
        %v1523 = vrot.slane %v429, 5
        %v1524 = vsel %vm1440, %v1522, %v1523
        %v1525 = vrot.slane %v1402, 5
        %v1526 = vrot.slane %v1525, 4
        %v1527 = vrot.slane %v410, 5
        %v1528 = vsel %vm1440, %v1526, %v1527
        %v1529 = vrot.slane %v1527, 4
        %v1530 = vrot.slane %v430, 5
        %v1531 = vsel %vm1440, %v1529, %v1530
        %v1532 = vrot.slane %v1403, 5
        %v1533 = vrot.slane %v1532, 4
        %v1534 = vrot.slane %v412, 5
        %v1535 = vsel %vm1440, %v1533, %v1534
        %v1536 = vrot.slane %v1534, 4
        %v1537 = vrot.slane %v431, 5
        %v1538 = vsel %vm1440, %v1536, %v1537
        %v1539 = vrot.slane %v1404, 5
        %v1540 = vrot.slane %v1539, 4
        %v1541 = vrot.slane %v414, 5
        %v1542 = vsel %vm1440, %v1540, %v1541
        %v1543 = vrot.slane %v1541, 4
        %v1544 = vrot.slane %v432, 5
        %v1545 = vsel %vm1440, %v1543, %v1544
        %v1546 = vrot.slane %v1405, 5
        %v1547 = vrot.slane %v1546, 4
        %v1548 = vrot.slane %v416, 5
        %v1549 = vsel %vm1440, %v1547, %v1548
        %v1550 = vrot.slane %v1548, 4
        %v1551 = vrot.slane %v433, 5
        %v1552 = vsel %vm1440, %v1550, %v1551
        %v1553 = vld [vmem:[%s1] sm:$0x8]
        %v1554 = vld [vmem:[%s1 + $0x4] sm:$0x1]
        %v1555 = vunpack.c.l.b16 %v1444
        %v1556 = vunpack.c.l.b16 %v1447
        %v1557 = vunpack.c.l.b16 %v1451
        %v1558 = vunpack.c.l.b16 %v1454
        %v1559 = vunpack.c.l.b16 %v1458
        %v1560 = vunpack.c.l.b16 %v1461
        %v1561 = vunpack.c.l.b16 %v1465
        %v1562 = vunpack.c.l.b16 %v1468
        %v1563 = vunpack.c.l.b16 %v1472
        %v1564 = vunpack.c.l.b16 %v1475
        %v1565 = vunpack.c.l.b16 %v1479
        %v1566 = vunpack.c.l.b16 %v1482
        %v1567 = vunpack.c.l.b16 %v1486
        %v1568 = vunpack.c.l.b16 %v1489
        %v1569 = vunpack.c.l.b16 %v1493
        %v1570 = vunpack.c.l.b16 %v1496
        %v1571 = vunpack.c.l.b16 %v1500
        %v1572 = vunpack.c.l.b16 %v1503
        %v1573 = vunpack.c.l.b16 %v1507
        %v1574 = vunpack.c.l.b16 %v1510
        %v1575 = vunpack.c.l.b16 %v1514
        %v1576 = vunpack.c.l.b16 %v1517
        %v1577 = vunpack.c.l.b16 %v1521
        %v1578 = vunpack.c.l.b16 %v1524
        %v1579 = vunpack.c.l.b16 %v1528
        %v1580 = vunpack.c.l.b16 %v1531
        %v1581 = vunpack.c.l.b16 %v1535
        %v1582 = vunpack.c.l.b16 %v1538
        %v1583 = vunpack.c.l.b16 %v1542
        %v1584 = vunpack.c.l.b16 %v1545
        %v1585 = vunpack.c.l.b16 %v1549
        %v1586 = vunpack.c.l.b16 %v1552
        %v1587 = vpack.c.b16 %v1556, %v1555
        %v1588 = vpack.c.b16 %v1558, %v1557
        %v1589 = vpack.c.b16 %v1560, %v1559
        %v1590 = vpack.c.b16 %v1562, %v1561
        %v1591 = vpack.c.b16 %v1564, %v1563
        %v1592 = vpack.c.b16 %v1566, %v1565
        %v1593 = vpack.c.b16 %v1568, %v1567
        %v1594 = vpack.c.b16 %v1570, %v1569
        %v1595 = vpack.c.b16 %v1572, %v1571
        %v1596 = vpack.c.b16 %v1574, %v1573
        %v1597 = vpack.c.b16 %v1576, %v1575
        %v1598 = vpack.c.b16 %v1578, %v1577
        %v1599 = vpack.c.b16 %v1580, %v1579
        %v1600 = vpack.c.b16 %v1582, %v1581
        %v1601 = vpack.c.b16 %v1584, %v1583
        %v1602 = vpack.c.b16 %v1586, %v1585
        %v1605 = vunpack.c.l.b16 %v1553
        %v1606 = vunpack.c.l.b16 %v1554
        %v1607 = vpack.c.b16 %v1606, %v1605
        %v1608 = vrot.slane %v1607, 3
        %v1610 = vsel %vm881, %v1587, 0
        %v1613 = vsel %vm881, %v1588, 0
        %v1616 = vsel %vm881, %v1589, 0
        %v1619 = vsel %vm881, %v1590, 0
        %v1622 = vsel %vm881, %v1591, 0
        %v1625 = vsel %vm881, %v1592, 0
        %v1628 = vsel %vm881, %v1593, 0
        %v1631 = vsel %vm881, %v1594, 0
        %v1634 = vsel %vm881, %v1595, 0
        %v1637 = vsel %vm881, %v1596, 0
        %v1640 = vsel %vm881, %v1597, 0
        %v1643 = vsel %vm881, %v1598, 0
        %v1646 = vsel %vm881, %v1599, 0
        %v1649 = vsel %vm881, %v1600, 0
        %v1652 = vsel %vm881, %v1601, 0
        %v1655 = vsel %vm881, %v1602, 0
        %v1658 = vand.u32 %v1608, %v933
        %1660 = vmatprep.subr.bf16.mxu0 0
        %1661 = vmatpush1.bf16.msra.mxu0 %v1658
        %1662 = vmatprep.subr.bf16.mxu0 0
        %1663 = vmatpush1.bf16.msra.mxu0 0
        %1664 = vmatprep.subr.bf16.mxu0 0
        %1665 = vmatpush1.bf16.msra.mxu0 0
        %1666 = vmatprep.subr.bf16.mxu0 0
        %1667 = vmatpush1.bf16.msra.mxu0 0
        %1668 = vmatprep.subr.bf16.mxu0 0
        %1669 = vmatpush1.bf16.msra.mxu0 0
        %1670 = vmatprep.subr.bf16.mxu0 0
        %1671 = vmatpush1.bf16.msra.mxu0 0
        %1672 = vmatprep.subr.bf16.mxu0 0
        %1673 = vmatpush1.bf16.msra.mxu0 0
        %1674 = vmatprep.subr.bf16.mxu0 0
        %1675 = vmatpush1.bf16.msra.mxu0 0
        %1676 = vmatprep.subr.bf16.mxu0 0
        %1677 = vmatpush1.bf16.msra.mxu0 0
        %1678 = vmatprep.subr.bf16.mxu0 0
        %1679 = vmatpush1.bf16.msra.mxu0 0
        %1680 = vmatprep.subr.bf16.mxu0 0
        %1681 = vmatpush1.bf16.msra.mxu0 0
        %1682 = vmatprep.subr.bf16.mxu0 0
        %1683 = vmatpush1.bf16.msra.mxu0 0
        %1684 = vmatprep.subr.bf16.mxu0 0
        %1685 = vmatpush1.bf16.msra.mxu0 0
        %1686 = vmatprep.subr.bf16.mxu0 0
        %1687 = vmatpush1.bf16.msra.mxu0 0
        %1688 = vmatprep.subr.bf16.mxu0 0
        %1689 = vmatpush1.bf16.msra.mxu0 0
        %1690 = vmatprep.subr.bf16.mxu0 0
        %1691 = vmatpush1.bf16.msra.mxu0 0
        %1692 = vmatprep.mubr.bf16.mxu0 0
        %1693 = vmatmul.mubr.bf16.gmra.mrb[0].mxu0 %v1610
        %v1694 = vpop.f32.mrb[0].mxu0
        %v1695 = vadd.f32 0.0, %v1694
        %v1696 = vpop.f32.mrb[0].mxu0
        %v1697 = vpop.f32.mrb[0].mxu0
        %v1698 = vadd.f32 0.0, %v1697
        %v1699 = vpop.f32.mrb[0].mxu0
        %1700 = vmatprep.mubr.bf16.mxu0 0
        %1701 = vmatmul.mubr.bf16.gmra.mrb[0].mxu0 %v1613
        %v1702 = vpop.f32.mrb[0].mxu0
        %v1703 = vadd.f32 0.0, %v1702
        %v1704 = vpop.f32.mrb[0].mxu0
        %v1705 = vpop.f32.mrb[0].mxu0
        %v1706 = vadd.f32 0.0, %v1705
        %v1707 = vpop.f32.mrb[0].mxu0
        %1708 = vmatprep.mubr.bf16.mxu0 0
        %1709 = vmatmul.mubr.bf16.gmra.mrb[0].mxu0 %v1616
        %v1710 = vpop.f32.mrb[0].mxu0
        %v1711 = vadd.f32 0.0, %v1710
        %v1712 = vpop.f32.mrb[0].mxu0
        %v1713 = vpop.f32.mrb[0].mxu0
        %v1714 = vadd.f32 0.0, %v1713
        %v1715 = vpop.f32.mrb[0].mxu0
        %1716 = vmatprep.mubr.bf16.mxu0 0
        %1717 = vmatmul.mubr.bf16.gmra.mrb[0].mxu0 %v1619
        %v1718 = vpop.f32.mrb[0].mxu0
        %v1719 = vadd.f32 0.0, %v1718
        %v1720 = vpop.f32.mrb[0].mxu0
        %v1721 = vpop.f32.mrb[0].mxu0
        %v1722 = vadd.f32 0.0, %v1721
        %v1723 = vpop.f32.mrb[0].mxu0
        %1724 = vmatprep.mubr.bf16.mxu0 0
        %1725 = vmatmul.mubr.bf16.gmra.mrb[0].mxu0 %v1622
        %v1726 = vpop.f32.mrb[0].mxu0
        %v1727 = vadd.f32 0.0, %v1726
        %v1728 = vpop.f32.mrb[0].mxu0
        %v1729 = vpop.f32.mrb[0].mxu0
        %v1730 = vadd.f32 0.0, %v1729
        %v1731 = vpop.f32.mrb[0].mxu0
        %1732 = vmatprep.mubr.bf16.mxu0 0
        %1733 = vmatmul.mubr.bf16.gmra.mrb[0].mxu0 %v1625
        %v1734 = vpop.f32.mrb[0].mxu0
        %v1735 = vadd.f32 0.0, %v1734
        %v1736 = vpop.f32.mrb[0].mxu0
        %v1737 = vpop.f32.mrb[0].mxu0
        %v1738 = vadd.f32 0.0, %v1737
        %v1739 = vpop.f32.mrb[0].mxu0
        %1740 = vmatprep.mubr.bf16.mxu0 0
        %1741 = vmatmul.mubr.bf16.gmra.mrb[0].mxu0 %v1628
        %v1742 = vpop.f32.mrb[0].mxu0
        %v1743 = vadd.f32 0.0, %v1742
        %v1744 = vpop.f32.mrb[0].mxu0
        %v1745 = vpop.f32.mrb[0].mxu0
        %v1746 = vadd.f32 0.0, %v1745
        %v1747 = vpop.f32.mrb[0].mxu0
        %1748 = vmatprep.mubr.bf16.mxu0 0
        %1749 = vmatmul.mubr.bf16.gmra.mrb[0].mxu0 %v1631
        %v1750 = vpop.f32.mrb[0].mxu0
        %v1751 = vadd.f32 0.0, %v1750
        %v1752 = vpop.f32.mrb[0].mxu0
        %v1753 = vpop.f32.mrb[0].mxu0
        %v1754 = vadd.f32 0.0, %v1753
        %v1755 = vpop.f32.mrb[0].mxu0
        %1756 = vmatprep.mubr.bf16.mxu0 0
        %1757 = vmatmul.mubr.bf16.gmra.mrb[0].mxu0 %v1634
        %v1758 = vpop.f32.mrb[0].mxu0
        %v1759 = vadd.f32 0.0, %v1758
        %v1760 = vpop.f32.mrb[0].mxu0
        %v1761 = vpop.f32.mrb[0].mxu0
        %v1762 = vadd.f32 0.0, %v1761
        %v1763 = vpop.f32.mrb[0].mxu0
        %1764 = vmatprep.mubr.bf16.mxu0 0
        %1765 = vmatmul.mubr.bf16.gmra.mrb[0].mxu0 %v1637
        %v1766 = vpop.f32.mrb[0].mxu0
        %v1767 = vadd.f32 0.0, %v1766
        %v1768 = vpop.f32.mrb[0].mxu0
        %v1769 = vpop.f32.mrb[0].mxu0
        %v1770 = vadd.f32 0.0, %v1769
        %v1771 = vpop.f32.mrb[0].mxu0
        %1772 = vmatprep.mubr.bf16.mxu0 0
        %1773 = vmatmul.mubr.bf16.gmra.mrb[0].mxu0 %v1640
        %v1774 = vpop.f32.mrb[0].mxu0
        %v1775 = vadd.f32 0.0, %v1774
        %v1776 = vpop.f32.mrb[0].mxu0
        %v1777 = vpop.f32.mrb[0].mxu0
        %v1778 = vadd.f32 0.0, %v1777
        %v1779 = vpop.f32.mrb[0].mxu0
        %1780 = vmatprep.mubr.bf16.mxu0 0
        %1781 = vmatmul.mubr.bf16.gmra.mrb[0].mxu0 %v1643
        %v1782 = vpop.f32.mrb[0].mxu0
        %v1783 = vadd.f32 0.0, %v1782
        %v1784 = vpop.f32.mrb[0].mxu0
        %v1785 = vpop.f32.mrb[0].mxu0
        %v1786 = vadd.f32 0.0, %v1785
        %v1787 = vpop.f32.mrb[0].mxu0
        %1788 = vmatprep.mubr.bf16.mxu0 0
        %1789 = vmatmul.mubr.bf16.gmra.mrb[0].mxu0 %v1646
        %v1790 = vpop.f32.mrb[0].mxu0
        %v1791 = vadd.f32 0.0, %v1790
        %v1792 = vpop.f32.mrb[0].mxu0
        %v1793 = vpop.f32.mrb[0].mxu0
        %v1794 = vadd.f32 0.0, %v1793
        %v1795 = vpop.f32.mrb[0].mxu0
        %1796 = vmatprep.mubr.bf16.mxu0 0
        %1797 = vmatmul.mubr.bf16.gmra.mrb[0].mxu0 %v1649
        %v1798 = vpop.f32.mrb[0].mxu0
        %v1799 = vadd.f32 0.0, %v1798
        %v1800 = vpop.f32.mrb[0].mxu0
        %v1801 = vpop.f32.mrb[0].mxu0
        %v1802 = vadd.f32 0.0, %v1801
        %v1803 = vpop.f32.mrb[0].mxu0
        %1804 = vmatprep.mubr.bf16.mxu0 0
        %1805 = vmatmul.mubr.bf16.gmra.mrb[0].mxu0 %v1652
        %v1806 = vpop.f32.mrb[0].mxu0
        %v1807 = vadd.f32 0.0, %v1806
        %v1808 = vpop.f32.mrb[0].mxu0
        %v1809 = vpop.f32.mrb[0].mxu0
        %v1810 = vadd.f32 0.0, %v1809
        %v1811 = vpop.f32.mrb[0].mxu0
        %1812 = vmatprep.mubr.bf16.mxu0 0
        %1813 = vmatmul.mubr.bf16.gmra.mrb[0].mxu0 %v1655
        %v1814 = vpop.f32.mrb[0].mxu0
        %v1815 = vadd.f32 0.0, %v1814
        %v1816 = vpop.f32.mrb[0].mxu0
        %v1817 = vpop.f32.mrb[0].mxu0
        %v1818 = vadd.f32 0.0, %v1817
        %v1819 = vpop.f32.mrb[0].mxu0
        %1820 = vdwg.mxu0
        %v1821 = vadd.f32 %v1264, %v1695
        %v1822 = vadd.f32 %v1267, %v1698
        %v1823 = vadd.f32 %v1272, %v1703
        %v1824 = vadd.f32 %v1275, %v1706
        %v1825 = vadd.f32 %v1280, %v1711
        %v1826 = vadd.f32 %v1283, %v1714
        %v1827 = vadd.f32 %v1288, %v1719
        %v1828 = vadd.f32 %v1291, %v1722
        %v1829 = vadd.f32 %v1296, %v1727
        %v1830 = vadd.f32 %v1299, %v1730
        %v1831 = vadd.f32 %v1304, %v1735
        %v1832 = vadd.f32 %v1307, %v1738
        %v1833 = vadd.f32 %v1312, %v1743
        %v1834 = vadd.f32 %v1315, %v1746
        %v1835 = vadd.f32 %v1320, %v1751
        %v1836 = vadd.f32 %v1323, %v1754
        %v1837 = vadd.f32 %v1328, %v1759
        %v1838 = vadd.f32 %v1331, %v1762
        %v1839 = vadd.f32 %v1336, %v1767
        %v1840 = vadd.f32 %v1339, %v1770
        %v1841 = vadd.f32 %v1344, %v1775
        %v1842 = vadd.f32 %v1347, %v1778
        %v1843 = vadd.f32 %v1352, %v1783
        %v1844 = vadd.f32 %v1355, %v1786
        %v1845 = vadd.f32 %v1360, %v1791
        %v1846 = vadd.f32 %v1363, %v1794
        %v1847 = vadd.f32 %v1368, %v1799
        %v1848 = vadd.f32 %v1371, %v1802
        %v1849 = vadd.f32 %v1376, %v1807
        %v1850 = vadd.f32 %v1379, %v1810
        %v1851 = vadd.f32 %v1384, %v1815
        %v1852 = vadd.f32 %v1387, %v1818
        %s1853 = scalar_lea.vmem %s383, 12
        %v1854 = vld [vmem:[%s1853] sm:$0xf]
        %v1855 = vld [vmem:[%s1853 + $0x4] sm:$0xf]
        %v1856 = vld [vmem:[%s1853 + $0xc] sm:$0xf]
        %v1857 = vld [vmem:[%s1853 + $0x10] sm:$0xf]
        %v1858 = vld [vmem:[%s1853 + $0x18] sm:$0xf]
        %v1859 = vld [vmem:[%s1853 + $0x1c] sm:$0xf]
        %v1860 = vld [vmem:[%s1853 + $0x24] sm:$0xf]
        %v1861 = vld [vmem:[%s1853 + $0x28] sm:$0xf]
        %v1862 = vld [vmem:[%s1853 + $0x30] sm:$0xf]
        %v1863 = vld [vmem:[%s1853 + $0x34] sm:$0xf]
        %v1864 = vld [vmem:[%s1853 + $0x3c] sm:$0xf]
        %v1865 = vld [vmem:[%s1853 + $0x40] sm:$0xf]
        %v1866 = vld [vmem:[%s1853 + $0x48] sm:$0xf]
        %v1867 = vld [vmem:[%s1853 + $0x4c] sm:$0xf]
        %v1868 = vld [vmem:[%s1853 + $0x54] sm:$0xf]
        %v1869 = vld [vmem:[%s1853 + $0x58] sm:$0xf]
        %v1870 = vld [vmem:[%s1853 + $0x60] sm:$0xf]
        %v1871 = vld [vmem:[%s1853 + $0x64] sm:$0xf]
        %v1872 = vld [vmem:[%s1853 + $0x6c] sm:$0xf]
        %v1873 = vld [vmem:[%s1853 + $0x70] sm:$0xf]
        %v1874 = vld [vmem:[%s1853 + $0x78] sm:$0xf]
        %v1875 = vld [vmem:[%s1853 + $0x7c] sm:$0xf]
        %v1876 = vld [vmem:[%s1853 + $0x84] sm:$0xf]
        %v1877 = vld [vmem:[%s1853 + $0x88] sm:$0xf]
        %v1878 = vld [vmem:[%s1853 + $0x90] sm:$0xf]
        %v1879 = vld [vmem:[%s1853 + $0x94] sm:$0xf]
        %v1880 = vld [vmem:[%s1853 + $0x9c] sm:$0xf]
        %v1881 = vld [vmem:[%s1853 + $0xa0] sm:$0xf]
        %v1882 = vld [vmem:[%s1853 + $0xa8] sm:$0xf]
        %v1883 = vld [vmem:[%s1853 + $0xac] sm:$0xf]
        %v1884 = vld [vmem:[%s1853 + $0xb4] sm:$0xf]
        %v1885 = vld [vmem:[%s1853 + $0xb8] sm:$0xf]
        %v1886 = vld [vmem:[%s1 + $0x4] sm:$0x3]
        %v1919 = vunpack.c.l.b16 %v1854
        %v1920 = vunpack.c.l.b16 %v1855
        %v1921 = vunpack.c.l.b16 %v1856
        %v1922 = vunpack.c.l.b16 %v1857
        %v1923 = vunpack.c.l.b16 %v1858
        %v1924 = vunpack.c.l.b16 %v1859
        %v1925 = vunpack.c.l.b16 %v1860
        %v1926 = vunpack.c.l.b16 %v1861
        %v1927 = vunpack.c.l.b16 %v1862
        %v1928 = vunpack.c.l.b16 %v1863
        %v1929 = vunpack.c.l.b16 %v1864
        %v1930 = vunpack.c.l.b16 %v1865
        %v1931 = vunpack.c.l.b16 %v1866
        %v1932 = vunpack.c.l.b16 %v1867
        %v1933 = vunpack.c.l.b16 %v1868
        %v1934 = vunpack.c.l.b16 %v1869
        %v1935 = vunpack.c.l.b16 %v1870
        %v1936 = vunpack.c.l.b16 %v1871
        %v1937 = vunpack.c.l.b16 %v1872
        %v1938 = vunpack.c.l.b16 %v1873
        %v1939 = vunpack.c.l.b16 %v1874
        %v1940 = vunpack.c.l.b16 %v1875
        %v1941 = vunpack.c.l.b16 %v1876
        %v1942 = vunpack.c.l.b16 %v1877
        %v1943 = vunpack.c.l.b16 %v1878
        %v1944 = vunpack.c.l.b16 %v1879
        %v1945 = vunpack.c.l.b16 %v1880
        %v1946 = vunpack.c.l.b16 %v1881
        %v1947 = vunpack.c.l.b16 %v1882
        %v1948 = vunpack.c.l.b16 %v1883
        %v1949 = vunpack.c.l.b16 %v1884
        %v1950 = vunpack.c.l.b16 %v1885
        %v1951 = vpack.c.b16 %v1920, %v1919
        %v1952 = vpack.c.b16 %v1922, %v1921
        %v1953 = vpack.c.b16 %v1924, %v1923
        %v1954 = vpack.c.b16 %v1926, %v1925
        %v1955 = vpack.c.b16 %v1928, %v1927
        %v1956 = vpack.c.b16 %v1930, %v1929
        %v1957 = vpack.c.b16 %v1932, %v1931
        %v1958 = vpack.c.b16 %v1934, %v1933
        %v1959 = vpack.c.b16 %v1936, %v1935
        %v1960 = vpack.c.b16 %v1938, %v1937
        %v1961 = vpack.c.b16 %v1940, %v1939
        %v1962 = vpack.c.b16 %v1942, %v1941
        %v1963 = vpack.c.b16 %v1944, %v1943
        %v1964 = vpack.c.b16 %v1946, %v1945
        %v1965 = vpack.c.b16 %v1948, %v1947
        %v1966 = vpack.c.b16 %v1950, %v1949
        %v1968 = vunpack.c.l.b16 %v1886
        %v1969 = vpack.c.b16 %v1968, %v1968
        %v1971 = vshrl.u32 %v1969, 16
        %v1973 = vshll.u32 %v1969, 16
        %v1975 = vrot.slane %v1973, 1
        %v1976 = vor.u32 %v1971, %v1975
        %v1978 = vsel %vm881, %v1951, 0
        %v1981 = vsel %vm881, %v1952, 0
        %v1984 = vsel %vm881, %v1953, 0
        %v1987 = vsel %vm881, %v1954, 0
        %v1990 = vsel %vm881, %v1955, 0
        %v1993 = vsel %vm881, %v1956, 0
        %v1996 = vsel %vm881, %v1957, 0
        %v1999 = vsel %vm881, %v1958, 0
        %v2002 = vsel %vm881, %v1959, 0
        %v2005 = vsel %vm881, %v1960, 0
        %v2008 = vsel %vm881, %v1961, 0
        %v2011 = vsel %vm881, %v1962, 0
        %v2014 = vsel %vm881, %v1963, 0
        %v2017 = vsel %vm881, %v1964, 0
        %v2020 = vsel %vm881, %v1965, 0
        %v2023 = vsel %vm881, %v1966, 0
        %v2026 = vand.u32 %v1976, %v933
        %2028 = vmatprep.subr.bf16.mxu0 0
        %2029 = vmatpush1.bf16.msra.mxu0 %v2026
        %2030 = vmatprep.subr.bf16.mxu0 0
        %2031 = vmatpush1.bf16.msra.mxu0 0
        %2032 = vmatprep.subr.bf16.mxu0 0
        %2033 = vmatpush1.bf16.msra.mxu0 0
        %2034 = vmatprep.subr.bf16.mxu0 0
        %2035 = vmatpush1.bf16.msra.mxu0 0
        %2036 = vmatprep.subr.bf16.mxu0 0
        %2037 = vmatpush1.bf16.msra.mxu0 0
        %2038 = vmatprep.subr.bf16.mxu0 0
        %2039 = vmatpush1.bf16.msra.mxu0 0
        %2040 = vmatprep.subr.bf16.mxu0 0
        %2041 = vmatpush1.bf16.msra.mxu0 0
        %2042 = vmatprep.subr.bf16.mxu0 0
        %2043 = vmatpush1.bf16.msra.mxu0 0
        %2044 = vmatprep.subr.bf16.mxu0 0
        %2045 = vmatpush1.bf16.msra.mxu0 0
        %2046 = vmatprep.subr.bf16.mxu0 0
        %2047 = vmatpush1.bf16.msra.mxu0 0
        %2048 = vmatprep.subr.bf16.mxu0 0
        %2049 = vmatpush1.bf16.msra.mxu0 0
        %2050 = vmatprep.subr.bf16.mxu0 0
        %2051 = vmatpush1.bf16.msra.mxu0 0
        %2052 = vmatprep.subr.bf16.mxu0 0
        %2053 = vmatpush1.bf16.msra.mxu0 0
        %2054 = vmatprep.subr.bf16.mxu0 0
        %2055 = vmatpush1.bf16.msra.mxu0 0
        %2056 = vmatprep.subr.bf16.mxu0 0
        %2057 = vmatpush1.bf16.msra.mxu0 0
        %2058 = vmatprep.subr.bf16.mxu0 0
        %2059 = vmatpush1.bf16.msra.mxu0 0
        %2060 = vmatprep.mubr.bf16.mxu0 0
        %2061 = vmatmul.mubr.bf16.gmra.mrb[0].mxu0 %v1978
        %v2062 = vpop.f32.mrb[0].mxu0
        %v2063 = vadd.f32 0.0, %v2062
        %v2064 = vpop.f32.mrb[0].mxu0
        %v2065 = vpop.f32.mrb[0].mxu0
        %v2066 = vadd.f32 0.0, %v2065
        %v2067 = vpop.f32.mrb[0].mxu0
        %2068 = vmatprep.mubr.bf16.mxu0 0
        %2069 = vmatmul.mubr.bf16.gmra.mrb[0].mxu0 %v1981
        %v2070 = vpop.f32.mrb[0].mxu0
        %v2071 = vadd.f32 0.0, %v2070
        %v2072 = vpop.f32.mrb[0].mxu0
        %v2073 = vpop.f32.mrb[0].mxu0
        %v2074 = vadd.f32 0.0, %v2073
        %v2075 = vpop.f32.mrb[0].mxu0
        %2076 = vmatprep.mubr.bf16.mxu0 0
        %2077 = vmatmul.mubr.bf16.gmra.mrb[0].mxu0 %v1984
        %v2078 = vpop.f32.mrb[0].mxu0
        %v2079 = vadd.f32 0.0, %v2078
        %v2080 = vpop.f32.mrb[0].mxu0
        %v2081 = vpop.f32.mrb[0].mxu0
        %v2082 = vadd.f32 0.0, %v2081
        %v2083 = vpop.f32.mrb[0].mxu0
        %2084 = vmatprep.mubr.bf16.mxu0 0
        %2085 = vmatmul.mubr.bf16.gmra.mrb[0].mxu0 %v1987
        %v2086 = vpop.f32.mrb[0].mxu0
        %v2087 = vadd.f32 0.0, %v2086
        %v2088 = vpop.f32.mrb[0].mxu0
        %v2089 = vpop.f32.mrb[0].mxu0
        %v2090 = vadd.f32 0.0, %v2089
        %v2091 = vpop.f32.mrb[0].mxu0
        %2092 = vmatprep.mubr.bf16.mxu0 0
        %2093 = vmatmul.mubr.bf16.gmra.mrb[0].mxu0 %v1990
        %v2094 = vpop.f32.mrb[0].mxu0
        %v2095 = vadd.f32 0.0, %v2094
        %v2096 = vpop.f32.mrb[0].mxu0
        %v2097 = vpop.f32.mrb[0].mxu0
        %v2098 = vadd.f32 0.0, %v2097
        %v2099 = vpop.f32.mrb[0].mxu0
        %2100 = vmatprep.mubr.bf16.mxu0 0
        %2101 = vmatmul.mubr.bf16.gmra.mrb[0].mxu0 %v1993
        %v2102 = vpop.f32.mrb[0].mxu0
        %v2103 = vadd.f32 0.0, %v2102
        %v2104 = vpop.f32.mrb[0].mxu0
        %v2105 = vpop.f32.mrb[0].mxu0
        %v2106 = vadd.f32 0.0, %v2105
        %v2107 = vpop.f32.mrb[0].mxu0
        %2108 = vmatprep.mubr.bf16.mxu0 0
        %2109 = vmatmul.mubr.bf16.gmra.mrb[0].mxu0 %v1996
        %v2110 = vpop.f32.mrb[0].mxu0
        %v2111 = vadd.f32 0.0, %v2110
        %v2112 = vpop.f32.mrb[0].mxu0
        %v2113 = vpop.f32.mrb[0].mxu0
        %v2114 = vadd.f32 0.0, %v2113
        %v2115 = vpop.f32.mrb[0].mxu0
        %2116 = vmatprep.mubr.bf16.mxu0 0
        %2117 = vmatmul.mubr.bf16.gmra.mrb[0].mxu0 %v1999
        %v2118 = vpop.f32.mrb[0].mxu0
        %v2119 = vadd.f32 0.0, %v2118
        %v2120 = vpop.f32.mrb[0].mxu0
        %v2121 = vpop.f32.mrb[0].mxu0
        %v2122 = vadd.f32 0.0, %v2121
        %v2123 = vpop.f32.mrb[0].mxu0
        %2124 = vmatprep.mubr.bf16.mxu0 0
        %2125 = vmatmul.mubr.bf16.gmra.mrb[0].mxu0 %v2002
        %v2126 = vpop.f32.mrb[0].mxu0
        %v2127 = vadd.f32 0.0, %v2126
        %v2128 = vpop.f32.mrb[0].mxu0
        %v2129 = vpop.f32.mrb[0].mxu0
        %v2130 = vadd.f32 0.0, %v2129
        %v2131 = vpop.f32.mrb[0].mxu0
        %2132 = vmatprep.mubr.bf16.mxu0 0
        %2133 = vmatmul.mubr.bf16.gmra.mrb[0].mxu0 %v2005
        %v2134 = vpop.f32.mrb[0].mxu0
        %v2135 = vadd.f32 0.0, %v2134
        %v2136 = vpop.f32.mrb[0].mxu0
        %v2137 = vpop.f32.mrb[0].mxu0
        %v2138 = vadd.f32 0.0, %v2137
        %v2139 = vpop.f32.mrb[0].mxu0
        %2140 = vmatprep.mubr.bf16.mxu0 0
        %2141 = vmatmul.mubr.bf16.gmra.mrb[0].mxu0 %v2008
        %v2142 = vpop.f32.mrb[0].mxu0
        %v2143 = vadd.f32 0.0, %v2142
        %v2144 = vpop.f32.mrb[0].mxu0
        %v2145 = vpop.f32.mrb[0].mxu0
        %v2146 = vadd.f32 0.0, %v2145
        %v2147 = vpop.f32.mrb[0].mxu0
        %2148 = vmatprep.mubr.bf16.mxu0 0
        %2149 = vmatmul.mubr.bf16.gmra.mrb[0].mxu0 %v2011
        %v2150 = vpop.f32.mrb[0].mxu0
        %v2151 = vadd.f32 0.0, %v2150
        %v2152 = vpop.f32.mrb[0].mxu0
        %v2153 = vpop.f32.mrb[0].mxu0
        %v2154 = vadd.f32 0.0, %v2153
        %v2155 = vpop.f32.mrb[0].mxu0
        %2156 = vmatprep.mubr.bf16.mxu0 0
        %2157 = vmatmul.mubr.bf16.gmra.mrb[0].mxu0 %v2014
        %v2158 = vpop.f32.mrb[0].mxu0
        %v2159 = vadd.f32 0.0, %v2158
        %v2160 = vpop.f32.mrb[0].mxu0
        %v2161 = vpop.f32.mrb[0].mxu0
        %v2162 = vadd.f32 0.0, %v2161
        %v2163 = vpop.f32.mrb[0].mxu0
        %2164 = vmatprep.mubr.bf16.mxu0 0
        %2165 = vmatmul.mubr.bf16.gmra.mrb[0].mxu0 %v2017
        %v2166 = vpop.f32.mrb[0].mxu0
        %v2167 = vadd.f32 0.0, %v2166
        %v2168 = vpop.f32.mrb[0].mxu0
        %v2169 = vpop.f32.mrb[0].mxu0
        %v2170 = vadd.f32 0.0, %v2169
        %v2171 = vpop.f32.mrb[0].mxu0
        %2172 = vmatprep.mubr.bf16.mxu0 0
        %2173 = vmatmul.mubr.bf16.gmra.mrb[0].mxu0 %v2020
        %v2174 = vpop.f32.mrb[0].mxu0
        %v2175 = vadd.f32 0.0, %v2174
        %v2176 = vpop.f32.mrb[0].mxu0
        %v2177 = vpop.f32.mrb[0].mxu0
        %v2178 = vadd.f32 0.0, %v2177
        %v2179 = vpop.f32.mrb[0].mxu0
        %2180 = vmatprep.mubr.bf16.mxu0 0
        %2181 = vmatmul.mubr.bf16.gmra.mrb[0].mxu0 %v2023
        %v2182 = vpop.f32.mrb[0].mxu0
        %v2183 = vadd.f32 0.0, %v2182
        %v2184 = vpop.f32.mrb[0].mxu0
        %v2185 = vpop.f32.mrb[0].mxu0
        %v2186 = vadd.f32 0.0, %v2185
        %v2187 = vpop.f32.mrb[0].mxu0
        %2188 = vdwg.mxu0
        %v2189 = vadd.f32 %v1821, %v2063
        %v2190 = vadd.f32 %v1822, %v2066
        %v2191 = vadd.f32 %v1823, %v2071
        %v2192 = vadd.f32 %v1824, %v2074
        %v2193 = vadd.f32 %v1825, %v2079
        %v2194 = vadd.f32 %v1826, %v2082
        %v2195 = vadd.f32 %v1827, %v2087
        %v2196 = vadd.f32 %v1828, %v2090
        %v2197 = vadd.f32 %v1829, %v2095
        %v2198 = vadd.f32 %v1830, %v2098
        %v2199 = vadd.f32 %v1831, %v2103
        %v2200 = vadd.f32 %v1832, %v2106
        %v2201 = vadd.f32 %v1833, %v2111
        %v2202 = vadd.f32 %v1834, %v2114
        %v2203 = vadd.f32 %v1835, %v2119
        %v2204 = vadd.f32 %v1836, %v2122
        %v2205 = vadd.f32 %v1837, %v2127
        %v2206 = vadd.f32 %v1838, %v2130
        %v2207 = vadd.f32 %v1839, %v2135
        %v2208 = vadd.f32 %v1840, %v2138
        %v2209 = vadd.f32 %v1841, %v2143
        %v2210 = vadd.f32 %v1842, %v2146
        %v2211 = vadd.f32 %v1843, %v2151
        %v2212 = vadd.f32 %v1844, %v2154
        %v2213 = vadd.f32 %v1845, %v2159
        %v2214 = vadd.f32 %v1846, %v2162
        %v2215 = vadd.f32 %v1847, %v2167
        %v2216 = vadd.f32 %v1848, %v2170
        %v2217 = vadd.f32 %v1849, %v2175
        %v2218 = vadd.f32 %v1850, %v2178
        %v2219 = vadd.f32 %v1851, %v2183
        %v2220 = vadd.f32 %v1852, %v2186
        %v2221 = vld [vmem:[%s1853] sm:$0xf]
        %v2222 = vld [vmem:[%s1853 + $0x4] sm:$0xf]
        %v2223 = vld [vmem:[%s1853 + $0x8] sm:$0x1]
        %v2224 = vld [vmem:[%s1853 + $0xc] sm:$0xf]
        %v2225 = vld [vmem:[%s1853 + $0x10] sm:$0xf]
        %v2226 = vld [vmem:[%s1853 + $0x14] sm:$0x1]
        %v2227 = vld [vmem:[%s1853 + $0x18] sm:$0xf]
        %v2228 = vld [vmem:[%s1853 + $0x1c] sm:$0xf]
        %v2229 = vld [vmem:[%s1853 + $0x20] sm:$0x1]
        %v2230 = vld [vmem:[%s1853 + $0x24] sm:$0xf]
        %v2231 = vld [vmem:[%s1853 + $0x28] sm:$0xf]
        %v2232 = vld [vmem:[%s1853 + $0x2c] sm:$0x1]
        %v2233 = vld [vmem:[%s1853 + $0x30] sm:$0xf]
        %v2234 = vld [vmem:[%s1853 + $0x34] sm:$0xf]
        %v2235 = vld [vmem:[%s1853 + $0x38] sm:$0x1]
        %v2236 = vld [vmem:[%s1853 + $0x3c] sm:$0xf]
        %v2237 = vld [vmem:[%s1853 + $0x40] sm:$0xf]
        %v2238 = vld [vmem:[%s1853 + $0x44] sm:$0x1]
        %v2239 = vld [vmem:[%s1853 + $0x48] sm:$0xf]
        %v2240 = vld [vmem:[%s1853 + $0x4c] sm:$0xf]
        %v2241 = vld [vmem:[%s1853 + $0x50] sm:$0x1]
        %v2242 = vld [vmem:[%s1853 + $0x54] sm:$0xf]
        %v2243 = vld [vmem:[%s1853 + $0x58] sm:$0xf]
        %v2244 = vld [vmem:[%s1853 + $0x5c] sm:$0x1]
        %v2245 = vld [vmem:[%s1853 + $0x60] sm:$0xf]
        %v2246 = vld [vmem:[%s1853 + $0x64] sm:$0xf]
        %v2247 = vld [vmem:[%s1853 + $0x68] sm:$0x1]
        %v2248 = vld [vmem:[%s1853 + $0x6c] sm:$0xf]
        %v2249 = vld [vmem:[%s1853 + $0x70] sm:$0xf]
        %v2250 = vld [vmem:[%s1853 + $0x74] sm:$0x1]
        %v2251 = vld [vmem:[%s1853 + $0x78] sm:$0xf]
        %v2252 = vld [vmem:[%s1853 + $0x7c] sm:$0xf]
        %v2253 = vld [vmem:[%s1853 + $0x80] sm:$0x1]
        %v2254 = vld [vmem:[%s1853 + $0x84] sm:$0xf]
        %v2255 = vld [vmem:[%s1853 + $0x88] sm:$0xf]
        %v2256 = vld [vmem:[%s1853 + $0x8c] sm:$0x1]
        %v2257 = vld [vmem:[%s1853 + $0x90] sm:$0xf]
        %v2258 = vld [vmem:[%s1853 + $0x94] sm:$0xf]
        %v2259 = vld [vmem:[%s1853 + $0x98] sm:$0x1]
        %v2260 = vld [vmem:[%s1853 + $0x9c] sm:$0xf]
        %v2261 = vld [vmem:[%s1853 + $0xa0] sm:$0xf]
        %v2262 = vld [vmem:[%s1853 + $0xa4] sm:$0x1]
        %v2263 = vld [vmem:[%s1853 + $0xa8] sm:$0xf]
        %v2264 = vld [vmem:[%s1853 + $0xac] sm:$0xf]
        %v2265 = vld [vmem:[%s1853 + $0xb0] sm:$0x1]
        %v2266 = vld [vmem:[%s1853 + $0xb4] sm:$0xf]
        %v2267 = vld [vmem:[%s1853 + $0xb8] sm:$0xf]
        %v2268 = vld [vmem:[%s1853 + $0xbc] sm:$0x1]
        %v2270 = vshrl.u32 %v2221, 16
        %v2272 = vrot.slane %v2270, 4
        %v2273 = vshll.u32 %v2221, 16
        %v2275 = vrot.slane %v2273, 5
        %v2276 = vor.u32 %v2272, %v2275
        %v2277 = vrot.slane %v2276, 4
        %v2279 = vshll.u32 %v2222, 16
        %v2281 = vrot.slane %v2279, 5
        %v2282 = vsel %vm436, %v2277, %v2281
        %v2283 = vshrl.u32 %v2222, 16
        %v2285 = vrot.slane %v2283, 4
        %v2286 = vor.u32 %v2285, %v2281
        %v2287 = vrot.slane %v2286, 4
        %v2289 = vshll.u32 %v2223, 16
        %v2291 = vrot.slane %v2289, 5
        %v2292 = vsel %vm436, %v2287, %v2291
        %v2294 = vshrl.u32 %v2224, 16
        %v2296 = vrot.slane %v2294, 4
        %v2297 = vshll.u32 %v2224, 16
        %v2299 = vrot.slane %v2297, 5
        %v2300 = vor.u32 %v2296, %v2299
        %v2301 = vrot.slane %v2300, 4
        %v2303 = vshll.u32 %v2225, 16
        %v2305 = vrot.slane %v2303, 5
        %v2306 = vsel %vm436, %v2301, %v2305
        %v2307 = vshrl.u32 %v2225, 16
        %v2309 = vrot.slane %v2307, 4
        %v2310 = vor.u32 %v2309, %v2305
        %v2311 = vrot.slane %v2310, 4
        %v2313 = vshll.u32 %v2226, 16
        %v2315 = vrot.slane %v2313, 5
        %v2316 = vsel %vm436, %v2311, %v2315
        %v2318 = vshrl.u32 %v2227, 16
        %v2320 = vrot.slane %v2318, 4
        %v2321 = vshll.u32 %v2227, 16
        %v2323 = vrot.slane %v2321, 5
        %v2324 = vor.u32 %v2320, %v2323
        %v2325 = vrot.slane %v2324, 4
        %v2327 = vshll.u32 %v2228, 16
        %v2329 = vrot.slane %v2327, 5
        %v2330 = vsel %vm436, %v2325, %v2329
        %v2331 = vshrl.u32 %v2228, 16
        %v2333 = vrot.slane %v2331, 4
        %v2334 = vor.u32 %v2333, %v2329
        %v2335 = vrot.slane %v2334, 4
        %v2337 = vshll.u32 %v2229, 16
        %v2339 = vrot.slane %v2337, 5
        %v2340 = vsel %vm436, %v2335, %v2339
        %v2342 = vshrl.u32 %v2230, 16
        %v2344 = vrot.slane %v2342, 4
        %v2345 = vshll.u32 %v2230, 16
        %v2347 = vrot.slane %v2345, 5
        %v2348 = vor.u32 %v2344, %v2347
        %v2349 = vrot.slane %v2348, 4
        %v2351 = vshll.u32 %v2231, 16
        %v2353 = vrot.slane %v2351, 5
        %v2354 = vsel %vm436, %v2349, %v2353
        %v2355 = vshrl.u32 %v2231, 16
        %v2357 = vrot.slane %v2355, 4
        %v2358 = vor.u32 %v2357, %v2353
        %v2359 = vrot.slane %v2358, 4
        %v2361 = vshll.u32 %v2232, 16
        %v2363 = vrot.slane %v2361, 5
        %v2364 = vsel %vm436, %v2359, %v2363
        %v2366 = vshrl.u32 %v2233, 16
        %v2368 = vrot.slane %v2366, 4
        %v2369 = vshll.u32 %v2233, 16
        %v2371 = vrot.slane %v2369, 5
        %v2372 = vor.u32 %v2368, %v2371
        %v2373 = vrot.slane %v2372, 4
        %v2375 = vshll.u32 %v2234, 16
        %v2377 = vrot.slane %v2375, 5
        %v2378 = vsel %vm436, %v2373, %v2377
        %v2379 = vshrl.u32 %v2234, 16
        %v2381 = vrot.slane %v2379, 4
        %v2382 = vor.u32 %v2381, %v2377
        %v2383 = vrot.slane %v2382, 4
        %v2385 = vshll.u32 %v2235, 16
        %v2387 = vrot.slane %v2385, 5
        %v2388 = vsel %vm436, %v2383, %v2387
        %v2390 = vshrl.u32 %v2236, 16
        %v2392 = vrot.slane %v2390, 4
        %v2393 = vshll.u32 %v2236, 16
        %v2395 = vrot.slane %v2393, 5
        %v2396 = vor.u32 %v2392, %v2395
        %v2397 = vrot.slane %v2396, 4
        %v2399 = vshll.u32 %v2237, 16
        %v2401 = vrot.slane %v2399, 5
        %v2402 = vsel %vm436, %v2397, %v2401
        %v2403 = vshrl.u32 %v2237, 16
        %v2405 = vrot.slane %v2403, 4
        %v2406 = vor.u32 %v2405, %v2401
        %v2407 = vrot.slane %v2406, 4
        %v2409 = vshll.u32 %v2238, 16
        %v2411 = vrot.slane %v2409, 5
        %v2412 = vsel %vm436, %v2407, %v2411
        %v2414 = vshrl.u32 %v2239, 16
        %v2416 = vrot.slane %v2414, 4
        %v2417 = vshll.u32 %v2239, 16
        %v2419 = vrot.slane %v2417, 5
        %v2420 = vor.u32 %v2416, %v2419
        %v2421 = vrot.slane %v2420, 4
        %v2423 = vshll.u32 %v2240, 16
        %v2425 = vrot.slane %v2423, 5
        %v2426 = vsel %vm436, %v2421, %v2425
        %v2427 = vshrl.u32 %v2240, 16
        %v2429 = vrot.slane %v2427, 4
        %v2430 = vor.u32 %v2429, %v2425
        %v2431 = vrot.slane %v2430, 4
        %v2433 = vshll.u32 %v2241, 16
        %v2435 = vrot.slane %v2433, 5
        %v2436 = vsel %vm436, %v2431, %v2435
        %v2438 = vshrl.u32 %v2242, 16
        %v2440 = vrot.slane %v2438, 4
        %v2441 = vshll.u32 %v2242, 16
        %v2443 = vrot.slane %v2441, 5
        %v2444 = vor.u32 %v2440, %v2443
        %v2445 = vrot.slane %v2444, 4
        %v2447 = vshll.u32 %v2243, 16
        %v2449 = vrot.slane %v2447, 5
        %v2450 = vsel %vm436, %v2445, %v2449
        %v2451 = vshrl.u32 %v2243, 16
        %v2453 = vrot.slane %v2451, 4
        %v2454 = vor.u32 %v2453, %v2449
        %v2455 = vrot.slane %v2454, 4
        %v2457 = vshll.u32 %v2244, 16
        %v2459 = vrot.slane %v2457, 5
        %v2460 = vsel %vm436, %v2455, %v2459
        %v2462 = vshrl.u32 %v2245, 16
        %v2464 = vrot.slane %v2462, 4
        %v2465 = vshll.u32 %v2245, 16
        %v2467 = vrot.slane %v2465, 5
        %v2468 = vor.u32 %v2464, %v2467
        %v2469 = vrot.slane %v2468, 4
        %v2471 = vshll.u32 %v2246, 16
        %v2473 = vrot.slane %v2471, 5
        %v2474 = vsel %vm436, %v2469, %v2473
        %v2475 = vshrl.u32 %v2246, 16
        %v2477 = vrot.slane %v2475, 4
        %v2478 = vor.u32 %v2477, %v2473
        %v2479 = vrot.slane %v2478, 4
        %v2481 = vshll.u32 %v2247, 16
        %v2483 = vrot.slane %v2481, 5
        %v2484 = vsel %vm436, %v2479, %v2483
        %v2486 = vshrl.u32 %v2248, 16
        %v2488 = vrot.slane %v2486, 4
        %v2489 = vshll.u32 %v2248, 16
        %v2491 = vrot.slane %v2489, 5
        %v2492 = vor.u32 %v2488, %v2491
        %v2493 = vrot.slane %v2492, 4
        %v2495 = vshll.u32 %v2249, 16
        %v2497 = vrot.slane %v2495, 5
        %v2498 = vsel %vm436, %v2493, %v2497
        %v2499 = vshrl.u32 %v2249, 16
        %v2501 = vrot.slane %v2499, 4
        %v2502 = vor.u32 %v2501, %v2497
        %v2503 = vrot.slane %v2502, 4
        %v2505 = vshll.u32 %v2250, 16
        %v2507 = vrot.slane %v2505, 5
        %v2508 = vsel %vm436, %v2503, %v2507
        %v2510 = vshrl.u32 %v2251, 16
        %v2512 = vrot.slane %v2510, 4
        %v2513 = vshll.u32 %v2251, 16
        %v2515 = vrot.slane %v2513, 5
        %v2516 = vor.u32 %v2512, %v2515
        %v2517 = vrot.slane %v2516, 4
        %v2519 = vshll.u32 %v2252, 16
        %v2521 = vrot.slane %v2519, 5
        %v2522 = vsel %vm436, %v2517, %v2521
        %v2523 = vshrl.u32 %v2252, 16
        %v2525 = vrot.slane %v2523, 4
        %v2526 = vor.u32 %v2525, %v2521
        %v2527 = vrot.slane %v2526, 4
        %v2529 = vshll.u32 %v2253, 16
        %v2531 = vrot.slane %v2529, 5
        %v2532 = vsel %vm436, %v2527, %v2531
        %v2534 = vshrl.u32 %v2254, 16
        %v2536 = vrot.slane %v2534, 4
        %v2537 = vshll.u32 %v2254, 16
        %v2539 = vrot.slane %v2537, 5
        %v2540 = vor.u32 %v2536, %v2539
        %v2541 = vrot.slane %v2540, 4
        %v2543 = vshll.u32 %v2255, 16
        %v2545 = vrot.slane %v2543, 5
        %v2546 = vsel %vm436, %v2541, %v2545
        %v2547 = vshrl.u32 %v2255, 16
        %v2549 = vrot.slane %v2547, 4
        %v2550 = vor.u32 %v2549, %v2545
        %v2551 = vrot.slane %v2550, 4
        %v2553 = vshll.u32 %v2256, 16
        %v2555 = vrot.slane %v2553, 5
        %v2556 = vsel %vm436, %v2551, %v2555
        %v2558 = vshrl.u32 %v2257, 16
        %v2560 = vrot.slane %v2558, 4
        %v2561 = vshll.u32 %v2257, 16
        %v2563 = vrot.slane %v2561, 5
        %v2564 = vor.u32 %v2560, %v2563
        %v2565 = vrot.slane %v2564, 4
        %v2567 = vshll.u32 %v2258, 16
        %v2569 = vrot.slane %v2567, 5
        %v2570 = vsel %vm436, %v2565, %v2569
        %v2571 = vshrl.u32 %v2258, 16
        %v2573 = vrot.slane %v2571, 4
        %v2574 = vor.u32 %v2573, %v2569
        %v2575 = vrot.slane %v2574, 4
        %v2577 = vshll.u32 %v2259, 16
        %v2579 = vrot.slane %v2577, 5
        %v2580 = vsel %vm436, %v2575, %v2579
        %v2582 = vshrl.u32 %v2260, 16
        %v2584 = vrot.slane %v2582, 4
        %v2585 = vshll.u32 %v2260, 16
        %v2587 = vrot.slane %v2585, 5
        %v2588 = vor.u32 %v2584, %v2587
        %v2589 = vrot.slane %v2588, 4
        %v2591 = vshll.u32 %v2261, 16
        %v2593 = vrot.slane %v2591, 5
        %v2594 = vsel %vm436, %v2589, %v2593
        %v2595 = vshrl.u32 %v2261, 16
        %v2597 = vrot.slane %v2595, 4
        %v2598 = vor.u32 %v2597, %v2593
        %v2599 = vrot.slane %v2598, 4
        %v2601 = vshll.u32 %v2262, 16
        %v2603 = vrot.slane %v2601, 5
        %v2604 = vsel %vm436, %v2599, %v2603
        %v2606 = vshrl.u32 %v2263, 16
        %v2608 = vrot.slane %v2606, 4
        %v2609 = vshll.u32 %v2263, 16
        %v2611 = vrot.slane %v2609, 5
        %v2612 = vor.u32 %v2608, %v2611
        %v2613 = vrot.slane %v2612, 4
        %v2615 = vshll.u32 %v2264, 16
        %v2617 = vrot.slane %v2615, 5
        %v2618 = vsel %vm436, %v2613, %v2617
        %v2619 = vshrl.u32 %v2264, 16
        %v2621 = vrot.slane %v2619, 4
        %v2622 = vor.u32 %v2621, %v2617
        %v2623 = vrot.slane %v2622, 4
        %v2625 = vshll.u32 %v2265, 16
        %v2627 = vrot.slane %v2625, 5
        %v2628 = vsel %vm436, %v2623, %v2627
        %v2630 = vshrl.u32 %v2266, 16
        %v2632 = vrot.slane %v2630, 4
        %v2633 = vshll.u32 %v2266, 16
        %v2635 = vrot.slane %v2633, 5
        %v2636 = vor.u32 %v2632, %v2635
        %v2637 = vrot.slane %v2636, 4
        %v2639 = vshll.u32 %v2267, 16
        %v2641 = vrot.slane %v2639, 5
        %v2642 = vsel %vm436, %v2637, %v2641
        %v2643 = vshrl.u32 %v2267, 16
        %v2645 = vrot.slane %v2643, 4
        %v2646 = vor.u32 %v2645, %v2641
        %v2647 = vrot.slane %v2646, 4
        %v2649 = vshll.u32 %v2268, 16
        %v2651 = vrot.slane %v2649, 5
        %v2652 = vsel %vm436, %v2647, %v2651
        %v2653 = vld [vmem:[%s1 + $0x4] sm:$0xc]
        %v2654 = vunpack.c.l.b16 %v2282
        %v2655 = vunpack.c.l.b16 %v2292
        %v2656 = vunpack.c.l.b16 %v2306
        %v2657 = vunpack.c.l.b16 %v2316
        %v2658 = vunpack.c.l.b16 %v2330
        %v2659 = vunpack.c.l.b16 %v2340
        %v2660 = vunpack.c.l.b16 %v2354
        %v2661 = vunpack.c.l.b16 %v2364
        %v2662 = vunpack.c.l.b16 %v2378
        %v2663 = vunpack.c.l.b16 %v2388
        %v2664 = vunpack.c.l.b16 %v2402
        %v2665 = vunpack.c.l.b16 %v2412
        %v2666 = vunpack.c.l.b16 %v2426
        %v2667 = vunpack.c.l.b16 %v2436
        %v2668 = vunpack.c.l.b16 %v2450
        %v2669 = vunpack.c.l.b16 %v2460
        %v2670 = vunpack.c.l.b16 %v2474
        %v2671 = vunpack.c.l.b16 %v2484
        %v2672 = vunpack.c.l.b16 %v2498
        %v2673 = vunpack.c.l.b16 %v2508
        %v2674 = vunpack.c.l.b16 %v2522
        %v2675 = vunpack.c.l.b16 %v2532
        %v2676 = vunpack.c.l.b16 %v2546
        %v2677 = vunpack.c.l.b16 %v2556
        %v2678 = vunpack.c.l.b16 %v2570
        %v2679 = vunpack.c.l.b16 %v2580
        %v2680 = vunpack.c.l.b16 %v2594
        %v2681 = vunpack.c.l.b16 %v2604
        %v2682 = vunpack.c.l.b16 %v2618
        %v2683 = vunpack.c.l.b16 %v2628
        %v2684 = vunpack.c.l.b16 %v2642
        %v2685 = vunpack.c.l.b16 %v2652
        %v2686 = vpack.c.b16 %v2655, %v2654
        %v2687 = vpack.c.b16 %v2657, %v2656
        %v2688 = vpack.c.b16 %v2659, %v2658
        %v2689 = vpack.c.b16 %v2661, %v2660
        %v2690 = vpack.c.b16 %v2663, %v2662
        %v2691 = vpack.c.b16 %v2665, %v2664
        %v2692 = vpack.c.b16 %v2667, %v2666
        %v2693 = vpack.c.b16 %v2669, %v2668
        %v2694 = vpack.c.b16 %v2671, %v2670
        %v2695 = vpack.c.b16 %v2673, %v2672
        %v2696 = vpack.c.b16 %v2675, %v2674
        %v2697 = vpack.c.b16 %v2677, %v2676
        %v2698 = vpack.c.b16 %v2679, %v2678
        %v2699 = vpack.c.b16 %v2681, %v2680
        %v2700 = vpack.c.b16 %v2683, %v2682
        %v2701 = vpack.c.b16 %v2685, %v2684
        %v2703 = vunpack.c.l.b16 %v2653
        %v2704 = vpack.c.b16 %v2703, %v2703
        %v2705 = vrot.slane %v2704, 2
        %v2707 = vsel %vm881, %v2686, 0
        %v2710 = vsel %vm881, %v2687, 0
        %v2713 = vsel %vm881, %v2688, 0
        %v2716 = vsel %vm881, %v2689, 0
        %v2719 = vsel %vm881, %v2690, 0
        %v2722 = vsel %vm881, %v2691, 0
        %v2725 = vsel %vm881, %v2692, 0
        %v2728 = vsel %vm881, %v2693, 0
        %v2731 = vsel %vm881, %v2694, 0
        %v2734 = vsel %vm881, %v2695, 0
        %v2737 = vsel %vm881, %v2696, 0
        %v2740 = vsel %vm881, %v2697, 0
        %v2743 = vsel %vm881, %v2698, 0
        %v2746 = vsel %vm881, %v2699, 0
        %v2749 = vsel %vm881, %v2700, 0
        %v2752 = vsel %vm881, %v2701, 0
        %v2755 = vand.u32 %v2705, %v933
        %2757 = vmatprep.subr.bf16.mxu0 0
        %2758 = vmatpush1.bf16.msra.mxu0 %v2755
        %2759 = vmatprep.subr.bf16.mxu0 0
        %2760 = vmatpush1.bf16.msra.mxu0 0
        %2761 = vmatprep.subr.bf16.mxu0 0
        %2762 = vmatpush1.bf16.msra.mxu0 0
        %2763 = vmatprep.subr.bf16.mxu0 0
        %2764 = vmatpush1.bf16.msra.mxu0 0
        %2765 = vmatprep.subr.bf16.mxu0 0
        %2766 = vmatpush1.bf16.msra.mxu0 0
        %2767 = vmatprep.subr.bf16.mxu0 0
        %2768 = vmatpush1.bf16.msra.mxu0 0
        %2769 = vmatprep.subr.bf16.mxu0 0
        %2770 = vmatpush1.bf16.msra.mxu0 0
        %2771 = vmatprep.subr.bf16.mxu0 0
        %2772 = vmatpush1.bf16.msra.mxu0 0
        %2773 = vmatprep.subr.bf16.mxu0 0
        %2774 = vmatpush1.bf16.msra.mxu0 0
        %2775 = vmatprep.subr.bf16.mxu0 0
        %2776 = vmatpush1.bf16.msra.mxu0 0
        %2777 = vmatprep.subr.bf16.mxu0 0
        %2778 = vmatpush1.bf16.msra.mxu0 0
        %2779 = vmatprep.subr.bf16.mxu0 0
        %2780 = vmatpush1.bf16.msra.mxu0 0
        %2781 = vmatprep.subr.bf16.mxu0 0
        %2782 = vmatpush1.bf16.msra.mxu0 0
        %2783 = vmatprep.subr.bf16.mxu0 0
        %2784 = vmatpush1.bf16.msra.mxu0 0
        %2785 = vmatprep.subr.bf16.mxu0 0
        %2786 = vmatpush1.bf16.msra.mxu0 0
        %2787 = vmatprep.subr.bf16.mxu0 0
        %2788 = vmatpush1.bf16.msra.mxu0 0
        %2789 = vmatprep.mubr.bf16.mxu0 0
        %2790 = vmatmul.mubr.bf16.gmra.mrb[0].mxu0 %v2707
        %v2791 = vpop.f32.mrb[0].mxu0
        %v2792 = vadd.f32 0.0, %v2791
        %v2793 = vpop.f32.mrb[0].mxu0
        %v2794 = vpop.f32.mrb[0].mxu0
        %v2795 = vadd.f32 0.0, %v2794
        %v2796 = vpop.f32.mrb[0].mxu0
        %2797 = vmatprep.mubr.bf16.mxu0 0
        %2798 = vmatmul.mubr.bf16.gmra.mrb[0].mxu0 %v2710
        %v2799 = vpop.f32.mrb[0].mxu0
        %v2800 = vadd.f32 0.0, %v2799
        %v2801 = vpop.f32.mrb[0].mxu0
        %v2802 = vpop.f32.mrb[0].mxu0
        %v2803 = vadd.f32 0.0, %v2802
        %v2804 = vpop.f32.mrb[0].mxu0
        %2805 = vmatprep.mubr.bf16.mxu0 0
        %2806 = vmatmul.mubr.bf16.gmra.mrb[0].mxu0 %v2713
        %v2807 = vpop.f32.mrb[0].mxu0
        %v2808 = vadd.f32 0.0, %v2807
        %v2809 = vpop.f32.mrb[0].mxu0
        %v2810 = vpop.f32.mrb[0].mxu0
        %v2811 = vadd.f32 0.0, %v2810
        %v2812 = vpop.f32.mrb[0].mxu0
        %2813 = vmatprep.mubr.bf16.mxu0 0
        %2814 = vmatmul.mubr.bf16.gmra.mrb[0].mxu0 %v2716
        %v2815 = vpop.f32.mrb[0].mxu0
        %v2816 = vadd.f32 0.0, %v2815
        %v2817 = vpop.f32.mrb[0].mxu0
        %v2818 = vpop.f32.mrb[0].mxu0
        %v2819 = vadd.f32 0.0, %v2818
        %v2820 = vpop.f32.mrb[0].mxu0
        %2821 = vmatprep.mubr.bf16.mxu0 0
        %2822 = vmatmul.mubr.bf16.gmra.mrb[0].mxu0 %v2719
        %v2823 = vpop.f32.mrb[0].mxu0
        %v2824 = vadd.f32 0.0, %v2823
        %v2825 = vpop.f32.mrb[0].mxu0
        %v2826 = vpop.f32.mrb[0].mxu0
        %v2827 = vadd.f32 0.0, %v2826
        %v2828 = vpop.f32.mrb[0].mxu0
        %2829 = vmatprep.mubr.bf16.mxu0 0
        %2830 = vmatmul.mubr.bf16.gmra.mrb[0].mxu0 %v2722
        %v2831 = vpop.f32.mrb[0].mxu0
        %v2832 = vadd.f32 0.0, %v2831
        %v2833 = vpop.f32.mrb[0].mxu0
        %v2834 = vpop.f32.mrb[0].mxu0
        %v2835 = vadd.f32 0.0, %v2834
        %v2836 = vpop.f32.mrb[0].mxu0
        %2837 = vmatprep.mubr.bf16.mxu0 0
        %2838 = vmatmul.mubr.bf16.gmra.mrb[0].mxu0 %v2725
        %v2839 = vpop.f32.mrb[0].mxu0
        %v2840 = vadd.f32 0.0, %v2839
        %v2841 = vpop.f32.mrb[0].mxu0
        %v2842 = vpop.f32.mrb[0].mxu0
        %v2843 = vadd.f32 0.0, %v2842
        %v2844 = vpop.f32.mrb[0].mxu0
        %2845 = vmatprep.mubr.bf16.mxu0 0
        %2846 = vmatmul.mubr.bf16.gmra.mrb[0].mxu0 %v2728
        %v2847 = vpop.f32.mrb[0].mxu0
        %v2848 = vadd.f32 0.0, %v2847
        %v2849 = vpop.f32.mrb[0].mxu0
        %v2850 = vpop.f32.mrb[0].mxu0
        %v2851 = vadd.f32 0.0, %v2850
        %v2852 = vpop.f32.mrb[0].mxu0
        %2853 = vmatprep.mubr.bf16.mxu0 0
        %2854 = vmatmul.mubr.bf16.gmra.mrb[0].mxu0 %v2731
        %v2855 = vpop.f32.mrb[0].mxu0
        %v2856 = vadd.f32 0.0, %v2855
        %v2857 = vpop.f32.mrb[0].mxu0
        %v2858 = vpop.f32.mrb[0].mxu0
        %v2859 = vadd.f32 0.0, %v2858
        %v2860 = vpop.f32.mrb[0].mxu0
        %2861 = vmatprep.mubr.bf16.mxu0 0
        %2862 = vmatmul.mubr.bf16.gmra.mrb[0].mxu0 %v2734
        %v2863 = vpop.f32.mrb[0].mxu0
        %v2864 = vadd.f32 0.0, %v2863
        %v2865 = vpop.f32.mrb[0].mxu0
        %v2866 = vpop.f32.mrb[0].mxu0
        %v2867 = vadd.f32 0.0, %v2866
        %v2868 = vpop.f32.mrb[0].mxu0
        %2869 = vmatprep.mubr.bf16.mxu0 0
        %2870 = vmatmul.mubr.bf16.gmra.mrb[0].mxu0 %v2737
        %v2871 = vpop.f32.mrb[0].mxu0
        %v2872 = vadd.f32 0.0, %v2871
        %v2873 = vpop.f32.mrb[0].mxu0
        %v2874 = vpop.f32.mrb[0].mxu0
        %v2875 = vadd.f32 0.0, %v2874
        %v2876 = vpop.f32.mrb[0].mxu0
        %2877 = vmatprep.mubr.bf16.mxu0 0
        %2878 = vmatmul.mubr.bf16.gmra.mrb[0].mxu0 %v2740
        %v2879 = vpop.f32.mrb[0].mxu0
        %v2880 = vadd.f32 0.0, %v2879
        %v2881 = vpop.f32.mrb[0].mxu0
        %v2882 = vpop.f32.mrb[0].mxu0
        %v2883 = vadd.f32 0.0, %v2882
        %v2884 = vpop.f32.mrb[0].mxu0
        %2885 = vmatprep.mubr.bf16.mxu0 0
        %2886 = vmatmul.mubr.bf16.gmra.mrb[0].mxu0 %v2743
        %v2887 = vpop.f32.mrb[0].mxu0
        %v2888 = vadd.f32 0.0, %v2887
        %v2889 = vpop.f32.mrb[0].mxu0
        %v2890 = vpop.f32.mrb[0].mxu0
        %v2891 = vadd.f32 0.0, %v2890
        %v2892 = vpop.f32.mrb[0].mxu0
        %2893 = vmatprep.mubr.bf16.mxu0 0
        %2894 = vmatmul.mubr.bf16.gmra.mrb[0].mxu0 %v2746
        %v2895 = vpop.f32.mrb[0].mxu0
        %v2896 = vadd.f32 0.0, %v2895
        %v2897 = vpop.f32.mrb[0].mxu0
        %v2898 = vpop.f32.mrb[0].mxu0
        %v2899 = vadd.f32 0.0, %v2898
        %v2900 = vpop.f32.mrb[0].mxu0
        %2901 = vmatprep.mubr.bf16.mxu0 0
        %2902 = vmatmul.mubr.bf16.gmra.mrb[0].mxu0 %v2749
        %v2903 = vpop.f32.mrb[0].mxu0
        %v2904 = vadd.f32 0.0, %v2903
        %v2905 = vpop.f32.mrb[0].mxu0
        %v2906 = vpop.f32.mrb[0].mxu0
        %v2907 = vadd.f32 0.0, %v2906
        %v2908 = vpop.f32.mrb[0].mxu0
        %2909 = vmatprep.mubr.bf16.mxu0 0
        %2910 = vmatmul.mubr.bf16.gmra.mrb[0].mxu0 %v2752
        %v2911 = vpop.f32.mrb[0].mxu0
        %v2912 = vadd.f32 0.0, %v2911
        %v2913 = vpop.f32.mrb[0].mxu0
        %v2914 = vpop.f32.mrb[0].mxu0
        %v2915 = vadd.f32 0.0, %v2914
        %v2916 = vpop.f32.mrb[0].mxu0
        %2917 = vdwg.mxu0
        %v2918 = vadd.f32 %v2189, %v2792
        %v2919 = vadd.f32 %v2190, %v2795
        %v2920 = vadd.f32 %v2191, %v2800
        %v2921 = vadd.f32 %v2192, %v2803
        %v2922 = vadd.f32 %v2193, %v2808
        %v2923 = vadd.f32 %v2194, %v2811
        %v2924 = vadd.f32 %v2195, %v2816
        %v2925 = vadd.f32 %v2196, %v2819
        %v2926 = vadd.f32 %v2197, %v2824
        %v2927 = vadd.f32 %v2198, %v2827
        %v2928 = vadd.f32 %v2199, %v2832
        %v2929 = vadd.f32 %v2200, %v2835
        %v2930 = vadd.f32 %v2201, %v2840
        %v2931 = vadd.f32 %v2202, %v2843
        %v2932 = vadd.f32 %v2203, %v2848
        %v2933 = vadd.f32 %v2204, %v2851
        %v2934 = vadd.f32 %v2205, %v2856
        %v2935 = vadd.f32 %v2206, %v2859
        %v2936 = vadd.f32 %v2207, %v2864
        %v2937 = vadd.f32 %v2208, %v2867
        %v2938 = vadd.f32 %v2209, %v2872
        %v2939 = vadd.f32 %v2210, %v2875
        %v2940 = vadd.f32 %v2211, %v2880
        %v2941 = vadd.f32 %v2212, %v2883
        %v2942 = vadd.f32 %v2213, %v2888
        %v2943 = vadd.f32 %v2214, %v2891
        %v2944 = vadd.f32 %v2215, %v2896
        %v2945 = vadd.f32 %v2216, %v2899
        %v2946 = vadd.f32 %v2217, %v2904
        %v2947 = vadd.f32 %v2218, %v2907
        %v2948 = vadd.f32 %v2219, %v2912
        %v2949 = vadd.f32 %v2220, %v2915
        %v2950 = vld [vmem:[%s1853] sm:$0xe]
        %v2951 = vld [vmem:[%s1853 + $0xc] sm:$0xe]
        %v2952 = vld [vmem:[%s1853 + $0x18] sm:$0xe]
        %v2953 = vld [vmem:[%s1853 + $0x24] sm:$0xe]
        %v2954 = vld [vmem:[%s1853 + $0x30] sm:$0xe]
        %v2955 = vld [vmem:[%s1853 + $0x3c] sm:$0xe]
        %v2956 = vld [vmem:[%s1853 + $0x48] sm:$0xe]
        %v2957 = vld [vmem:[%s1853 + $0x54] sm:$0xe]
        %v2958 = vld [vmem:[%s1853 + $0x60] sm:$0xe]
        %v2959 = vld [vmem:[%s1853 + $0x6c] sm:$0xe]
        %v2960 = vld [vmem:[%s1853 + $0x78] sm:$0xe]
        %v2961 = vld [vmem:[%s1853 + $0x84] sm:$0xe]
        %v2962 = vld [vmem:[%s1853 + $0x90] sm:$0xe]
        %v2963 = vld [vmem:[%s1853 + $0x9c] sm:$0xe]
        %v2964 = vld [vmem:[%s1853 + $0xa8] sm:$0xe]
        %v2965 = vld [vmem:[%s1853 + $0xb4] sm:$0xe]
        %v3014 = vrot.slane %v2950, 5
        %v3015 = vrot.slane %v3014, 4
        %v3016 = vrot.slane %v2222, 5
        %v3017 = vsel %vm1440, %v3015, %v3016
        %v3018 = vrot.slane %v3016, 4
        %v3019 = vrot.slane %v2223, 5
        %v3020 = vsel %vm1440, %v3018, %v3019
        %v3021 = vrot.slane %v2951, 5
        %v3022 = vrot.slane %v3021, 4
        %v3023 = vrot.slane %v2225, 5
        %v3024 = vsel %vm1440, %v3022, %v3023
        %v3025 = vrot.slane %v3023, 4
        %v3026 = vrot.slane %v2226, 5
        %v3027 = vsel %vm1440, %v3025, %v3026
        %v3028 = vrot.slane %v2952, 5
        %v3029 = vrot.slane %v3028, 4
        %v3030 = vrot.slane %v2228, 5
        %v3031 = vsel %vm1440, %v3029, %v3030
        %v3032 = vrot.slane %v3030, 4
        %v3033 = vrot.slane %v2229, 5
        %v3034 = vsel %vm1440, %v3032, %v3033
        %v3035 = vrot.slane %v2953, 5
        %v3036 = vrot.slane %v3035, 4
        %v3037 = vrot.slane %v2231, 5
        %v3038 = vsel %vm1440, %v3036, %v3037
        %v3039 = vrot.slane %v3037, 4
        %v3040 = vrot.slane %v2232, 5
        %v3041 = vsel %vm1440, %v3039, %v3040
        %v3042 = vrot.slane %v2954, 5
        %v3043 = vrot.slane %v3042, 4
        %v3044 = vrot.slane %v2234, 5
        %v3045 = vsel %vm1440, %v3043, %v3044
        %v3046 = vrot.slane %v3044, 4
        %v3047 = vrot.slane %v2235, 5
        %v3048 = vsel %vm1440, %v3046, %v3047
        %v3049 = vrot.slane %v2955, 5
        %v3050 = vrot.slane %v3049, 4
        %v3051 = vrot.slane %v2237, 5
        %v3052 = vsel %vm1440, %v3050, %v3051
        %v3053 = vrot.slane %v3051, 4
        %v3054 = vrot.slane %v2238, 5
        %v3055 = vsel %vm1440, %v3053, %v3054
        %v3056 = vrot.slane %v2956, 5
        %v3057 = vrot.slane %v3056, 4
        %v3058 = vrot.slane %v2240, 5
        %v3059 = vsel %vm1440, %v3057, %v3058
        %v3060 = vrot.slane %v3058, 4
        %v3061 = vrot.slane %v2241, 5
        %v3062 = vsel %vm1440, %v3060, %v3061
        %v3063 = vrot.slane %v2957, 5
        %v3064 = vrot.slane %v3063, 4
        %v3065 = vrot.slane %v2243, 5
        %v3066 = vsel %vm1440, %v3064, %v3065
        %v3067 = vrot.slane %v3065, 4
        %v3068 = vrot.slane %v2244, 5
        %v3069 = vsel %vm1440, %v3067, %v3068
        %v3070 = vrot.slane %v2958, 5
        %v3071 = vrot.slane %v3070, 4
        %v3072 = vrot.slane %v2246, 5
        %v3073 = vsel %vm1440, %v3071, %v3072
        %v3074 = vrot.slane %v3072, 4
        %v3075 = vrot.slane %v2247, 5
        %v3076 = vsel %vm1440, %v3074, %v3075
        %v3077 = vrot.slane %v2959, 5
        %v3078 = vrot.slane %v3077, 4
        %v3079 = vrot.slane %v2249, 5
        %v3080 = vsel %vm1440, %v3078, %v3079
        %v3081 = vrot.slane %v3079, 4
        %v3082 = vrot.slane %v2250, 5
        %v3083 = vsel %vm1440, %v3081, %v3082
        %v3084 = vrot.slane %v2960, 5
        %v3085 = vrot.slane %v3084, 4
        %v3086 = vrot.slane %v2252, 5
        %v3087 = vsel %vm1440, %v3085, %v3086
        %v3088 = vrot.slane %v3086, 4
        %v3089 = vrot.slane %v2253, 5
        %v3090 = vsel %vm1440, %v3088, %v3089
        %v3091 = vrot.slane %v2961, 5
        %v3092 = vrot.slane %v3091, 4
        %v3093 = vrot.slane %v2255, 5
        %v3094 = vsel %vm1440, %v3092, %v3093
        %v3095 = vrot.slane %v3093, 4
        %v3096 = vrot.slane %v2256, 5
        %v3097 = vsel %vm1440, %v3095, %v3096
        %v3098 = vrot.slane %v2962, 5
        %v3099 = vrot.slane %v3098, 4
        %v3100 = vrot.slane %v2258, 5
        %v3101 = vsel %vm1440, %v3099, %v3100
        %v3102 = vrot.slane %v3100, 4
        %v3103 = vrot.slane %v2259, 5
        %v3104 = vsel %vm1440, %v3102, %v3103
        %v3105 = vrot.slane %v2963, 5
        %v3106 = vrot.slane %v3105, 4
        %v3107 = vrot.slane %v2261, 5
        %v3108 = vsel %vm1440, %v3106, %v3107
        %v3109 = vrot.slane %v3107, 4
        %v3110 = vrot.slane %v2262, 5
        %v3111 = vsel %vm1440, %v3109, %v3110
        %v3112 = vrot.slane %v2964, 5
        %v3113 = vrot.slane %v3112, 4
        %v3114 = vrot.slane %v2264, 5
        %v3115 = vsel %vm1440, %v3113, %v3114
        %v3116 = vrot.slane %v3114, 4
        %v3117 = vrot.slane %v2265, 5
        %v3118 = vsel %vm1440, %v3116, %v3117
        %v3119 = vrot.slane %v2965, 5
        %v3120 = vrot.slane %v3119, 4
        %v3121 = vrot.slane %v2267, 5
        %v3122 = vsel %vm1440, %v3120, %v3121
        %v3123 = vrot.slane %v3121, 4
        %v3124 = vrot.slane %v2268, 5
        %v3125 = vsel %vm1440, %v3123, %v3124
        %v3126 = vld [vmem:[%s1 + $0x4] sm:$0x8]
        %v3127 = vld [vmem:[%s1 + $0x8] sm:$0x1]
        %v3128 = vunpack.c.l.b16 %v3017
        %v3129 = vunpack.c.l.b16 %v3020
        %v3130 = vunpack.c.l.b16 %v3024
        %v3131 = vunpack.c.l.b16 %v3027
        %v3132 = vunpack.c.l.b16 %v3031
        %v3133 = vunpack.c.l.b16 %v3034
        %v3134 = vunpack.c.l.b16 %v3038
        %v3135 = vunpack.c.l.b16 %v3041
        %v3136 = vunpack.c.l.b16 %v3045
        %v3137 = vunpack.c.l.b16 %v3048
        %v3138 = vunpack.c.l.b16 %v3052
        %v3139 = vunpack.c.l.b16 %v3055
        %v3140 = vunpack.c.l.b16 %v3059
        %v3141 = vunpack.c.l.b16 %v3062
        %v3142 = vunpack.c.l.b16 %v3066
        %v3143 = vunpack.c.l.b16 %v3069
        %v3144 = vunpack.c.l.b16 %v3073
        %v3145 = vunpack.c.l.b16 %v3076
        %v3146 = vunpack.c.l.b16 %v3080
        %v3147 = vunpack.c.l.b16 %v3083
        %v3148 = vunpack.c.l.b16 %v3087
        %v3149 = vunpack.c.l.b16 %v3090
        %v3150 = vunpack.c.l.b16 %v3094
        %v3151 = vunpack.c.l.b16 %v3097
        %v3152 = vunpack.c.l.b16 %v3101
        %v3153 = vunpack.c.l.b16 %v3104
        %v3154 = vunpack.c.l.b16 %v3108
        %v3155 = vunpack.c.l.b16 %v3111
        %v3156 = vunpack.c.l.b16 %v3115
        %v3157 = vunpack.c.l.b16 %v3118
        %v3158 = vunpack.c.l.b16 %v3122
        %v3159 = vunpack.c.l.b16 %v3125
        %v3160 = vpack.c.b16 %v3129, %v3128
        %v3161 = vpack.c.b16 %v3131, %v3130
        %v3162 = vpack.c.b16 %v3133, %v3132
        %v3163 = vpack.c.b16 %v3135, %v3134
        %v3164 = vpack.c.b16 %v3137, %v3136
        %v3165 = vpack.c.b16 %v3139, %v3138
        %v3166 = vpack.c.b16 %v3141, %v3140
        %v3167 = vpack.c.b16 %v3143, %v3142
        %v3168 = vpack.c.b16 %v3145, %v3144
        %v3169 = vpack.c.b16 %v3147, %v3146
        %v3170 = vpack.c.b16 %v3149, %v3148
        %v3171 = vpack.c.b16 %v3151, %v3150
        %v3172 = vpack.c.b16 %v3153, %v3152
        %v3173 = vpack.c.b16 %v3155, %v3154
        %v3174 = vpack.c.b16 %v3157, %v3156
        %v3175 = vpack.c.b16 %v3159, %v3158
        %v3178 = vunpack.c.l.b16 %v3126
        %v3179 = vunpack.c.l.b16 %v3127
        %v3180 = vpack.c.b16 %v3179, %v3178
        %v3182 = vshrl.u32 %v3180, 16
        %v3184 = vrot.slane %v3182, 3
        %v3185 = vshll.u32 %v3180, 16
        %v3187 = vrot.slane %v3185, 4
        %v3188 = vor.u32 %v3184, %v3187
        %v3190 = vsel %vm881, %v3160, 0
        %v3193 = vsel %vm881, %v3161, 0
        %v3196 = vsel %vm881, %v3162, 0
        %v3199 = vsel %vm881, %v3163, 0
        %v3202 = vsel %vm881, %v3164, 0
        %v3205 = vsel %vm881, %v3165, 0
        %v3208 = vsel %vm881, %v3166, 0
        %v3211 = vsel %vm881, %v3167, 0
        %v3214 = vsel %vm881, %v3168, 0
        %v3217 = vsel %vm881, %v3169, 0
        %v3220 = vsel %vm881, %v3170, 0
        %v3223 = vsel %vm881, %v3171, 0
        %v3226 = vsel %vm881, %v3172, 0
        %v3229 = vsel %vm881, %v3173, 0
        %v3232 = vsel %vm881, %v3174, 0
        %v3235 = vsel %vm881, %v3175, 0
        %v3238 = vand.u32 %v3188, %v933
        %3240 = vmatprep.subr.bf16.mxu0 0
        %3241 = vmatpush1.bf16.msra.mxu0 %v3238
        %3242 = vmatprep.subr.bf16.mxu0 0
        %3243 = vmatpush1.bf16.msra.mxu0 0
        %3244 = vmatprep.subr.bf16.mxu0 0
        %3245 = vmatpush1.bf16.msra.mxu0 0
        %3246 = vmatprep.subr.bf16.mxu0 0
        %3247 = vmatpush1.bf16.msra.mxu0 0
        %3248 = vmatprep.subr.bf16.mxu0 0
        %3249 = vmatpush1.bf16.msra.mxu0 0
        %3250 = vmatprep.subr.bf16.mxu0 0
        %3251 = vmatpush1.bf16.msra.mxu0 0
        %3252 = vmatprep.subr.bf16.mxu0 0
        %3253 = vmatpush1.bf16.msra.mxu0 0
        %3254 = vmatprep.subr.bf16.mxu0 0
        %3255 = vmatpush1.bf16.msra.mxu0 0
        %3256 = vmatprep.subr.bf16.mxu0 0
        %3257 = vmatpush1.bf16.msra.mxu0 0
        %3258 = vmatprep.subr.bf16.mxu0 0
        %3259 = vmatpush1.bf16.msra.mxu0 0
        %3260 = vmatprep.subr.bf16.mxu0 0
        %3261 = vmatpush1.bf16.msra.mxu0 0
        %3262 = vmatprep.subr.bf16.mxu0 0
        %3263 = vmatpush1.bf16.msra.mxu0 0
        %3264 = vmatprep.subr.bf16.mxu0 0
        %3265 = vmatpush1.bf16.msra.mxu0 0
        %3266 = vmatprep.subr.bf16.mxu0 0
        %3267 = vmatpush1.bf16.msra.mxu0 0
        %3268 = vmatprep.subr.bf16.mxu0 0
        %3269 = vmatpush1.bf16.msra.mxu0 0
        %3270 = vmatprep.subr.bf16.mxu0 0
        %3271 = vmatpush1.bf16.msra.mxu0 0
        %3272 = vmatprep.mubr.bf16.mxu0 0
        %3273 = vmatmul.mubr.bf16.gmra.mrb[0].mxu0 %v3190
        %v3274 = vpop.f32.mrb[0].mxu0
        %v3275 = vadd.f32 0.0, %v3274
        %v3276 = vpop.f32.mrb[0].mxu0
        %v3277 = vpop.f32.mrb[0].mxu0
        %v3278 = vadd.f32 0.0, %v3277
        %v3279 = vpop.f32.mrb[0].mxu0
        %3280 = vmatprep.mubr.bf16.mxu0 0
        %3281 = vmatmul.mubr.bf16.gmra.mrb[0].mxu0 %v3193
        %v3282 = vpop.f32.mrb[0].mxu0
        %v3283 = vadd.f32 0.0, %v3282
        %v3284 = vpop.f32.mrb[0].mxu0
        %v3285 = vpop.f32.mrb[0].mxu0
        %v3286 = vadd.f32 0.0, %v3285
        %v3287 = vpop.f32.mrb[0].mxu0
        %3288 = vmatprep.mubr.bf16.mxu0 0
        %3289 = vmatmul.mubr.bf16.gmra.mrb[0].mxu0 %v3196
        %v3290 = vpop.f32.mrb[0].mxu0
        %v3291 = vadd.f32 0.0, %v3290
        %v3292 = vpop.f32.mrb[0].mxu0
        %v3293 = vpop.f32.mrb[0].mxu0
        %v3294 = vadd.f32 0.0, %v3293
        %v3295 = vpop.f32.mrb[0].mxu0
        %3296 = vmatprep.mubr.bf16.mxu0 0
        %3297 = vmatmul.mubr.bf16.gmra.mrb[0].mxu0 %v3199
        %v3298 = vpop.f32.mrb[0].mxu0
        %v3299 = vadd.f32 0.0, %v3298
        %v3300 = vpop.f32.mrb[0].mxu0
        %v3301 = vpop.f32.mrb[0].mxu0
        %v3302 = vadd.f32 0.0, %v3301
        %v3303 = vpop.f32.mrb[0].mxu0
        %3304 = vmatprep.mubr.bf16.mxu0 0
        %3305 = vmatmul.mubr.bf16.gmra.mrb[0].mxu0 %v3202
        %v3306 = vpop.f32.mrb[0].mxu0
        %v3307 = vadd.f32 0.0, %v3306
        %v3308 = vpop.f32.mrb[0].mxu0
        %v3309 = vpop.f32.mrb[0].mxu0
        %v3310 = vadd.f32 0.0, %v3309
        %v3311 = vpop.f32.mrb[0].mxu0
        %3312 = vmatprep.mubr.bf16.mxu0 0
        %3313 = vmatmul.mubr.bf16.gmra.mrb[0].mxu0 %v3205
        %v3314 = vpop.f32.mrb[0].mxu0
        %v3315 = vadd.f32 0.0, %v3314
        %v3316 = vpop.f32.mrb[0].mxu0
        %v3317 = vpop.f32.mrb[0].mxu0
        %v3318 = vadd.f32 0.0, %v3317
        %v3319 = vpop.f32.mrb[0].mxu0
        %3320 = vmatprep.mubr.bf16.mxu0 0
        %3321 = vmatmul.mubr.bf16.gmra.mrb[0].mxu0 %v3208
        %v3322 = vpop.f32.mrb[0].mxu0
        %v3323 = vadd.f32 0.0, %v3322
        %v3324 = vpop.f32.mrb[0].mxu0
        %v3325 = vpop.f32.mrb[0].mxu0
        %v3326 = vadd.f32 0.0, %v3325
        %v3327 = vpop.f32.mrb[0].mxu0
        %3328 = vmatprep.mubr.bf16.mxu0 0
        %3329 = vmatmul.mubr.bf16.gmra.mrb[0].mxu0 %v3211
        %v3330 = vpop.f32.mrb[0].mxu0
        %v3331 = vadd.f32 0.0, %v3330
        %v3332 = vpop.f32.mrb[0].mxu0
        %v3333 = vpop.f32.mrb[0].mxu0
        %v3334 = vadd.f32 0.0, %v3333
        %v3335 = vpop.f32.mrb[0].mxu0
        %3336 = vmatprep.mubr.bf16.mxu0 0
        %3337 = vmatmul.mubr.bf16.gmra.mrb[0].mxu0 %v3214
        %v3338 = vpop.f32.mrb[0].mxu0
        %v3339 = vadd.f32 0.0, %v3338
        %v3340 = vpop.f32.mrb[0].mxu0
        %v3341 = vpop.f32.mrb[0].mxu0
        %v3342 = vadd.f32 0.0, %v3341
        %v3343 = vpop.f32.mrb[0].mxu0
        %3344 = vmatprep.mubr.bf16.mxu0 0
        %3345 = vmatmul.mubr.bf16.gmra.mrb[0].mxu0 %v3217
        %v3346 = vpop.f32.mrb[0].mxu0
        %v3347 = vadd.f32 0.0, %v3346
        %v3348 = vpop.f32.mrb[0].mxu0
        %v3349 = vpop.f32.mrb[0].mxu0
        %v3350 = vadd.f32 0.0, %v3349
        %v3351 = vpop.f32.mrb[0].mxu0
        %3352 = vmatprep.mubr.bf16.mxu0 0
        %3353 = vmatmul.mubr.bf16.gmra.mrb[0].mxu0 %v3220
        %v3354 = vpop.f32.mrb[0].mxu0
        %v3355 = vadd.f32 0.0, %v3354
        %v3356 = vpop.f32.mrb[0].mxu0
        %v3357 = vpop.f32.mrb[0].mxu0
        %v3358 = vadd.f32 0.0, %v3357
        %v3359 = vpop.f32.mrb[0].mxu0
        %3360 = vmatprep.mubr.bf16.mxu0 0
        %3361 = vmatmul.mubr.bf16.gmra.mrb[0].mxu0 %v3223
        %v3362 = vpop.f32.mrb[0].mxu0
        %v3363 = vadd.f32 0.0, %v3362
        %v3364 = vpop.f32.mrb[0].mxu0
        %v3365 = vpop.f32.mrb[0].mxu0
        %v3366 = vadd.f32 0.0, %v3365
        %v3367 = vpop.f32.mrb[0].mxu0
        %3368 = vmatprep.mubr.bf16.mxu0 0
        %3369 = vmatmul.mubr.bf16.gmra.mrb[0].mxu0 %v3226
        %v3370 = vpop.f32.mrb[0].mxu0
        %v3371 = vadd.f32 0.0, %v3370
        %v3372 = vpop.f32.mrb[0].mxu0
        %v3373 = vpop.f32.mrb[0].mxu0
        %v3374 = vadd.f32 0.0, %v3373
        %v3375 = vpop.f32.mrb[0].mxu0
        %3376 = vmatprep.mubr.bf16.mxu0 0
        %3377 = vmatmul.mubr.bf16.gmra.mrb[0].mxu0 %v3229
        %v3378 = vpop.f32.mrb[0].mxu0
        %v3379 = vadd.f32 0.0, %v3378
        %v3380 = vpop.f32.mrb[0].mxu0
        %v3381 = vpop.f32.mrb[0].mxu0
        %v3382 = vadd.f32 0.0, %v3381
        %v3383 = vpop.f32.mrb[0].mxu0
        %3384 = vmatprep.mubr.bf16.mxu0 0
        %3385 = vmatmul.mubr.bf16.gmra.mrb[0].mxu0 %v3232
        %v3386 = vpop.f32.mrb[0].mxu0
        %v3387 = vadd.f32 0.0, %v3386
        %v3388 = vpop.f32.mrb[0].mxu0
        %v3389 = vpop.f32.mrb[0].mxu0
        %v3390 = vadd.f32 0.0, %v3389
        %v3391 = vpop.f32.mrb[0].mxu0
        %3392 = vmatprep.mubr.bf16.mxu0 0
        %3393 = vmatmul.mubr.bf16.gmra.mrb[0].mxu0 %v3235
        %v3394 = vpop.f32.mrb[0].mxu0
        %v3395 = vadd.f32 0.0, %v3394
        %v3396 = vpop.f32.mrb[0].mxu0
        %v3397 = vpop.f32.mrb[0].mxu0
        %v3398 = vadd.f32 0.0, %v3397
        %v3399 = vpop.f32.mrb[0].mxu0
        %3400 = vdwg.mxu0
        %v3401 = vadd.f32 %v2918, %v3275
        %v3402 = vadd.f32 %v2919, %v3278
        %v3403 = vadd.f32 %v2920, %v3283
        %v3404 = vadd.f32 %v2921, %v3286
        %v3405 = vadd.f32 %v2922, %v3291
        %v3406 = vadd.f32 %v2923, %v3294
        %v3407 = vadd.f32 %v2924, %v3299
        %v3408 = vadd.f32 %v2925, %v3302
        %v3409 = vadd.f32 %v2926, %v3307
        %v3410 = vadd.f32 %v2927, %v3310
        %v3411 = vadd.f32 %v2928, %v3315
        %v3412 = vadd.f32 %v2929, %v3318
        %v3413 = vadd.f32 %v2930, %v3323
        %v3414 = vadd.f32 %v2931, %v3326
        %v3415 = vadd.f32 %v2932, %v3331
        %v3416 = vadd.f32 %v2933, %v3334
        %v3417 = vadd.f32 %v2934, %v3339
        %v3418 = vadd.f32 %v2935, %v3342
        %v3419 = vadd.f32 %v2936, %v3347
        %v3420 = vadd.f32 %v2937, %v3350
        %v3421 = vadd.f32 %v2938, %v3355
        %v3422 = vadd.f32 %v2939, %v3358
        %v3423 = vadd.f32 %v2940, %v3363
        %v3424 = vadd.f32 %v2941, %v3366
        %v3425 = vadd.f32 %v2942, %v3371
        %v3426 = vadd.f32 %v2943, %v3374
        %v3427 = vadd.f32 %v2944, %v3379
        %v3428 = vadd.f32 %v2945, %v3382
        %v3429 = vadd.f32 %v2946, %v3387
        %v3430 = vadd.f32 %v2947, %v3390
        %v3431 = vadd.f32 %v2948, %v3395
        %v3432 = vadd.f32 %v2949, %v3398
        %s3433 = scalar_lea.vmem %s383, 24
        %v3434 = vld [vmem:[%s3433] sm:$0xf]
        %v3435 = vld [vmem:[%s3433 + $0x4] sm:$0xf]
        %v3436 = vld [vmem:[%s3433 + $0xc] sm:$0xf]
        %v3437 = vld [vmem:[%s3433 + $0x10] sm:$0xf]
        %v3438 = vld [vmem:[%s3433 + $0x18] sm:$0xf]
        %v3439 = vld [vmem:[%s3433 + $0x1c] sm:$0xf]
        %v3440 = vld [vmem:[%s3433 + $0x24] sm:$0xf]
        %v3441 = vld [vmem:[%s3433 + $0x28] sm:$0xf]
        %v3442 = vld [vmem:[%s3433 + $0x30] sm:$0xf]
        %v3443 = vld [vmem:[%s3433 + $0x34] sm:$0xf]
        %v3444 = vld [vmem:[%s3433 + $0x3c] sm:$0xf]
        %v3445 = vld [vmem:[%s3433 + $0x40] sm:$0xf]
        %v3446 = vld [vmem:[%s3433 + $0x48] sm:$0xf]
        %v3447 = vld [vmem:[%s3433 + $0x4c] sm:$0xf]
        %v3448 = vld [vmem:[%s3433 + $0x54] sm:$0xf]
        %v3449 = vld [vmem:[%s3433 + $0x58] sm:$0xf]
        %v3450 = vld [vmem:[%s3433 + $0x60] sm:$0xf]
        %v3451 = vld [vmem:[%s3433 + $0x64] sm:$0xf]
        %v3452 = vld [vmem:[%s3433 + $0x6c] sm:$0xf]
        %v3453 = vld [vmem:[%s3433 + $0x70] sm:$0xf]
        %v3454 = vld [vmem:[%s3433 + $0x78] sm:$0xf]
        %v3455 = vld [vmem:[%s3433 + $0x7c] sm:$0xf]
        %v3456 = vld [vmem:[%s3433 + $0x84] sm:$0xf]
        %v3457 = vld [vmem:[%s3433 + $0x88] sm:$0xf]
        %v3458 = vld [vmem:[%s3433 + $0x90] sm:$0xf]
        %v3459 = vld [vmem:[%s3433 + $0x94] sm:$0xf]
        %v3460 = vld [vmem:[%s3433 + $0x9c] sm:$0xf]
        %v3461 = vld [vmem:[%s3433 + $0xa0] sm:$0xf]
        %v3462 = vld [vmem:[%s3433 + $0xa8] sm:$0xf]
        %v3463 = vld [vmem:[%s3433 + $0xac] sm:$0xf]
        %v3464 = vld [vmem:[%s3433 + $0xb4] sm:$0xf]
        %v3465 = vld [vmem:[%s3433 + $0xb8] sm:$0xf]
        %v3466 = vld [vmem:[%s1 + $0x8] sm:$0x6]
        %v3499 = vunpack.c.l.b16 %v3434
        %v3500 = vunpack.c.l.b16 %v3435
        %v3501 = vunpack.c.l.b16 %v3436
        %v3502 = vunpack.c.l.b16 %v3437
        %v3503 = vunpack.c.l.b16 %v3438
        %v3504 = vunpack.c.l.b16 %v3439
        %v3505 = vunpack.c.l.b16 %v3440
        %v3506 = vunpack.c.l.b16 %v3441
        %v3507 = vunpack.c.l.b16 %v3442
        %v3508 = vunpack.c.l.b16 %v3443
        %v3509 = vunpack.c.l.b16 %v3444
        %v3510 = vunpack.c.l.b16 %v3445
        %v3511 = vunpack.c.l.b16 %v3446
        %v3512 = vunpack.c.l.b16 %v3447
        %v3513 = vunpack.c.l.b16 %v3448
        %v3514 = vunpack.c.l.b16 %v3449
        %v3515 = vunpack.c.l.b16 %v3450
        %v3516 = vunpack.c.l.b16 %v3451
        %v3517 = vunpack.c.l.b16 %v3452
        %v3518 = vunpack.c.l.b16 %v3453
        %v3519 = vunpack.c.l.b16 %v3454
        %v3520 = vunpack.c.l.b16 %v3455
        %v3521 = vunpack.c.l.b16 %v3456
        %v3522 = vunpack.c.l.b16 %v3457
        %v3523 = vunpack.c.l.b16 %v3458
        %v3524 = vunpack.c.l.b16 %v3459
        %v3525 = vunpack.c.l.b16 %v3460
        %v3526 = vunpack.c.l.b16 %v3461
        %v3527 = vunpack.c.l.b16 %v3462
        %v3528 = vunpack.c.l.b16 %v3463
        %v3529 = vunpack.c.l.b16 %v3464
        %v3530 = vunpack.c.l.b16 %v3465
        %v3531 = vpack.c.b16 %v3500, %v3499
        %v3532 = vpack.c.b16 %v3502, %v3501
        %v3533 = vpack.c.b16 %v3504, %v3503
        %v3534 = vpack.c.b16 %v3506, %v3505
        %v3535 = vpack.c.b16 %v3508, %v3507
        %v3536 = vpack.c.b16 %v3510, %v3509
        %v3537 = vpack.c.b16 %v3512, %v3511
        %v3538 = vpack.c.b16 %v3514, %v3513
        %v3539 = vpack.c.b16 %v3516, %v3515
        %v3540 = vpack.c.b16 %v3518, %v3517
        %v3541 = vpack.c.b16 %v3520, %v3519
        %v3542 = vpack.c.b16 %v3522, %v3521
        %v3543 = vpack.c.b16 %v3524, %v3523
        %v3544 = vpack.c.b16 %v3526, %v3525
        %v3545 = vpack.c.b16 %v3528, %v3527
        %v3546 = vpack.c.b16 %v3530, %v3529
        %v3548 = vunpack.c.l.b16 %v3466
        %v3549 = vpack.c.b16 %v3548, %v3548
        %v3550 = vrot.slane %v3549, 1
        %v3552 = vsel %vm881, %v3531, 0
        %v3555 = vsel %vm881, %v3532, 0
        %v3558 = vsel %vm881, %v3533, 0
        %v3561 = vsel %vm881, %v3534, 0
        %v3564 = vsel %vm881, %v3535, 0
        %v3567 = vsel %vm881, %v3536, 0
        %v3570 = vsel %vm881, %v3537, 0
        %v3573 = vsel %vm881, %v3538, 0
        %v3576 = vsel %vm881, %v3539, 0
        %v3579 = vsel %vm881, %v3540, 0
        %v3582 = vsel %vm881, %v3541, 0
        %v3585 = vsel %vm881, %v3542, 0
        %v3588 = vsel %vm881, %v3543, 0
        %v3591 = vsel %vm881, %v3544, 0
        %v3594 = vsel %vm881, %v3545, 0
        %v3597 = vsel %vm881, %v3546, 0
        %v3600 = vand.u32 %v3550, %v933
        %3602 = vmatprep.subr.bf16.mxu0 0
        %3603 = vmatpush1.bf16.msra.mxu0 %v3600
        %3604 = vmatprep.subr.bf16.mxu0 0
        %3605 = vmatpush1.bf16.msra.mxu0 0
        %3606 = vmatprep.subr.bf16.mxu0 0
        %3607 = vmatpush1.bf16.msra.mxu0 0
        %3608 = vmatprep.subr.bf16.mxu0 0
        %3609 = vmatpush1.bf16.msra.mxu0 0
        %3610 = vmatprep.subr.bf16.mxu0 0
        %3611 = vmatpush1.bf16.msra.mxu0 0
        %3612 = vmatprep.subr.bf16.mxu0 0
        %3613 = vmatpush1.bf16.msra.mxu0 0
        %3614 = vmatprep.subr.bf16.mxu0 0
        %3615 = vmatpush1.bf16.msra.mxu0 0
        %3616 = vmatprep.subr.bf16.mxu0 0
        %3617 = vmatpush1.bf16.msra.mxu0 0
        %3618 = vmatprep.subr.bf16.mxu0 0
        %3619 = vmatpush1.bf16.msra.mxu0 0
        %3620 = vmatprep.subr.bf16.mxu0 0
        %3621 = vmatpush1.bf16.msra.mxu0 0
        %3622 = vmatprep.subr.bf16.mxu0 0
        %3623 = vmatpush1.bf16.msra.mxu0 0
        %3624 = vmatprep.subr.bf16.mxu0 0
        %3625 = vmatpush1.bf16.msra.mxu0 0
        %3626 = vmatprep.subr.bf16.mxu0 0
        %3627 = vmatpush1.bf16.msra.mxu0 0
        %3628 = vmatprep.subr.bf16.mxu0 0
        %3629 = vmatpush1.bf16.msra.mxu0 0
        %3630 = vmatprep.subr.bf16.mxu0 0
        %3631 = vmatpush1.bf16.msra.mxu0 0
        %3632 = vmatprep.subr.bf16.mxu0 0
        %3633 = vmatpush1.bf16.msra.mxu0 0
        %3634 = vmatprep.mubr.bf16.mxu0 0
        %3635 = vmatmul.mubr.bf16.gmra.mrb[0].mxu0 %v3552
        %v3636 = vpop.f32.mrb[0].mxu0
        %v3637 = vadd.f32 0.0, %v3636
        %v3638 = vpop.f32.mrb[0].mxu0
        %v3639 = vpop.f32.mrb[0].mxu0
        %v3640 = vadd.f32 0.0, %v3639
        %v3641 = vpop.f32.mrb[0].mxu0
        %3642 = vmatprep.mubr.bf16.mxu0 0
        %3643 = vmatmul.mubr.bf16.gmra.mrb[0].mxu0 %v3555
        %v3644 = vpop.f32.mrb[0].mxu0
        %v3645 = vadd.f32 0.0, %v3644
        %v3646 = vpop.f32.mrb[0].mxu0
        %v3647 = vpop.f32.mrb[0].mxu0
        %v3648 = vadd.f32 0.0, %v3647
        %v3649 = vpop.f32.mrb[0].mxu0
        %3650 = vmatprep.mubr.bf16.mxu0 0
        %3651 = vmatmul.mubr.bf16.gmra.mrb[0].mxu0 %v3558
        %v3652 = vpop.f32.mrb[0].mxu0
        %v3653 = vadd.f32 0.0, %v3652
        %v3654 = vpop.f32.mrb[0].mxu0
        %v3655 = vpop.f32.mrb[0].mxu0
        %v3656 = vadd.f32 0.0, %v3655
        %v3657 = vpop.f32.mrb[0].mxu0
        %3658 = vmatprep.mubr.bf16.mxu0 0
        %3659 = vmatmul.mubr.bf16.gmra.mrb[0].mxu0 %v3561
        %v3660 = vpop.f32.mrb[0].mxu0
        %v3661 = vadd.f32 0.0, %v3660
        %v3662 = vpop.f32.mrb[0].mxu0
        %v3663 = vpop.f32.mrb[0].mxu0
        %v3664 = vadd.f32 0.0, %v3663
        %v3665 = vpop.f32.mrb[0].mxu0
        %3666 = vmatprep.mubr.bf16.mxu0 0
        %3667 = vmatmul.mubr.bf16.gmra.mrb[0].mxu0 %v3564
        %v3668 = vpop.f32.mrb[0].mxu0
        %v3669 = vadd.f32 0.0, %v3668
        %v3670 = vpop.f32.mrb[0].mxu0
        %v3671 = vpop.f32.mrb[0].mxu0
        %v3672 = vadd.f32 0.0, %v3671
        %v3673 = vpop.f32.mrb[0].mxu0
        %3674 = vmatprep.mubr.bf16.mxu0 0
        %3675 = vmatmul.mubr.bf16.gmra.mrb[0].mxu0 %v3567
        %v3676 = vpop.f32.mrb[0].mxu0
        %v3677 = vadd.f32 0.0, %v3676
        %v3678 = vpop.f32.mrb[0].mxu0
        %v3679 = vpop.f32.mrb[0].mxu0
        %v3680 = vadd.f32 0.0, %v3679
        %v3681 = vpop.f32.mrb[0].mxu0
        %3682 = vmatprep.mubr.bf16.mxu0 0
        %3683 = vmatmul.mubr.bf16.gmra.mrb[0].mxu0 %v3570
        %v3684 = vpop.f32.mrb[0].mxu0
        %v3685 = vadd.f32 0.0, %v3684
        %v3686 = vpop.f32.mrb[0].mxu0
        %v3687 = vpop.f32.mrb[0].mxu0
        %v3688 = vadd.f32 0.0, %v3687
        %v3689 = vpop.f32.mrb[0].mxu0
        %3690 = vmatprep.mubr.bf16.mxu0 0
        %3691 = vmatmul.mubr.bf16.gmra.mrb[0].mxu0 %v3573
        %v3692 = vpop.f32.mrb[0].mxu0
        %v3693 = vadd.f32 0.0, %v3692
        %v3694 = vpop.f32.mrb[0].mxu0
        %v3695 = vpop.f32.mrb[0].mxu0
        %v3696 = vadd.f32 0.0, %v3695
        %v3697 = vpop.f32.mrb[0].mxu0
        %3698 = vmatprep.mubr.bf16.mxu0 0
        %3699 = vmatmul.mubr.bf16.gmra.mrb[0].mxu0 %v3576
        %v3700 = vpop.f32.mrb[0].mxu0
        %v3701 = vadd.f32 0.0, %v3700
        %v3702 = vpop.f32.mrb[0].mxu0
        %v3703 = vpop.f32.mrb[0].mxu0
        %v3704 = vadd.f32 0.0, %v3703
        %v3705 = vpop.f32.mrb[0].mxu0
        %3706 = vmatprep.mubr.bf16.mxu0 0
        %3707 = vmatmul.mubr.bf16.gmra.mrb[0].mxu0 %v3579
        %v3708 = vpop.f32.mrb[0].mxu0
        %v3709 = vadd.f32 0.0, %v3708
        %v3710 = vpop.f32.mrb[0].mxu0
        %v3711 = vpop.f32.mrb[0].mxu0
        %v3712 = vadd.f32 0.0, %v3711
        %v3713 = vpop.f32.mrb[0].mxu0
        %3714 = vmatprep.mubr.bf16.mxu0 0
        %3715 = vmatmul.mubr.bf16.gmra.mrb[0].mxu0 %v3582
        %v3716 = vpop.f32.mrb[0].mxu0
        %v3717 = vadd.f32 0.0, %v3716
        %v3718 = vpop.f32.mrb[0].mxu0
        %v3719 = vpop.f32.mrb[0].mxu0
        %v3720 = vadd.f32 0.0, %v3719
        %v3721 = vpop.f32.mrb[0].mxu0
        %3722 = vmatprep.mubr.bf16.mxu0 0
        %3723 = vmatmul.mubr.bf16.gmra.mrb[0].mxu0 %v3585
        %v3724 = vpop.f32.mrb[0].mxu0
        %v3725 = vadd.f32 0.0, %v3724
        %v3726 = vpop.f32.mrb[0].mxu0
        %v3727 = vpop.f32.mrb[0].mxu0
        %v3728 = vadd.f32 0.0, %v3727
        %v3729 = vpop.f32.mrb[0].mxu0
        %3730 = vmatprep.mubr.bf16.mxu0 0
        %3731 = vmatmul.mubr.bf16.gmra.mrb[0].mxu0 %v3588
        %v3732 = vpop.f32.mrb[0].mxu0
        %v3733 = vadd.f32 0.0, %v3732
        %v3734 = vpop.f32.mrb[0].mxu0
        %v3735 = vpop.f32.mrb[0].mxu0
        %v3736 = vadd.f32 0.0, %v3735
        %v3737 = vpop.f32.mrb[0].mxu0
        %3738 = vmatprep.mubr.bf16.mxu0 0
        %3739 = vmatmul.mubr.bf16.gmra.mrb[0].mxu0 %v3591
        %v3740 = vpop.f32.mrb[0].mxu0
        %v3741 = vadd.f32 0.0, %v3740
        %v3742 = vpop.f32.mrb[0].mxu0
        %v3743 = vpop.f32.mrb[0].mxu0
        %v3744 = vadd.f32 0.0, %v3743
        %v3745 = vpop.f32.mrb[0].mxu0
        %3746 = vmatprep.mubr.bf16.mxu0 0
        %3747 = vmatmul.mubr.bf16.gmra.mrb[0].mxu0 %v3594
        %v3748 = vpop.f32.mrb[0].mxu0
        %v3749 = vadd.f32 0.0, %v3748
        %v3750 = vpop.f32.mrb[0].mxu0
        %v3751 = vpop.f32.mrb[0].mxu0
        %v3752 = vadd.f32 0.0, %v3751
        %v3753 = vpop.f32.mrb[0].mxu0
        %3754 = vmatprep.mubr.bf16.mxu0 0
        %3755 = vmatmul.mubr.bf16.gmra.mrb[0].mxu0 %v3597
        %v3756 = vpop.f32.mrb[0].mxu0
        %v3757 = vadd.f32 0.0, %v3756
        %v3758 = vpop.f32.mrb[0].mxu0
        %v3759 = vpop.f32.mrb[0].mxu0
        %v3760 = vadd.f32 0.0, %v3759
        %v3761 = vpop.f32.mrb[0].mxu0
        %3762 = vdwg.mxu0
        %v3763 = vadd.f32 %v3401, %v3637
        %v3764 = vadd.f32 %v3402, %v3640
        %v3765 = vadd.f32 %v3403, %v3645
        %v3766 = vadd.f32 %v3404, %v3648
        %v3767 = vadd.f32 %v3405, %v3653
        %v3768 = vadd.f32 %v3406, %v3656
        %v3769 = vadd.f32 %v3407, %v3661
        %v3770 = vadd.f32 %v3408, %v3664
        %v3771 = vadd.f32 %v3409, %v3669
        %v3772 = vadd.f32 %v3410, %v3672
        %v3773 = vadd.f32 %v3411, %v3677
        %v3774 = vadd.f32 %v3412, %v3680
        %v3775 = vadd.f32 %v3413, %v3685
        %v3776 = vadd.f32 %v3414, %v3688
        %v3777 = vadd.f32 %v3415, %v3693
        %v3778 = vadd.f32 %v3416, %v3696
        %v3779 = vadd.f32 %v3417, %v3701
        %v3780 = vadd.f32 %v3418, %v3704
        %v3781 = vadd.f32 %v3419, %v3709
        %v3782 = vadd.f32 %v3420, %v3712
        %v3783 = vadd.f32 %v3421, %v3717
        %v3784 = vadd.f32 %v3422, %v3720
        %v3785 = vadd.f32 %v3423, %v3725
        %v3786 = vadd.f32 %v3424, %v3728
        %v3787 = vadd.f32 %v3425, %v3733
        %v3788 = vadd.f32 %v3426, %v3736
        %v3789 = vadd.f32 %v3427, %v3741
        %v3790 = vadd.f32 %v3428, %v3744
        %v3791 = vadd.f32 %v3429, %v3749
        %v3792 = vadd.f32 %v3430, %v3752
        %v3793 = vadd.f32 %v3431, %v3757
        %v3794 = vadd.f32 %v3432, %v3760
        %v3795 = vld [vmem:[%s3433] sm:$0xf]
        %v3796 = vld [vmem:[%s3433 + $0x4] sm:$0xf]
        %v3797 = vld [vmem:[%s3433 + $0x8] sm:$0x1]
        %v3798 = vld [vmem:[%s3433 + $0xc] sm:$0xf]
        %v3799 = vld [vmem:[%s3433 + $0x10] sm:$0xf]
        %v3800 = vld [vmem:[%s3433 + $0x14] sm:$0x1]
        %v3801 = vld [vmem:[%s3433 + $0x18] sm:$0xf]
        %v3802 = vld [vmem:[%s3433 + $0x1c] sm:$0xf]
        %v3803 = vld [vmem:[%s3433 + $0x20] sm:$0x1]
        %v3804 = vld [vmem:[%s3433 + $0x24] sm:$0xf]
        %v3805 = vld [vmem:[%s3433 + $0x28] sm:$0xf]
        %v3806 = vld [vmem:[%s3433 + $0x2c] sm:$0x1]
        %v3807 = vld [vmem:[%s3433 + $0x30] sm:$0xf]
        %v3808 = vld [vmem:[%s3433 + $0x34] sm:$0xf]
        %v3809 = vld [vmem:[%s3433 + $0x38] sm:$0x1]
        %v3810 = vld [vmem:[%s3433 + $0x3c] sm:$0xf]
        %v3811 = vld [vmem:[%s3433 + $0x40] sm:$0xf]
        %v3812 = vld [vmem:[%s3433 + $0x44] sm:$0x1]
        %v3813 = vld [vmem:[%s3433 + $0x48] sm:$0xf]
        %v3814 = vld [vmem:[%s3433 + $0x4c] sm:$0xf]
        %v3815 = vld [vmem:[%s3433 + $0x50] sm:$0x1]
        %v3816 = vld [vmem:[%s3433 + $0x54] sm:$0xf]
        %v3817 = vld [vmem:[%s3433 + $0x58] sm:$0xf]
        %v3818 = vld [vmem:[%s3433 + $0x5c] sm:$0x1]
        %v3819 = vld [vmem:[%s3433 + $0x60] sm:$0xf]
        %v3820 = vld [vmem:[%s3433 + $0x64] sm:$0xf]
        %v3821 = vld [vmem:[%s3433 + $0x68] sm:$0x1]
        %v3822 = vld [vmem:[%s3433 + $0x6c] sm:$0xf]
        %v3823 = vld [vmem:[%s3433 + $0x70] sm:$0xf]
        %v3824 = vld [vmem:[%s3433 + $0x74] sm:$0x1]
        %v3825 = vld [vmem:[%s3433 + $0x78] sm:$0xf]
        %v3826 = vld [vmem:[%s3433 + $0x7c] sm:$0xf]
        %v3827 = vld [vmem:[%s3433 + $0x80] sm:$0x1]
        %v3828 = vld [vmem:[%s3433 + $0x84] sm:$0xf]
        %v3829 = vld [vmem:[%s3433 + $0x88] sm:$0xf]
        %v3830 = vld [vmem:[%s3433 + $0x8c] sm:$0x1]
        %v3831 = vld [vmem:[%s3433 + $0x90] sm:$0xf]
        %v3832 = vld [vmem:[%s3433 + $0x94] sm:$0xf]
        %v3833 = vld [vmem:[%s3433 + $0x98] sm:$0x1]
        %v3834 = vld [vmem:[%s3433 + $0x9c] sm:$0xf]
        %v3835 = vld [vmem:[%s3433 + $0xa0] sm:$0xf]
        %v3836 = vld [vmem:[%s3433 + $0xa4] sm:$0x1]
        %v3837 = vld [vmem:[%s3433 + $0xa8] sm:$0xf]
        %v3838 = vld [vmem:[%s3433 + $0xac] sm:$0xf]
        %v3839 = vld [vmem:[%s3433 + $0xb0] sm:$0x1]
        %v3840 = vld [vmem:[%s3433 + $0xb4] sm:$0xf]
        %v3841 = vld [vmem:[%s3433 + $0xb8] sm:$0xf]
        %v3842 = vld [vmem:[%s3433 + $0xbc] sm:$0x1]
        %v3844 = vshrl.u32 %v3795, 16
        %v3846 = vrot.slane %v3844, 4
        %v3847 = vshll.u32 %v3795, 16
        %v3849 = vrot.slane %v3847, 5
        %v3850 = vor.u32 %v3846, %v3849
        %v3851 = vrot.slane %v3850, 4
        %v3853 = vshll.u32 %v3796, 16
        %v3855 = vrot.slane %v3853, 5
        %v3856 = vsel %vm436, %v3851, %v3855
        %v3857 = vshrl.u32 %v3796, 16
        %v3859 = vrot.slane %v3857, 4
        %v3860 = vor.u32 %v3859, %v3855
        %v3861 = vrot.slane %v3860, 4
        %v3863 = vshll.u32 %v3797, 16
        %v3865 = vrot.slane %v3863, 5
        %v3866 = vsel %vm436, %v3861, %v3865
        %v3868 = vshrl.u32 %v3798, 16
        %v3870 = vrot.slane %v3868, 4
        %v3871 = vshll.u32 %v3798, 16
        %v3873 = vrot.slane %v3871, 5
        %v3874 = vor.u32 %v3870, %v3873
        %v3875 = vrot.slane %v3874, 4
        %v3877 = vshll.u32 %v3799, 16
        %v3879 = vrot.slane %v3877, 5
        %v3880 = vsel %vm436, %v3875, %v3879
        %v3881 = vshrl.u32 %v3799, 16
        %v3883 = vrot.slane %v3881, 4
        %v3884 = vor.u32 %v3883, %v3879
        %v3885 = vrot.slane %v3884, 4
        %v3887 = vshll.u32 %v3800, 16
        %v3889 = vrot.slane %v3887, 5
        %v3890 = vsel %vm436, %v3885, %v3889
        %v3892 = vshrl.u32 %v3801, 16
        %v3894 = vrot.slane %v3892, 4
        %v3895 = vshll.u32 %v3801, 16
        %v3897 = vrot.slane %v3895, 5
        %v3898 = vor.u32 %v3894, %v3897
        %v3899 = vrot.slane %v3898, 4
        %v3901 = vshll.u32 %v3802, 16
        %v3903 = vrot.slane %v3901, 5
        %v3904 = vsel %vm436, %v3899, %v3903
        %v3905 = vshrl.u32 %v3802, 16
        %v3907 = vrot.slane %v3905, 4
        %v3908 = vor.u32 %v3907, %v3903
        %v3909 = vrot.slane %v3908, 4
        %v3911 = vshll.u32 %v3803, 16
        %v3913 = vrot.slane %v3911, 5
        %v3914 = vsel %vm436, %v3909, %v3913
        %v3916 = vshrl.u32 %v3804, 16
        %v3918 = vrot.slane %v3916, 4
        %v3919 = vshll.u32 %v3804, 16
        %v3921 = vrot.slane %v3919, 5
        %v3922 = vor.u32 %v3918, %v3921
        %v3923 = vrot.slane %v3922, 4
        %v3925 = vshll.u32 %v3805, 16
        %v3927 = vrot.slane %v3925, 5
        %v3928 = vsel %vm436, %v3923, %v3927
        %v3929 = vshrl.u32 %v3805, 16
        %v3931 = vrot.slane %v3929, 4
        %v3932 = vor.u32 %v3931, %v3927
        %v3933 = vrot.slane %v3932, 4
        %v3935 = vshll.u32 %v3806, 16
        %v3937 = vrot.slane %v3935, 5
        %v3938 = vsel %vm436, %v3933, %v3937
        %v3940 = vshrl.u32 %v3807, 16
        %v3942 = vrot.slane %v3940, 4
        %v3943 = vshll.u32 %v3807, 16
        %v3945 = vrot.slane %v3943, 5
        %v3946 = vor.u32 %v3942, %v3945
        %v3947 = vrot.slane %v3946, 4
        %v3949 = vshll.u32 %v3808, 16
        %v3951 = vrot.slane %v3949, 5
        %v3952 = vsel %vm436, %v3947, %v3951
        %v3953 = vshrl.u32 %v3808, 16
        %v3955 = vrot.slane %v3953, 4
        %v3956 = vor.u32 %v3955, %v3951
        %v3957 = vrot.slane %v3956, 4
        %v3959 = vshll.u32 %v3809, 16
        %v3961 = vrot.slane %v3959, 5
        %v3962 = vsel %vm436, %v3957, %v3961
        %v3964 = vshrl.u32 %v3810, 16
        %v3966 = vrot.slane %v3964, 4
        %v3967 = vshll.u32 %v3810, 16
        %v3969 = vrot.slane %v3967, 5
        %v3970 = vor.u32 %v3966, %v3969
        %v3971 = vrot.slane %v3970, 4
        %v3973 = vshll.u32 %v3811, 16
        %v3975 = vrot.slane %v3973, 5
        %v3976 = vsel %vm436, %v3971, %v3975
        %v3977 = vshrl.u32 %v3811, 16
        %v3979 = vrot.slane %v3977, 4
        %v3980 = vor.u32 %v3979, %v3975
        %v3981 = vrot.slane %v3980, 4
        %v3983 = vshll.u32 %v3812, 16
        %v3985 = vrot.slane %v3983, 5
        %v3986 = vsel %vm436, %v3981, %v3985
        %v3988 = vshrl.u32 %v3813, 16
        %v3990 = vrot.slane %v3988, 4
        %v3991 = vshll.u32 %v3813, 16
        %v3993 = vrot.slane %v3991, 5
        %v3994 = vor.u32 %v3990, %v3993
        %v3995 = vrot.slane %v3994, 4
        %v3997 = vshll.u32 %v3814, 16
        %v3999 = vrot.slane %v3997, 5
        %v4000 = vsel %vm436, %v3995, %v3999
        %v4001 = vshrl.u32 %v3814, 16
        %v4003 = vrot.slane %v4001, 4
        %v4004 = vor.u32 %v4003, %v3999
        %v4005 = vrot.slane %v4004, 4
        %v4007 = vshll.u32 %v3815, 16
        %v4009 = vrot.slane %v4007, 5
        %v4010 = vsel %vm436, %v4005, %v4009
        %v4012 = vshrl.u32 %v3816, 16
        %v4014 = vrot.slane %v4012, 4
        %v4015 = vshll.u32 %v3816, 16
        %v4017 = vrot.slane %v4015, 5
        %v4018 = vor.u32 %v4014, %v4017
        %v4019 = vrot.slane %v4018, 4
        %v4021 = vshll.u32 %v3817, 16
        %v4023 = vrot.slane %v4021, 5
        %v4024 = vsel %vm436, %v4019, %v4023
        %v4025 = vshrl.u32 %v3817, 16
        %v4027 = vrot.slane %v4025, 4
        %v4028 = vor.u32 %v4027, %v4023
        %v4029 = vrot.slane %v4028, 4
        %v4031 = vshll.u32 %v3818, 16
        %v4033 = vrot.slane %v4031, 5
        %v4034 = vsel %vm436, %v4029, %v4033
        %v4036 = vshrl.u32 %v3819, 16
        %v4038 = vrot.slane %v4036, 4
        %v4039 = vshll.u32 %v3819, 16
        %v4041 = vrot.slane %v4039, 5
        %v4042 = vor.u32 %v4038, %v4041
        %v4043 = vrot.slane %v4042, 4
        %v4045 = vshll.u32 %v3820, 16
        %v4047 = vrot.slane %v4045, 5
        %v4048 = vsel %vm436, %v4043, %v4047
        %v4049 = vshrl.u32 %v3820, 16
        %v4051 = vrot.slane %v4049, 4
        %v4052 = vor.u32 %v4051, %v4047
        %v4053 = vrot.slane %v4052, 4
        %v4055 = vshll.u32 %v3821, 16
        %v4057 = vrot.slane %v4055, 5
        %v4058 = vsel %vm436, %v4053, %v4057
        %v4060 = vshrl.u32 %v3822, 16
        %v4062 = vrot.slane %v4060, 4
        %v4063 = vshll.u32 %v3822, 16
        %v4065 = vrot.slane %v4063, 5
        %v4066 = vor.u32 %v4062, %v4065
        %v4067 = vrot.slane %v4066, 4
        %v4069 = vshll.u32 %v3823, 16
        %v4071 = vrot.slane %v4069, 5
        %v4072 = vsel %vm436, %v4067, %v4071
        %v4073 = vshrl.u32 %v3823, 16
        %v4075 = vrot.slane %v4073, 4
        %v4076 = vor.u32 %v4075, %v4071
        %v4077 = vrot.slane %v4076, 4
        %v4079 = vshll.u32 %v3824, 16
        %v4081 = vrot.slane %v4079, 5
        %v4082 = vsel %vm436, %v4077, %v4081
        %v4084 = vshrl.u32 %v3825, 16
        %v4086 = vrot.slane %v4084, 4
        %v4087 = vshll.u32 %v3825, 16
        %v4089 = vrot.slane %v4087, 5
        %v4090 = vor.u32 %v4086, %v4089
        %v4091 = vrot.slane %v4090, 4
        %v4093 = vshll.u32 %v3826, 16
        %v4095 = vrot.slane %v4093, 5
        %v4096 = vsel %vm436, %v4091, %v4095
        %v4097 = vshrl.u32 %v3826, 16
        %v4099 = vrot.slane %v4097, 4
        %v4100 = vor.u32 %v4099, %v4095
        %v4101 = vrot.slane %v4100, 4
        %v4103 = vshll.u32 %v3827, 16
        %v4105 = vrot.slane %v4103, 5
        %v4106 = vsel %vm436, %v4101, %v4105
        %v4108 = vshrl.u32 %v3828, 16
        %v4110 = vrot.slane %v4108, 4
        %v4111 = vshll.u32 %v3828, 16
        %v4113 = vrot.slane %v4111, 5
        %v4114 = vor.u32 %v4110, %v4113
        %v4115 = vrot.slane %v4114, 4
        %v4117 = vshll.u32 %v3829, 16
        %v4119 = vrot.slane %v4117, 5
        %v4120 = vsel %vm436, %v4115, %v4119
        %v4121 = vshrl.u32 %v3829, 16
        %v4123 = vrot.slane %v4121, 4
        %v4124 = vor.u32 %v4123, %v4119
        %v4125 = vrot.slane %v4124, 4
        %v4127 = vshll.u32 %v3830, 16
        %v4129 = vrot.slane %v4127, 5
        %v4130 = vsel %vm436, %v4125, %v4129
        %v4132 = vshrl.u32 %v3831, 16
        %v4134 = vrot.slane %v4132, 4
        %v4135 = vshll.u32 %v3831, 16
        %v4137 = vrot.slane %v4135, 5
        %v4138 = vor.u32 %v4134, %v4137
        %v4139 = vrot.slane %v4138, 4
        %v4141 = vshll.u32 %v3832, 16
        %v4143 = vrot.slane %v4141, 5
        %v4144 = vsel %vm436, %v4139, %v4143
        %v4145 = vshrl.u32 %v3832, 16
        %v4147 = vrot.slane %v4145, 4
        %v4148 = vor.u32 %v4147, %v4143
        %v4149 = vrot.slane %v4148, 4
        %v4151 = vshll.u32 %v3833, 16
        %v4153 = vrot.slane %v4151, 5
        %v4154 = vsel %vm436, %v4149, %v4153
        %v4156 = vshrl.u32 %v3834, 16
        %v4158 = vrot.slane %v4156, 4
        %v4159 = vshll.u32 %v3834, 16
        %v4161 = vrot.slane %v4159, 5
        %v4162 = vor.u32 %v4158, %v4161
        %v4163 = vrot.slane %v4162, 4
        %v4165 = vshll.u32 %v3835, 16
        %v4167 = vrot.slane %v4165, 5
        %v4168 = vsel %vm436, %v4163, %v4167
        %v4169 = vshrl.u32 %v3835, 16
        %v4171 = vrot.slane %v4169, 4
        %v4172 = vor.u32 %v4171, %v4167
        %v4173 = vrot.slane %v4172, 4
        %v4175 = vshll.u32 %v3836, 16
        %v4177 = vrot.slane %v4175, 5
        %v4178 = vsel %vm436, %v4173, %v4177
        %v4180 = vshrl.u32 %v3837, 16
        %v4182 = vrot.slane %v4180, 4
        %v4183 = vshll.u32 %v3837, 16
        %v4185 = vrot.slane %v4183, 5
        %v4186 = vor.u32 %v4182, %v4185
        %v4187 = vrot.slane %v4186, 4
        %v4189 = vshll.u32 %v3838, 16
        %v4191 = vrot.slane %v4189, 5
        %v4192 = vsel %vm436, %v4187, %v4191
        %v4193 = vshrl.u32 %v3838, 16
        %v4195 = vrot.slane %v4193, 4
        %v4196 = vor.u32 %v4195, %v4191
        %v4197 = vrot.slane %v4196, 4
        %v4199 = vshll.u32 %v3839, 16
        %v4201 = vrot.slane %v4199, 5
        %v4202 = vsel %vm436, %v4197, %v4201
        %v4204 = vshrl.u32 %v3840, 16
        %v4206 = vrot.slane %v4204, 4
        %v4207 = vshll.u32 %v3840, 16
        %v4209 = vrot.slane %v4207, 5
        %v4210 = vor.u32 %v4206, %v4209
        %v4211 = vrot.slane %v4210, 4
        %v4213 = vshll.u32 %v3841, 16
        %v4215 = vrot.slane %v4213, 5
        %v4216 = vsel %vm436, %v4211, %v4215
        %v4217 = vshrl.u32 %v3841, 16
        %v4219 = vrot.slane %v4217, 4
        %v4220 = vor.u32 %v4219, %v4215
        %v4221 = vrot.slane %v4220, 4
        %v4223 = vshll.u32 %v3842, 16
        %v4225 = vrot.slane %v4223, 5
        %v4226 = vsel %vm436, %v4221, %v4225
        %v4227 = vld [vmem:[%s1 + $0x8] sm:$0xc]
        %v4228 = vunpack.c.l.b16 %v3856
        %v4229 = vunpack.c.l.b16 %v3866
        %v4230 = vunpack.c.l.b16 %v3880
        %v4231 = vunpack.c.l.b16 %v3890
        %v4232 = vunpack.c.l.b16 %v3904
        %v4233 = vunpack.c.l.b16 %v3914
        %v4234 = vunpack.c.l.b16 %v3928
        %v4235 = vunpack.c.l.b16 %v3938
        %v4236 = vunpack.c.l.b16 %v3952
        %v4237 = vunpack.c.l.b16 %v3962
        %v4238 = vunpack.c.l.b16 %v3976
        %v4239 = vunpack.c.l.b16 %v3986
        %v4240 = vunpack.c.l.b16 %v4000
        %v4241 = vunpack.c.l.b16 %v4010
        %v4242 = vunpack.c.l.b16 %v4024
        %v4243 = vunpack.c.l.b16 %v4034
        %v4244 = vunpack.c.l.b16 %v4048
        %v4245 = vunpack.c.l.b16 %v4058
        %v4246 = vunpack.c.l.b16 %v4072
        %v4247 = vunpack.c.l.b16 %v4082
        %v4248 = vunpack.c.l.b16 %v4096
        %v4249 = vunpack.c.l.b16 %v4106
        %v4250 = vunpack.c.l.b16 %v4120
        %v4251 = vunpack.c.l.b16 %v4130
        %v4252 = vunpack.c.l.b16 %v4144
        %v4253 = vunpack.c.l.b16 %v4154
        %v4254 = vunpack.c.l.b16 %v4168
        %v4255 = vunpack.c.l.b16 %v4178
        %v4256 = vunpack.c.l.b16 %v4192
        %v4257 = vunpack.c.l.b16 %v4202
        %v4258 = vunpack.c.l.b16 %v4216
        %v4259 = vunpack.c.l.b16 %v4226
        %v4260 = vpack.c.b16 %v4229, %v4228
        %v4261 = vpack.c.b16 %v4231, %v4230
        %v4262 = vpack.c.b16 %v4233, %v4232
        %v4263 = vpack.c.b16 %v4235, %v4234
        %v4264 = vpack.c.b16 %v4237, %v4236
        %v4265 = vpack.c.b16 %v4239, %v4238
        %v4266 = vpack.c.b16 %v4241, %v4240
        %v4267 = vpack.c.b16 %v4243, %v4242
        %v4268 = vpack.c.b16 %v4245, %v4244
        %v4269 = vpack.c.b16 %v4247, %v4246
        %v4270 = vpack.c.b16 %v4249, %v4248
        %v4271 = vpack.c.b16 %v4251, %v4250
        %v4272 = vpack.c.b16 %v4253, %v4252
        %v4273 = vpack.c.b16 %v4255, %v4254
        %v4274 = vpack.c.b16 %v4257, %v4256
        %v4275 = vpack.c.b16 %v4259, %v4258
        %v4277 = vunpack.c.l.b16 %v4227
        %v4278 = vpack.c.b16 %v4277, %v4277
        %v4280 = vshrl.u32 %v4278, 16
        %v4282 = vrot.slane %v4280, 2
        %v4283 = vshll.u32 %v4278, 16
        %v4285 = vrot.slane %v4283, 3
        %v4286 = vor.u32 %v4282, %v4285
        %v4288 = vsel %vm881, %v4260, 0
        %v4291 = vsel %vm881, %v4261, 0
        %v4294 = vsel %vm881, %v4262, 0
        %v4297 = vsel %vm881, %v4263, 0
        %v4300 = vsel %vm881, %v4264, 0
        %v4303 = vsel %vm881, %v4265, 0
        %v4306 = vsel %vm881, %v4266, 0
        %v4309 = vsel %vm881, %v4267, 0
        %v4312 = vsel %vm881, %v4268, 0
        %v4315 = vsel %vm881, %v4269, 0
        %v4318 = vsel %vm881, %v4270, 0
        %v4321 = vsel %vm881, %v4271, 0
        %v4324 = vsel %vm881, %v4272, 0
        %v4327 = vsel %vm881, %v4273, 0
        %v4330 = vsel %vm881, %v4274, 0
        %v4333 = vsel %vm881, %v4275, 0
        %v4336 = vand.u32 %v4286, %v933
        %4338 = vmatprep.subr.bf16.mxu0 0
        %4339 = vmatpush1.bf16.msra.mxu0 %v4336
        %4340 = vmatprep.subr.bf16.mxu0 0
        %4341 = vmatpush1.bf16.msra.mxu0 0
        %4342 = vmatprep.subr.bf16.mxu0 0
        %4343 = vmatpush1.bf16.msra.mxu0 0
        %4344 = vmatprep.subr.bf16.mxu0 0
        %4345 = vmatpush1.bf16.msra.mxu0 0
        %4346 = vmatprep.subr.bf16.mxu0 0
        %4347 = vmatpush1.bf16.msra.mxu0 0
        %4348 = vmatprep.subr.bf16.mxu0 0
        %4349 = vmatpush1.bf16.msra.mxu0 0
        %4350 = vmatprep.subr.bf16.mxu0 0
        %4351 = vmatpush1.bf16.msra.mxu0 0
        %4352 = vmatprep.subr.bf16.mxu0 0
        %4353 = vmatpush1.bf16.msra.mxu0 0
        %4354 = vmatprep.subr.bf16.mxu0 0
        %4355 = vmatpush1.bf16.msra.mxu0 0
        %4356 = vmatprep.subr.bf16.mxu0 0
        %4357 = vmatpush1.bf16.msra.mxu0 0
        %4358 = vmatprep.subr.bf16.mxu0 0
        %4359 = vmatpush1.bf16.msra.mxu0 0
        %4360 = vmatprep.subr.bf16.mxu0 0
        %4361 = vmatpush1.bf16.msra.mxu0 0
        %4362 = vmatprep.subr.bf16.mxu0 0
        %4363 = vmatpush1.bf16.msra.mxu0 0
        %4364 = vmatprep.subr.bf16.mxu0 0
        %4365 = vmatpush1.bf16.msra.mxu0 0
        %4366 = vmatprep.subr.bf16.mxu0 0
        %4367 = vmatpush1.bf16.msra.mxu0 0
        %4368 = vmatprep.subr.bf16.mxu0 0
        %4369 = vmatpush1.bf16.msra.mxu0 0
        %4370 = vmatprep.mubr.bf16.mxu0 0
        %4371 = vmatmul.mubr.bf16.gmra.mrb[0].mxu0 %v4288
        %v4372 = vpop.f32.mrb[0].mxu0
        %v4373 = vadd.f32 0.0, %v4372
        %v4374 = vpop.f32.mrb[0].mxu0
        %v4375 = vpop.f32.mrb[0].mxu0
        %v4376 = vadd.f32 0.0, %v4375
        %v4377 = vpop.f32.mrb[0].mxu0
        %4378 = vmatprep.mubr.bf16.mxu0 0
        %4379 = vmatmul.mubr.bf16.gmra.mrb[0].mxu0 %v4291
        %v4380 = vpop.f32.mrb[0].mxu0
        %v4381 = vadd.f32 0.0, %v4380
        %v4382 = vpop.f32.mrb[0].mxu0
        %v4383 = vpop.f32.mrb[0].mxu0
        %v4384 = vadd.f32 0.0, %v4383
        %v4385 = vpop.f32.mrb[0].mxu0
        %4386 = vmatprep.mubr.bf16.mxu0 0
        %4387 = vmatmul.mubr.bf16.gmra.mrb[0].mxu0 %v4294
        %v4388 = vpop.f32.mrb[0].mxu0
        %v4389 = vadd.f32 0.0, %v4388
        %v4390 = vpop.f32.mrb[0].mxu0
        %v4391 = vpop.f32.mrb[0].mxu0
        %v4392 = vadd.f32 0.0, %v4391
        %v4393 = vpop.f32.mrb[0].mxu0
        %4394 = vmatprep.mubr.bf16.mxu0 0
        %4395 = vmatmul.mubr.bf16.gmra.mrb[0].mxu0 %v4297
        %v4396 = vpop.f32.mrb[0].mxu0
        %v4397 = vadd.f32 0.0, %v4396
        %v4398 = vpop.f32.mrb[0].mxu0
        %v4399 = vpop.f32.mrb[0].mxu0
        %v4400 = vadd.f32 0.0, %v4399
        %v4401 = vpop.f32.mrb[0].mxu0
        %4402 = vmatprep.mubr.bf16.mxu0 0
        %4403 = vmatmul.mubr.bf16.gmra.mrb[0].mxu0 %v4300
        %v4404 = vpop.f32.mrb[0].mxu0
        %v4405 = vadd.f32 0.0, %v4404
        %v4406 = vpop.f32.mrb[0].mxu0
        %v4407 = vpop.f32.mrb[0].mxu0
        %v4408 = vadd.f32 0.0, %v4407
        %v4409 = vpop.f32.mrb[0].mxu0
        %4410 = vmatprep.mubr.bf16.mxu0 0
        %4411 = vmatmul.mubr.bf16.gmra.mrb[0].mxu0 %v4303
        %v4412 = vpop.f32.mrb[0].mxu0
        %v4413 = vadd.f32 0.0, %v4412
        %v4414 = vpop.f32.mrb[0].mxu0
        %v4415 = vpop.f32.mrb[0].mxu0
        %v4416 = vadd.f32 0.0, %v4415
        %v4417 = vpop.f32.mrb[0].mxu0
        %4418 = vmatprep.mubr.bf16.mxu0 0
        %4419 = vmatmul.mubr.bf16.gmra.mrb[0].mxu0 %v4306
        %v4420 = vpop.f32.mrb[0].mxu0
        %v4421 = vadd.f32 0.0, %v4420
        %v4422 = vpop.f32.mrb[0].mxu0
        %v4423 = vpop.f32.mrb[0].mxu0
        %v4424 = vadd.f32 0.0, %v4423
        %v4425 = vpop.f32.mrb[0].mxu0
        %4426 = vmatprep.mubr.bf16.mxu0 0
        %4427 = vmatmul.mubr.bf16.gmra.mrb[0].mxu0 %v4309
        %v4428 = vpop.f32.mrb[0].mxu0
        %v4429 = vadd.f32 0.0, %v4428
        %v4430 = vpop.f32.mrb[0].mxu0
        %v4431 = vpop.f32.mrb[0].mxu0
        %v4432 = vadd.f32 0.0, %v4431
        %v4433 = vpop.f32.mrb[0].mxu0
        %4434 = vmatprep.mubr.bf16.mxu0 0
        %4435 = vmatmul.mubr.bf16.gmra.mrb[0].mxu0 %v4312
        %v4436 = vpop.f32.mrb[0].mxu0
        %v4437 = vadd.f32 0.0, %v4436
        %v4438 = vpop.f32.mrb[0].mxu0
        %v4439 = vpop.f32.mrb[0].mxu0
        %v4440 = vadd.f32 0.0, %v4439
        %v4441 = vpop.f32.mrb[0].mxu0
        %4442 = vmatprep.mubr.bf16.mxu0 0
        %4443 = vmatmul.mubr.bf16.gmra.mrb[0].mxu0 %v4315
        %v4444 = vpop.f32.mrb[0].mxu0
        %v4445 = vadd.f32 0.0, %v4444
        %v4446 = vpop.f32.mrb[0].mxu0
        %v4447 = vpop.f32.mrb[0].mxu0
        %v4448 = vadd.f32 0.0, %v4447
        %v4449 = vpop.f32.mrb[0].mxu0
        %4450 = vmatprep.mubr.bf16.mxu0 0
        %4451 = vmatmul.mubr.bf16.gmra.mrb[0].mxu0 %v4318
        %v4452 = vpop.f32.mrb[0].mxu0
        %v4453 = vadd.f32 0.0, %v4452
        %v4454 = vpop.f32.mrb[0].mxu0
        %v4455 = vpop.f32.mrb[0].mxu0
        %v4456 = vadd.f32 0.0, %v4455
        %v4457 = vpop.f32.mrb[0].mxu0
        %4458 = vmatprep.mubr.bf16.mxu0 0
        %4459 = vmatmul.mubr.bf16.gmra.mrb[0].mxu0 %v4321
        %v4460 = vpop.f32.mrb[0].mxu0
        %v4461 = vadd.f32 0.0, %v4460
        %v4462 = vpop.f32.mrb[0].mxu0
        %v4463 = vpop.f32.mrb[0].mxu0
        %v4464 = vadd.f32 0.0, %v4463
        %v4465 = vpop.f32.mrb[0].mxu0
        %4466 = vmatprep.mubr.bf16.mxu0 0
        %4467 = vmatmul.mubr.bf16.gmra.mrb[0].mxu0 %v4324
        %v4468 = vpop.f32.mrb[0].mxu0
        %v4469 = vadd.f32 0.0, %v4468
        %v4470 = vpop.f32.mrb[0].mxu0
        %v4471 = vpop.f32.mrb[0].mxu0
        %v4472 = vadd.f32 0.0, %v4471
        %v4473 = vpop.f32.mrb[0].mxu0
        %4474 = vmatprep.mubr.bf16.mxu0 0
        %4475 = vmatmul.mubr.bf16.gmra.mrb[0].mxu0 %v4327
        %v4476 = vpop.f32.mrb[0].mxu0
        %v4477 = vadd.f32 0.0, %v4476
        %v4478 = vpop.f32.mrb[0].mxu0
        %v4479 = vpop.f32.mrb[0].mxu0
        %v4480 = vadd.f32 0.0, %v4479
        %v4481 = vpop.f32.mrb[0].mxu0
        %4482 = vmatprep.mubr.bf16.mxu0 0
        %4483 = vmatmul.mubr.bf16.gmra.mrb[0].mxu0 %v4330
        %v4484 = vpop.f32.mrb[0].mxu0
        %v4485 = vadd.f32 0.0, %v4484
        %v4486 = vpop.f32.mrb[0].mxu0
        %v4487 = vpop.f32.mrb[0].mxu0
        %v4488 = vadd.f32 0.0, %v4487
        %v4489 = vpop.f32.mrb[0].mxu0
        %4490 = vmatprep.mubr.bf16.mxu0 0
        %4491 = vmatmul.mubr.bf16.gmra.mrb[0].mxu0 %v4333
        %v4492 = vpop.f32.mrb[0].mxu0
        %v4493 = vadd.f32 0.0, %v4492
        %v4494 = vpop.f32.mrb[0].mxu0
        %v4495 = vpop.f32.mrb[0].mxu0
        %v4496 = vadd.f32 0.0, %v4495
        %v4497 = vpop.f32.mrb[0].mxu0
        %4498 = vdwg.mxu0
        %v4499 = vadd.f32 %v3763, %v4373
        %v4500 = vadd.f32 %v3764, %v4376
        %v4501 = vadd.f32 %v3765, %v4381
        %v4502 = vadd.f32 %v3766, %v4384
        %v4503 = vadd.f32 %v3767, %v4389
        %v4504 = vadd.f32 %v3768, %v4392
        %v4505 = vadd.f32 %v3769, %v4397
        %v4506 = vadd.f32 %v3770, %v4400
        %v4507 = vadd.f32 %v3771, %v4405
        %v4508 = vadd.f32 %v3772, %v4408
        %v4509 = vadd.f32 %v3773, %v4413
        %v4510 = vadd.f32 %v3774, %v4416
        %v4511 = vadd.f32 %v3775, %v4421
        %v4512 = vadd.f32 %v3776, %v4424
        %v4513 = vadd.f32 %v3777, %v4429
        %v4514 = vadd.f32 %v3778, %v4432
        %v4515 = vadd.f32 %v3779, %v4437
        %v4516 = vadd.f32 %v3780, %v4440
        %v4517 = vadd.f32 %v3781, %v4445
        %v4518 = vadd.f32 %v3782, %v4448
        %v4519 = vadd.f32 %v3783, %v4453
        %v4520 = vadd.f32 %v3784, %v4456
        %v4521 = vadd.f32 %v3785, %v4461
        %v4522 = vadd.f32 %v3786, %v4464
        %v4523 = vadd.f32 %v3787, %v4469
        %v4524 = vadd.f32 %v3788, %v4472
        %v4525 = vadd.f32 %v3789, %v4477
        %v4526 = vadd.f32 %v3790, %v4480
        %v4527 = vadd.f32 %v3791, %v4485
        %v4528 = vadd.f32 %v3792, %v4488
        %v4529 = vadd.f32 %v3793, %v4493
        %v4530 = vadd.f32 %v3794, %v4496
        %v4531 = vld [vmem:[%s3433] sm:$0xe]
        %v4532 = vld [vmem:[%s3433 + $0xc] sm:$0xe]
        %v4533 = vld [vmem:[%s3433 + $0x18] sm:$0xe]
        %v4534 = vld [vmem:[%s3433 + $0x24] sm:$0xe]
        %v4535 = vld [vmem:[%s3433 + $0x30] sm:$0xe]
        %v4536 = vld [vmem:[%s3433 + $0x3c] sm:$0xe]
        %v4537 = vld [vmem:[%s3433 + $0x48] sm:$0xe]
        %v4538 = vld [vmem:[%s3433 + $0x54] sm:$0xe]
        %v4539 = vld [vmem:[%s3433 + $0x60] sm:$0xe]
        %v4540 = vld [vmem:[%s3433 + $0x6c] sm:$0xe]
        %v4541 = vld [vmem:[%s3433 + $0x78] sm:$0xe]
        %v4542 = vld [vmem:[%s3433 + $0x84] sm:$0xe]
        %v4543 = vld [vmem:[%s3433 + $0x90] sm:$0xe]
        %v4544 = vld [vmem:[%s3433 + $0x9c] sm:$0xe]
        %v4545 = vld [vmem:[%s3433 + $0xa8] sm:$0xe]
        %v4546 = vld [vmem:[%s3433 + $0xb4] sm:$0xe]
        %v4595 = vrot.slane %v4531, 5
        %v4596 = vrot.slane %v4595, 4
        %v4597 = vrot.slane %v3796, 5
        %v4598 = vsel %vm1440, %v4596, %v4597
        %v4599 = vrot.slane %v4597, 4
        %v4600 = vrot.slane %v3797, 5
        %v4601 = vsel %vm1440, %v4599, %v4600
        %v4602 = vrot.slane %v4532, 5
        %v4603 = vrot.slane %v4602, 4
        %v4604 = vrot.slane %v3799, 5
        %v4605 = vsel %vm1440, %v4603, %v4604
        %v4606 = vrot.slane %v4604, 4
        %v4607 = vrot.slane %v3800, 5
        %v4608 = vsel %vm1440, %v4606, %v4607
        %v4609 = vrot.slane %v4533, 5
        %v4610 = vrot.slane %v4609, 4
        %v4611 = vrot.slane %v3802, 5
        %v4612 = vsel %vm1440, %v4610, %v4611
        %v4613 = vrot.slane %v4611, 4
        %v4614 = vrot.slane %v3803, 5
        %v4615 = vsel %vm1440, %v4613, %v4614
        %v4616 = vrot.slane %v4534, 5
        %v4617 = vrot.slane %v4616, 4
        %v4618 = vrot.slane %v3805, 5
        %v4619 = vsel %vm1440, %v4617, %v4618
        %v4620 = vrot.slane %v4618, 4
        %v4621 = vrot.slane %v3806, 5
        %v4622 = vsel %vm1440, %v4620, %v4621
        %v4623 = vrot.slane %v4535, 5
        %v4624 = vrot.slane %v4623, 4
        %v4625 = vrot.slane %v3808, 5
        %v4626 = vsel %vm1440, %v4624, %v4625
        %v4627 = vrot.slane %v4625, 4
        %v4628 = vrot.slane %v3809, 5
        %v4629 = vsel %vm1440, %v4627, %v4628
        %v4630 = vrot.slane %v4536, 5
        %v4631 = vrot.slane %v4630, 4
        %v4632 = vrot.slane %v3811, 5
        %v4633 = vsel %vm1440, %v4631, %v4632
        %v4634 = vrot.slane %v4632, 4
        %v4635 = vrot.slane %v3812, 5
        %v4636 = vsel %vm1440, %v4634, %v4635
        %v4637 = vrot.slane %v4537, 5
        %v4638 = vrot.slane %v4637, 4
        %v4639 = vrot.slane %v3814, 5
        %v4640 = vsel %vm1440, %v4638, %v4639
        %v4641 = vrot.slane %v4639, 4
        %v4642 = vrot.slane %v3815, 5
        %v4643 = vsel %vm1440, %v4641, %v4642
        %v4644 = vrot.slane %v4538, 5
        %v4645 = vrot.slane %v4644, 4
        %v4646 = vrot.slane %v3817, 5
        %v4647 = vsel %vm1440, %v4645, %v4646
        %v4648 = vrot.slane %v4646, 4
        %v4649 = vrot.slane %v3818, 5
        %v4650 = vsel %vm1440, %v4648, %v4649
        %v4651 = vrot.slane %v4539, 5
        %v4652 = vrot.slane %v4651, 4
        %v4653 = vrot.slane %v3820, 5
        %v4654 = vsel %vm1440, %v4652, %v4653
        %v4655 = vrot.slane %v4653, 4
        %v4656 = vrot.slane %v3821, 5
        %v4657 = vsel %vm1440, %v4655, %v4656
        %v4658 = vrot.slane %v4540, 5
        %v4659 = vrot.slane %v4658, 4
        %v4660 = vrot.slane %v3823, 5
        %v4661 = vsel %vm1440, %v4659, %v4660
        %v4662 = vrot.slane %v4660, 4
        %v4663 = vrot.slane %v3824, 5
        %v4664 = vsel %vm1440, %v4662, %v4663
        %v4665 = vrot.slane %v4541, 5
        %v4666 = vrot.slane %v4665, 4
        %v4667 = vrot.slane %v3826, 5
        %v4668 = vsel %vm1440, %v4666, %v4667
        %v4669 = vrot.slane %v4667, 4
        %v4670 = vrot.slane %v3827, 5
        %v4671 = vsel %vm1440, %v4669, %v4670
        %v4672 = vrot.slane %v4542, 5
        %v4673 = vrot.slane %v4672, 4
        %v4674 = vrot.slane %v3829, 5
        %v4675 = vsel %vm1440, %v4673, %v4674
        %v4676 = vrot.slane %v4674, 4
        %v4677 = vrot.slane %v3830, 5
        %v4678 = vsel %vm1440, %v4676, %v4677
        %v4679 = vrot.slane %v4543, 5
        %v4680 = vrot.slane %v4679, 4
        %v4681 = vrot.slane %v3832, 5
        %v4682 = vsel %vm1440, %v4680, %v4681
        %v4683 = vrot.slane %v4681, 4
        %v4684 = vrot.slane %v3833, 5
        %v4685 = vsel %vm1440, %v4683, %v4684
        %v4686 = vrot.slane %v4544, 5
        %v4687 = vrot.slane %v4686, 4
        %v4688 = vrot.slane %v3835, 5
        %v4689 = vsel %vm1440, %v4687, %v4688
        %v4690 = vrot.slane %v4688, 4
        %v4691 = vrot.slane %v3836, 5
        %v4692 = vsel %vm1440, %v4690, %v4691
        %v4693 = vrot.slane %v4545, 5
        %v4694 = vrot.slane %v4693, 4
        %v4695 = vrot.slane %v3838, 5
        %v4696 = vsel %vm1440, %v4694, %v4695
        %v4697 = vrot.slane %v4695, 4
        %v4698 = vrot.slane %v3839, 5
        %v4699 = vsel %vm1440, %v4697, %v4698
        %v4700 = vrot.slane %v4546, 5
        %v4701 = vrot.slane %v4700, 4
        %v4702 = vrot.slane %v3841, 5
        %v4703 = vsel %vm1440, %v4701, %v4702
        %v4704 = vrot.slane %v4702, 4
        %v4705 = vrot.slane %v3842, 5
        %v4706 = vsel %vm1440, %v4704, %v4705
        %v4707 = vld [vmem:[%s1 + $0xc] sm:$0x3]
        %v4708 = vunpack.c.l.b16 %v4598
        %v4709 = vunpack.c.l.b16 %v4601
        %v4710 = vunpack.c.l.b16 %v4605
        %v4711 = vunpack.c.l.b16 %v4608
        %v4712 = vunpack.c.l.b16 %v4612
        %v4713 = vunpack.c.l.b16 %v4615
        %v4714 = vunpack.c.l.b16 %v4619
        %v4715 = vunpack.c.l.b16 %v4622
        %v4716 = vunpack.c.l.b16 %v4626
        %v4717 = vunpack.c.l.b16 %v4629
        %v4718 = vunpack.c.l.b16 %v4633
        %v4719 = vunpack.c.l.b16 %v4636
        %v4720 = vunpack.c.l.b16 %v4640
        %v4721 = vunpack.c.l.b16 %v4643
        %v4722 = vunpack.c.l.b16 %v4647
        %v4723 = vunpack.c.l.b16 %v4650
        %v4724 = vunpack.c.l.b16 %v4654
        %v4725 = vunpack.c.l.b16 %v4657
        %v4726 = vunpack.c.l.b16 %v4661
        %v4727 = vunpack.c.l.b16 %v4664
        %v4728 = vunpack.c.l.b16 %v4668
        %v4729 = vunpack.c.l.b16 %v4671
        %v4730 = vunpack.c.l.b16 %v4675
        %v4731 = vunpack.c.l.b16 %v4678
        %v4732 = vunpack.c.l.b16 %v4682
        %v4733 = vunpack.c.l.b16 %v4685
        %v4734 = vunpack.c.l.b16 %v4689
        %v4735 = vunpack.c.l.b16 %v4692
        %v4736 = vunpack.c.l.b16 %v4696
        %v4737 = vunpack.c.l.b16 %v4699
        %v4738 = vunpack.c.l.b16 %v4703
        %v4739 = vunpack.c.l.b16 %v4706
        %v4740 = vpack.c.b16 %v4709, %v4708
        %v4741 = vpack.c.b16 %v4711, %v4710
        %v4742 = vpack.c.b16 %v4713, %v4712
        %v4743 = vpack.c.b16 %v4715, %v4714
        %v4744 = vpack.c.b16 %v4717, %v4716
        %v4745 = vpack.c.b16 %v4719, %v4718
        %v4746 = vpack.c.b16 %v4721, %v4720
        %v4747 = vpack.c.b16 %v4723, %v4722
        %v4748 = vpack.c.b16 %v4725, %v4724
        %v4749 = vpack.c.b16 %v4727, %v4726
        %v4750 = vpack.c.b16 %v4729, %v4728
        %v4751 = vpack.c.b16 %v4731, %v4730
        %v4752 = vpack.c.b16 %v4733, %v4732
        %v4753 = vpack.c.b16 %v4735, %v4734
        %v4754 = vpack.c.b16 %v4737, %v4736
        %v4755 = vpack.c.b16 %v4739, %v4738
        %v4757 = vsel %vm881, %v4740, 0
        %v4760 = vsel %vm881, %v4741, 0
        %v4763 = vsel %vm881, %v4742, 0
        %v4766 = vsel %vm881, %v4743, 0
        %v4769 = vsel %vm881, %v4744, 0
        %v4772 = vsel %vm881, %v4745, 0
        %v4775 = vsel %vm881, %v4746, 0
        %v4778 = vsel %vm881, %v4747, 0
        %v4781 = vsel %vm881, %v4748, 0
        %v4784 = vsel %vm881, %v4749, 0
        %v4787 = vsel %vm881, %v4750, 0
        %v4790 = vsel %vm881, %v4751, 0
        %v4793 = vsel %vm881, %v4752, 0
        %v4796 = vsel %vm881, %v4753, 0
        %v4799 = vsel %vm881, %v4754, 0
        %v4802 = vsel %vm881, %v4755, 0
        %v4805 = vand.u32 %v4707, %v933
        %4807 = vmatprep.subr.bf16.mxu0 0
        %4808 = vmatpush1.bf16.msra.mxu0 %v4805
        %4809 = vmatprep.subr.bf16.mxu0 0
        %4810 = vmatpush1.bf16.msra.mxu0 0
        %4811 = vmatprep.subr.bf16.mxu0 0
        %4812 = vmatpush1.bf16.msra.mxu0 0
        %4813 = vmatprep.subr.bf16.mxu0 0
        %4814 = vmatpush1.bf16.msra.mxu0 0
        %4815 = vmatprep.subr.bf16.mxu0 0
        %4816 = vmatpush1.bf16.msra.mxu0 0
        %4817 = vmatprep.subr.bf16.mxu0 0
        %4818 = vmatpush1.bf16.msra.mxu0 0
        %4819 = vmatprep.subr.bf16.mxu0 0
        %4820 = vmatpush1.bf16.msra.mxu0 0
        %4821 = vmatprep.subr.bf16.mxu0 0
        %4822 = vmatpush1.bf16.msra.mxu0 0
        %4823 = vmatprep.subr.bf16.mxu0 0
        %4824 = vmatpush1.bf16.msra.mxu0 0
        %4825 = vmatprep.subr.bf16.mxu0 0
        %4826 = vmatpush1.bf16.msra.mxu0 0
        %4827 = vmatprep.subr.bf16.mxu0 0
        %4828 = vmatpush1.bf16.msra.mxu0 0
        %4829 = vmatprep.subr.bf16.mxu0 0
        %4830 = vmatpush1.bf16.msra.mxu0 0
        %4831 = vmatprep.subr.bf16.mxu0 0
        %4832 = vmatpush1.bf16.msra.mxu0 0
        %4833 = vmatprep.subr.bf16.mxu0 0
        %4834 = vmatpush1.bf16.msra.mxu0 0
        %4835 = vmatprep.subr.bf16.mxu0 0
        %4836 = vmatpush1.bf16.msra.mxu0 0
        %4837 = vmatprep.subr.bf16.mxu0 0
        %4838 = vmatpush1.bf16.msra.mxu0 0
        %4839 = vmatprep.mubr.bf16.mxu0 0
        %4840 = vmatmul.mubr.bf16.gmra.mrb[0].mxu0 %v4757
        %v4841 = vpop.f32.mrb[0].mxu0
        %v4842 = vadd.f32 0.0, %v4841
        %v4843 = vpop.f32.mrb[0].mxu0
        %v4844 = vpop.f32.mrb[0].mxu0
        %v4845 = vadd.f32 0.0, %v4844
        %v4846 = vpop.f32.mrb[0].mxu0
        %4847 = vmatprep.mubr.bf16.mxu0 0
        %4848 = vmatmul.mubr.bf16.gmra.mrb[0].mxu0 %v4760
        %v4849 = vpop.f32.mrb[0].mxu0
        %v4850 = vadd.f32 0.0, %v4849
        %v4851 = vpop.f32.mrb[0].mxu0
        %v4852 = vpop.f32.mrb[0].mxu0
        %v4853 = vadd.f32 0.0, %v4852
        %v4854 = vpop.f32.mrb[0].mxu0
        %4855 = vmatprep.mubr.bf16.mxu0 0
        %4856 = vmatmul.mubr.bf16.gmra.mrb[0].mxu0 %v4763
        %v4857 = vpop.f32.mrb[0].mxu0
        %v4858 = vadd.f32 0.0, %v4857
        %v4859 = vpop.f32.mrb[0].mxu0
        %v4860 = vpop.f32.mrb[0].mxu0
        %v4861 = vadd.f32 0.0, %v4860
        %v4862 = vpop.f32.mrb[0].mxu0
        %4863 = vmatprep.mubr.bf16.mxu0 0
        %4864 = vmatmul.mubr.bf16.gmra.mrb[0].mxu0 %v4766
        %v4865 = vpop.f32.mrb[0].mxu0
        %v4866 = vadd.f32 0.0, %v4865
        %v4867 = vpop.f32.mrb[0].mxu0
        %v4868 = vpop.f32.mrb[0].mxu0
        %v4869 = vadd.f32 0.0, %v4868
        %v4870 = vpop.f32.mrb[0].mxu0
        %4871 = vmatprep.mubr.bf16.mxu0 0
        %4872 = vmatmul.mubr.bf16.gmra.mrb[0].mxu0 %v4769
        %v4873 = vpop.f32.mrb[0].mxu0
        %v4874 = vadd.f32 0.0, %v4873
        %v4875 = vpop.f32.mrb[0].mxu0
        %v4876 = vpop.f32.mrb[0].mxu0
        %v4877 = vadd.f32 0.0, %v4876
        %v4878 = vpop.f32.mrb[0].mxu0
        %4879 = vmatprep.mubr.bf16.mxu0 0
        %4880 = vmatmul.mubr.bf16.gmra.mrb[0].mxu0 %v4772
        %v4881 = vpop.f32.mrb[0].mxu0
        %v4882 = vadd.f32 0.0, %v4881
        %v4883 = vpop.f32.mrb[0].mxu0
        %v4884 = vpop.f32.mrb[0].mxu0
        %v4885 = vadd.f32 0.0, %v4884
        %v4886 = vpop.f32.mrb[0].mxu0
        %4887 = vmatprep.mubr.bf16.mxu0 0
        %4888 = vmatmul.mubr.bf16.gmra.mrb[0].mxu0 %v4775
        %v4889 = vpop.f32.mrb[0].mxu0
        %v4890 = vadd.f32 0.0, %v4889
        %v4891 = vpop.f32.mrb[0].mxu0
        %v4892 = vpop.f32.mrb[0].mxu0
        %v4893 = vadd.f32 0.0, %v4892
        %v4894 = vpop.f32.mrb[0].mxu0
        %4895 = vmatprep.mubr.bf16.mxu0 0
        %4896 = vmatmul.mubr.bf16.gmra.mrb[0].mxu0 %v4778
        %v4897 = vpop.f32.mrb[0].mxu0
        %v4898 = vadd.f32 0.0, %v4897
        %v4899 = vpop.f32.mrb[0].mxu0
        %v4900 = vpop.f32.mrb[0].mxu0
        %v4901 = vadd.f32 0.0, %v4900
        %v4902 = vpop.f32.mrb[0].mxu0
        %4903 = vmatprep.mubr.bf16.mxu0 0
        %4904 = vmatmul.mubr.bf16.gmra.mrb[0].mxu0 %v4781
        %v4905 = vpop.f32.mrb[0].mxu0
        %v4906 = vadd.f32 0.0, %v4905
        %v4907 = vpop.f32.mrb[0].mxu0
        %v4908 = vpop.f32.mrb[0].mxu0
        %v4909 = vadd.f32 0.0, %v4908
        %v4910 = vpop.f32.mrb[0].mxu0
        %4911 = vmatprep.mubr.bf16.mxu0 0
        %4912 = vmatmul.mubr.bf16.gmra.mrb[0].mxu0 %v4784
        %v4913 = vpop.f32.mrb[0].mxu0
        %v4914 = vadd.f32 0.0, %v4913
        %v4915 = vpop.f32.mrb[0].mxu0
        %v4916 = vpop.f32.mrb[0].mxu0
        %v4917 = vadd.f32 0.0, %v4916
        %v4918 = vpop.f32.mrb[0].mxu0
        %4919 = vmatprep.mubr.bf16.mxu0 0
        %4920 = vmatmul.mubr.bf16.gmra.mrb[0].mxu0 %v4787
        %v4921 = vpop.f32.mrb[0].mxu0
        %v4922 = vadd.f32 0.0, %v4921
        %v4923 = vpop.f32.mrb[0].mxu0
        %v4924 = vpop.f32.mrb[0].mxu0
        %v4925 = vadd.f32 0.0, %v4924
        %v4926 = vpop.f32.mrb[0].mxu0
        %4927 = vmatprep.mubr.bf16.mxu0 0
        %4928 = vmatmul.mubr.bf16.gmra.mrb[0].mxu0 %v4790
        %v4929 = vpop.f32.mrb[0].mxu0
        %v4930 = vadd.f32 0.0, %v4929
        %v4931 = vpop.f32.mrb[0].mxu0
        %v4932 = vpop.f32.mrb[0].mxu0
        %v4933 = vadd.f32 0.0, %v4932
        %v4934 = vpop.f32.mrb[0].mxu0
        %4935 = vmatprep.mubr.bf16.mxu0 0
        %4936 = vmatmul.mubr.bf16.gmra.mrb[0].mxu0 %v4793
        %v4937 = vpop.f32.mrb[0].mxu0
        %v4938 = vadd.f32 0.0, %v4937
        %v4939 = vpop.f32.mrb[0].mxu0
        %v4940 = vpop.f32.mrb[0].mxu0
        %v4941 = vadd.f32 0.0, %v4940
        %v4942 = vpop.f32.mrb[0].mxu0
        %4943 = vmatprep.mubr.bf16.mxu0 0
        %4944 = vmatmul.mubr.bf16.gmra.mrb[0].mxu0 %v4796
        %v4945 = vpop.f32.mrb[0].mxu0
        %v4946 = vadd.f32 0.0, %v4945
        %v4947 = vpop.f32.mrb[0].mxu0
        %v4948 = vpop.f32.mrb[0].mxu0
        %v4949 = vadd.f32 0.0, %v4948
        %v4950 = vpop.f32.mrb[0].mxu0
        %4951 = vmatprep.mubr.bf16.mxu0 0
        %4952 = vmatmul.mubr.bf16.gmra.mrb[0].mxu0 %v4799
        %v4953 = vpop.f32.mrb[0].mxu0
        %v4954 = vadd.f32 0.0, %v4953
        %v4955 = vpop.f32.mrb[0].mxu0
        %v4956 = vpop.f32.mrb[0].mxu0
        %v4957 = vadd.f32 0.0, %v4956
        %v4958 = vpop.f32.mrb[0].mxu0
        %4959 = vmatprep.mubr.bf16.mxu0 0
        %4960 = vmatmul.mubr.bf16.gmra.mrb[0].mxu0 %v4802
        %v4961 = vpop.f32.mrb[0].mxu0
        %v4962 = vadd.f32 0.0, %v4961
        %v4963 = vpop.f32.mrb[0].mxu0
        %v4964 = vpop.f32.mrb[0].mxu0
        %v4965 = vadd.f32 0.0, %v4964
        %v4966 = vpop.f32.mrb[0].mxu0
        %4967 = vdwg.mxu0
        %v4968 = vadd.f32 %v4499, %v4842
        %v4969 = vadd.f32 %v4500, %v4845
        %v4970 = vadd.f32 %v4501, %v4850
        %v4971 = vadd.f32 %v4502, %v4853
        %v4972 = vadd.f32 %v4503, %v4858
        %v4973 = vadd.f32 %v4504, %v4861
        %v4974 = vadd.f32 %v4505, %v4866
        %v4975 = vadd.f32 %v4506, %v4869
        %v4976 = vadd.f32 %v4507, %v4874
        %v4977 = vadd.f32 %v4508, %v4877
        %v4978 = vadd.f32 %v4509, %v4882
        %v4979 = vadd.f32 %v4510, %v4885
        %v4980 = vadd.f32 %v4511, %v4890
        %v4981 = vadd.f32 %v4512, %v4893
        %v4982 = vadd.f32 %v4513, %v4898
        %v4983 = vadd.f32 %v4514, %v4901
        %v4984 = vadd.f32 %v4515, %v4906
        %v4985 = vadd.f32 %v4516, %v4909
        %v4986 = vadd.f32 %v4517, %v4914
        %v4987 = vadd.f32 %v4518, %v4917
        %v4988 = vadd.f32 %v4519, %v4922
        %v4989 = vadd.f32 %v4520, %v4925
        %v4990 = vadd.f32 %v4521, %v4930
        %v4991 = vadd.f32 %v4522, %v4933
        %v4992 = vadd.f32 %v4523, %v4938
        %v4993 = vadd.f32 %v4524, %v4941
        %v4994 = vadd.f32 %v4525, %v4946
        %v4995 = vadd.f32 %v4526, %v4949
        %v4996 = vadd.f32 %v4527, %v4954
        %v4997 = vadd.f32 %v4528, %v4957
        %v4998 = vadd.f32 %v4529, %v4962
        %v4999 = vadd.f32 %v4530, %v4965
        %v5000 = vld [vmem:[%s2] sm:$0x1]
        %v5002 = vlaneseq
        %v5003 = vshrl.u32 %v5002, 7
        %v5004 = vsub.s32 0, %v5003
        %v5005 = vrot.slane %v5000, %v5004
        %v5007 = vadd.f32 %v4968, %v5005
        %v5008 = vadd.f32 %v4969, %v5005
        %v5009 = vadd.f32 %v4970, %v5005
        %v5010 = vadd.f32 %v4971, %v5005
        %v5011 = vadd.f32 %v4972, %v5005
        %v5012 = vadd.f32 %v4973, %v5005
        %v5013 = vadd.f32 %v4974, %v5005
        %v5014 = vadd.f32 %v4975, %v5005
        %v5015 = vadd.f32 %v4976, %v5005
        %v5016 = vadd.f32 %v4977, %v5005
        %v5017 = vadd.f32 %v4978, %v5005
        %v5018 = vadd.f32 %v4979, %v5005
        %v5019 = vadd.f32 %v4980, %v5005
        %v5020 = vadd.f32 %v4981, %v5005
        %v5021 = vadd.f32 %v4982, %v5005
        %v5022 = vadd.f32 %v4983, %v5005
        %v5023 = vadd.f32 %v4984, %v5005
        %v5024 = vadd.f32 %v4985, %v5005
        %v5025 = vadd.f32 %v4986, %v5005
        %v5026 = vadd.f32 %v4987, %v5005
        %v5027 = vadd.f32 %v4988, %v5005
        %v5028 = vadd.f32 %v4989, %v5005
        %v5029 = vadd.f32 %v4990, %v5005
        %v5030 = vadd.f32 %v4991, %v5005
        %v5031 = vadd.f32 %v4992, %v5005
        %v5032 = vadd.f32 %v4993, %v5005
        %v5033 = vadd.f32 %v4994, %v5005
        %v5034 = vadd.f32 %v4995, %v5005
        %v5035 = vadd.f32 %v4996, %v5005
        %v5036 = vadd.f32 %v4997, %v5005
        %v5037 = vadd.f32 %v4998, %v5005
        %v5038 = vadd.f32 %v4999, %v5005
        %v5039 = vmax.f32 %v5007, 0.0
        %v5040 = vmax.f32 %v5008, 0.0
        %v5041 = vmax.f32 %v5009, 0.0
        %v5042 = vmax.f32 %v5010, 0.0
        %v5043 = vmax.f32 %v5011, 0.0
        %v5044 = vmax.f32 %v5012, 0.0
        %v5045 = vmax.f32 %v5013, 0.0
        %v5046 = vmax.f32 %v5014, 0.0
        %v5047 = vmax.f32 %v5015, 0.0
        %v5048 = vmax.f32 %v5016, 0.0
        %v5049 = vmax.f32 %v5017, 0.0
        %v5050 = vmax.f32 %v5018, 0.0
        %v5051 = vmax.f32 %v5019, 0.0
        %v5052 = vmax.f32 %v5020, 0.0
        %v5053 = vmax.f32 %v5021, 0.0
        %v5054 = vmax.f32 %v5022, 0.0
        %v5055 = vmax.f32 %v5023, 0.0
        %v5056 = vmax.f32 %v5024, 0.0
        %v5057 = vmax.f32 %v5025, 0.0
        %v5058 = vmax.f32 %v5026, 0.0
        %v5059 = vmax.f32 %v5027, 0.0
        %v5060 = vmax.f32 %v5028, 0.0
        %v5061 = vmax.f32 %v5029, 0.0
        %v5062 = vmax.f32 %v5030, 0.0
        %v5063 = vmax.f32 %v5031, 0.0
        %v5064 = vmax.f32 %v5032, 0.0
        %v5065 = vmax.f32 %v5033, 0.0
        %v5066 = vmax.f32 %v5034, 0.0
        %v5067 = vmax.f32 %v5035, 0.0
        %v5068 = vmax.f32 %v5036, 0.0
        %v5069 = vmax.f32 %v5037, 0.0
        %v5070 = vmax.f32 %v5038, 0.0
        %v5071 = vmax.f32 %v5039, %v5041
        %v5072 = vmax.f32 %v5040, %v5042
        %v5073 = vmax.f32 %v5043, %v5045
        %v5074 = vmax.f32 %v5044, %v5046
        %v5075 = vmax.f32 %v5047, %v5049
        %v5076 = vmax.f32 %v5048, %v5050
        %v5077 = vmax.f32 %v5051, %v5053
        %v5078 = vmax.f32 %v5052, %v5054
        %v5079 = vmax.f32 %v5055, %v5057
        %v5080 = vmax.f32 %v5056, %v5058
        %v5081 = vmax.f32 %v5059, %v5061
        %v5082 = vmax.f32 %v5060, %v5062
        %v5083 = vmax.f32 %v5063, %v5065
        %v5084 = vmax.f32 %v5064, %v5066
        %v5085 = vmax.f32 %v5067, %v5069
        %v5086 = vmax.f32 %v5068, %v5070
        %v5103 = vcombine.high %v5071, %v5071
        %v5105 = vunpack.c.l.s4 1983009808
        %v5106 = vunpack.c.0.s8 %v5105
        %v5107 = vlaneseq
        %v5108 = vshrl.u32 %v5107, 7
        %v5109 = vsub.s32 %v5106, %v5108
        %v5110 = vrot.slane %v5071, %v5109
        %v5112 = vunpack.c.l.s4 1983009808
        %v5113 = vunpack.c.0.s8 %v5112
        %v5114 = vlaneseq
        %v5115 = vshrl.u32 %v5114, 7
        %v5116 = vsub.s32 %v5113, %v5115
        %v5117 = vrot.slane %v5103, %v5116
        %v5118 = vcombine.high %v5110, %v5110
        %v5119 = vcombine.high %v5117, %v5117
        %v5120 = vcombine.high %v5072, %v5072
        %v5122 = vunpack.c.l.s4 1983009808
        %v5123 = vunpack.c.0.s8 %v5122
        %v5124 = vlaneseq
        %v5125 = vshrl.u32 %v5124, 7
        %v5126 = vsub.s32 %v5123, %v5125
        %v5127 = vrot.slane %v5072, %v5126
        %v5129 = vunpack.c.l.s4 1983009808
        %v5130 = vunpack.c.0.s8 %v5129
        %v5131 = vlaneseq
        %v5132 = vshrl.u32 %v5131, 7
        %v5133 = vsub.s32 %v5130, %v5132
        %v5134 = vrot.slane %v5120, %v5133
        %v5135 = vcombine.high %v5127, %v5127
        %v5136 = vcombine.high %v5134, %v5134
        %v5137 = vcombine.high %v5073, %v5073
        %v5139 = vunpack.c.l.s4 1983009808
        %v5140 = vunpack.c.0.s8 %v5139
        %v5141 = vlaneseq
        %v5142 = vshrl.u32 %v5141, 7
        %v5143 = vsub.s32 %v5140, %v5142
        %v5144 = vrot.slane %v5073, %v5143
        %v5146 = vunpack.c.l.s4 1983009808
        %v5147 = vunpack.c.0.s8 %v5146
        %v5148 = vlaneseq
        %v5149 = vshrl.u32 %v5148, 7
        %v5150 = vsub.s32 %v5147, %v5149
        %v5151 = vrot.slane %v5137, %v5150
        %v5152 = vcombine.high %v5144, %v5144
        %v5153 = vcombine.high %v5151, %v5151
        %v5154 = vcombine.high %v5074, %v5074
        %v5156 = vunpack.c.l.s4 1983009808
        %v5157 = vunpack.c.0.s8 %v5156
        %v5158 = vlaneseq
        %v5159 = vshrl.u32 %v5158, 7
        %v5160 = vsub.s32 %v5157, %v5159
        %v5161 = vrot.slane %v5074, %v5160
        %v5163 = vunpack.c.l.s4 1983009808
        %v5164 = vunpack.c.0.s8 %v5163
        %v5165 = vlaneseq
        %v5166 = vshrl.u32 %v5165, 7
        %v5167 = vsub.s32 %v5164, %v5166
        %v5168 = vrot.slane %v5154, %v5167
        %v5169 = vcombine.high %v5161, %v5161
        %v5170 = vcombine.high %v5168, %v5168
        %v5171 = vcombine.high %v5075, %v5075
        %v5173 = vunpack.c.l.s4 1983009808
        %v5174 = vunpack.c.0.s8 %v5173
        %v5175 = vlaneseq
        %v5176 = vshrl.u32 %v5175, 7
        %v5177 = vsub.s32 %v5174, %v5176
        %v5178 = vrot.slane %v5075, %v5177
        %v5180 = vunpack.c.l.s4 1983009808
        %v5181 = vunpack.c.0.s8 %v5180
        %v5182 = vlaneseq
        %v5183 = vshrl.u32 %v5182, 7
        %v5184 = vsub.s32 %v5181, %v5183
        %v5185 = vrot.slane %v5171, %v5184
        %v5186 = vcombine.high %v5178, %v5178
        %v5187 = vcombine.high %v5185, %v5185
        %v5188 = vcombine.high %v5076, %v5076
        %v5190 = vunpack.c.l.s4 1983009808
        %v5191 = vunpack.c.0.s8 %v5190
        %v5192 = vlaneseq
        %v5193 = vshrl.u32 %v5192, 7
        %v5194 = vsub.s32 %v5191, %v5193
        %v5195 = vrot.slane %v5076, %v5194
        %v5197 = vunpack.c.l.s4 1983009808
        %v5198 = vunpack.c.0.s8 %v5197
        %v5199 = vlaneseq
        %v5200 = vshrl.u32 %v5199, 7
        %v5201 = vsub.s32 %v5198, %v5200
        %v5202 = vrot.slane %v5188, %v5201
        %v5203 = vcombine.high %v5195, %v5195
        %v5204 = vcombine.high %v5202, %v5202
        %v5205 = vcombine.high %v5077, %v5077
        %v5207 = vunpack.c.l.s4 1983009808
        %v5208 = vunpack.c.0.s8 %v5207
        %v5209 = vlaneseq
        %v5210 = vshrl.u32 %v5209, 7
        %v5211 = vsub.s32 %v5208, %v5210
        %v5212 = vrot.slane %v5077, %v5211
        %v5214 = vunpack.c.l.s4 1983009808
        %v5215 = vunpack.c.0.s8 %v5214
        %v5216 = vlaneseq
        %v5217 = vshrl.u32 %v5216, 7
        %v5218 = vsub.s32 %v5215, %v5217
        %v5219 = vrot.slane %v5205, %v5218
        %v5220 = vcombine.high %v5212, %v5212
        %v5221 = vcombine.high %v5219, %v5219
        %v5222 = vcombine.high %v5078, %v5078
        %v5224 = vunpack.c.l.s4 1983009808
        %v5225 = vunpack.c.0.s8 %v5224
        %v5226 = vlaneseq
        %v5227 = vshrl.u32 %v5226, 7
        %v5228 = vsub.s32 %v5225, %v5227
        %v5229 = vrot.slane %v5078, %v5228
        %v5231 = vunpack.c.l.s4 1983009808
        %v5232 = vunpack.c.0.s8 %v5231
        %v5233 = vlaneseq
        %v5234 = vshrl.u32 %v5233, 7
        %v5235 = vsub.s32 %v5232, %v5234
        %v5236 = vrot.slane %v5222, %v5235
        %v5237 = vcombine.high %v5229, %v5229
        %v5238 = vcombine.high %v5236, %v5236
        %v5239 = vcombine.high %v5079, %v5079
        %v5241 = vunpack.c.l.s4 1983009808
        %v5242 = vunpack.c.0.s8 %v5241
        %v5243 = vlaneseq
        %v5244 = vshrl.u32 %v5243, 7
        %v5245 = vsub.s32 %v5242, %v5244
        %v5246 = vrot.slane %v5079, %v5245
        %v5248 = vunpack.c.l.s4 1983009808
        %v5249 = vunpack.c.0.s8 %v5248
        %v5250 = vlaneseq
        %v5251 = vshrl.u32 %v5250, 7
        %v5252 = vsub.s32 %v5249, %v5251
        %v5253 = vrot.slane %v5239, %v5252
        %v5254 = vcombine.high %v5246, %v5246
        %v5255 = vcombine.high %v5253, %v5253
        %v5256 = vcombine.high %v5080, %v5080
        %v5258 = vunpack.c.l.s4 1983009808
        %v5259 = vunpack.c.0.s8 %v5258
        %v5260 = vlaneseq
        %v5261 = vshrl.u32 %v5260, 7
        %v5262 = vsub.s32 %v5259, %v5261
        %v5263 = vrot.slane %v5080, %v5262
        %v5265 = vunpack.c.l.s4 1983009808
        %v5266 = vunpack.c.0.s8 %v5265
        %v5267 = vlaneseq
        %v5268 = vshrl.u32 %v5267, 7
        %v5269 = vsub.s32 %v5266, %v5268
        %v5270 = vrot.slane %v5256, %v5269
        %v5271 = vcombine.high %v5263, %v5263
        %v5272 = vcombine.high %v5270, %v5270
        %v5273 = vcombine.high %v5081, %v5081
        %v5275 = vunpack.c.l.s4 1983009808
        %v5276 = vunpack.c.0.s8 %v5275
        %v5277 = vlaneseq
        %v5278 = vshrl.u32 %v5277, 7
        %v5279 = vsub.s32 %v5276, %v5278
        %v5280 = vrot.slane %v5081, %v5279
        %v5282 = vunpack.c.l.s4 1983009808
        %v5283 = vunpack.c.0.s8 %v5282
        %v5284 = vlaneseq
        %v5285 = vshrl.u32 %v5284, 7
        %v5286 = vsub.s32 %v5283, %v5285
        %v5287 = vrot.slane %v5273, %v5286
        %v5288 = vcombine.high %v5280, %v5280
        %v5289 = vcombine.high %v5287, %v5287
        %v5290 = vcombine.high %v5082, %v5082
        %v5292 = vunpack.c.l.s4 1983009808
        %v5293 = vunpack.c.0.s8 %v5292
        %v5294 = vlaneseq
        %v5295 = vshrl.u32 %v5294, 7
        %v5296 = vsub.s32 %v5293, %v5295
        %v5297 = vrot.slane %v5082, %v5296
        %v5299 = vunpack.c.l.s4 1983009808
        %v5300 = vunpack.c.0.s8 %v5299
        %v5301 = vlaneseq
        %v5302 = vshrl.u32 %v5301, 7
        %v5303 = vsub.s32 %v5300, %v5302
        %v5304 = vrot.slane %v5290, %v5303
        %v5305 = vcombine.high %v5297, %v5297
        %v5306 = vcombine.high %v5304, %v5304
        %v5307 = vcombine.high %v5083, %v5083
        %v5309 = vunpack.c.l.s4 1983009808
        %v5310 = vunpack.c.0.s8 %v5309
        %v5311 = vlaneseq
        %v5312 = vshrl.u32 %v5311, 7
        %v5313 = vsub.s32 %v5310, %v5312
        %v5314 = vrot.slane %v5083, %v5313
        %v5316 = vunpack.c.l.s4 1983009808
        %v5317 = vunpack.c.0.s8 %v5316
        %v5318 = vlaneseq
        %v5319 = vshrl.u32 %v5318, 7
        %v5320 = vsub.s32 %v5317, %v5319
        %v5321 = vrot.slane %v5307, %v5320
        %v5322 = vcombine.high %v5314, %v5314
        %v5323 = vcombine.high %v5321, %v5321
        %v5324 = vcombine.high %v5084, %v5084
        %v5326 = vunpack.c.l.s4 1983009808
        %v5327 = vunpack.c.0.s8 %v5326
        %v5328 = vlaneseq
        %v5329 = vshrl.u32 %v5328, 7
        %v5330 = vsub.s32 %v5327, %v5329
        %v5331 = vrot.slane %v5084, %v5330
        %v5333 = vunpack.c.l.s4 1983009808
        %v5334 = vunpack.c.0.s8 %v5333
        %v5335 = vlaneseq
        %v5336 = vshrl.u32 %v5335, 7
        %v5337 = vsub.s32 %v5334, %v5336
        %v5338 = vrot.slane %v5324, %v5337
        %v5339 = vcombine.high %v5331, %v5331
        %v5340 = vcombine.high %v5338, %v5338
        %v5341 = vcombine.high %v5085, %v5085
        %v5343 = vunpack.c.l.s4 1983009808
        %v5344 = vunpack.c.0.s8 %v5343
        %v5345 = vlaneseq
        %v5346 = vshrl.u32 %v5345, 7
        %v5347 = vsub.s32 %v5344, %v5346
        %v5348 = vrot.slane %v5085, %v5347
        %v5350 = vunpack.c.l.s4 1983009808
        %v5351 = vunpack.c.0.s8 %v5350
        %v5352 = vlaneseq
        %v5353 = vshrl.u32 %v5352, 7
        %v5354 = vsub.s32 %v5351, %v5353
        %v5355 = vrot.slane %v5341, %v5354
        %v5356 = vcombine.high %v5348, %v5348
        %v5357 = vcombine.high %v5355, %v5355
        %v5358 = vcombine.high %v5086, %v5086
        %v5360 = vunpack.c.l.s4 1983009808
        %v5361 = vunpack.c.0.s8 %v5360
        %v5362 = vlaneseq
        %v5363 = vshrl.u32 %v5362, 7
        %v5364 = vsub.s32 %v5361, %v5363
        %v5365 = vrot.slane %v5086, %v5364
        %v5367 = vunpack.c.l.s4 1983009808
        %v5368 = vunpack.c.0.s8 %v5367
        %v5369 = vlaneseq
        %v5370 = vshrl.u32 %v5369, 7
        %v5371 = vsub.s32 %v5368, %v5370
        %v5372 = vrot.slane %v5358, %v5371
        %v5373 = vcombine.high %v5365, %v5365
        %v5374 = vcombine.high %v5372, %v5372
        %v5439 = vrot.slane %v5110, 7
        %v5440 = vrot.slane %v5439, 2
        %v5441 = vrot.slane %v5118, 7
        %v5442 = vrot.slane %v5441, 2
        %v5443 = vrot.slane %v5117, 7
        %v5444 = vrot.slane %v5443, 2
        %v5445 = vrot.slane %v5119, 7
        %v5446 = vrot.slane %v5445, 2
        %v5447 = vrot.slane %v5127, 7
        %v5448 = vrot.slane %v5447, 2
        %v5449 = vrot.slane %v5135, 7
        %v5450 = vrot.slane %v5449, 2
        %v5451 = vrot.slane %v5134, 7
        %v5452 = vrot.slane %v5451, 2
        %v5453 = vrot.slane %v5136, 7
        %v5454 = vrot.slane %v5453, 2
        %v5455 = vrot.slane %v5144, 7
        %v5456 = vrot.slane %v5455, 2
        %v5457 = vrot.slane %v5152, 7
        %v5458 = vrot.slane %v5457, 2
        %v5459 = vrot.slane %v5151, 7
        %v5460 = vrot.slane %v5459, 2
        %v5461 = vrot.slane %v5153, 7
        %v5462 = vrot.slane %v5461, 2
        %v5463 = vrot.slane %v5161, 7
        %v5464 = vrot.slane %v5463, 2
        %v5465 = vrot.slane %v5169, 7
        %v5466 = vrot.slane %v5465, 2
        %v5467 = vrot.slane %v5168, 7
        %v5468 = vrot.slane %v5467, 2
        %v5469 = vrot.slane %v5170, 7
        %v5470 = vrot.slane %v5469, 2
        %v5471 = vrot.slane %v5178, 7
        %v5472 = vrot.slane %v5471, 2
        %v5473 = vrot.slane %v5186, 7
        %v5474 = vrot.slane %v5473, 2
        %v5475 = vrot.slane %v5185, 7
        %v5476 = vrot.slane %v5475, 2
        %v5477 = vrot.slane %v5187, 7
        %v5478 = vrot.slane %v5477, 2
        %v5479 = vrot.slane %v5195, 7
        %v5480 = vrot.slane %v5479, 2
        %v5481 = vrot.slane %v5203, 7
        %v5482 = vrot.slane %v5481, 2
        %v5483 = vrot.slane %v5202, 7
        %v5484 = vrot.slane %v5483, 2
        %v5485 = vrot.slane %v5204, 7
        %v5486 = vrot.slane %v5485, 2
        %v5487 = vrot.slane %v5212, 7
        %v5488 = vrot.slane %v5487, 2
        %v5489 = vrot.slane %v5220, 7
        %v5490 = vrot.slane %v5489, 2
        %v5491 = vrot.slane %v5219, 7
        %v5492 = vrot.slane %v5491, 2
        %v5493 = vrot.slane %v5221, 7
        %v5494 = vrot.slane %v5493, 2
        %v5495 = vrot.slane %v5229, 7
        %v5496 = vrot.slane %v5495, 2
        %v5497 = vrot.slane %v5237, 7
        %v5498 = vrot.slane %v5497, 2
        %v5499 = vrot.slane %v5236, 7
        %v5500 = vrot.slane %v5499, 2
        %v5501 = vrot.slane %v5238, 7
        %v5502 = vrot.slane %v5501, 2
        %v5503 = vrot.slane %v5246, 7
        %v5504 = vrot.slane %v5503, 2
        %v5505 = vrot.slane %v5254, 7
        %v5506 = vrot.slane %v5505, 2
        %v5507 = vrot.slane %v5253, 7
        %v5508 = vrot.slane %v5507, 2
        %v5509 = vrot.slane %v5255, 7
        %v5510 = vrot.slane %v5509, 2
        %v5511 = vrot.slane %v5263, 7
        %v5512 = vrot.slane %v5511, 2
        %v5513 = vrot.slane %v5271, 7
        %v5514 = vrot.slane %v5513, 2
        %v5515 = vrot.slane %v5270, 7
        %v5516 = vrot.slane %v5515, 2
        %v5517 = vrot.slane %v5272, 7
        %v5518 = vrot.slane %v5517, 2
        %v5519 = vrot.slane %v5280, 7
        %v5520 = vrot.slane %v5519, 2
        %v5521 = vrot.slane %v5288, 7
        %v5522 = vrot.slane %v5521, 2
        %v5523 = vrot.slane %v5287, 7
        %v5524 = vrot.slane %v5523, 2
        %v5525 = vrot.slane %v5289, 7
        %v5526 = vrot.slane %v5525, 2
        %v5527 = vrot.slane %v5297, 7
        %v5528 = vrot.slane %v5527, 2
        %v5529 = vrot.slane %v5305, 7
        %v5530 = vrot.slane %v5529, 2
        %v5531 = vrot.slane %v5304, 7
        %v5532 = vrot.slane %v5531, 2
        %v5533 = vrot.slane %v5306, 7
        %v5534 = vrot.slane %v5533, 2
        %v5535 = vrot.slane %v5314, 7
        %v5536 = vrot.slane %v5535, 2
        %v5537 = vrot.slane %v5322, 7
        %v5538 = vrot.slane %v5537, 2
        %v5539 = vrot.slane %v5321, 7
        %v5540 = vrot.slane %v5539, 2
        %v5541 = vrot.slane %v5323, 7
        %v5542 = vrot.slane %v5541, 2
        %v5543 = vrot.slane %v5331, 7
        %v5544 = vrot.slane %v5543, 2
        %v5545 = vrot.slane %v5339, 7
        %v5546 = vrot.slane %v5545, 2
        %v5547 = vrot.slane %v5338, 7
        %v5548 = vrot.slane %v5547, 2
        %v5549 = vrot.slane %v5340, 7
        %v5550 = vrot.slane %v5549, 2
        %v5551 = vrot.slane %v5348, 7
        %v5552 = vrot.slane %v5551, 2
        %v5553 = vrot.slane %v5356, 7
        %v5554 = vrot.slane %v5553, 2
        %v5555 = vrot.slane %v5355, 7
        %v5556 = vrot.slane %v5555, 2
        %v5557 = vrot.slane %v5357, 7
        %v5558 = vrot.slane %v5557, 2
        %v5559 = vrot.slane %v5365, 7
        %v5560 = vrot.slane %v5559, 2
        %v5561 = vrot.slane %v5373, 7
        %v5562 = vrot.slane %v5561, 2
        %v5563 = vrot.slane %v5372, 7
        %v5564 = vrot.slane %v5563, 2
        %v5565 = vrot.slane %v5374, 7
        %v5566 = vrot.slane %v5565, 2
        %v5631 = vmax.f32 %v5110, %v5440
        %v5632 = vmax.f32 %v5118, %v5442
        %v5633 = vmax.f32 %v5117, %v5444
        %v5634 = vmax.f32 %v5119, %v5446
        %v5635 = vmax.f32 %v5127, %v5448
        %v5636 = vmax.f32 %v5135, %v5450
        %v5637 = vmax.f32 %v5134, %v5452
        %v5638 = vmax.f32 %v5136, %v5454
        %v5639 = vmax.f32 %v5144, %v5456
        %v5640 = vmax.f32 %v5152, %v5458
        %v5641 = vmax.f32 %v5151, %v5460
        %v5642 = vmax.f32 %v5153, %v5462
        %v5643 = vmax.f32 %v5161, %v5464
        %v5644 = vmax.f32 %v5169, %v5466
        %v5645 = vmax.f32 %v5168, %v5468
        %v5646 = vmax.f32 %v5170, %v5470
        %v5647 = vmax.f32 %v5178, %v5472
        %v5648 = vmax.f32 %v5186, %v5474
        %v5649 = vmax.f32 %v5185, %v5476
        %v5650 = vmax.f32 %v5187, %v5478
        %v5651 = vmax.f32 %v5195, %v5480
        %v5652 = vmax.f32 %v5203, %v5482
        %v5653 = vmax.f32 %v5202, %v5484
        %v5654 = vmax.f32 %v5204, %v5486
        %v5655 = vmax.f32 %v5212, %v5488
        %v5656 = vmax.f32 %v5220, %v5490
        %v5657 = vmax.f32 %v5219, %v5492
        %v5658 = vmax.f32 %v5221, %v5494
        %v5659 = vmax.f32 %v5229, %v5496
        %v5660 = vmax.f32 %v5237, %v5498
        %v5661 = vmax.f32 %v5236, %v5500
        %v5662 = vmax.f32 %v5238, %v5502
        %v5663 = vmax.f32 %v5246, %v5504
        %v5664 = vmax.f32 %v5254, %v5506
        %v5665 = vmax.f32 %v5253, %v5508
        %v5666 = vmax.f32 %v5255, %v5510
        %v5667 = vmax.f32 %v5263, %v5512
        %v5668 = vmax.f32 %v5271, %v5514
        %v5669 = vmax.f32 %v5270, %v5516
        %v5670 = vmax.f32 %v5272, %v5518
        %v5671 = vmax.f32 %v5280, %v5520
        %v5672 = vmax.f32 %v5288, %v5522
        %v5673 = vmax.f32 %v5287, %v5524
        %v5674 = vmax.f32 %v5289, %v5526
        %v5675 = vmax.f32 %v5297, %v5528
        %v5676 = vmax.f32 %v5305, %v5530
        %v5677 = vmax.f32 %v5304, %v5532
        %v5678 = vmax.f32 %v5306, %v5534
        %v5679 = vmax.f32 %v5314, %v5536
        %v5680 = vmax.f32 %v5322, %v5538
        %v5681 = vmax.f32 %v5321, %v5540
        %v5682 = vmax.f32 %v5323, %v5542
        %v5683 = vmax.f32 %v5331, %v5544
        %v5684 = vmax.f32 %v5339, %v5546
        %v5685 = vmax.f32 %v5338, %v5548
        %v5686 = vmax.f32 %v5340, %v5550
        %v5687 = vmax.f32 %v5348, %v5552
        %v5688 = vmax.f32 %v5356, %v5554
        %v5689 = vmax.f32 %v5355, %v5556
        %v5690 = vmax.f32 %v5357, %v5558
        %v5691 = vmax.f32 %v5365, %v5560
        %v5692 = vmax.f32 %v5373, %v5562
        %v5693 = vmax.f32 %v5372, %v5564
        %v5694 = vmax.f32 %v5374, %v5566
        %vm5695 = vcmask 130048
        %5696 = vst.msk [vmem:[#allocation2] sm:$0xff] %vm5695, 0.0
        %vm5697 = vcmask 123904
        %5698 = vst.msk [vmem:[#allocation2 + $0x8] sm:$0x3] %vm5697, 0.0
        %s5699 = scalar_lea.vmem [#allocation2], 144
        %5700 = vst.msk [vmem:[%s5699] sm:$0xff] %vm5695, 0.0
        %5701 = vst.msk [vmem:[%s5699 + $0x8] sm:$0x3] %vm5697, 0.0
        %vm5702 = vcmask 122880
        %5703 = vst.msk [vmem:[#allocation2] sm:$0x1] %vm5702, 0.0
        %5704 = vst.msk [vmem:[#allocation2 + $0x10] sm:$0x1] %vm5702, 0.0
        %5705 = vst.msk [vmem:[#allocation2 + $0x20] sm:$0x1] %vm5702, 0.0
        %5706 = vst.msk [vmem:[#allocation2 + $0x30] sm:$0x1] %vm5702, 0.0
        %5707 = vst.msk [vmem:[#allocation2 + $0x40] sm:$0x1] %vm5702, 0.0
        %5708 = vst.msk [vmem:[#allocation2 + $0x50] sm:$0x1] %vm5702, 0.0
        %5709 = vst.msk [vmem:[#allocation2 + $0x60] sm:$0x1] %vm5702, 0.0
        %5710 = vst.msk [vmem:[#allocation2 + $0x70] sm:$0x1] %vm5702, 0.0
        %5711 = vst.msk [vmem:[#allocation2 + $0x80] sm:$0x1] %vm5702, 0.0
        %5712 = vst.msk [vmem:[#allocation2 + $0x90] sm:$0x1] %vm5702, 0.0
        %5713 = vst.msk [vmem:[#allocation2 + $0x9] sm:$0x1] %vm5702, 0.0
        %5714 = vst.msk [vmem:[#allocation2 + $0x19] sm:$0x1] %vm5702, 0.0
        %5715 = vst.msk [vmem:[#allocation2 + $0x29] sm:$0x1] %vm5702, 0.0
        %5716 = vst.msk [vmem:[#allocation2 + $0x39] sm:$0x1] %vm5702, 0.0
        %5717 = vst.msk [vmem:[#allocation2 + $0x49] sm:$0x1] %vm5702, 0.0
        %5718 = vst.msk [vmem:[#allocation2 + $0x59] sm:$0x1] %vm5702, 0.0
        %5719 = vst.msk [vmem:[#allocation2 + $0x69] sm:$0x1] %vm5702, 0.0
        %5720 = vst.msk [vmem:[#allocation2 + $0x79] sm:$0x1] %vm5702, 0.0
        %5721 = vst.msk [vmem:[#allocation2 + $0x89] sm:$0x1] %vm5702, 0.0
        %5722 = vst.msk [vmem:[#allocation2 + $0x99] sm:$0x1] %vm5702, 0.0
        %v5787 = vlaneseq
        %v5788 = vshrl.u32 %v5787, 7
        %v5789 = vsub.s32 0, %v5788
        %v5790 = vrot.slane %v5631, %v5789
        %v5791 = vlaneseq
        %v5792 = vshrl.u32 %v5791, 7
        %v5793 = vsub.s32 0, %v5792
        %v5794 = vrot.slane %v5632, %v5793
        %v5795 = vlaneseq
        %v5796 = vshrl.u32 %v5795, 7
        %v5797 = vsub.s32 0, %v5796
        %v5798 = vrot.slane %v5633, %v5797
        %v5799 = vlaneseq
        %v5800 = vshrl.u32 %v5799, 7
        %v5801 = vsub.s32 0, %v5800
        %v5802 = vrot.slane %v5634, %v5801
        %v5803 = vlaneseq
        %v5804 = vshrl.u32 %v5803, 7
        %v5805 = vsub.s32 0, %v5804
        %v5806 = vrot.slane %v5635, %v5805
        %v5807 = vlaneseq
        %v5808 = vshrl.u32 %v5807, 7
        %v5809 = vsub.s32 0, %v5808
        %v5810 = vrot.slane %v5636, %v5809
        %v5811 = vlaneseq
        %v5812 = vshrl.u32 %v5811, 7
        %v5813 = vsub.s32 0, %v5812
        %v5814 = vrot.slane %v5637, %v5813
        %v5815 = vlaneseq
        %v5816 = vshrl.u32 %v5815, 7
        %v5817 = vsub.s32 0, %v5816
        %v5818 = vrot.slane %v5638, %v5817
        %v5819 = vlaneseq
        %v5820 = vshrl.u32 %v5819, 7
        %v5821 = vsub.s32 0, %v5820
        %v5822 = vrot.slane %v5639, %v5821
        %v5823 = vlaneseq
        %v5824 = vshrl.u32 %v5823, 7
        %v5825 = vsub.s32 0, %v5824
        %v5826 = vrot.slane %v5640, %v5825
        %v5827 = vlaneseq
        %v5828 = vshrl.u32 %v5827, 7
        %v5829 = vsub.s32 0, %v5828
        %v5830 = vrot.slane %v5641, %v5829
        %v5831 = vlaneseq
        %v5832 = vshrl.u32 %v5831, 7
        %v5833 = vsub.s32 0, %v5832
        %v5834 = vrot.slane %v5642, %v5833
        %v5835 = vlaneseq
        %v5836 = vshrl.u32 %v5835, 7
        %v5837 = vsub.s32 0, %v5836
        %v5838 = vrot.slane %v5643, %v5837
        %v5839 = vlaneseq
        %v5840 = vshrl.u32 %v5839, 7
        %v5841 = vsub.s32 0, %v5840
        %v5842 = vrot.slane %v5644, %v5841
        %v5843 = vlaneseq
        %v5844 = vshrl.u32 %v5843, 7
        %v5845 = vsub.s32 0, %v5844
        %v5846 = vrot.slane %v5645, %v5845
        %v5847 = vlaneseq
        %v5848 = vshrl.u32 %v5847, 7
        %v5849 = vsub.s32 0, %v5848
        %v5850 = vrot.slane %v5646, %v5849
        %v5851 = vlaneseq
        %v5852 = vshrl.u32 %v5851, 7
        %v5853 = vsub.s32 0, %v5852
        %v5854 = vrot.slane %v5647, %v5853
        %v5855 = vlaneseq
        %v5856 = vshrl.u32 %v5855, 7
        %v5857 = vsub.s32 0, %v5856
        %v5858 = vrot.slane %v5648, %v5857
        %v5859 = vlaneseq
        %v5860 = vshrl.u32 %v5859, 7
        %v5861 = vsub.s32 0, %v5860
        %v5862 = vrot.slane %v5649, %v5861
        %v5863 = vlaneseq
        %v5864 = vshrl.u32 %v5863, 7
        %v5865 = vsub.s32 0, %v5864
        %v5866 = vrot.slane %v5650, %v5865
        %v5867 = vlaneseq
        %v5868 = vshrl.u32 %v5867, 7
        %v5869 = vsub.s32 0, %v5868
        %v5870 = vrot.slane %v5651, %v5869
        %v5871 = vlaneseq
        %v5872 = vshrl.u32 %v5871, 7
        %v5873 = vsub.s32 0, %v5872
        %v5874 = vrot.slane %v5652, %v5873
        %v5875 = vlaneseq
        %v5876 = vshrl.u32 %v5875, 7
        %v5877 = vsub.s32 0, %v5876
        %v5878 = vrot.slane %v5653, %v5877
        %v5879 = vlaneseq
        %v5880 = vshrl.u32 %v5879, 7
        %v5881 = vsub.s32 0, %v5880
        %v5882 = vrot.slane %v5654, %v5881
        %v5883 = vlaneseq
        %v5884 = vshrl.u32 %v5883, 7
        %v5885 = vsub.s32 0, %v5884
        %v5886 = vrot.slane %v5655, %v5885
        %v5887 = vlaneseq
        %v5888 = vshrl.u32 %v5887, 7
        %v5889 = vsub.s32 0, %v5888
        %v5890 = vrot.slane %v5656, %v5889
        %v5891 = vlaneseq
        %v5892 = vshrl.u32 %v5891, 7
        %v5893 = vsub.s32 0, %v5892
        %v5894 = vrot.slane %v5657, %v5893
        %v5895 = vlaneseq
        %v5896 = vshrl.u32 %v5895, 7
        %v5897 = vsub.s32 0, %v5896
        %v5898 = vrot.slane %v5658, %v5897
        %v5899 = vlaneseq
        %v5900 = vshrl.u32 %v5899, 7
        %v5901 = vsub.s32 0, %v5900
        %v5902 = vrot.slane %v5659, %v5901
        %v5903 = vlaneseq
        %v5904 = vshrl.u32 %v5903, 7
        %v5905 = vsub.s32 0, %v5904
        %v5906 = vrot.slane %v5660, %v5905
        %v5907 = vlaneseq
        %v5908 = vshrl.u32 %v5907, 7
        %v5909 = vsub.s32 0, %v5908
        %v5910 = vrot.slane %v5661, %v5909
        %v5911 = vlaneseq
        %v5912 = vshrl.u32 %v5911, 7
        %v5913 = vsub.s32 0, %v5912
        %v5914 = vrot.slane %v5662, %v5913
        %v5915 = vlaneseq
        %v5916 = vshrl.u32 %v5915, 7
        %v5917 = vsub.s32 0, %v5916
        %v5918 = vrot.slane %v5663, %v5917
        %v5919 = vlaneseq
        %v5920 = vshrl.u32 %v5919, 7
        %v5921 = vsub.s32 0, %v5920
        %v5922 = vrot.slane %v5664, %v5921
        %v5923 = vlaneseq
        %v5924 = vshrl.u32 %v5923, 7
        %v5925 = vsub.s32 0, %v5924
        %v5926 = vrot.slane %v5665, %v5925
        %v5927 = vlaneseq
        %v5928 = vshrl.u32 %v5927, 7
        %v5929 = vsub.s32 0, %v5928
        %v5930 = vrot.slane %v5666, %v5929
        %v5931 = vlaneseq
        %v5932 = vshrl.u32 %v5931, 7
        %v5933 = vsub.s32 0, %v5932
        %v5934 = vrot.slane %v5667, %v5933
        %v5935 = vlaneseq
        %v5936 = vshrl.u32 %v5935, 7
        %v5937 = vsub.s32 0, %v5936
        %v5938 = vrot.slane %v5668, %v5937
        %v5939 = vlaneseq
        %v5940 = vshrl.u32 %v5939, 7
        %v5941 = vsub.s32 0, %v5940
        %v5942 = vrot.slane %v5669, %v5941
        %v5943 = vlaneseq
        %v5944 = vshrl.u32 %v5943, 7
        %v5945 = vsub.s32 0, %v5944
        %v5946 = vrot.slane %v5670, %v5945
        %v5947 = vlaneseq
        %v5948 = vshrl.u32 %v5947, 7
        %v5949 = vsub.s32 0, %v5948
        %v5950 = vrot.slane %v5671, %v5949
        %v5951 = vlaneseq
        %v5952 = vshrl.u32 %v5951, 7
        %v5953 = vsub.s32 0, %v5952
        %v5954 = vrot.slane %v5672, %v5953
        %v5955 = vlaneseq
        %v5956 = vshrl.u32 %v5955, 7
        %v5957 = vsub.s32 0, %v5956
        %v5958 = vrot.slane %v5673, %v5957
        %v5959 = vlaneseq
        %v5960 = vshrl.u32 %v5959, 7
        %v5961 = vsub.s32 0, %v5960
        %v5962 = vrot.slane %v5674, %v5961
        %v5963 = vlaneseq
        %v5964 = vshrl.u32 %v5963, 7
        %v5965 = vsub.s32 0, %v5964
        %v5966 = vrot.slane %v5675, %v5965
        %v5967 = vlaneseq
        %v5968 = vshrl.u32 %v5967, 7
        %v5969 = vsub.s32 0, %v5968
        %v5970 = vrot.slane %v5676, %v5969
        %v5971 = vlaneseq
        %v5972 = vshrl.u32 %v5971, 7
        %v5973 = vsub.s32 0, %v5972
        %v5974 = vrot.slane %v5677, %v5973
        %v5975 = vlaneseq
        %v5976 = vshrl.u32 %v5975, 7
        %v5977 = vsub.s32 0, %v5976
        %v5978 = vrot.slane %v5678, %v5977
        %v5979 = vlaneseq
        %v5980 = vshrl.u32 %v5979, 7
        %v5981 = vsub.s32 0, %v5980
        %v5982 = vrot.slane %v5679, %v5981
        %v5983 = vlaneseq
        %v5984 = vshrl.u32 %v5983, 7
        %v5985 = vsub.s32 0, %v5984
        %v5986 = vrot.slane %v5680, %v5985
        %v5987 = vlaneseq
        %v5988 = vshrl.u32 %v5987, 7
        %v5989 = vsub.s32 0, %v5988
        %v5990 = vrot.slane %v5681, %v5989
        %v5991 = vlaneseq
        %v5992 = vshrl.u32 %v5991, 7
        %v5993 = vsub.s32 0, %v5992
        %v5994 = vrot.slane %v5682, %v5993
        %v5995 = vlaneseq
        %v5996 = vshrl.u32 %v5995, 7
        %v5997 = vsub.s32 0, %v5996
        %v5998 = vrot.slane %v5683, %v5997
        %v5999 = vlaneseq
        %v6000 = vshrl.u32 %v5999, 7
        %v6001 = vsub.s32 0, %v6000
        %v6002 = vrot.slane %v5684, %v6001
        %v6003 = vlaneseq
        %v6004 = vshrl.u32 %v6003, 7
        %v6005 = vsub.s32 0, %v6004
        %v6006 = vrot.slane %v5685, %v6005
        %v6007 = vlaneseq
        %v6008 = vshrl.u32 %v6007, 7
        %v6009 = vsub.s32 0, %v6008
        %v6010 = vrot.slane %v5686, %v6009
        %v6011 = vlaneseq
        %v6012 = vshrl.u32 %v6011, 7
        %v6013 = vsub.s32 0, %v6012
        %v6014 = vrot.slane %v5687, %v6013
        %v6015 = vlaneseq
        %v6016 = vshrl.u32 %v6015, 7
        %v6017 = vsub.s32 0, %v6016
        %v6018 = vrot.slane %v5688, %v6017
        %v6019 = vlaneseq
        %v6020 = vshrl.u32 %v6019, 7
        %v6021 = vsub.s32 0, %v6020
        %v6022 = vrot.slane %v5689, %v6021
        %v6023 = vlaneseq
        %v6024 = vshrl.u32 %v6023, 7
        %v6025 = vsub.s32 0, %v6024
        %v6026 = vrot.slane %v5690, %v6025
        %v6027 = vlaneseq
        %v6028 = vshrl.u32 %v6027, 7
        %v6029 = vsub.s32 0, %v6028
        %v6030 = vrot.slane %v5691, %v6029
        %v6031 = vlaneseq
        %v6032 = vshrl.u32 %v6031, 7
        %v6033 = vsub.s32 0, %v6032
        %v6034 = vrot.slane %v5692, %v6033
        %v6035 = vlaneseq
        %v6036 = vshrl.u32 %v6035, 7
        %v6037 = vsub.s32 0, %v6036
        %v6038 = vrot.slane %v5693, %v6037
        %v6039 = vlaneseq
        %v6040 = vshrl.u32 %v6039, 7
        %v6041 = vsub.s32 0, %v6040
        %v6042 = vrot.slane %v5694, %v6041
        %vm6043 = vcmask 1041409
        %v6044 = vsel %vm6043, %v5794, %v5790
        %vm6045 = vcmask 1042434
        %v6046 = vsel %vm6045, %v5798, %v6044
        %vm6047 = vcmask 1043459
        %v6048 = vsel %vm6047, %v5802, %v6046
        %vm6049 = vcmask 1044484
        %v6050 = vsel %vm6049, %v5806, %v6048
        %vm6051 = vcmask 1045509
        %v6052 = vsel %vm6051, %v5810, %v6050
        %vm6053 = vcmask 1046534
        %v6054 = vsel %vm6053, %v5814, %v6052
        %vm6055 = vcmask 1047559
        %v6056 = vsel %vm6055, %v5818, %v6054
        %v6057 = vsel %vm6043, %v5826, %v5822
        %v6058 = vsel %vm6045, %v5830, %v6057
        %v6059 = vsel %vm6047, %v5834, %v6058
        %v6060 = vsel %vm6049, %v5838, %v6059
        %v6061 = vsel %vm6051, %v5842, %v6060
        %v6062 = vsel %vm6053, %v5846, %v6061
        %v6063 = vsel %vm6055, %v5850, %v6062
        %v6064 = vsel %vm6043, %v5858, %v5854
        %v6065 = vsel %vm6045, %v5862, %v6064
        %v6066 = vsel %vm6047, %v5866, %v6065
        %v6067 = vsel %vm6049, %v5870, %v6066
        %v6068 = vsel %vm6051, %v5874, %v6067
        %v6069 = vsel %vm6053, %v5878, %v6068
        %v6070 = vsel %vm6055, %v5882, %v6069
        %v6071 = vsel %vm6043, %v5890, %v5886
        %v6072 = vsel %vm6045, %v5894, %v6071
        %v6073 = vsel %vm6047, %v5898, %v6072
        %v6074 = vsel %vm6049, %v5902, %v6073
        %v6075 = vsel %vm6051, %v5906, %v6074
        %v6076 = vsel %vm6053, %v5910, %v6075
        %v6077 = vsel %vm6055, %v5914, %v6076
        %v6078 = vsel %vm6043, %v5922, %v5918
        %v6079 = vsel %vm6045, %v5926, %v6078
        %v6080 = vsel %vm6047, %v5930, %v6079
        %v6081 = vsel %vm6049, %v5934, %v6080
        %v6082 = vsel %vm6051, %v5938, %v6081
        %v6083 = vsel %vm6053, %v5942, %v6082
        %v6084 = vsel %vm6055, %v5946, %v6083
        %v6085 = vsel %vm6043, %v5954, %v5950
        %v6086 = vsel %vm6045, %v5958, %v6085
        %v6087 = vsel %vm6047, %v5962, %v6086
        %v6088 = vsel %vm6049, %v5966, %v6087
        %v6089 = vsel %vm6051, %v5970, %v6088
        %v6090 = vsel %vm6053, %v5974, %v6089
        %v6091 = vsel %vm6055, %v5978, %v6090
        %v6092 = vsel %vm6043, %v5986, %v5982
        %v6093 = vsel %vm6045, %v5990, %v6092
        %v6094 = vsel %vm6047, %v5994, %v6093
        %v6095 = vsel %vm6049, %v5998, %v6094
        %v6096 = vsel %vm6051, %v6002, %v6095
        %v6097 = vsel %vm6053, %v6006, %v6096
        %v6098 = vsel %vm6055, %v6010, %v6097
        %v6099 = vsel %vm6043, %v6018, %v6014
        %v6100 = vsel %vm6045, %v6022, %v6099
        %v6101 = vsel %vm6047, %v6026, %v6100
        %v6102 = vsel %vm6049, %v6030, %v6101
        %v6103 = vsel %vm6051, %v6034, %v6102
        %v6104 = vsel %vm6053, %v6038, %v6103
        %v6105 = vsel %vm6055, %v6042, %v6104
        %s6114 = scalar_lea.vmem [#allocation2], 16
        %6115 = vst.msk [vmem:[%s6114 + $0x1] sm:$0xff] %vm5695, %v6056
        %6116 = vst.msk [vmem:[%s6114 + $0x11] sm:$0xff] %vm5695, %v6063
        %6117 = vst.msk [vmem:[%s6114 + $0x21] sm:$0xff] %vm5695, %v6070
        %6118 = vst.msk [vmem:[%s6114 + $0x31] sm:$0xff] %vm5695, %v6077
        %6119 = vst.msk [vmem:[%s6114 + $0x41] sm:$0xff] %vm5695, %v6084
        %6120 = vst.msk [vmem:[%s6114 + $0x51] sm:$0xff] %vm5695, %v6091
        %6121 = vst.msk [vmem:[%s6114 + $0x61] sm:$0xff] %vm5695, %v6098
        %6122 = vst.msk [vmem:[%s6114 + $0x71] sm:$0xff] %vm5695, %v6105
        %v6123 = vld [vmem:[#allocation2] sm:$0xff]
        %v6124 = vld [vmem:[#allocation2 + $0x10] sm:$0xff]
        %v6125 = vld [vmem:[#allocation2 + $0x20] sm:$0xff]
        %v6126 = vld [vmem:[#allocation2 + $0x30] sm:$0xff]
        %v6127 = vld [vmem:[#allocation2 + $0x40] sm:$0xff]
        %v6128 = vld [vmem:[#allocation2 + $0x50] sm:$0xff]
        %v6129 = vld [vmem:[#allocation2 + $0x60] sm:$0xff]
        %v6130 = vld [vmem:[#allocation2 + $0x70] sm:$0xff]
        %v6131 = vpack.c.bf16 %v6123, %v6123
        %v6132 = vpack.c.bf16 %v6124, %v6124
        %v6133 = vpack.c.bf16 %v6125, %v6125
        %v6134 = vpack.c.bf16 %v6126, %v6126
        %v6135 = vpack.c.bf16 %v6127, %v6127
        %v6136 = vpack.c.bf16 %v6128, %v6128
        %v6137 = vpack.c.bf16 %v6129, %v6129
        %v6138 = vpack.c.bf16 %v6130, %v6130
        %v6139 = vld [vmem:[%s3] sm:$0xf]
        %v6140 = vld [vmem:[%s3 + $0x4] sm:$0xf]
        %v6141 = vld [vmem:[#allocation2 + $0x1] sm:$0xff]
        %v6142 = vld [vmem:[#allocation2 + $0x11] sm:$0xff]
        %v6143 = vld [vmem:[#allocation2 + $0x21] sm:$0xff]
        %v6144 = vld [vmem:[#allocation2 + $0x31] sm:$0xff]
        %v6145 = vld [vmem:[#allocation2 + $0x41] sm:$0xff]
        %v6146 = vld [vmem:[#allocation2 + $0x51] sm:$0xff]
        %v6147 = vld [vmem:[#allocation2 + $0x61] sm:$0xff]
        %v6148 = vld [vmem:[#allocation2 + $0x71] sm:$0xff]
        %v6149 = vpack.c.bf16 %v6141, %v6141
        %v6150 = vpack.c.bf16 %v6142, %v6142
        %v6151 = vpack.c.bf16 %v6143, %v6143
        %v6152 = vpack.c.bf16 %v6144, %v6144
        %v6153 = vpack.c.bf16 %v6145, %v6145
        %v6154 = vpack.c.bf16 %v6146, %v6146
        %v6155 = vpack.c.bf16 %v6147, %v6147
        %v6156 = vpack.c.bf16 %v6148, %v6148
        %v6157 = vld [vmem:[%s3 + $0x8] sm:$0xf]
        %v6158 = vld [vmem:[%s3 + $0xc] sm:$0xf]
        %v6167 = vunpack.c.l.b16 %v6149
        %v6168 = vunpack.c.l.b16 %v6150
        %v6169 = vunpack.c.l.b16 %v6151
        %v6170 = vunpack.c.l.b16 %v6152
        %v6171 = vunpack.c.l.b16 %v6153
        %v6172 = vunpack.c.l.b16 %v6154
        %v6173 = vunpack.c.l.b16 %v6155
        %v6174 = vunpack.c.l.b16 %v6156
        %v6175 = vpack.c.b16 %v6168, %v6167
        %v6176 = vpack.c.b16 %v6170, %v6169
        %v6177 = vpack.c.b16 %v6172, %v6171
        %v6178 = vpack.c.b16 %v6174, %v6173
        %v6181 = vunpack.c.l.b16 %v6157
        %v6182 = vunpack.c.l.b16 %v6158
        %v6183 = vpack.c.b16 %v6182, %v6181
        %v6186 = vsel %vm5695, %v6175, 0
        %v6189 = vsel %vm5695, %v6176, 0
        %v6192 = vsel %vm5695, %v6177, 0
        %v6195 = vsel %vm5695, %v6178, 0
        %6197 = vmatprep.subr.bf16.mxu0 0
        %6198 = vmatpush1.bf16.msra.mxu0 %v6183
        %6199 = vmatprep.subr.bf16.mxu0 0
        %6200 = vmatpush1.bf16.msra.mxu0 0
        %6201 = vmatprep.subr.bf16.mxu0 0
        %6202 = vmatpush1.bf16.msra.mxu0 0
        %6203 = vmatprep.subr.bf16.mxu0 0
        %6204 = vmatpush1.bf16.msra.mxu0 0
        %6205 = vmatprep.subr.bf16.mxu0 0
        %6206 = vmatpush1.bf16.msra.mxu0 0
        %6207 = vmatprep.subr.bf16.mxu0 0
        %6208 = vmatpush1.bf16.msra.mxu0 0
        %6209 = vmatprep.subr.bf16.mxu0 0
        %6210 = vmatpush1.bf16.msra.mxu0 0
        %6211 = vmatprep.subr.bf16.mxu0 0
        %6212 = vmatpush1.bf16.msra.mxu0 0
        %6213 = vmatprep.subr.bf16.mxu0 0
        %6214 = vmatpush1.bf16.msra.mxu0 0
        %6215 = vmatprep.subr.bf16.mxu0 0
        %6216 = vmatpush1.bf16.msra.mxu0 0
        %6217 = vmatprep.subr.bf16.mxu0 0
        %6218 = vmatpush1.bf16.msra.mxu0 0
        %6219 = vmatprep.subr.bf16.mxu0 0
        %6220 = vmatpush1.bf16.msra.mxu0 0
        %6221 = vmatprep.subr.bf16.mxu0 0
        %6222 = vmatpush1.bf16.msra.mxu0 0
        %6223 = vmatprep.subr.bf16.mxu0 0
        %6224 = vmatpush1.bf16.msra.mxu0 0
        %6225 = vmatprep.subr.bf16.mxu0 0
        %6226 = vmatpush1.bf16.msra.mxu0 0
        %6227 = vmatprep.subr.bf16.mxu0 0
        %6228 = vmatpush1.bf16.msra.mxu0 0
        %6229 = vmatprep.mubr.bf16.mxu0 0
        %6230 = vmatmul.mubr.bf16.gmra.mrb[0].mxu0 %v6186
        %v6231 = vpop.f32.mrb[0].mxu0
        %v6232 = vadd.f32 0.0, %v6231
        %v6233 = vpop.f32.mrb[0].mxu0
        %v6234 = vpop.f32.mrb[0].mxu0
        %v6235 = vadd.f32 0.0, %v6234
        %v6236 = vpop.f32.mrb[0].mxu0
        %6237 = vmatprep.mubr.bf16.mxu0 0
        %6238 = vmatmul.mubr.bf16.gmra.mrb[0].mxu0 %v6189
        %v6239 = vpop.f32.mrb[0].mxu0
        %v6240 = vadd.f32 0.0, %v6239
        %v6241 = vpop.f32.mrb[0].mxu0
        %v6242 = vpop.f32.mrb[0].mxu0
        %v6243 = vadd.f32 0.0, %v6242
        %v6244 = vpop.f32.mrb[0].mxu0
        %6245 = vmatprep.mubr.bf16.mxu0 0
        %6246 = vmatmul.mubr.bf16.gmra.mrb[0].mxu0 %v6192
        %v6247 = vpop.f32.mrb[0].mxu0
        %v6248 = vadd.f32 0.0, %v6247
        %v6249 = vpop.f32.mrb[0].mxu0
        %v6250 = vpop.f32.mrb[0].mxu0
        %v6251 = vadd.f32 0.0, %v6250
        %v6252 = vpop.f32.mrb[0].mxu0
        %6253 = vmatprep.mubr.bf16.mxu0 0
        %6254 = vmatmul.mubr.bf16.gmra.mrb[0].mxu0 %v6195
        %v6255 = vpop.f32.mrb[0].mxu0
        %v6256 = vadd.f32 0.0, %v6255
        %v6257 = vpop.f32.mrb[0].mxu0
        %v6258 = vpop.f32.mrb[0].mxu0
        %v6259 = vadd.f32 0.0, %v6258
        %v6260 = vpop.f32.mrb[0].mxu0
        %6261 = vdwg.mxu0
        %v6270 = vunpack.c.l.b16 %v6131
        %v6271 = vunpack.c.l.b16 %v6132
        %v6272 = vunpack.c.l.b16 %v6133
        %v6273 = vunpack.c.l.b16 %v6134
        %v6274 = vunpack.c.l.b16 %v6135
        %v6275 = vunpack.c.l.b16 %v6136
        %v6276 = vunpack.c.l.b16 %v6137
        %v6277 = vunpack.c.l.b16 %v6138
        %v6278 = vpack.c.b16 %v6271, %v6270
        %v6279 = vpack.c.b16 %v6273, %v6272
        %v6280 = vpack.c.b16 %v6275, %v6274
        %v6281 = vpack.c.b16 %v6277, %v6276
        %v6284 = vunpack.c.l.b16 %v6139
        %v6285 = vunpack.c.l.b16 %v6140
        %v6286 = vpack.c.b16 %v6285, %v6284
        %v6289 = vsel %vm5695, %v6278, 0
        %v6292 = vsel %vm5695, %v6279, 0
        %v6295 = vsel %vm5695, %v6280, 0
        %v6298 = vsel %vm5695, %v6281, 0
        %6300 = vmatprep.subr.bf16.mxu0 0
        %6301 = vmatpush1.bf16.msra.mxu0 %v6286
        %6302 = vmatprep.subr.bf16.mxu0 0
        %6303 = vmatpush1.bf16.msra.mxu0 0
        %6304 = vmatprep.subr.bf16.mxu0 0
        %6305 = vmatpush1.bf16.msra.mxu0 0
        %6306 = vmatprep.subr.bf16.mxu0 0
        %6307 = vmatpush1.bf16.msra.mxu0 0
        %6308 = vmatprep.subr.bf16.mxu0 0
        %6309 = vmatpush1.bf16.msra.mxu0 0
        %6310 = vmatprep.subr.bf16.mxu0 0
        %6311 = vmatpush1.bf16.msra.mxu0 0
        %6312 = vmatprep.subr.bf16.mxu0 0
        %6313 = vmatpush1.bf16.msra.mxu0 0
        %6314 = vmatprep.subr.bf16.mxu0 0
        %6315 = vmatpush1.bf16.msra.mxu0 0
        %6316 = vmatprep.subr.bf16.mxu0 0
        %6317 = vmatpush1.bf16.msra.mxu0 0
        %6318 = vmatprep.subr.bf16.mxu0 0
        %6319 = vmatpush1.bf16.msra.mxu0 0
        %6320 = vmatprep.subr.bf16.mxu0 0
        %6321 = vmatpush1.bf16.msra.mxu0 0
        %6322 = vmatprep.subr.bf16.mxu0 0
        %6323 = vmatpush1.bf16.msra.mxu0 0
        %6324 = vmatprep.subr.bf16.mxu0 0
        %6325 = vmatpush1.bf16.msra.mxu0 0
        %6326 = vmatprep.subr.bf16.mxu0 0
        %6327 = vmatpush1.bf16.msra.mxu0 0
        %6328 = vmatprep.subr.bf16.mxu0 0
        %6329 = vmatpush1.bf16.msra.mxu0 0
        %6330 = vmatprep.subr.bf16.mxu0 0
        %6331 = vmatpush1.bf16.msra.mxu0 0
        %6332 = vmatprep.mubr.bf16.mxu0 0
        %6333 = vmatmul.mubr.bf16.gmra.mrb[0].mxu0 %v6289
        %v6334 = vpop.f32.mrb[0].mxu0
        %v6335 = vadd.f32 %v6232, %v6334
        %v6336 = vpop.f32.mrb[0].mxu0
        %v6337 = vpop.f32.mrb[0].mxu0
        %v6338 = vadd.f32 %v6235, %v6337
        %v6339 = vpop.f32.mrb[0].mxu0
        %6340 = vmatprep.mubr.bf16.mxu0 0
        %6341 = vmatmul.mubr.bf16.gmra.mrb[0].mxu0 %v6292
        %v6342 = vpop.f32.mrb[0].mxu0
        %v6343 = vadd.f32 %v6240, %v6342
        %v6344 = vpop.f32.mrb[0].mxu0
        %v6345 = vpop.f32.mrb[0].mxu0
        %v6346 = vadd.f32 %v6243, %v6345
        %v6347 = vpop.f32.mrb[0].mxu0
        %6348 = vmatprep.mubr.bf16.mxu0 0
        %6349 = vmatmul.mubr.bf16.gmra.mrb[0].mxu0 %v6295
        %v6350 = vpop.f32.mrb[0].mxu0
        %v6351 = vadd.f32 %v6248, %v6350
        %v6352 = vpop.f32.mrb[0].mxu0
        %v6353 = vpop.f32.mrb[0].mxu0
        %v6354 = vadd.f32 %v6251, %v6353
        %v6355 = vpop.f32.mrb[0].mxu0
        %6356 = vmatprep.mubr.bf16.mxu0 0
        %6357 = vmatmul.mubr.bf16.gmra.mrb[0].mxu0 %v6298
        %v6358 = vpop.f32.mrb[0].mxu0
        %v6359 = vadd.f32 %v6256, %v6358
        %v6360 = vpop.f32.mrb[0].mxu0
        %v6361 = vpop.f32.mrb[0].mxu0
        %v6362 = vadd.f32 %v6259, %v6361
        %v6363 = vpop.f32.mrb[0].mxu0
        %6364 = vdwg.mxu0
        %v6365 = vld [vmem:[#allocation2 + $0x2] sm:$0xff]
        %v6366 = vld [vmem:[#allocation2 + $0x12] sm:$0xff]
        %v6367 = vld [vmem:[#allocation2 + $0x22] sm:$0xff]
        %v6368 = vld [vmem:[#allocation2 + $0x32] sm:$0xff]
        %v6369 = vld [vmem:[#allocation2 + $0x42] sm:$0xff]
        %v6370 = vld [vmem:[#allocation2 + $0x52] sm:$0xff]
        %v6371 = vld [vmem:[#allocation2 + $0x62] sm:$0xff]
        %v6372 = vld [vmem:[#allocation2 + $0x72] sm:$0xff]
        %v6373 = vpack.c.bf16 %v6365, %v6365
        %v6374 = vpack.c.bf16 %v6366, %v6366
        %v6375 = vpack.c.bf16 %v6367, %v6367
        %v6376 = vpack.c.bf16 %v6368, %v6368
        %v6377 = vpack.c.bf16 %v6369, %v6369
        %v6378 = vpack.c.bf16 %v6370, %v6370
        %v6379 = vpack.c.bf16 %v6371, %v6371
        %v6380 = vpack.c.bf16 %v6372, %v6372
        %v6381 = vld [vmem:[%s3 + $0x10] sm:$0xf]
        %v6382 = vld [vmem:[%s3 + $0x14] sm:$0xf]
        %v6391 = vunpack.c.l.b16 %v6373
        %v6392 = vunpack.c.l.b16 %v6374
        %v6393 = vunpack.c.l.b16 %v6375
        %v6394 = vunpack.c.l.b16 %v6376
        %v6395 = vunpack.c.l.b16 %v6377
        %v6396 = vunpack.c.l.b16 %v6378
        %v6397 = vunpack.c.l.b16 %v6379
        %v6398 = vunpack.c.l.b16 %v6380
        %v6399 = vpack.c.b16 %v6392, %v6391
        %v6400 = vpack.c.b16 %v6394, %v6393
        %v6401 = vpack.c.b16 %v6396, %v6395
        %v6402 = vpack.c.b16 %v6398, %v6397
        %v6405 = vunpack.c.l.b16 %v6381
        %v6406 = vunpack.c.l.b16 %v6382
        %v6407 = vpack.c.b16 %v6406, %v6405
        %v6410 = vsel %vm5695, %v6399, 0
        %v6413 = vsel %vm5695, %v6400, 0
        %v6416 = vsel %vm5695, %v6401, 0
        %v6419 = vsel %vm5695, %v6402, 0
        %6421 = vmatprep.subr.bf16.mxu0 0
        %6422 = vmatpush1.bf16.msra.mxu0 %v6407
        %6423 = vmatprep.subr.bf16.mxu0 0
        %6424 = vmatpush1.bf16.msra.mxu0 0
        %6425 = vmatprep.subr.bf16.mxu0 0
        %6426 = vmatpush1.bf16.msra.mxu0 0
        %6427 = vmatprep.subr.bf16.mxu0 0
        %6428 = vmatpush1.bf16.msra.mxu0 0
        %6429 = vmatprep.subr.bf16.mxu0 0
        %6430 = vmatpush1.bf16.msra.mxu0 0
        %6431 = vmatprep.subr.bf16.mxu0 0
        %6432 = vmatpush1.bf16.msra.mxu0 0
        %6433 = vmatprep.subr.bf16.mxu0 0
        %6434 = vmatpush1.bf16.msra.mxu0 0
        %6435 = vmatprep.subr.bf16.mxu0 0
        %6436 = vmatpush1.bf16.msra.mxu0 0
        %6437 = vmatprep.subr.bf16.mxu0 0
        %6438 = vmatpush1.bf16.msra.mxu0 0
        %6439 = vmatprep.subr.bf16.mxu0 0
        %6440 = vmatpush1.bf16.msra.mxu0 0
        %6441 = vmatprep.subr.bf16.mxu0 0
        %6442 = vmatpush1.bf16.msra.mxu0 0
        %6443 = vmatprep.subr.bf16.mxu0 0
        %6444 = vmatpush1.bf16.msra.mxu0 0
        %6445 = vmatprep.subr.bf16.mxu0 0
        %6446 = vmatpush1.bf16.msra.mxu0 0
        %6447 = vmatprep.subr.bf16.mxu0 0
        %6448 = vmatpush1.bf16.msra.mxu0 0
        %6449 = vmatprep.subr.bf16.mxu0 0
        %6450 = vmatpush1.bf16.msra.mxu0 0
        %6451 = vmatprep.subr.bf16.mxu0 0
        %6452 = vmatpush1.bf16.msra.mxu0 0
        %6453 = vmatprep.mubr.bf16.mxu0 0
        %6454 = vmatmul.mubr.bf16.gmra.mrb[0].mxu0 %v6410
        %v6455 = vpop.f32.mrb[0].mxu0
        %v6456 = vadd.f32 0.0, %v6455
        %v6457 = vpop.f32.mrb[0].mxu0
        %v6458 = vpop.f32.mrb[0].mxu0
        %v6459 = vadd.f32 0.0, %v6458
        %v6460 = vpop.f32.mrb[0].mxu0
        %6461 = vmatprep.mubr.bf16.mxu0 0
        %6462 = vmatmul.mubr.bf16.gmra.mrb[0].mxu0 %v6413
        %v6463 = vpop.f32.mrb[0].mxu0
        %v6464 = vadd.f32 0.0, %v6463
        %v6465 = vpop.f32.mrb[0].mxu0
        %v6466 = vpop.f32.mrb[0].mxu0
        %v6467 = vadd.f32 0.0, %v6466
        %v6468 = vpop.f32.mrb[0].mxu0
        %6469 = vmatprep.mubr.bf16.mxu0 0
        %6470 = vmatmul.mubr.bf16.gmra.mrb[0].mxu0 %v6416
        %v6471 = vpop.f32.mrb[0].mxu0
        %v6472 = vadd.f32 0.0, %v6471
        %v6473 = vpop.f32.mrb[0].mxu0
        %v6474 = vpop.f32.mrb[0].mxu0
        %v6475 = vadd.f32 0.0, %v6474
        %v6476 = vpop.f32.mrb[0].mxu0
        %6477 = vmatprep.mubr.bf16.mxu0 0
        %6478 = vmatmul.mubr.bf16.gmra.mrb[0].mxu0 %v6419
        %v6479 = vpop.f32.mrb[0].mxu0
        %v6480 = vadd.f32 0.0, %v6479
        %v6481 = vpop.f32.mrb[0].mxu0
        %v6482 = vpop.f32.mrb[0].mxu0
        %v6483 = vadd.f32 0.0, %v6482
        %v6484 = vpop.f32.mrb[0].mxu0
        %6485 = vdwg.mxu0
        %v6486 = vadd.f32 %v6335, %v6456
        %v6487 = vadd.f32 %v6338, %v6459
        %v6488 = vadd.f32 %v6343, %v6464
        %v6489 = vadd.f32 %v6346, %v6467
        %v6490 = vadd.f32 %v6351, %v6472
        %v6491 = vadd.f32 %v6354, %v6475
        %v6492 = vadd.f32 %v6359, %v6480
        %v6493 = vadd.f32 %v6362, %v6483
        %v6494 = vld [vmem:[%s6114] sm:$0xff]
        %v6495 = vld [vmem:[%s6114 + $0x10] sm:$0xff]
        %v6496 = vld [vmem:[%s6114 + $0x20] sm:$0xff]
        %v6497 = vld [vmem:[%s6114 + $0x30] sm:$0xff]
        %v6498 = vld [vmem:[%s6114 + $0x40] sm:$0xff]
        %v6499 = vld [vmem:[%s6114 + $0x50] sm:$0xff]
        %v6500 = vld [vmem:[%s6114 + $0x60] sm:$0xff]
        %v6501 = vld [vmem:[%s6114 + $0x70] sm:$0xff]
        %v6502 = vpack.c.bf16 %v6494, %v6494
        %v6503 = vpack.c.bf16 %v6495, %v6495
        %v6504 = vpack.c.bf16 %v6496, %v6496
        %v6505 = vpack.c.bf16 %v6497, %v6497
        %v6506 = vpack.c.bf16 %v6498, %v6498
        %v6507 = vpack.c.bf16 %v6499, %v6499
        %v6508 = vpack.c.bf16 %v6500, %v6500
        %v6509 = vpack.c.bf16 %v6501, %v6501
        %v6510 = vld [vmem:[%s3 + $0x18] sm:$0xf]
        %v6511 = vld [vmem:[%s3 + $0x1c] sm:$0xf]
        %v6520 = vunpack.c.l.b16 %v6502
        %v6521 = vunpack.c.l.b16 %v6503
        %v6522 = vunpack.c.l.b16 %v6504
        %v6523 = vunpack.c.l.b16 %v6505
        %v6524 = vunpack.c.l.b16 %v6506
        %v6525 = vunpack.c.l.b16 %v6507
        %v6526 = vunpack.c.l.b16 %v6508
        %v6527 = vunpack.c.l.b16 %v6509
        %v6528 = vpack.c.b16 %v6521, %v6520
        %v6529 = vpack.c.b16 %v6523, %v6522
        %v6530 = vpack.c.b16 %v6525, %v6524
        %v6531 = vpack.c.b16 %v6527, %v6526
        %v6534 = vunpack.c.l.b16 %v6510
        %v6535 = vunpack.c.l.b16 %v6511
        %v6536 = vpack.c.b16 %v6535, %v6534
        %v6539 = vsel %vm5695, %v6528, 0
        %v6542 = vsel %vm5695, %v6529, 0
        %v6545 = vsel %vm5695, %v6530, 0
        %v6548 = vsel %vm5695, %v6531, 0
        %6550 = vmatprep.subr.bf16.mxu0 0
        %6551 = vmatpush1.bf16.msra.mxu0 %v6536
        %6552 = vmatprep.subr.bf16.mxu0 0
        %6553 = vmatpush1.bf16.msra.mxu0 0
        %6554 = vmatprep.subr.bf16.mxu0 0
        %6555 = vmatpush1.bf16.msra.mxu0 0
        %6556 = vmatprep.subr.bf16.mxu0 0
        %6557 = vmatpush1.bf16.msra.mxu0 0
        %6558 = vmatprep.subr.bf16.mxu0 0
        %6559 = vmatpush1.bf16.msra.mxu0 0
        %6560 = vmatprep.subr.bf16.mxu0 0
        %6561 = vmatpush1.bf16.msra.mxu0 0
        %6562 = vmatprep.subr.bf16.mxu0 0
        %6563 = vmatpush1.bf16.msra.mxu0 0
        %6564 = vmatprep.subr.bf16.mxu0 0
        %6565 = vmatpush1.bf16.msra.mxu0 0
        %6566 = vmatprep.subr.bf16.mxu0 0
        %6567 = vmatpush1.bf16.msra.mxu0 0
        %6568 = vmatprep.subr.bf16.mxu0 0
        %6569 = vmatpush1.bf16.msra.mxu0 0
        %6570 = vmatprep.subr.bf16.mxu0 0
        %6571 = vmatpush1.bf16.msra.mxu0 0
        %6572 = vmatprep.subr.bf16.mxu0 0
        %6573 = vmatpush1.bf16.msra.mxu0 0
        %6574 = vmatprep.subr.bf16.mxu0 0
        %6575 = vmatpush1.bf16.msra.mxu0 0
        %6576 = vmatprep.subr.bf16.mxu0 0
        %6577 = vmatpush1.bf16.msra.mxu0 0
        %6578 = vmatprep.subr.bf16.mxu0 0
        %6579 = vmatpush1.bf16.msra.mxu0 0
        %6580 = vmatprep.subr.bf16.mxu0 0
        %6581 = vmatpush1.bf16.msra.mxu0 0
        %6582 = vmatprep.mubr.bf16.mxu0 0
        %6583 = vmatmul.mubr.bf16.gmra.mrb[0].mxu0 %v6539
        %v6584 = vpop.f32.mrb[0].mxu0
        %v6585 = vadd.f32 0.0, %v6584
        %v6586 = vpop.f32.mrb[0].mxu0
        %v6587 = vpop.f32.mrb[0].mxu0
        %v6588 = vadd.f32 0.0, %v6587
        %v6589 = vpop.f32.mrb[0].mxu0
        %6590 = vmatprep.mubr.bf16.mxu0 0
        %6591 = vmatmul.mubr.bf16.gmra.mrb[0].mxu0 %v6542
        %v6592 = vpop.f32.mrb[0].mxu0
        %v6593 = vadd.f32 0.0, %v6592
        %v6594 = vpop.f32.mrb[0].mxu0
        %v6595 = vpop.f32.mrb[0].mxu0
        %v6596 = vadd.f32 0.0, %v6595
        %v6597 = vpop.f32.mrb[0].mxu0
        %6598 = vmatprep.mubr.bf16.mxu0 0
        %6599 = vmatmul.mubr.bf16.gmra.mrb[0].mxu0 %v6545
        %v6600 = vpop.f32.mrb[0].mxu0
        %v6601 = vadd.f32 0.0, %v6600
        %v6602 = vpop.f32.mrb[0].mxu0
        %v6603 = vpop.f32.mrb[0].mxu0
        %v6604 = vadd.f32 0.0, %v6603
        %v6605 = vpop.f32.mrb[0].mxu0
        %6606 = vmatprep.mubr.bf16.mxu0 0
        %6607 = vmatmul.mubr.bf16.gmra.mrb[0].mxu0 %v6548
        %v6608 = vpop.f32.mrb[0].mxu0
        %v6609 = vadd.f32 0.0, %v6608
        %v6610 = vpop.f32.mrb[0].mxu0
        %v6611 = vpop.f32.mrb[0].mxu0
        %v6612 = vadd.f32 0.0, %v6611
        %v6613 = vpop.f32.mrb[0].mxu0
        %6614 = vdwg.mxu0
        %v6615 = vadd.f32 %v6486, %v6585
        %v6616 = vadd.f32 %v6487, %v6588
        %v6617 = vadd.f32 %v6488, %v6593
        %v6618 = vadd.f32 %v6489, %v6596
        %v6619 = vadd.f32 %v6490, %v6601
        %v6620 = vadd.f32 %v6491, %v6604
        %v6621 = vadd.f32 %v6492, %v6609
        %v6622 = vadd.f32 %v6493, %v6612
        %v6623 = vld [vmem:[%s6114 + $0x1] sm:$0xff]
        %v6624 = vld [vmem:[%s6114 + $0x11] sm:$0xff]
        %v6625 = vld [vmem:[%s6114 + $0x21] sm:$0xff]
        %v6626 = vld [vmem:[%s6114 + $0x31] sm:$0xff]
        %v6627 = vld [vmem:[%s6114 + $0x41] sm:$0xff]
        %v6628 = vld [vmem:[%s6114 + $0x51] sm:$0xff]
        %v6629 = vld [vmem:[%s6114 + $0x61] sm:$0xff]
        %v6630 = vld [vmem:[%s6114 + $0x71] sm:$0xff]
        %v6631 = vpack.c.bf16 %v6623, %v6623
        %v6632 = vpack.c.bf16 %v6624, %v6624
        %v6633 = vpack.c.bf16 %v6625, %v6625
        %v6634 = vpack.c.bf16 %v6626, %v6626
        %v6635 = vpack.c.bf16 %v6627, %v6627
        %v6636 = vpack.c.bf16 %v6628, %v6628
        %v6637 = vpack.c.bf16 %v6629, %v6629
        %v6638 = vpack.c.bf16 %v6630, %v6630
        %v6639 = vld [vmem:[%s3 + $0x20] sm:$0xf]
        %v6640 = vld [vmem:[%s3 + $0x24] sm:$0xf]
        %v6649 = vunpack.c.l.b16 %v6631
        %v6650 = vunpack.c.l.b16 %v6632
        %v6651 = vunpack.c.l.b16 %v6633
        %v6652 = vunpack.c.l.b16 %v6634
        %v6653 = vunpack.c.l.b16 %v6635
        %v6654 = vunpack.c.l.b16 %v6636
        %v6655 = vunpack.c.l.b16 %v6637
        %v6656 = vunpack.c.l.b16 %v6638
        %v6657 = vpack.c.b16 %v6650, %v6649
        %v6658 = vpack.c.b16 %v6652, %v6651
        %v6659 = vpack.c.b16 %v6654, %v6653
        %v6660 = vpack.c.b16 %v6656, %v6655
        %v6663 = vunpack.c.l.b16 %v6639
        %v6664 = vunpack.c.l.b16 %v6640
        %v6665 = vpack.c.b16 %v6664, %v6663
        %v6668 = vsel %vm5695, %v6657, 0
        %v6671 = vsel %vm5695, %v6658, 0
        %v6674 = vsel %vm5695, %v6659, 0
        %v6677 = vsel %vm5695, %v6660, 0
        %6679 = vmatprep.subr.bf16.mxu0 0
        %6680 = vmatpush1.bf16.msra.mxu0 %v6665
        %6681 = vmatprep.subr.bf16.mxu0 0
        %6682 = vmatpush1.bf16.msra.mxu0 0
        %6683 = vmatprep.subr.bf16.mxu0 0
        %6684 = vmatpush1.bf16.msra.mxu0 0
        %6685 = vmatprep.subr.bf16.mxu0 0
        %6686 = vmatpush1.bf16.msra.mxu0 0
        %6687 = vmatprep.subr.bf16.mxu0 0
        %6688 = vmatpush1.bf16.msra.mxu0 0
        %6689 = vmatprep.subr.bf16.mxu0 0
        %6690 = vmatpush1.bf16.msra.mxu0 0
        %6691 = vmatprep.subr.bf16.mxu0 0
        %6692 = vmatpush1.bf16.msra.mxu0 0
        %6693 = vmatprep.subr.bf16.mxu0 0
        %6694 = vmatpush1.bf16.msra.mxu0 0
        %6695 = vmatprep.subr.bf16.mxu0 0
        %6696 = vmatpush1.bf16.msra.mxu0 0
        %6697 = vmatprep.subr.bf16.mxu0 0
        %6698 = vmatpush1.bf16.msra.mxu0 0
        %6699 = vmatprep.subr.bf16.mxu0 0
        %6700 = vmatpush1.bf16.msra.mxu0 0
        %6701 = vmatprep.subr.bf16.mxu0 0
        %6702 = vmatpush1.bf16.msra.mxu0 0
        %6703 = vmatprep.subr.bf16.mxu0 0
        %6704 = vmatpush1.bf16.msra.mxu0 0
        %6705 = vmatprep.subr.bf16.mxu0 0
        %6706 = vmatpush1.bf16.msra.mxu0 0
        %6707 = vmatprep.subr.bf16.mxu0 0
        %6708 = vmatpush1.bf16.msra.mxu0 0
        %6709 = vmatprep.subr.bf16.mxu0 0
        %6710 = vmatpush1.bf16.msra.mxu0 0
        %6711 = vmatprep.mubr.bf16.mxu0 0
        %6712 = vmatmul.mubr.bf16.gmra.mrb[0].mxu0 %v6668
        %v6713 = vpop.f32.mrb[0].mxu0
        %v6714 = vadd.f32 0.0, %v6713
        %v6715 = vpop.f32.mrb[0].mxu0
        %v6716 = vpop.f32.mrb[0].mxu0
        %v6717 = vadd.f32 0.0, %v6716
        %v6718 = vpop.f32.mrb[0].mxu0
        %6719 = vmatprep.mubr.bf16.mxu0 0
        %6720 = vmatmul.mubr.bf16.gmra.mrb[0].mxu0 %v6671
        %v6721 = vpop.f32.mrb[0].mxu0
        %v6722 = vadd.f32 0.0, %v6721
        %v6723 = vpop.f32.mrb[0].mxu0
        %v6724 = vpop.f32.mrb[0].mxu0
        %v6725 = vadd.f32 0.0, %v6724
        %v6726 = vpop.f32.mrb[0].mxu0
        %6727 = vmatprep.mubr.bf16.mxu0 0
        %6728 = vmatmul.mubr.bf16.gmra.mrb[0].mxu0 %v6674
        %v6729 = vpop.f32.mrb[0].mxu0
        %v6730 = vadd.f32 0.0, %v6729
        %v6731 = vpop.f32.mrb[0].mxu0
        %v6732 = vpop.f32.mrb[0].mxu0
        %v6733 = vadd.f32 0.0, %v6732
        %v6734 = vpop.f32.mrb[0].mxu0
        %6735 = vmatprep.mubr.bf16.mxu0 0
        %6736 = vmatmul.mubr.bf16.gmra.mrb[0].mxu0 %v6677
        %v6737 = vpop.f32.mrb[0].mxu0
        %v6738 = vadd.f32 0.0, %v6737
        %v6739 = vpop.f32.mrb[0].mxu0
        %v6740 = vpop.f32.mrb[0].mxu0
        %v6741 = vadd.f32 0.0, %v6740
        %v6742 = vpop.f32.mrb[0].mxu0
        %6743 = vdwg.mxu0
        %v6744 = vadd.f32 %v6615, %v6714
        %v6745 = vadd.f32 %v6616, %v6717
        %v6746 = vadd.f32 %v6617, %v6722
        %v6747 = vadd.f32 %v6618, %v6725
        %v6748 = vadd.f32 %v6619, %v6730
        %v6749 = vadd.f32 %v6620, %v6733
        %v6750 = vadd.f32 %v6621, %v6738
        %v6751 = vadd.f32 %v6622, %v6741
        %v6752 = vld [vmem:[%s6114 + $0x2] sm:$0xff]
        %v6753 = vld [vmem:[%s6114 + $0x12] sm:$0xff]
        %v6754 = vld [vmem:[%s6114 + $0x22] sm:$0xff]
        %v6755 = vld [vmem:[%s6114 + $0x32] sm:$0xff]
        %v6756 = vld [vmem:[%s6114 + $0x42] sm:$0xff]
        %v6757 = vld [vmem:[%s6114 + $0x52] sm:$0xff]
        %v6758 = vld [vmem:[%s6114 + $0x62] sm:$0xff]
        %v6759 = vld [vmem:[%s6114 + $0x72] sm:$0xff]
        %v6760 = vpack.c.bf16 %v6752, %v6752
        %v6761 = vpack.c.bf16 %v6753, %v6753
        %v6762 = vpack.c.bf16 %v6754, %v6754
        %v6763 = vpack.c.bf16 %v6755, %v6755
        %v6764 = vpack.c.bf16 %v6756, %v6756
        %v6765 = vpack.c.bf16 %v6757, %v6757
        %v6766 = vpack.c.bf16 %v6758, %v6758
        %v6767 = vpack.c.bf16 %v6759, %v6759
        %v6768 = vld [vmem:[%s3 + $0x28] sm:$0xf]
        %v6769 = vld [vmem:[%s3 + $0x2c] sm:$0xf]
        %v6778 = vunpack.c.l.b16 %v6760
        %v6779 = vunpack.c.l.b16 %v6761
        %v6780 = vunpack.c.l.b16 %v6762
        %v6781 = vunpack.c.l.b16 %v6763
        %v6782 = vunpack.c.l.b16 %v6764
        %v6783 = vunpack.c.l.b16 %v6765
        %v6784 = vunpack.c.l.b16 %v6766
        %v6785 = vunpack.c.l.b16 %v6767
        %v6786 = vpack.c.b16 %v6779, %v6778
        %v6787 = vpack.c.b16 %v6781, %v6780
        %v6788 = vpack.c.b16 %v6783, %v6782
        %v6789 = vpack.c.b16 %v6785, %v6784
        %v6792 = vunpack.c.l.b16 %v6768
        %v6793 = vunpack.c.l.b16 %v6769
        %v6794 = vpack.c.b16 %v6793, %v6792
        %v6797 = vsel %vm5695, %v6786, 0
        %v6800 = vsel %vm5695, %v6787, 0
        %v6803 = vsel %vm5695, %v6788, 0
        %v6806 = vsel %vm5695, %v6789, 0
        %6808 = vmatprep.subr.bf16.mxu0 0
        %6809 = vmatpush1.bf16.msra.mxu0 %v6794
        %6810 = vmatprep.subr.bf16.mxu0 0
        %6811 = vmatpush1.bf16.msra.mxu0 0
        %6812 = vmatprep.subr.bf16.mxu0 0
        %6813 = vmatpush1.bf16.msra.mxu0 0
        %6814 = vmatprep.subr.bf16.mxu0 0
        %6815 = vmatpush1.bf16.msra.mxu0 0
        %6816 = vmatprep.subr.bf16.mxu0 0
        %6817 = vmatpush1.bf16.msra.mxu0 0
        %6818 = vmatprep.subr.bf16.mxu0 0
        %6819 = vmatpush1.bf16.msra.mxu0 0
        %6820 = vmatprep.subr.bf16.mxu0 0
        %6821 = vmatpush1.bf16.msra.mxu0 0
        %6822 = vmatprep.subr.bf16.mxu0 0
        %6823 = vmatpush1.bf16.msra.mxu0 0
        %6824 = vmatprep.subr.bf16.mxu0 0
        %6825 = vmatpush1.bf16.msra.mxu0 0
        %6826 = vmatprep.subr.bf16.mxu0 0
        %6827 = vmatpush1.bf16.msra.mxu0 0
        %6828 = vmatprep.subr.bf16.mxu0 0
        %6829 = vmatpush1.bf16.msra.mxu0 0
        %6830 = vmatprep.subr.bf16.mxu0 0
        %6831 = vmatpush1.bf16.msra.mxu0 0
        %6832 = vmatprep.subr.bf16.mxu0 0
        %6833 = vmatpush1.bf16.msra.mxu0 0
        %6834 = vmatprep.subr.bf16.mxu0 0
        %6835 = vmatpush1.bf16.msra.mxu0 0
        %6836 = vmatprep.subr.bf16.mxu0 0
        %6837 = vmatpush1.bf16.msra.mxu0 0
        %6838 = vmatprep.subr.bf16.mxu0 0
        %6839 = vmatpush1.bf16.msra.mxu0 0
        %6840 = vmatprep.mubr.bf16.mxu0 0
        %6841 = vmatmul.mubr.bf16.gmra.mrb[0].mxu0 %v6797
        %v6842 = vpop.f32.mrb[0].mxu0
        %v6843 = vadd.f32 0.0, %v6842
        %v6844 = vpop.f32.mrb[0].mxu0
        %v6845 = vpop.f32.mrb[0].mxu0
        %v6846 = vadd.f32 0.0, %v6845
        %v6847 = vpop.f32.mrb[0].mxu0
        %6848 = vmatprep.mubr.bf16.mxu0 0
        %6849 = vmatmul.mubr.bf16.gmra.mrb[0].mxu0 %v6800
        %v6850 = vpop.f32.mrb[0].mxu0
        %v6851 = vadd.f32 0.0, %v6850
        %v6852 = vpop.f32.mrb[0].mxu0
        %v6853 = vpop.f32.mrb[0].mxu0
        %v6854 = vadd.f32 0.0, %v6853
        %v6855 = vpop.f32.mrb[0].mxu0
        %6856 = vmatprep.mubr.bf16.mxu0 0
        %6857 = vmatmul.mubr.bf16.gmra.mrb[0].mxu0 %v6803
        %v6858 = vpop.f32.mrb[0].mxu0
        %v6859 = vadd.f32 0.0, %v6858
        %v6860 = vpop.f32.mrb[0].mxu0
        %v6861 = vpop.f32.mrb[0].mxu0
        %v6862 = vadd.f32 0.0, %v6861
        %v6863 = vpop.f32.mrb[0].mxu0
        %6864 = vmatprep.mubr.bf16.mxu0 0
        %6865 = vmatmul.mubr.bf16.gmra.mrb[0].mxu0 %v6806
        %v6866 = vpop.f32.mrb[0].mxu0
        %v6867 = vadd.f32 0.0, %v6866
        %v6868 = vpop.f32.mrb[0].mxu0
        %v6869 = vpop.f32.mrb[0].mxu0
        %v6870 = vadd.f32 0.0, %v6869
        %v6871 = vpop.f32.mrb[0].mxu0
        %6872 = vdwg.mxu0
        %v6873 = vadd.f32 %v6744, %v6843
        %v6874 = vadd.f32 %v6745, %v6846
        %v6875 = vadd.f32 %v6746, %v6851
        %v6876 = vadd.f32 %v6747, %v6854
        %v6877 = vadd.f32 %v6748, %v6859
        %v6878 = vadd.f32 %v6749, %v6862
        %v6879 = vadd.f32 %v6750, %v6867
        %v6880 = vadd.f32 %v6751, %v6870
        %s6881 = scalar_lea.vmem [#allocation2], 32
        %v6882 = vld [vmem:[%s6881] sm:$0xff]
        %v6883 = vld [vmem:[%s6881 + $0x10] sm:$0xff]
        %v6884 = vld [vmem:[%s6881 + $0x20] sm:$0xff]
        %v6885 = vld [vmem:[%s6881 + $0x30] sm:$0xff]
        %v6886 = vld [vmem:[%s6881 + $0x40] sm:$0xff]
        %v6887 = vld [vmem:[%s6881 + $0x50] sm:$0xff]
        %v6888 = vld [vmem:[%s6881 + $0x60] sm:$0xff]
        %v6889 = vld [vmem:[%s6881 + $0x70] sm:$0xff]
        %v6890 = vpack.c.bf16 %v6882, %v6882
        %v6891 = vpack.c.bf16 %v6883, %v6883
        %v6892 = vpack.c.bf16 %v6884, %v6884
        %v6893 = vpack.c.bf16 %v6885, %v6885
        %v6894 = vpack.c.bf16 %v6886, %v6886
        %v6895 = vpack.c.bf16 %v6887, %v6887
        %v6896 = vpack.c.bf16 %v6888, %v6888
        %v6897 = vpack.c.bf16 %v6889, %v6889
        %v6898 = vld [vmem:[%s3 + $0x30] sm:$0xf]
        %v6899 = vld [vmem:[%s3 + $0x34] sm:$0xf]
        %v6908 = vunpack.c.l.b16 %v6890
        %v6909 = vunpack.c.l.b16 %v6891
        %v6910 = vunpack.c.l.b16 %v6892
        %v6911 = vunpack.c.l.b16 %v6893
        %v6912 = vunpack.c.l.b16 %v6894
        %v6913 = vunpack.c.l.b16 %v6895
        %v6914 = vunpack.c.l.b16 %v6896
        %v6915 = vunpack.c.l.b16 %v6897
        %v6916 = vpack.c.b16 %v6909, %v6908
        %v6917 = vpack.c.b16 %v6911, %v6910
        %v6918 = vpack.c.b16 %v6913, %v6912
        %v6919 = vpack.c.b16 %v6915, %v6914
        %v6922 = vunpack.c.l.b16 %v6898
        %v6923 = vunpack.c.l.b16 %v6899
        %v6924 = vpack.c.b16 %v6923, %v6922
        %v6927 = vsel %vm5695, %v6916, 0
        %v6930 = vsel %vm5695, %v6917, 0
        %v6933 = vsel %vm5695, %v6918, 0
        %v6936 = vsel %vm5695, %v6919, 0
        %6938 = vmatprep.subr.bf16.mxu0 0
        %6939 = vmatpush1.bf16.msra.mxu0 %v6924
        %6940 = vmatprep.subr.bf16.mxu0 0
        %6941 = vmatpush1.bf16.msra.mxu0 0
        %6942 = vmatprep.subr.bf16.mxu0 0
        %6943 = vmatpush1.bf16.msra.mxu0 0
        %6944 = vmatprep.subr.bf16.mxu0 0
        %6945 = vmatpush1.bf16.msra.mxu0 0
        %6946 = vmatprep.subr.bf16.mxu0 0
        %6947 = vmatpush1.bf16.msra.mxu0 0
        %6948 = vmatprep.subr.bf16.mxu0 0
        %6949 = vmatpush1.bf16.msra.mxu0 0
        %6950 = vmatprep.subr.bf16.mxu0 0
        %6951 = vmatpush1.bf16.msra.mxu0 0
        %6952 = vmatprep.subr.bf16.mxu0 0
        %6953 = vmatpush1.bf16.msra.mxu0 0
        %6954 = vmatprep.subr.bf16.mxu0 0
        %6955 = vmatpush1.bf16.msra.mxu0 0
        %6956 = vmatprep.subr.bf16.mxu0 0
        %6957 = vmatpush1.bf16.msra.mxu0 0
        %6958 = vmatprep.subr.bf16.mxu0 0
        %6959 = vmatpush1.bf16.msra.mxu0 0
        %6960 = vmatprep.subr.bf16.mxu0 0
        %6961 = vmatpush1.bf16.msra.mxu0 0
        %6962 = vmatprep.subr.bf16.mxu0 0
        %6963 = vmatpush1.bf16.msra.mxu0 0
        %6964 = vmatprep.subr.bf16.mxu0 0
        %6965 = vmatpush1.bf16.msra.mxu0 0
        %6966 = vmatprep.subr.bf16.mxu0 0
        %6967 = vmatpush1.bf16.msra.mxu0 0
        %6968 = vmatprep.subr.bf16.mxu0 0
        %6969 = vmatpush1.bf16.msra.mxu0 0
        %6970 = vmatprep.mubr.bf16.mxu0 0
        %6971 = vmatmul.mubr.bf16.gmra.mrb[0].mxu0 %v6927
        %v6972 = vpop.f32.mrb[0].mxu0
        %v6973 = vadd.f32 0.0, %v6972
        %v6974 = vpop.f32.mrb[0].mxu0
        %v6975 = vpop.f32.mrb[0].mxu0
        %v6976 = vadd.f32 0.0, %v6975
        %v6977 = vpop.f32.mrb[0].mxu0
        %6978 = vmatprep.mubr.bf16.mxu0 0
        %6979 = vmatmul.mubr.bf16.gmra.mrb[0].mxu0 %v6930
        %v6980 = vpop.f32.mrb[0].mxu0
        %v6981 = vadd.f32 0.0, %v6980
        %v6982 = vpop.f32.mrb[0].mxu0
        %v6983 = vpop.f32.mrb[0].mxu0
        %v6984 = vadd.f32 0.0, %v6983
        %v6985 = vpop.f32.mrb[0].mxu0
        %6986 = vmatprep.mubr.bf16.mxu0 0
        %6987 = vmatmul.mubr.bf16.gmra.mrb[0].mxu0 %v6933
        %v6988 = vpop.f32.mrb[0].mxu0
        %v6989 = vadd.f32 0.0, %v6988
        %v6990 = vpop.f32.mrb[0].mxu0
        %v6991 = vpop.f32.mrb[0].mxu0
        %v6992 = vadd.f32 0.0, %v6991
        %v6993 = vpop.f32.mrb[0].mxu0
        %6994 = vmatprep.mubr.bf16.mxu0 0
        %6995 = vmatmul.mubr.bf16.gmra.mrb[0].mxu0 %v6936
        %v6996 = vpop.f32.mrb[0].mxu0
        %v6997 = vadd.f32 0.0, %v6996
        %v6998 = vpop.f32.mrb[0].mxu0
        %v6999 = vpop.f32.mrb[0].mxu0
        %v7000 = vadd.f32 0.0, %v6999
        %v7001 = vpop.f32.mrb[0].mxu0
        %7002 = vdwg.mxu0
        %v7003 = vadd.f32 %v6873, %v6973
        %v7004 = vadd.f32 %v6874, %v6976
        %v7005 = vadd.f32 %v6875, %v6981
        %v7006 = vadd.f32 %v6876, %v6984
        %v7007 = vadd.f32 %v6877, %v6989
        %v7008 = vadd.f32 %v6878, %v6992
        %v7009 = vadd.f32 %v6879, %v6997
        %v7010 = vadd.f32 %v6880, %v7000
        %v7011 = vld [vmem:[%s6881 + $0x1] sm:$0xff]
        %v7012 = vld [vmem:[%s6881 + $0x11] sm:$0xff]
        %v7013 = vld [vmem:[%s6881 + $0x21] sm:$0xff]
        %v7014 = vld [vmem:[%s6881 + $0x31] sm:$0xff]
        %v7015 = vld [vmem:[%s6881 + $0x41] sm:$0xff]
        %v7016 = vld [vmem:[%s6881 + $0x51] sm:$0xff]
        %v7017 = vld [vmem:[%s6881 + $0x61] sm:$0xff]
        %v7018 = vld [vmem:[%s6881 + $0x71] sm:$0xff]
        %v7019 = vpack.c.bf16 %v7011, %v7011
        %v7020 = vpack.c.bf16 %v7012, %v7012
        %v7021 = vpack.c.bf16 %v7013, %v7013
        %v7022 = vpack.c.bf16 %v7014, %v7014
        %v7023 = vpack.c.bf16 %v7015, %v7015
        %v7024 = vpack.c.bf16 %v7016, %v7016
        %v7025 = vpack.c.bf16 %v7017, %v7017
        %v7026 = vpack.c.bf16 %v7018, %v7018
        %v7027 = vld [vmem:[%s3 + $0x38] sm:$0xf]
        %v7028 = vld [vmem:[%s3 + $0x3c] sm:$0xf]
        %v7037 = vunpack.c.l.b16 %v7019
        %v7038 = vunpack.c.l.b16 %v7020
        %v7039 = vunpack.c.l.b16 %v7021
        %v7040 = vunpack.c.l.b16 %v7022
        %v7041 = vunpack.c.l.b16 %v7023
        %v7042 = vunpack.c.l.b16 %v7024
        %v7043 = vunpack.c.l.b16 %v7025
        %v7044 = vunpack.c.l.b16 %v7026
        %v7045 = vpack.c.b16 %v7038, %v7037
        %v7046 = vpack.c.b16 %v7040, %v7039
        %v7047 = vpack.c.b16 %v7042, %v7041
        %v7048 = vpack.c.b16 %v7044, %v7043
        %v7051 = vunpack.c.l.b16 %v7027
        %v7052 = vunpack.c.l.b16 %v7028
        %v7053 = vpack.c.b16 %v7052, %v7051
        %v7056 = vsel %vm5695, %v7045, 0
        %v7059 = vsel %vm5695, %v7046, 0
        %v7062 = vsel %vm5695, %v7047, 0
        %v7065 = vsel %vm5695, %v7048, 0
        %7067 = vmatprep.subr.bf16.mxu0 0
        %7068 = vmatpush1.bf16.msra.mxu0 %v7053
        %7069 = vmatprep.subr.bf16.mxu0 0
        %7070 = vmatpush1.bf16.msra.mxu0 0
        %7071 = vmatprep.subr.bf16.mxu0 0
        %7072 = vmatpush1.bf16.msra.mxu0 0
        %7073 = vmatprep.subr.bf16.mxu0 0
        %7074 = vmatpush1.bf16.msra.mxu0 0
        %7075 = vmatprep.subr.bf16.mxu0 0
        %7076 = vmatpush1.bf16.msra.mxu0 0
        %7077 = vmatprep.subr.bf16.mxu0 0
        %7078 = vmatpush1.bf16.msra.mxu0 0
        %7079 = vmatprep.subr.bf16.mxu0 0
        %7080 = vmatpush1.bf16.msra.mxu0 0
        %7081 = vmatprep.subr.bf16.mxu0 0
        %7082 = vmatpush1.bf16.msra.mxu0 0
        %7083 = vmatprep.subr.bf16.mxu0 0
        %7084 = vmatpush1.bf16.msra.mxu0 0
        %7085 = vmatprep.subr.bf16.mxu0 0
        %7086 = vmatpush1.bf16.msra.mxu0 0
        %7087 = vmatprep.subr.bf16.mxu0 0
        %7088 = vmatpush1.bf16.msra.mxu0 0
        %7089 = vmatprep.subr.bf16.mxu0 0
        %7090 = vmatpush1.bf16.msra.mxu0 0
        %7091 = vmatprep.subr.bf16.mxu0 0
        %7092 = vmatpush1.bf16.msra.mxu0 0
        %7093 = vmatprep.subr.bf16.mxu0 0
        %7094 = vmatpush1.bf16.msra.mxu0 0
        %7095 = vmatprep.subr.bf16.mxu0 0
        %7096 = vmatpush1.bf16.msra.mxu0 0
        %7097 = vmatprep.subr.bf16.mxu0 0
        %7098 = vmatpush1.bf16.msra.mxu0 0
        %7099 = vmatprep.mubr.bf16.mxu0 0
        %7100 = vmatmul.mubr.bf16.gmra.mrb[0].mxu0 %v7056
        %v7101 = vpop.f32.mrb[0].mxu0
        %v7102 = vadd.f32 0.0, %v7101
        %v7103 = vpop.f32.mrb[0].mxu0
        %v7104 = vpop.f32.mrb[0].mxu0
        %v7105 = vadd.f32 0.0, %v7104
        %v7106 = vpop.f32.mrb[0].mxu0
        %7107 = vmatprep.mubr.bf16.mxu0 0
        %7108 = vmatmul.mubr.bf16.gmra.mrb[0].mxu0 %v7059
        %v7109 = vpop.f32.mrb[0].mxu0
        %v7110 = vadd.f32 0.0, %v7109
        %v7111 = vpop.f32.mrb[0].mxu0
        %v7112 = vpop.f32.mrb[0].mxu0
        %v7113 = vadd.f32 0.0, %v7112
        %v7114 = vpop.f32.mrb[0].mxu0
        %7115 = vmatprep.mubr.bf16.mxu0 0
        %7116 = vmatmul.mubr.bf16.gmra.mrb[0].mxu0 %v7062
        %v7117 = vpop.f32.mrb[0].mxu0
        %v7118 = vadd.f32 0.0, %v7117
        %v7119 = vpop.f32.mrb[0].mxu0
        %v7120 = vpop.f32.mrb[0].mxu0
        %v7121 = vadd.f32 0.0, %v7120
        %v7122 = vpop.f32.mrb[0].mxu0
        %7123 = vmatprep.mubr.bf16.mxu0 0
        %7124 = vmatmul.mubr.bf16.gmra.mrb[0].mxu0 %v7065
        %v7125 = vpop.f32.mrb[0].mxu0
        %v7126 = vadd.f32 0.0, %v7125
        %v7127 = vpop.f32.mrb[0].mxu0
        %v7128 = vpop.f32.mrb[0].mxu0
        %v7129 = vadd.f32 0.0, %v7128
        %v7130 = vpop.f32.mrb[0].mxu0
        %7131 = vdwg.mxu0
        %v7132 = vadd.f32 %v7003, %v7102
        %v7133 = vadd.f32 %v7004, %v7105
        %v7134 = vadd.f32 %v7005, %v7110
        %v7135 = vadd.f32 %v7006, %v7113
        %v7136 = vadd.f32 %v7007, %v7118
        %v7137 = vadd.f32 %v7008, %v7121
        %v7138 = vadd.f32 %v7009, %v7126
        %v7139 = vadd.f32 %v7010, %v7129
        %v7140 = vld [vmem:[%s6881 + $0x2] sm:$0xff]
        %v7141 = vld [vmem:[%s6881 + $0x12] sm:$0xff]
        %v7142 = vld [vmem:[%s6881 + $0x22] sm:$0xff]
        %v7143 = vld [vmem:[%s6881 + $0x32] sm:$0xff]
        %v7144 = vld [vmem:[%s6881 + $0x42] sm:$0xff]
        %v7145 = vld [vmem:[%s6881 + $0x52] sm:$0xff]
        %v7146 = vld [vmem:[%s6881 + $0x62] sm:$0xff]
        %v7147 = vld [vmem:[%s6881 + $0x72] sm:$0xff]
        %v7148 = vpack.c.bf16 %v7140, %v7140
        %v7149 = vpack.c.bf16 %v7141, %v7141
        %v7150 = vpack.c.bf16 %v7142, %v7142
        %v7151 = vpack.c.bf16 %v7143, %v7143
        %v7152 = vpack.c.bf16 %v7144, %v7144
        %v7153 = vpack.c.bf16 %v7145, %v7145
        %v7154 = vpack.c.bf16 %v7146, %v7146
        %v7155 = vpack.c.bf16 %v7147, %v7147
        %v7156 = vld [vmem:[%s3 + $0x40] sm:$0xf]
        %v7157 = vld [vmem:[%s3 + $0x44] sm:$0xf]
        %v7166 = vunpack.c.l.b16 %v7148
        %v7167 = vunpack.c.l.b16 %v7149
        %v7168 = vunpack.c.l.b16 %v7150
        %v7169 = vunpack.c.l.b16 %v7151
        %v7170 = vunpack.c.l.b16 %v7152
        %v7171 = vunpack.c.l.b16 %v7153
        %v7172 = vunpack.c.l.b16 %v7154
        %v7173 = vunpack.c.l.b16 %v7155
        %v7174 = vpack.c.b16 %v7167, %v7166
        %v7175 = vpack.c.b16 %v7169, %v7168
        %v7176 = vpack.c.b16 %v7171, %v7170
        %v7177 = vpack.c.b16 %v7173, %v7172
        %v7180 = vunpack.c.l.b16 %v7156
        %v7181 = vunpack.c.l.b16 %v7157
        %v7182 = vpack.c.b16 %v7181, %v7180
        %v7185 = vsel %vm5695, %v7174, 0
        %v7188 = vsel %vm5695, %v7175, 0
        %v7191 = vsel %vm5695, %v7176, 0
        %v7194 = vsel %vm5695, %v7177, 0
        %7196 = vmatprep.subr.bf16.mxu0 0
        %7197 = vmatpush1.bf16.msra.mxu0 %v7182
        %7198 = vmatprep.subr.bf16.mxu0 0
        %7199 = vmatpush1.bf16.msra.mxu0 0
        %7200 = vmatprep.subr.bf16.mxu0 0
        %7201 = vmatpush1.bf16.msra.mxu0 0
        %7202 = vmatprep.subr.bf16.mxu0 0
        %7203 = vmatpush1.bf16.msra.mxu0 0
        %7204 = vmatprep.subr.bf16.mxu0 0
        %7205 = vmatpush1.bf16.msra.mxu0 0
        %7206 = vmatprep.subr.bf16.mxu0 0
        %7207 = vmatpush1.bf16.msra.mxu0 0
        %7208 = vmatprep.subr.bf16.mxu0 0
        %7209 = vmatpush1.bf16.msra.mxu0 0
        %7210 = vmatprep.subr.bf16.mxu0 0
        %7211 = vmatpush1.bf16.msra.mxu0 0
        %7212 = vmatprep.subr.bf16.mxu0 0
        %7213 = vmatpush1.bf16.msra.mxu0 0
        %7214 = vmatprep.subr.bf16.mxu0 0
        %7215 = vmatpush1.bf16.msra.mxu0 0
        %7216 = vmatprep.subr.bf16.mxu0 0
        %7217 = vmatpush1.bf16.msra.mxu0 0
        %7218 = vmatprep.subr.bf16.mxu0 0
        %7219 = vmatpush1.bf16.msra.mxu0 0
        %7220 = vmatprep.subr.bf16.mxu0 0
        %7221 = vmatpush1.bf16.msra.mxu0 0
        %7222 = vmatprep.subr.bf16.mxu0 0
        %7223 = vmatpush1.bf16.msra.mxu0 0
        %7224 = vmatprep.subr.bf16.mxu0 0
        %7225 = vmatpush1.bf16.msra.mxu0 0
        %7226 = vmatprep.subr.bf16.mxu0 0
        %7227 = vmatpush1.bf16.msra.mxu0 0
        %7228 = vmatprep.mubr.bf16.mxu0 0
        %7229 = vmatmul.mubr.bf16.gmra.mrb[0].mxu0 %v7185
        %v7230 = vpop.f32.mrb[0].mxu0
        %v7231 = vadd.f32 0.0, %v7230
        %v7232 = vpop.f32.mrb[0].mxu0
        %v7233 = vpop.f32.mrb[0].mxu0
        %v7234 = vadd.f32 0.0, %v7233
        %v7235 = vpop.f32.mrb[0].mxu0
        %7236 = vmatprep.mubr.bf16.mxu0 0
        %7237 = vmatmul.mubr.bf16.gmra.mrb[0].mxu0 %v7188
        %v7238 = vpop.f32.mrb[0].mxu0
        %v7239 = vadd.f32 0.0, %v7238
        %v7240 = vpop.f32.mrb[0].mxu0
        %v7241 = vpop.f32.mrb[0].mxu0
        %v7242 = vadd.f32 0.0, %v7241
        %v7243 = vpop.f32.mrb[0].mxu0
        %7244 = vmatprep.mubr.bf16.mxu0 0
        %7245 = vmatmul.mubr.bf16.gmra.mrb[0].mxu0 %v7191
        %v7246 = vpop.f32.mrb[0].mxu0
        %v7247 = vadd.f32 0.0, %v7246
        %v7248 = vpop.f32.mrb[0].mxu0
        %v7249 = vpop.f32.mrb[0].mxu0
        %v7250 = vadd.f32 0.0, %v7249
        %v7251 = vpop.f32.mrb[0].mxu0
        %7252 = vmatprep.mubr.bf16.mxu0 0
        %7253 = vmatmul.mubr.bf16.gmra.mrb[0].mxu0 %v7194
        %v7254 = vpop.f32.mrb[0].mxu0
        %v7255 = vadd.f32 0.0, %v7254
        %v7256 = vpop.f32.mrb[0].mxu0
        %v7257 = vpop.f32.mrb[0].mxu0
        %v7258 = vadd.f32 0.0, %v7257
        %v7259 = vpop.f32.mrb[0].mxu0
        %7260 = vdwg.mxu0
        %v7261 = vadd.f32 %v7132, %v7231
        %v7262 = vadd.f32 %v7133, %v7234
        %v7263 = vadd.f32 %v7134, %v7239
        %v7264 = vadd.f32 %v7135, %v7242
        %v7265 = vadd.f32 %v7136, %v7247
        %v7266 = vadd.f32 %v7137, %v7250
        %v7267 = vadd.f32 %v7138, %v7255
        %v7268 = vadd.f32 %v7139, %v7258
        %v7269 = vld [vmem:[%s4] sm:$0x1]
        %v7271 = vlaneseq
        %v7272 = vshrl.u32 %v7271, 7
        %v7273 = vsub.s32 0, %v7272
        %v7274 = vrot.slane %v7269, %v7273
        %v7276 = vadd.f32 %v7261, %v7274
        %v7277 = vadd.f32 %v7262, %v7274
        %v7278 = vadd.f32 %v7263, %v7274
        %v7279 = vadd.f32 %v7264, %v7274
        %v7280 = vadd.f32 %v7265, %v7274
        %v7281 = vadd.f32 %v7266, %v7274
        %v7282 = vadd.f32 %v7267, %v7274
        %v7283 = vadd.f32 %v7268, %v7274
        %v7284 = vmax.f32 %v7276, 0.0
        %v7285 = vmax.f32 %v7277, 0.0
        %v7286 = vmax.f32 %v7278, 0.0
        %v7287 = vmax.f32 %v7279, 0.0
        %v7288 = vmax.f32 %v7280, 0.0
        %v7289 = vmax.f32 %v7281, 0.0
        %v7290 = vmax.f32 %v7282, 0.0
        %v7291 = vmax.f32 %v7283, 0.0
        %v7292 = vmax.f32 %v7284, %v7285
        %v7293 = vmax.f32 %v7286, %v7287
        %v7294 = vmax.f32 %v7288, %v7289
        %v7295 = vmax.f32 %v7290, %v7291
        %v7300 = vcombine.high %v7292, %v7292
        %v7302 = vunpack.c.l.s4 1983009808
        %v7303 = vunpack.c.0.s8 %v7302
        %v7304 = vlaneseq
        %v7305 = vshrl.u32 %v7304, 7
        %v7306 = vsub.s32 %v7303, %v7305
        %v7307 = vrot.slane %v7292, %v7306
        %v7309 = vunpack.c.l.s4 1983009808
        %v7310 = vunpack.c.0.s8 %v7309
        %v7311 = vlaneseq
        %v7312 = vshrl.u32 %v7311, 7
        %v7313 = vsub.s32 %v7310, %v7312
        %v7314 = vrot.slane %v7300, %v7313
        %v7315 = vcombine.high %v7307, %v7307
        %v7316 = vcombine.high %v7314, %v7314
        %v7317 = vcombine.high %v7293, %v7293
        %v7319 = vunpack.c.l.s4 1983009808
        %v7320 = vunpack.c.0.s8 %v7319
        %v7321 = vlaneseq
        %v7322 = vshrl.u32 %v7321, 7
        %v7323 = vsub.s32 %v7320, %v7322
        %v7324 = vrot.slane %v7293, %v7323
        %v7326 = vunpack.c.l.s4 1983009808
        %v7327 = vunpack.c.0.s8 %v7326
        %v7328 = vlaneseq
        %v7329 = vshrl.u32 %v7328, 7
        %v7330 = vsub.s32 %v7327, %v7329
        %v7331 = vrot.slane %v7317, %v7330
        %v7332 = vcombine.high %v7324, %v7324
        %v7333 = vcombine.high %v7331, %v7331
        %v7334 = vcombine.high %v7294, %v7294
        %v7336 = vunpack.c.l.s4 1983009808
        %v7337 = vunpack.c.0.s8 %v7336
        %v7338 = vlaneseq
        %v7339 = vshrl.u32 %v7338, 7
        %v7340 = vsub.s32 %v7337, %v7339
        %v7341 = vrot.slane %v7294, %v7340
        %v7343 = vunpack.c.l.s4 1983009808
        %v7344 = vunpack.c.0.s8 %v7343
        %v7345 = vlaneseq
        %v7346 = vshrl.u32 %v7345, 7
        %v7347 = vsub.s32 %v7344, %v7346
        %v7348 = vrot.slane %v7334, %v7347
        %v7349 = vcombine.high %v7341, %v7341
        %v7350 = vcombine.high %v7348, %v7348
        %v7351 = vcombine.high %v7295, %v7295
        %v7353 = vunpack.c.l.s4 1983009808
        %v7354 = vunpack.c.0.s8 %v7353
        %v7355 = vlaneseq
        %v7356 = vshrl.u32 %v7355, 7
        %v7357 = vsub.s32 %v7354, %v7356
        %v7358 = vrot.slane %v7295, %v7357
        %v7360 = vunpack.c.l.s4 1983009808
        %v7361 = vunpack.c.0.s8 %v7360
        %v7362 = vlaneseq
        %v7363 = vshrl.u32 %v7362, 7
        %v7364 = vsub.s32 %v7361, %v7363
        %v7365 = vrot.slane %v7351, %v7364
        %v7366 = vcombine.high %v7358, %v7358
        %v7367 = vcombine.high %v7365, %v7365
        %v7384 = vrot.slane %v7307, 7
        %v7385 = vrot.slane %v7384, 2
        %v7386 = vrot.slane %v7315, 7
        %v7387 = vrot.slane %v7386, 2
        %v7388 = vrot.slane %v7314, 7
        %v7389 = vrot.slane %v7388, 2
        %v7390 = vrot.slane %v7316, 7
        %v7391 = vrot.slane %v7390, 2
        %v7392 = vrot.slane %v7324, 7
        %v7393 = vrot.slane %v7392, 2
        %v7394 = vrot.slane %v7332, 7
        %v7395 = vrot.slane %v7394, 2
        %v7396 = vrot.slane %v7331, 7
        %v7397 = vrot.slane %v7396, 2
        %v7398 = vrot.slane %v7333, 7
        %v7399 = vrot.slane %v7398, 2
        %v7400 = vrot.slane %v7341, 7
        %v7401 = vrot.slane %v7400, 2
        %v7402 = vrot.slane %v7349, 7
        %v7403 = vrot.slane %v7402, 2
        %v7404 = vrot.slane %v7348, 7
        %v7405 = vrot.slane %v7404, 2
        %v7406 = vrot.slane %v7350, 7
        %v7407 = vrot.slane %v7406, 2
        %v7408 = vrot.slane %v7358, 7
        %v7409 = vrot.slane %v7408, 2
        %v7410 = vrot.slane %v7366, 7
        %v7411 = vrot.slane %v7410, 2
        %v7412 = vrot.slane %v7365, 7
        %v7413 = vrot.slane %v7412, 2
        %v7414 = vrot.slane %v7367, 7
        %v7415 = vrot.slane %v7414, 2
        %v7432 = vmax.f32 %v7307, %v7385
        %v7433 = vmax.f32 %v7315, %v7387
        %v7434 = vmax.f32 %v7314, %v7389
        %v7435 = vmax.f32 %v7316, %v7391
        %v7436 = vmax.f32 %v7324, %v7393
        %v7437 = vmax.f32 %v7332, %v7395
        %v7438 = vmax.f32 %v7331, %v7397
        %v7439 = vmax.f32 %v7333, %v7399
        %v7440 = vmax.f32 %v7341, %v7401
        %v7441 = vmax.f32 %v7349, %v7403
        %v7442 = vmax.f32 %v7348, %v7405
        %v7443 = vmax.f32 %v7350, %v7407
        %v7444 = vmax.f32 %v7358, %v7409
        %v7445 = vmax.f32 %v7366, %v7411
        %v7446 = vmax.f32 %v7365, %v7413
        %v7447 = vmax.f32 %v7367, %v7415
        %vm7448 = vcmask 259072
        %7449 = vst.msk [vmem:[#allocation3] sm:$0x3f] %vm7448, 0.0
        %s7450 = scalar_lea.vmem [#allocation3], 40
        %7451 = vst.msk [vmem:[%s7450] sm:$0x3f] %vm7448, 0.0
        %vm7452 = vcmask 253952
        %7453 = vst.msk [vmem:[#allocation3] sm:$0x1] %vm7452, 0.0
        %7454 = vst.msk [vmem:[#allocation3 + $0x8] sm:$0x1] %vm7452, 0.0
        %7455 = vst.msk [vmem:[#allocation3 + $0x10] sm:$0x1] %vm7452, 0.0
        %7456 = vst.msk [vmem:[#allocation3 + $0x18] sm:$0x1] %vm7452, 0.0
        %7457 = vst.msk [vmem:[#allocation3 + $0x20] sm:$0x1] %vm7452, 0.0
        %7458 = vst.msk [vmem:[#allocation3 + $0x28] sm:$0x1] %vm7452, 0.0
        %7459 = vst.msk [vmem:[#allocation3 + $0x5] sm:$0x1] %vm7452, 0.0
        %7460 = vst.msk [vmem:[#allocation3 + $0xd] sm:$0x1] %vm7452, 0.0
        %7461 = vst.msk [vmem:[#allocation3 + $0x15] sm:$0x1] %vm7452, 0.0
        %7462 = vst.msk [vmem:[#allocation3 + $0x1d] sm:$0x1] %vm7452, 0.0
        %7463 = vst.msk [vmem:[#allocation3 + $0x25] sm:$0x1] %vm7452, 0.0
        %7464 = vst.msk [vmem:[#allocation3 + $0x2d] sm:$0x1] %vm7452, 0.0
        %v7481 = vlaneseq
        %v7482 = vshrl.u32 %v7481, 7
        %v7483 = vsub.s32 0, %v7482
        %v7484 = vrot.slane %v7432, %v7483
        %v7485 = vlaneseq
        %v7486 = vshrl.u32 %v7485, 7
        %v7487 = vsub.s32 0, %v7486
        %v7488 = vrot.slane %v7433, %v7487
        %v7489 = vlaneseq
        %v7490 = vshrl.u32 %v7489, 7
        %v7491 = vsub.s32 0, %v7490
        %v7492 = vrot.slane %v7434, %v7491
        %v7493 = vlaneseq
        %v7494 = vshrl.u32 %v7493, 7
        %v7495 = vsub.s32 0, %v7494
        %v7496 = vrot.slane %v7435, %v7495
        %v7497 = vlaneseq
        %v7498 = vshrl.u32 %v7497, 7
        %v7499 = vsub.s32 0, %v7498
        %v7500 = vrot.slane %v7436, %v7499
        %v7501 = vlaneseq
        %v7502 = vshrl.u32 %v7501, 7
        %v7503 = vsub.s32 0, %v7502
        %v7504 = vrot.slane %v7437, %v7503
        %v7505 = vlaneseq
        %v7506 = vshrl.u32 %v7505, 7
        %v7507 = vsub.s32 0, %v7506
        %v7508 = vrot.slane %v7438, %v7507
        %v7509 = vlaneseq
        %v7510 = vshrl.u32 %v7509, 7
        %v7511 = vsub.s32 0, %v7510
        %v7512 = vrot.slane %v7439, %v7511
        %v7513 = vlaneseq
        %v7514 = vshrl.u32 %v7513, 7
        %v7515 = vsub.s32 0, %v7514
        %v7516 = vrot.slane %v7440, %v7515
        %v7517 = vlaneseq
        %v7518 = vshrl.u32 %v7517, 7
        %v7519 = vsub.s32 0, %v7518
        %v7520 = vrot.slane %v7441, %v7519
        %v7521 = vlaneseq
        %v7522 = vshrl.u32 %v7521, 7
        %v7523 = vsub.s32 0, %v7522
        %v7524 = vrot.slane %v7442, %v7523
        %v7525 = vlaneseq
        %v7526 = vshrl.u32 %v7525, 7
        %v7527 = vsub.s32 0, %v7526
        %v7528 = vrot.slane %v7443, %v7527
        %v7529 = vlaneseq
        %v7530 = vshrl.u32 %v7529, 7
        %v7531 = vsub.s32 0, %v7530
        %v7532 = vrot.slane %v7444, %v7531
        %v7533 = vlaneseq
        %v7534 = vshrl.u32 %v7533, 7
        %v7535 = vsub.s32 0, %v7534
        %v7536 = vrot.slane %v7445, %v7535
        %v7537 = vlaneseq
        %v7538 = vshrl.u32 %v7537, 7
        %v7539 = vsub.s32 0, %v7538
        %v7540 = vrot.slane %v7446, %v7539
        %v7541 = vlaneseq
        %v7542 = vshrl.u32 %v7541, 7
        %v7543 = vsub.s32 0, %v7542
        %v7544 = vrot.slane %v7447, %v7543
        %v7545 = vsel %vm6043, %v7488, %v7484
        %v7546 = vsel %vm6045, %v7492, %v7545
        %v7547 = vsel %vm6047, %v7496, %v7546
        %v7548 = vsel %vm6043, %v7504, %v7500
        %v7549 = vsel %vm6045, %v7508, %v7548
        %v7550 = vsel %vm6047, %v7512, %v7549
        %v7551 = vsel %vm6043, %v7520, %v7516
        %v7552 = vsel %vm6045, %v7524, %v7551
        %v7553 = vsel %vm6047, %v7528, %v7552
        %v7554 = vsel %vm6043, %v7536, %v7532
        %v7555 = vsel %vm6045, %v7540, %v7554
        %v7556 = vsel %vm6047, %v7544, %v7555
        %s7561 = scalar_lea.vmem [#allocation3], 8
        %vm7562 = vcmask 257024
        %7563 = vst.msk [vmem:[%s7561 + $0x1] sm:$0xf] %vm7562, %v7547
        %7564 = vst.msk [vmem:[%s7561 + $0x9] sm:$0xf] %vm7562, %v7550
        %7565 = vst.msk [vmem:[%s7561 + $0x11] sm:$0xf] %vm7562, %v7553
        %7566 = vst.msk [vmem:[%s7561 + $0x19] sm:$0xf] %vm7562, %v7556
        %v7567 = vld [vmem:[#allocation3] sm:$0xf]
        %v7568 = vld [vmem:[#allocation3 + $0x8] sm:$0xf]
        %v7569 = vld [vmem:[#allocation3 + $0x10] sm:$0xf]
        %v7570 = vld [vmem:[#allocation3 + $0x18] sm:$0xf]
        %v7571 = vld [vmem:[#allocation3 + $0x1] sm:$0xf]
        %v7572 = vld [vmem:[#allocation3 + $0x9] sm:$0xf]
        %v7573 = vld [vmem:[#allocation3 + $0x11] sm:$0xf]
        %v7574 = vld [vmem:[#allocation3 + $0x19] sm:$0xf]
        %v7575 = vld [vmem:[#allocation3 + $0x2] sm:$0xf]
        %v7576 = vld [vmem:[#allocation3 + $0xa] sm:$0xf]
        %v7577 = vld [vmem:[#allocation3 + $0x12] sm:$0xf]
        %v7578 = vld [vmem:[#allocation3 + $0x1a] sm:$0xf]
        %v7579 = vld [vmem:[%s7561] sm:$0xf]
        %v7580 = vld [vmem:[%s7561 + $0x8] sm:$0xf]
        %v7581 = vld [vmem:[%s7561 + $0x10] sm:$0xf]
        %v7582 = vld [vmem:[%s7561 + $0x18] sm:$0xf]
        %v7583 = vld [vmem:[%s7561 + $0x1] sm:$0xf]
        %v7584 = vld [vmem:[%s7561 + $0x9] sm:$0xf]
        %v7585 = vld [vmem:[%s7561 + $0x11] sm:$0xf]
        %v7586 = vld [vmem:[%s7561 + $0x19] sm:$0xf]
        %v7587 = vld [vmem:[%s7561 + $0x2] sm:$0xf]
        %v7588 = vld [vmem:[%s7561 + $0xa] sm:$0xf]
        %v7589 = vld [vmem:[%s7561 + $0x12] sm:$0xf]
        %v7590 = vld [vmem:[%s7561 + $0x1a] sm:$0xf]
        %s7591 = scalar_lea.vmem [#allocation3], 16
        %v7592 = vld [vmem:[%s7591] sm:$0xf]
        %v7593 = vld [vmem:[%s7591 + $0x8] sm:$0xf]
        %v7594 = vld [vmem:[%s7591 + $0x10] sm:$0xf]
        %v7595 = vld [vmem:[%s7591 + $0x18] sm:$0xf]
        %v7596 = vld [vmem:[%s7591 + $0x1] sm:$0xf]
        %v7597 = vld [vmem:[%s7591 + $0x9] sm:$0xf]
        %v7598 = vld [vmem:[%s7591 + $0x11] sm:$0xf]
        %v7599 = vld [vmem:[%s7591 + $0x19] sm:$0xf]
        %v7600 = vld [vmem:[%s7591 + $0x2] sm:$0xf]
        %v7601 = vld [vmem:[%s7591 + $0xa] sm:$0xf]
        %v7602 = vld [vmem:[%s7591 + $0x12] sm:$0xf]
        %v7603 = vld [vmem:[%s7591 + $0x1a] sm:$0xf]
        %7608 = vrot.lane.b32.xlu0 %v7571, 32
        %v7609 = vpop.permute.xlu0 %7608
        %7610 = vrot.lane.b32.xlu0 %v7572, 32
        %v7611 = vpop.permute.xlu0 %7610
        %7612 = vrot.lane.b32.xlu0 %v7573, 32
        %v7613 = vpop.permute.xlu0 %7612
        %7614 = vrot.lane.b32.xlu0 %v7574, 32
        %v7615 = vpop.permute.xlu0 %7614
        %7624 = vrot.lane.b32.xlu0 %v7575, 64
        %v7625 = vpop.permute.xlu0 %7624
        %7626 = vrot.lane.b32.xlu0 %v7576, 64
        %v7627 = vpop.permute.xlu0 %7626
        %7628 = vrot.lane.b32.xlu0 %v7577, 64
        %v7629 = vpop.permute.xlu0 %7628
        %7630 = vrot.lane.b32.xlu0 %v7578, 64
        %v7631 = vpop.permute.xlu0 %7630
        %7640 = vrot.lane.b32.xlu0 %v7579, 96
        %v7641 = vpop.permute.xlu0 %7640
        %7642 = vrot.lane.b32.xlu0 %v7580, 96
        %v7643 = vpop.permute.xlu0 %7642
        %7644 = vrot.lane.b32.xlu0 %v7581, 96
        %v7645 = vpop.permute.xlu0 %7644
        %7646 = vrot.lane.b32.xlu0 %v7582, 96
        %v7647 = vpop.permute.xlu0 %7646
        %7656 = vrot.lane.b32.xlu0 %v7587, 32
        %v7657 = vpop.permute.xlu0 %7656
        %7658 = vrot.lane.b32.xlu0 %v7588, 32
        %v7659 = vpop.permute.xlu0 %7658
        %7660 = vrot.lane.b32.xlu0 %v7589, 32
        %v7661 = vpop.permute.xlu0 %7660
        %7662 = vrot.lane.b32.xlu0 %v7590, 32
        %v7663 = vpop.permute.xlu0 %7662
        %7672 = vrot.lane.b32.xlu0 %v7592, 64
        %v7673 = vpop.permute.xlu0 %7672
        %7674 = vrot.lane.b32.xlu0 %v7593, 64
        %v7675 = vpop.permute.xlu0 %7674
        %7676 = vrot.lane.b32.xlu0 %v7594, 64
        %v7677 = vpop.permute.xlu0 %7676
        %7678 = vrot.lane.b32.xlu0 %v7595, 64
        %v7679 = vpop.permute.xlu0 %7678
        %7688 = vrot.lane.b32.xlu0 %v7596, 96
        %v7689 = vpop.permute.xlu0 %7688
        %7690 = vrot.lane.b32.xlu0 %v7597, 96
        %v7691 = vpop.permute.xlu0 %7690
        %7692 = vrot.lane.b32.xlu0 %v7598, 96
        %v7693 = vpop.permute.xlu0 %7692
        %7694 = vrot.lane.b32.xlu0 %v7599, 96
        %v7695 = vpop.permute.xlu0 %7694
        %vm7700 = vcmask 261120
        %v7701 = vsel %vm7700, %v7567, %v7609
        %v7702 = vsel %vm7700, %v7568, %v7611
        %v7703 = vsel %vm7700, %v7569, %v7613
        %v7704 = vsel %vm7700, %v7570, %v7615
        %vm7705 = vcmask 523264
        %v7706 = vsel %vm7705, %v7701, %v7625
        %v7707 = vsel %vm7705, %v7702, %v7627
        %v7708 = vsel %vm7705, %v7703, %v7629
        %v7709 = vsel %vm7705, %v7704, %v7631
        %vm7710 = vcmask 785408
        %v7711 = vsel %vm7710, %v7706, %v7641
        %v7712 = vsel %vm7710, %v7707, %v7643
        %v7713 = vsel %vm7710, %v7708, %v7645
        %v7714 = vsel %vm7710, %v7709, %v7647
        %v7715 = vsel %vm7700, %v7583, %v7657
        %v7716 = vsel %vm7700, %v7584, %v7659
        %v7717 = vsel %vm7700, %v7585, %v7661
        %v7718 = vsel %vm7700, %v7586, %v7663
        %v7719 = vsel %vm7705, %v7715, %v7673
        %v7720 = vsel %vm7705, %v7716, %v7675
        %v7721 = vsel %vm7705, %v7717, %v7677
        %v7722 = vsel %vm7705, %v7718, %v7679
        %v7723 = vsel %vm7710, %v7719, %v7689
        %v7724 = vsel %vm7710, %v7720, %v7691
        %v7725 = vsel %vm7710, %v7721, %v7693
        %v7726 = vsel %vm7710, %v7722, %v7695
        %v7727 = vpack.c.bf16 %v7711, %v7711
        %v7728 = vpack.c.bf16 %v7723, %v7723
        %v7729 = vpack.c.bf16 %v7600, %v7600
        %v7730 = vpack.c.bf16 %v7712, %v7712
        %v7731 = vpack.c.bf16 %v7724, %v7724
        %v7732 = vpack.c.bf16 %v7601, %v7601
        %v7733 = vpack.c.bf16 %v7713, %v7713
        %v7734 = vpack.c.bf16 %v7725, %v7725
        %v7735 = vpack.c.bf16 %v7602, %v7602
        %v7736 = vpack.c.bf16 %v7714, %v7714
        %v7737 = vpack.c.bf16 %v7726, %v7726
        %v7738 = vpack.c.bf16 %v7603, %v7603
        %v7751 = vcombine.low %v7727, %v7728
        %v7753 = vunpack.c.l.s4 1983009808
        %v7754 = vunpack.c.0.s8 %v7753
        %v7755 = vlaneseq
        %v7756 = vshrl.u32 %v7755, 7
        %v7757 = vsub.s32 %v7754, %v7756
        %v7758 = vrot.slane %v7751, %v7757
        %v7760 = vunpack.c.l.s4 1983009808
        %v7761 = vunpack.c.0.s8 %v7760
        %v7762 = vlaneseq
        %v7763 = vshrl.u32 %v7762, 7
        %v7764 = vsub.s32 %v7761, %v7763
        %v7765 = vrot.slane %v7729, %v7764
        %v7766 = vcombine.low %v7758, %v7765
        %v7767 = vcombine.low %v7730, %v7731
        %v7769 = vunpack.c.l.s4 1983009808
        %v7770 = vunpack.c.0.s8 %v7769
        %v7771 = vlaneseq
        %v7772 = vshrl.u32 %v7771, 7
        %v7773 = vsub.s32 %v7770, %v7772
        %v7774 = vrot.slane %v7767, %v7773
        %v7776 = vunpack.c.l.s4 1983009808
        %v7777 = vunpack.c.0.s8 %v7776
        %v7778 = vlaneseq
        %v7779 = vshrl.u32 %v7778, 7
        %v7780 = vsub.s32 %v7777, %v7779
        %v7781 = vrot.slane %v7732, %v7780
        %v7782 = vcombine.low %v7774, %v7781
        %v7783 = vcombine.low %v7733, %v7734
        %v7785 = vunpack.c.l.s4 1983009808
        %v7786 = vunpack.c.0.s8 %v7785
        %v7787 = vlaneseq
        %v7788 = vshrl.u32 %v7787, 7
        %v7789 = vsub.s32 %v7786, %v7788
        %v7790 = vrot.slane %v7783, %v7789
        %v7792 = vunpack.c.l.s4 1983009808
        %v7793 = vunpack.c.0.s8 %v7792
        %v7794 = vlaneseq
        %v7795 = vshrl.u32 %v7794, 7
        %v7796 = vsub.s32 %v7793, %v7795
        %v7797 = vrot.slane %v7735, %v7796
        %v7798 = vcombine.low %v7790, %v7797
        %v7799 = vcombine.low %v7736, %v7737
        %v7801 = vunpack.c.l.s4 1983009808
        %v7802 = vunpack.c.0.s8 %v7801
        %v7803 = vlaneseq
        %v7804 = vshrl.u32 %v7803, 7
        %v7805 = vsub.s32 %v7802, %v7804
        %v7806 = vrot.slane %v7799, %v7805
        %v7808 = vunpack.c.l.s4 1983009808
        %v7809 = vunpack.c.0.s8 %v7808
        %v7810 = vlaneseq
        %v7811 = vshrl.u32 %v7810, 7
        %v7812 = vsub.s32 %v7809, %v7811
        %v7813 = vrot.slane %v7738, %v7812
        %v7814 = vcombine.low %v7806, %v7813
        %v7815 = vld [vmem:[%s5] sm:$0xf]
        %v7816 = vld [vmem:[%s5 + $0x4] sm:$0xf]
        %v7817 = vld [vmem:[%s5 + $0x8] sm:$0xf]
        %v7818 = vld [vmem:[%s5 + $0xc] sm:$0xf]
        %v7819 = vld [vmem:[%s5 + $0x10] sm:$0xf]
        %v7820 = vld [vmem:[%s5 + $0x14] sm:$0xf]
        %v7821 = vld [vmem:[%s5 + $0x18] sm:$0xf]
        %v7822 = vld [vmem:[%s5 + $0x1c] sm:$0xf]
        %v7823 = vld [vmem:[%s5 + $0x20] sm:$0xf]
        %v7824 = vld [vmem:[%s5 + $0x24] sm:$0xf]
        %v7825 = vld [vmem:[%s5 + $0x28] sm:$0xf]
        %v7826 = vld [vmem:[%s5 + $0x2c] sm:$0xf]
        %v7827 = vld [vmem:[%s5 + $0x30] sm:$0xf]
        %v7828 = vld [vmem:[%s5 + $0x34] sm:$0xf]
        %v7829 = vld [vmem:[%s5 + $0x38] sm:$0xf]
        %v7830 = vld [vmem:[%s5 + $0x3c] sm:$0xf]
        %v7831 = vld [vmem:[%s5 + $0x40] sm:$0xf]
        %v7832 = vld [vmem:[%s5 + $0x44] sm:$0xf]
        %v7833 = vld [vmem:[%s5 + $0x48] sm:$0xf]
        %v7834 = vld [vmem:[%s5 + $0x4c] sm:$0xf]
        %v7835 = vld [vmem:[%s5 + $0x50] sm:$0xf]
        %v7836 = vld [vmem:[%s5 + $0x54] sm:$0xf]
        %v7837 = vld [vmem:[%s5 + $0x58] sm:$0xf]
        %v7838 = vld [vmem:[%s5 + $0x5c] sm:$0xf]
        %v7839 = vld [vmem:[%s5 + $0x60] sm:$0xf]
        %v7840 = vld [vmem:[%s5 + $0x64] sm:$0xf]
        %v7841 = vld [vmem:[%s5 + $0x68] sm:$0xf]
        %v7842 = vld [vmem:[%s5 + $0x6c] sm:$0xf]
        %v7843 = vld [vmem:[%s5 + $0x70] sm:$0xf]
        %v7844 = vld [vmem:[%s5 + $0x74] sm:$0xf]
        %v7845 = vld [vmem:[%s5 + $0x78] sm:$0xf]
        %v7846 = vld [vmem:[%s5 + $0x7c] sm:$0xf]
        %v7847 = vld [vmem:[%s5 + $0x80] sm:$0xf]
        %v7848 = vld [vmem:[%s5 + $0x84] sm:$0xf]
        %v7849 = vld [vmem:[%s5 + $0x88] sm:$0xf]
        %v7850 = vld [vmem:[%s5 + $0x8c] sm:$0xf]
        %v7851 = vld [vmem:[%s6] sm:$0x1]
        %v7853 = vlaneseq
        %v7854 = vshrl.u32 %v7853, 7
        %v7855 = vsub.s32 0, %v7854
        %v7856 = vrot.slane %v7851, %v7855
        %v7858 = vcombine.low %v7766, %v7782
        %v7859 = vcombine.high %v7766, %v7782
        %v7860 = vcombine.low %v7798, %v7814
        %v7861 = vcombine.high %v7798, %v7814
        %v7863 = vunpack.c.l.s4 1983009808
        %v7864 = vunpack.c.0.s8 %v7863
        %v7865 = vlaneseq
        %v7866 = vshrl.u32 %v7865, 7
        %v7867 = vsub.s32 %v7864, %v7866
        %v7868 = vrot.slane %v7858, %v7867
        %v7870 = vunpack.c.l.s4 1983009808
        %v7871 = vunpack.c.0.s8 %v7870
        %v7872 = vlaneseq
        %v7873 = vshrl.u32 %v7872, 7
        %v7874 = vsub.s32 %v7871, %v7873
        %v7875 = vrot.slane %v7859, %v7874
        %v7877 = vunpack.c.l.s4 1983009808
        %v7878 = vunpack.c.0.s8 %v7877
        %v7879 = vlaneseq
        %v7880 = vshrl.u32 %v7879, 7
        %v7881 = vsub.s32 %v7878, %v7880
        %v7882 = vrot.slane %v7860, %v7881
        %v7884 = vunpack.c.l.s4 1983009808
        %v7885 = vunpack.c.0.s8 %v7884
        %v7886 = vlaneseq
        %v7887 = vshrl.u32 %v7886, 7
        %v7888 = vsub.s32 %v7885, %v7887
        %v7889 = vrot.slane %v7861, %v7888
        %v7890 = vcombine.low %v7868, %v7882
        %v7891 = vcombine.high %v7868, %v7882
        %v7892 = vcombine.low %v7875, %v7889
        %v7931 = vunpack.c.l.b16 %v7815
        %v7932 = vunpack.c.l.b16 %v7816
        %v7933 = vunpack.c.l.b16 %v7817
        %v7934 = vunpack.c.l.b16 %v7818
        %v7935 = vunpack.c.l.b16 %v7819
        %v7936 = vunpack.c.l.b16 %v7820
        %v7937 = vunpack.c.l.b16 %v7821
        %v7938 = vunpack.c.l.b16 %v7822
        %v7939 = vunpack.c.l.b16 %v7823
        %v7940 = vunpack.c.l.b16 %v7824
        %v7941 = vunpack.c.l.b16 %v7825
        %v7942 = vunpack.c.l.b16 %v7826
        %v7943 = vunpack.c.l.b16 %v7827
        %v7944 = vunpack.c.l.b16 %v7828
        %v7945 = vunpack.c.l.b16 %v7829
        %v7946 = vunpack.c.l.b16 %v7830
        %v7947 = vunpack.c.l.b16 %v7831
        %v7948 = vunpack.c.l.b16 %v7832
        %v7949 = vunpack.c.l.b16 %v7833
        %v7950 = vunpack.c.l.b16 %v7834
        %v7951 = vunpack.c.l.b16 %v7835
        %v7952 = vunpack.c.l.b16 %v7836
        %v7953 = vunpack.c.l.b16 %v7837
        %v7954 = vunpack.c.l.b16 %v7838
        %v7955 = vunpack.c.l.b16 %v7839
        %v7956 = vunpack.c.l.b16 %v7840
        %v7957 = vunpack.c.l.b16 %v7841
        %v7958 = vunpack.c.l.b16 %v7842
        %v7959 = vunpack.c.l.b16 %v7843
        %v7960 = vunpack.c.l.b16 %v7844
        %v7961 = vunpack.c.l.b16 %v7845
        %v7962 = vunpack.c.l.b16 %v7846
        %v7963 = vunpack.c.l.b16 %v7847
        %v7964 = vunpack.c.l.b16 %v7848
        %v7965 = vunpack.c.l.b16 %v7849
        %v7966 = vunpack.c.l.b16 %v7850
        %v7967 = vpack.c.b16 %v7932, %v7931
        %v7968 = vpack.c.b16 %v7934, %v7933
        %v7969 = vpack.c.b16 %v7936, %v7935
        %v7970 = vpack.c.b16 %v7938, %v7937
        %v7971 = vpack.c.b16 %v7940, %v7939
        %v7972 = vpack.c.b16 %v7942, %v7941
        %v7973 = vpack.c.b16 %v7944, %v7943
        %v7974 = vpack.c.b16 %v7946, %v7945
        %v7975 = vpack.c.b16 %v7948, %v7947
        %v7976 = vpack.c.b16 %v7950, %v7949
        %v7977 = vpack.c.b16 %v7952, %v7951
        %v7978 = vpack.c.b16 %v7954, %v7953
        %v7979 = vpack.c.b16 %v7956, %v7955
        %v7980 = vpack.c.b16 %v7958, %v7957
        %v7981 = vpack.c.b16 %v7960, %v7959
        %v7982 = vpack.c.b16 %v7962, %v7961
        %v7983 = vpack.c.b16 %v7964, %v7963
        %v7984 = vpack.c.b16 %v7966, %v7965
        %v8004 = vsel %vm7700, %v7892, 0
        %8006 = vmatprep.subr.bf16.mxu0 0
        %8007 = vmatpush1.bf16.msra.mxu0 %v7967
        %8008 = vmatprep.subr.bf16.mxu0 0
        %8009 = vmatpush1.bf16.msra.mxu0 %v7968
        %8010 = vmatprep.subr.bf16.mxu0 0
        %8011 = vmatpush1.bf16.msra.mxu0 %v7969
        %8012 = vmatprep.subr.bf16.mxu0 0
        %8013 = vmatpush1.bf16.msra.mxu0 %v7970
        %8014 = vmatprep.subr.bf16.mxu0 0
        %8015 = vmatpush1.bf16.msra.mxu0 %v7971
        %8016 = vmatprep.subr.bf16.mxu0 0
        %8017 = vmatpush1.bf16.msra.mxu0 %v7972
        %8018 = vmatprep.subr.bf16.mxu0 0
        %8019 = vmatpush1.bf16.msra.mxu0 %v7973
        %8020 = vmatprep.subr.bf16.mxu0 0
        %8021 = vmatpush1.bf16.msra.mxu0 %v7974
        %8022 = vmatprep.subr.bf16.mxu0 0
        %8023 = vmatpush1.bf16.msra.mxu0 %v7975
        %8024 = vmatprep.subr.bf16.mxu0 0
        %8025 = vmatpush1.bf16.msra.mxu0 %v7976
        %8026 = vmatprep.subr.bf16.mxu0 0
        %8027 = vmatpush1.bf16.msra.mxu0 %v7977
        %8028 = vmatprep.subr.bf16.mxu0 0
        %8029 = vmatpush1.bf16.msra.mxu0 %v7978
        %8030 = vmatprep.subr.bf16.mxu0 0
        %8031 = vmatpush1.bf16.msra.mxu0 %v7979
        %8032 = vmatprep.subr.bf16.mxu0 0
        %8033 = vmatpush1.bf16.msra.mxu0 %v7980
        %8034 = vmatprep.subr.bf16.mxu0 0
        %8035 = vmatpush1.bf16.msra.mxu0 %v7981
        %8036 = vmatprep.subr.bf16.mxu0 0
        %8037 = vmatpush1.bf16.msra.mxu0 %v7982
        %8038 = vmatprep.mubr.bf16.mxu0 %v7891
        %8039 = vmatmul.mubr.bf16.gmra.mrb[0].mxu0 %v7890
        %v8040 = vpop.f32.mrb[0].mxu0
        %v8041 = vadd.f32 %v7856, %v8040
        %v8042 = vpop.f32.mrb[0].mxu0
        %v8043 = vpop.f32.mrb[0].mxu0
        %v8044 = vadd.f32 %v7856, %v8043
        %v8045 = vpop.f32.mrb[0].mxu0
        %8046 = vdwg.mxu0
        %8047 = vmatprep.subr.bf16.mxu0 0
        %8048 = vmatpush1.bf16.msra.mxu0 %v7983
        %8049 = vmatprep.subr.bf16.mxu0 0
        %8050 = vmatpush1.bf16.msra.mxu0 %v7984
        %8051 = vmatprep.subr.bf16.mxu0 0
        %8052 = vmatpush1.bf16.msra.mxu0 0
        %8053 = vmatprep.subr.bf16.mxu0 0
        %8054 = vmatpush1.bf16.msra.mxu0 0
        %8055 = vmatprep.subr.bf16.mxu0 0
        %8056 = vmatpush1.bf16.msra.mxu0 0
        %8057 = vmatprep.subr.bf16.mxu0 0
        %8058 = vmatpush1.bf16.msra.mxu0 0
        %8059 = vmatprep.subr.bf16.mxu0 0
        %8060 = vmatpush1.bf16.msra.mxu0 0
        %8061 = vmatprep.subr.bf16.mxu0 0
        %8062 = vmatpush1.bf16.msra.mxu0 0
        %8063 = vmatprep.subr.bf16.mxu0 0
        %8064 = vmatpush1.bf16.msra.mxu0 0
        %8065 = vmatprep.subr.bf16.mxu0 0
        %8066 = vmatpush1.bf16.msra.mxu0 0
        %8067 = vmatprep.subr.bf16.mxu0 0
        %8068 = vmatpush1.bf16.msra.mxu0 0
        %8069 = vmatprep.subr.bf16.mxu0 0
        %8070 = vmatpush1.bf16.msra.mxu0 0
        %8071 = vmatprep.subr.bf16.mxu0 0
        %8072 = vmatpush1.bf16.msra.mxu0 0
        %8073 = vmatprep.subr.bf16.mxu0 0
        %8074 = vmatpush1.bf16.msra.mxu0 0
        %8075 = vmatprep.subr.bf16.mxu0 0
        %8076 = vmatpush1.bf16.msra.mxu0 0
        %8077 = vmatprep.subr.bf16.mxu0 0
        %8078 = vmatpush1.bf16.msra.mxu0 0
        %8079 = vmatprep.mubr.bf16.mxu0 0
        %8080 = vmatmul.mubr.bf16.gmra.mrb[0].mxu0 %v8004
        %v8081 = vpop.f32.mrb[0].mxu0
        %v8082 = vadd.f32 %v8041, %v8081
        %v8083 = vpop.f32.mrb[0].mxu0
        %v8084 = vpop.f32.mrb[0].mxu0
        %v8085 = vadd.f32 %v8044, %v8084
        %v8086 = vpop.f32.mrb[0].mxu0
        %8087 = vdwg.mxu0
        %v8088 = vmax.f32 %v8082, 0.0
        %v8089 = vmax.f32 %v8085, 0.0
        %v8092 = vcombine.high %v8088, %v8088
        %v8093 = vcombine.high %v8089, %v8089
        %v8096 = vmax.f32 %v8088, %v8092
        %v8097 = vmax.f32 %v8089, %v8093
        %v8101 = vunpack.c.l.s4 1983009808
        %v8102 = vunpack.c.0.s8 %v8101
        %v8103 = vlaneseq
        %v8104 = vshrl.u32 %v8103, 7
        %v8105 = vsub.s32 %v8102, %v8104
        %v8106 = vrot.slane %v8096, %v8105
        %v8107 = vcombine.high %v8106, %v8106
        %v8109 = vunpack.c.l.s4 1983009808
        %v8110 = vunpack.c.0.s8 %v8109
        %v8111 = vlaneseq
        %v8112 = vshrl.u32 %v8111, 7
        %v8113 = vsub.s32 %v8110, %v8112
        %v8114 = vrot.slane %v8097, %v8113
        %v8115 = vcombine.high %v8114, %v8114
        %v8120 = vrot.slane %v8106, 7
        %v8121 = vrot.slane %v8120, 2
        %v8122 = vrot.slane %v8107, 7
        %v8123 = vrot.slane %v8122, 2
        %v8124 = vrot.slane %v8114, 7
        %v8125 = vrot.slane %v8124, 2
        %v8126 = vrot.slane %v8115, 7
        %v8127 = vrot.slane %v8126, 2
        %v8132 = vmax.f32 %v8106, %v8121
        %v8133 = vmax.f32 %v8107, %v8123
        %v8134 = vmax.f32 %v8114, %v8125
        %v8135 = vmax.f32 %v8115, %v8127
        %vm8136 = vcmask 519168
        %8137 = vst.msk [vmem:[#allocation4] sm:$0xf] %vm8136, 0.0
        %s8138 = scalar_lea.vmem [#allocation4], 12
        %8139 = vst.msk [vmem:[%s8138] sm:$0xf] %vm8136, 0.0
        %vm8140 = vcmask 516096
        %8141 = vst.msk [vmem:[#allocation4] sm:$0x1] %vm8140, 0.0
        %8142 = vst.msk [vmem:[#allocation4 + $0x4] sm:$0x1] %vm8140, 0.0
        %8143 = vst.msk [vmem:[#allocation4 + $0x8] sm:$0x1] %vm8140, 0.0
        %8144 = vst.msk [vmem:[#allocation4 + $0xc] sm:$0x1] %vm8140, 0.0
        %8145 = vst.msk [vmem:[#allocation4 + $0x3] sm:$0x1] %vm8140, 0.0
        %8146 = vst.msk [vmem:[#allocation4 + $0x7] sm:$0x1] %vm8140, 0.0
        %8147 = vst.msk [vmem:[#allocation4 + $0xb] sm:$0x1] %vm8140, 0.0
        %8148 = vst.msk [vmem:[#allocation4 + $0xf] sm:$0x1] %vm8140, 0.0
        %v8153 = vlaneseq
        %v8154 = vshrl.u32 %v8153, 7
        %v8155 = vsub.s32 0, %v8154
        %v8156 = vrot.slane %v8132, %v8155
        %v8157 = vlaneseq
        %v8158 = vshrl.u32 %v8157, 7
        %v8159 = vsub.s32 0, %v8158
        %v8160 = vrot.slane %v8133, %v8159
        %v8161 = vlaneseq
        %v8162 = vshrl.u32 %v8161, 7
        %v8163 = vsub.s32 0, %v8162
        %v8164 = vrot.slane %v8134, %v8163
        %v8165 = vlaneseq
        %v8166 = vshrl.u32 %v8165, 7
        %v8167 = vsub.s32 0, %v8166
        %v8168 = vrot.slane %v8135, %v8167
        %v8169 = vsel %vm6043, %v8160, %v8156
        %v8170 = vsel %vm6043, %v8168, %v8164
        %s8173 = scalar_lea.vmem [#allocation4], 4
        %vm8174 = vcmask 517120
        %8175 = vst.msk [vmem:[%s8173 + $0x1] sm:$0x3] %vm8174, %v8169
        %8176 = vst.msk [vmem:[%s8173 + $0x5] sm:$0x3] %vm8174, %v8170
        %v8177 = vld [vmem:[#allocation4] sm:$0x3]
        %v8178 = vld [vmem:[#allocation4 + $0x4] sm:$0x3]
        %v8179 = vld [vmem:[#allocation4 + $0x1] sm:$0x3]
        %v8180 = vld [vmem:[#allocation4 + $0x5] sm:$0x3]
        %v8181 = vld [vmem:[#allocation4 + $0x2] sm:$0x3]
        %v8182 = vld [vmem:[#allocation4 + $0x6] sm:$0x3]
        %v8183 = vld [vmem:[%s8173] sm:$0x3]
        %v8184 = vld [vmem:[%s8173 + $0x4] sm:$0x3]
        %v8185 = vld [vmem:[%s8173 + $0x1] sm:$0x3]
        %v8186 = vld [vmem:[%s8173 + $0x5] sm:$0x3]
        %v8187 = vld [vmem:[%s8173 + $0x2] sm:$0x3]
        %v8188 = vld [vmem:[%s8173 + $0x6] sm:$0x3]
        %s8189 = scalar_lea.vmem [#allocation4], 8
        %v8190 = vld [vmem:[%s8189] sm:$0x3]
        %v8191 = vld [vmem:[%s8189 + $0x4] sm:$0x3]
        %v8192 = vld [vmem:[%s8189 + $0x1] sm:$0x3]
        %v8193 = vld [vmem:[%s8189 + $0x5] sm:$0x3]
        %v8194 = vld [vmem:[%s8189 + $0x2] sm:$0x3]
        %v8195 = vld [vmem:[%s8189 + $0x6] sm:$0x3]
        %8198 = vrot.lane.b32.xlu0 %v8179, 64
        %v8199 = vpop.permute.xlu0 %8198
        %8200 = vrot.lane.b32.xlu0 %v8180, 64
        %v8201 = vpop.permute.xlu0 %8200
        %8206 = vrot.lane.b32.xlu0 %v8183, 64
        %v8207 = vpop.permute.xlu0 %8206
        %8208 = vrot.lane.b32.xlu0 %v8184, 64
        %v8209 = vpop.permute.xlu0 %8208
        %8214 = vrot.lane.b32.xlu0 %v8187, 64
        %v8215 = vpop.permute.xlu0 %8214
        %8216 = vrot.lane.b32.xlu0 %v8188, 64
        %v8217 = vpop.permute.xlu0 %8216
        %8222 = vrot.lane.b32.xlu0 %v8192, 64
        %v8223 = vpop.permute.xlu0 %8222
        %8224 = vrot.lane.b32.xlu0 %v8193, 64
        %v8225 = vpop.permute.xlu0 %8224
        %v8228 = vsel %vm7705, %v8177, %v8199
        %v8229 = vsel %vm7705, %v8178, %v8201
        %v8230 = vsel %vm7705, %v8181, %v8207
        %v8231 = vsel %vm7705, %v8182, %v8209
        %v8232 = vsel %vm7705, %v8185, %v8215
        %v8233 = vsel %vm7705, %v8186, %v8217
        %v8234 = vsel %vm7705, %v8190, %v8223
        %v8235 = vsel %vm7705, %v8191, %v8225
        %v8236 = vpack.c.bf16 %v8228, %v8228
        %v8237 = vpack.c.bf16 %v8230, %v8230
        %v8238 = vpack.c.bf16 %v8232, %v8232
        %v8239 = vpack.c.bf16 %v8234, %v8234
        %v8240 = vpack.c.bf16 %v8194, %v8194
        %v8241 = vpack.c.bf16 %v8229, %v8229
        %v8242 = vpack.c.bf16 %v8231, %v8231
        %v8243 = vpack.c.bf16 %v8233, %v8233
        %v8244 = vpack.c.bf16 %v8235, %v8235
        %v8245 = vpack.c.bf16 %v8195, %v8195
        %v8256 = vcombine.low %v8236, %v8237
        %v8257 = vcombine.low %v8238, %v8239
        %v8259 = vunpack.c.l.s4 1966171168
        %v8260 = vunpack.c.0.s8 %v8259
        %v8261 = vlaneseq
        %v8262 = vshrl.u32 %v8261, 7
        %v8263 = vsub.s32 %v8260, %v8262
        %v8264 = vrot.slane %v8256, %v8263
        %v8266 = vunpack.c.l.s4 1966171168
        %v8267 = vunpack.c.0.s8 %v8266
        %v8268 = vlaneseq
        %v8269 = vshrl.u32 %v8268, 7
        %v8270 = vsub.s32 %v8267, %v8269
        %v8271 = vrot.slane %v8257, %v8270
        %v8273 = vunpack.c.l.s4 1966171168
        %v8274 = vunpack.c.0.s8 %v8273
        %v8275 = vlaneseq
        %v8276 = vshrl.u32 %v8275, 7
        %v8277 = vsub.s32 %v8274, %v8276
        %v8278 = vrot.slane %v8240, %v8277
        %v8279 = vcombine.low %v8264, %v8271
        %v8281 = vunpack.c.l.s4 1966171168
        %v8282 = vunpack.c.0.s8 %v8281
        %v8283 = vlaneseq
        %v8284 = vshrl.u32 %v8283, 7
        %v8285 = vsub.s32 %v8282, %v8284
        %v8286 = vrot.slane %v8279, %v8285
        %v8288 = vunpack.c.l.s4 1966171168
        %v8289 = vunpack.c.0.s8 %v8288
        %v8290 = vlaneseq
        %v8291 = vshrl.u32 %v8290, 7
        %v8292 = vsub.s32 %v8289, %v8291
        %v8293 = vrot.slane %v8278, %v8292
        %v8294 = vcombine.low %v8286, %v8293
        %v8295 = vcombine.low %v8241, %v8242
        %v8296 = vcombine.low %v8243, %v8244
        %v8298 = vunpack.c.l.s4 1966171168
        %v8299 = vunpack.c.0.s8 %v8298
        %v8300 = vlaneseq
        %v8301 = vshrl.u32 %v8300, 7
        %v8302 = vsub.s32 %v8299, %v8301
        %v8303 = vrot.slane %v8295, %v8302
        %v8305 = vunpack.c.l.s4 1966171168
        %v8306 = vunpack.c.0.s8 %v8305
        %v8307 = vlaneseq
        %v8308 = vshrl.u32 %v8307, 7
        %v8309 = vsub.s32 %v8306, %v8308
        %v8310 = vrot.slane %v8296, %v8309
        %v8312 = vunpack.c.l.s4 1966171168
        %v8313 = vunpack.c.0.s8 %v8312
        %v8314 = vlaneseq
        %v8315 = vshrl.u32 %v8314, 7
        %v8316 = vsub.s32 %v8313, %v8315
        %v8317 = vrot.slane %v8245, %v8316
        %v8318 = vcombine.low %v8303, %v8310
        %v8320 = vunpack.c.l.s4 1966171168
        %v8321 = vunpack.c.0.s8 %v8320
        %v8322 = vlaneseq
        %v8323 = vshrl.u32 %v8322, 7
        %v8324 = vsub.s32 %v8321, %v8323
        %v8325 = vrot.slane %v8318, %v8324
        %v8327 = vunpack.c.l.s4 1966171168
        %v8328 = vunpack.c.0.s8 %v8327
        %v8329 = vlaneseq
        %v8330 = vshrl.u32 %v8329, 7
        %v8331 = vsub.s32 %v8328, %v8330
        %v8332 = vrot.slane %v8317, %v8331
        %v8333 = vcombine.low %v8325, %v8332
        %v8334 = vld [vmem:[%s7] sm:$0xf]
        %v8335 = vld [vmem:[%s7 + $0x4] sm:$0xf]
        %v8336 = vld [vmem:[%s7 + $0x8] sm:$0xf]
        %v8337 = vld [vmem:[%s7 + $0xc] sm:$0xf]
        %v8338 = vld [vmem:[%s7 + $0x10] sm:$0xf]
        %v8339 = vld [vmem:[%s7 + $0x14] sm:$0xf]
        %v8340 = vld [vmem:[%s7 + $0x18] sm:$0xf]
        %v8341 = vld [vmem:[%s7 + $0x1c] sm:$0xf]
        %v8342 = vld [vmem:[%s7 + $0x20] sm:$0xf]
        %v8343 = vld [vmem:[%s7 + $0x24] sm:$0xf]
        %v8344 = vld [vmem:[%s7 + $0x28] sm:$0xf]
        %v8345 = vld [vmem:[%s7 + $0x2c] sm:$0xf]
        %v8346 = vld [vmem:[%s7 + $0x30] sm:$0xf]
        %v8347 = vld [vmem:[%s7 + $0x34] sm:$0xf]
        %v8348 = vld [vmem:[%s7 + $0x38] sm:$0xf]
        %v8349 = vld [vmem:[%s7 + $0x3c] sm:$0xf]
        %v8350 = vld [vmem:[%s7 + $0x40] sm:$0xf]
        %v8351 = vld [vmem:[%s7 + $0x44] sm:$0xf]
        %v8352 = vld [vmem:[%s7 + $0x48] sm:$0xf]
        %v8353 = vld [vmem:[%s7 + $0x4c] sm:$0xf]
        %v8354 = vld [vmem:[%s7 + $0x50] sm:$0xf]
        %v8355 = vld [vmem:[%s7 + $0x54] sm:$0xf]
        %v8356 = vld [vmem:[%s7 + $0x58] sm:$0xf]
        %v8357 = vld [vmem:[%s7 + $0x5c] sm:$0xf]
        %v8358 = vld [vmem:[%s7 + $0x60] sm:$0xf]
        %v8359 = vld [vmem:[%s7 + $0x64] sm:$0xf]
        %v8360 = vld [vmem:[%s7 + $0x68] sm:$0xf]
        %v8361 = vld [vmem:[%s7 + $0x6c] sm:$0xf]
        %v8362 = vld [vmem:[%s7 + $0x70] sm:$0xf]
        %v8363 = vld [vmem:[%s7 + $0x74] sm:$0xf]
        %v8364 = vld [vmem:[%s7 + $0x78] sm:$0xf]
        %v8365 = vld [vmem:[%s7 + $0x7c] sm:$0xf]
        %v8366 = vld [vmem:[%s7 + $0x80] sm:$0xf]
        %v8367 = vld [vmem:[%s7 + $0x84] sm:$0xf]
        %v8368 = vld [vmem:[%s7 + $0x88] sm:$0xf]
        %v8369 = vld [vmem:[%s7 + $0x8c] sm:$0xf]
        %v8370 = vld [vmem:[%s7 + $0x90] sm:$0xf]
        %v8371 = vld [vmem:[%s7 + $0x94] sm:$0xf]
        %v8372 = vld [vmem:[%s7 + $0x98] sm:$0xf]
        %v8373 = vld [vmem:[%s7 + $0x9c] sm:$0xf]
        %v8374 = vld [vmem:[%s7 + $0xa0] sm:$0xf]
        %v8375 = vld [vmem:[%s7 + $0xa4] sm:$0xf]
        %v8376 = vld [vmem:[%s7 + $0xa8] sm:$0xf]
        %v8377 = vld [vmem:[%s7 + $0xac] sm:$0xf]
        %v8378 = vld [vmem:[%s7 + $0xb0] sm:$0xf]
        %v8379 = vld [vmem:[%s7 + $0xb4] sm:$0xf]
        %v8380 = vld [vmem:[%s7 + $0xb8] sm:$0xf]
        %v8381 = vld [vmem:[%s7 + $0xbc] sm:$0xf]
        %v8382 = vld [vmem:[%s7 + $0xc0] sm:$0xf]
        %v8383 = vld [vmem:[%s7 + $0xc4] sm:$0xf]
        %v8384 = vld [vmem:[%s7 + $0xc8] sm:$0xf]
        %v8385 = vld [vmem:[%s7 + $0xcc] sm:$0xf]
        %v8386 = vld [vmem:[%s7 + $0xd0] sm:$0xf]
        %v8387 = vld [vmem:[%s7 + $0xd4] sm:$0xf]
        %v8388 = vld [vmem:[%s7 + $0xd8] sm:$0xf]
        %v8389 = vld [vmem:[%s7 + $0xdc] sm:$0xf]
        %v8390 = vld [vmem:[%s7 + $0xe0] sm:$0xf]
        %v8391 = vld [vmem:[%s7 + $0xe4] sm:$0xf]
        %v8392 = vld [vmem:[%s7 + $0xe8] sm:$0xf]
        %v8393 = vld [vmem:[%s7 + $0xec] sm:$0xf]
        %v8394 = vld [vmem:[%s7 + $0xf0] sm:$0xf]
        %v8395 = vld [vmem:[%s7 + $0xf4] sm:$0xf]
        %v8396 = vld [vmem:[%s7 + $0xf8] sm:$0xf]
        %v8397 = vld [vmem:[%s7 + $0xfc] sm:$0xf]
        %v8398 = vld [vmem:[%s7 + $0x100] sm:$0xf]
        %v8399 = vld [vmem:[%s7 + $0x104] sm:$0xf]
        %v8400 = vld [vmem:[%s7 + $0x108] sm:$0xf]
        %v8401 = vld [vmem:[%s7 + $0x10c] sm:$0xf]
        %v8402 = vld [vmem:[%s7 + $0x110] sm:$0xf]
        %v8403 = vld [vmem:[%s7 + $0x114] sm:$0xf]
        %v8404 = vld [vmem:[%s7 + $0x118] sm:$0xf]
        %v8405 = vld [vmem:[%s7 + $0x11c] sm:$0xf]
        %v8406 = vld [vmem:[%s8] sm:$0x1]
        %v8408 = vlaneseq
        %v8409 = vshrl.u32 %v8408, 7
        %v8410 = vsub.s32 0, %v8409
        %v8411 = vrot.slane %v8406, %v8410
        %v8413 = vcombine.low %v8294, %v8333
        %v8414 = vcombine.high %v8294, %v8333
        %v8416 = vunpack.c.l.s4 1966171168
        %v8417 = vunpack.c.0.s8 %v8416
        %v8418 = vlaneseq
        %v8419 = vshrl.u32 %v8418, 7
        %v8420 = vsub.s32 %v8417, %v8419
        %v8421 = vrot.slane %v8413, %v8420
        %v8423 = vunpack.c.l.s4 1966171168
        %v8424 = vunpack.c.0.s8 %v8423
        %v8425 = vlaneseq
        %v8426 = vshrl.u32 %v8425, 7
        %v8427 = vsub.s32 %v8424, %v8426
        %v8428 = vrot.slane %v8414, %v8427
        %v8429 = vcombine.high %v8421, %v8421
        %v8431 = vunpack.c.l.s4 1966171168
        %v8432 = vunpack.c.0.s8 %v8431
        %v8433 = vlaneseq
        %v8434 = vshrl.u32 %v8433, 7
        %v8435 = vsub.s32 %v8432, %v8434
        %v8436 = vrot.slane %v8421, %v8435
        %v8438 = vunpack.c.l.s4 1966171168
        %v8439 = vunpack.c.0.s8 %v8438
        %v8440 = vlaneseq
        %v8441 = vshrl.u32 %v8440, 7
        %v8442 = vsub.s32 %v8439, %v8441
        %v8443 = vrot.slane %v8428, %v8442
        %v8445 = vunpack.c.l.s4 1966171168
        %v8446 = vunpack.c.0.s8 %v8445
        %v8447 = vlaneseq
        %v8448 = vshrl.u32 %v8447, 7
        %v8449 = vsub.s32 %v8446, %v8448
        %v8450 = vrot.slane %v8429, %v8449
        %v8451 = vcombine.high %v8436, %v8436
        %v8452 = vcombine.high %v8450, %v8450
        %v8529 = vunpack.c.l.b16 %v8334
        %v8530 = vunpack.c.l.b16 %v8335
        %v8531 = vunpack.c.l.b16 %v8336
        %v8532 = vunpack.c.l.b16 %v8337
        %v8533 = vunpack.c.l.b16 %v8338
        %v8534 = vunpack.c.l.b16 %v8339
        %v8535 = vunpack.c.l.b16 %v8340
        %v8536 = vunpack.c.l.b16 %v8341
        %v8537 = vunpack.c.l.b16 %v8342
        %v8538 = vunpack.c.l.b16 %v8343
        %v8539 = vunpack.c.l.b16 %v8344
        %v8540 = vunpack.c.l.b16 %v8345
        %v8541 = vunpack.c.l.b16 %v8346
        %v8542 = vunpack.c.l.b16 %v8347
        %v8543 = vunpack.c.l.b16 %v8348
        %v8544 = vunpack.c.l.b16 %v8349
        %v8545 = vunpack.c.l.b16 %v8350
        %v8546 = vunpack.c.l.b16 %v8351
        %v8547 = vunpack.c.l.b16 %v8352
        %v8548 = vunpack.c.l.b16 %v8353
        %v8549 = vunpack.c.l.b16 %v8354
        %v8550 = vunpack.c.l.b16 %v8355
        %v8551 = vunpack.c.l.b16 %v8356
        %v8552 = vunpack.c.l.b16 %v8357
        %v8553 = vunpack.c.l.b16 %v8358
        %v8554 = vunpack.c.l.b16 %v8359
        %v8555 = vunpack.c.l.b16 %v8360
        %v8556 = vunpack.c.l.b16 %v8361
        %v8557 = vunpack.c.l.b16 %v8362
        %v8558 = vunpack.c.l.b16 %v8363
        %v8559 = vunpack.c.l.b16 %v8364
        %v8560 = vunpack.c.l.b16 %v8365
        %v8561 = vunpack.c.l.b16 %v8366
        %v8562 = vunpack.c.l.b16 %v8367
        %v8563 = vunpack.c.l.b16 %v8368
        %v8564 = vunpack.c.l.b16 %v8369
        %v8565 = vunpack.c.l.b16 %v8370
        %v8566 = vunpack.c.l.b16 %v8371
        %v8567 = vunpack.c.l.b16 %v8372
        %v8568 = vunpack.c.l.b16 %v8373
        %v8569 = vunpack.c.l.b16 %v8374
        %v8570 = vunpack.c.l.b16 %v8375
        %v8571 = vunpack.c.l.b16 %v8376
        %v8572 = vunpack.c.l.b16 %v8377
        %v8573 = vunpack.c.l.b16 %v8378
        %v8574 = vunpack.c.l.b16 %v8379
        %v8575 = vunpack.c.l.b16 %v8380
        %v8576 = vunpack.c.l.b16 %v8381
        %v8577 = vunpack.c.l.b16 %v8382
        %v8578 = vunpack.c.l.b16 %v8383
        %v8579 = vunpack.c.l.b16 %v8384
        %v8580 = vunpack.c.l.b16 %v8385
        %v8581 = vunpack.c.l.b16 %v8386
        %v8582 = vunpack.c.l.b16 %v8387
        %v8583 = vunpack.c.l.b16 %v8388
        %v8584 = vunpack.c.l.b16 %v8389
        %v8585 = vunpack.c.l.b16 %v8390
        %v8586 = vunpack.c.l.b16 %v8391
        %v8587 = vunpack.c.l.b16 %v8392
        %v8588 = vunpack.c.l.b16 %v8393
        %v8589 = vunpack.c.l.b16 %v8394
        %v8590 = vunpack.c.l.b16 %v8395
        %v8591 = vunpack.c.l.b16 %v8396
        %v8592 = vunpack.c.l.b16 %v8397
        %v8593 = vunpack.c.l.b16 %v8398
        %v8594 = vunpack.c.l.b16 %v8399
        %v8595 = vunpack.c.l.b16 %v8400
        %v8596 = vunpack.c.l.b16 %v8401
        %v8597 = vunpack.c.l.b16 %v8402
        %v8598 = vunpack.c.l.b16 %v8403
        %v8599 = vunpack.c.l.b16 %v8404
        %v8600 = vunpack.c.l.b16 %v8405
        %v8601 = vpack.c.b16 %v8530, %v8529
        %v8602 = vpack.c.b16 %v8532, %v8531
        %v8603 = vpack.c.b16 %v8534, %v8533
        %v8604 = vpack.c.b16 %v8536, %v8535
        %v8605 = vpack.c.b16 %v8538, %v8537
        %v8606 = vpack.c.b16 %v8540, %v8539
        %v8607 = vpack.c.b16 %v8542, %v8541
        %v8608 = vpack.c.b16 %v8544, %v8543
        %v8609 = vpack.c.b16 %v8546, %v8545
        %v8610 = vpack.c.b16 %v8548, %v8547
        %v8611 = vpack.c.b16 %v8550, %v8549
        %v8612 = vpack.c.b16 %v8552, %v8551
        %v8613 = vpack.c.b16 %v8554, %v8553
        %v8614 = vpack.c.b16 %v8556, %v8555
        %v8615 = vpack.c.b16 %v8558, %v8557
        %v8616 = vpack.c.b16 %v8560, %v8559
        %v8617 = vpack.c.b16 %v8562, %v8561
        %v8618 = vpack.c.b16 %v8564, %v8563
        %v8619 = vpack.c.b16 %v8566, %v8565
        %v8620 = vpack.c.b16 %v8568, %v8567
        %v8621 = vpack.c.b16 %v8570, %v8569
        %v8622 = vpack.c.b16 %v8572, %v8571
        %v8623 = vpack.c.b16 %v8574, %v8573
        %v8624 = vpack.c.b16 %v8576, %v8575
        %v8625 = vpack.c.b16 %v8578, %v8577
        %v8626 = vpack.c.b16 %v8580, %v8579
        %v8627 = vpack.c.b16 %v8582, %v8581
        %v8628 = vpack.c.b16 %v8584, %v8583
        %v8629 = vpack.c.b16 %v8586, %v8585
        %v8630 = vpack.c.b16 %v8588, %v8587
        %v8631 = vpack.c.b16 %v8590, %v8589
        %v8632 = vpack.c.b16 %v8592, %v8591
        %v8633 = vpack.c.b16 %v8594, %v8593
        %v8634 = vpack.c.b16 %v8596, %v8595
        %v8635 = vpack.c.b16 %v8598, %v8597
        %v8636 = vpack.c.b16 %v8600, %v8599
        %v8674 = vsel %vm7705, %v8443, 0
        %8676 = vmatprep.subr.bf16.mxu0 0
        %8677 = vmatpush1.bf16.msra.mxu0 %v8601
        %8678 = vmatprep.subr.bf16.mxu0 0
        %8679 = vmatpush1.bf16.msra.mxu0 %v8602
        %8680 = vmatprep.subr.bf16.mxu0 0
        %8681 = vmatpush1.bf16.msra.mxu0 %v8603
        %8682 = vmatprep.subr.bf16.mxu0 0
        %8683 = vmatpush1.bf16.msra.mxu0 %v8604
        %8684 = vmatprep.subr.bf16.mxu0 0
        %8685 = vmatpush1.bf16.msra.mxu0 %v8605
        %8686 = vmatprep.subr.bf16.mxu0 0
        %8687 = vmatpush1.bf16.msra.mxu0 %v8606
        %8688 = vmatprep.subr.bf16.mxu0 0
        %8689 = vmatpush1.bf16.msra.mxu0 %v8607
        %8690 = vmatprep.subr.bf16.mxu0 0
        %8691 = vmatpush1.bf16.msra.mxu0 %v8608
        %8692 = vmatprep.subr.bf16.mxu0 0
        %8693 = vmatpush1.bf16.msra.mxu0 %v8609
        %8694 = vmatprep.subr.bf16.mxu0 0
        %8695 = vmatpush1.bf16.msra.mxu0 %v8610
        %8696 = vmatprep.subr.bf16.mxu0 0
        %8697 = vmatpush1.bf16.msra.mxu0 %v8611
        %8698 = vmatprep.subr.bf16.mxu0 0
        %8699 = vmatpush1.bf16.msra.mxu0 %v8612
        %8700 = vmatprep.subr.bf16.mxu0 0
        %8701 = vmatpush1.bf16.msra.mxu0 %v8613
        %8702 = vmatprep.subr.bf16.mxu0 0
        %8703 = vmatpush1.bf16.msra.mxu0 %v8614
        %8704 = vmatprep.subr.bf16.mxu0 0
        %8705 = vmatpush1.bf16.msra.mxu0 %v8615
        %8706 = vmatprep.subr.bf16.mxu0 0
        %8707 = vmatpush1.bf16.msra.mxu0 %v8616
        %8708 = vmatprep.mubr.bf16.mxu0 %v8450
        %8709 = vmatmul.mubr.bf16.gmra.mrb[0].mxu0 %v8436
        %v8710 = vpop.f32.mrb[0].mxu0
        %v8711 = vadd.f32 %v8411, %v8710
        %v8712 = vpop.f32.mrb[0].mxu0
        %v8713 = vpop.f32.mrb[0].mxu0
        %v8714 = vpop.f32.mrb[0].mxu0
        %8715 = vdwg.mxu0
        %8716 = vmatprep.subr.bf16.mxu0 0
        %8717 = vmatpush1.bf16.msra.mxu0 %v8617
        %8718 = vmatprep.subr.bf16.mxu0 0
        %8719 = vmatpush1.bf16.msra.mxu0 %v8618
        %8720 = vmatprep.subr.bf16.mxu0 0
        %8721 = vmatpush1.bf16.msra.mxu0 %v8619
        %8722 = vmatprep.subr.bf16.mxu0 0
        %8723 = vmatpush1.bf16.msra.mxu0 %v8620
        %8724 = vmatprep.subr.bf16.mxu0 0
        %8725 = vmatpush1.bf16.msra.mxu0 %v8621
        %8726 = vmatprep.subr.bf16.mxu0 0
        %8727 = vmatpush1.bf16.msra.mxu0 %v8622
        %8728 = vmatprep.subr.bf16.mxu0 0
        %8729 = vmatpush1.bf16.msra.mxu0 %v8623
        %8730 = vmatprep.subr.bf16.mxu0 0
        %8731 = vmatpush1.bf16.msra.mxu0 %v8624
        %8732 = vmatprep.subr.bf16.mxu0 0
        %8733 = vmatpush1.bf16.msra.mxu0 %v8625
        %8734 = vmatprep.subr.bf16.mxu0 0
        %8735 = vmatpush1.bf16.msra.mxu0 %v8626
        %8736 = vmatprep.subr.bf16.mxu0 0
        %8737 = vmatpush1.bf16.msra.mxu0 %v8627
        %8738 = vmatprep.subr.bf16.mxu0 0
        %8739 = vmatpush1.bf16.msra.mxu0 %v8628
        %8740 = vmatprep.subr.bf16.mxu0 0
        %8741 = vmatpush1.bf16.msra.mxu0 %v8629
        %8742 = vmatprep.subr.bf16.mxu0 0
        %8743 = vmatpush1.bf16.msra.mxu0 %v8630
        %8744 = vmatprep.subr.bf16.mxu0 0
        %8745 = vmatpush1.bf16.msra.mxu0 %v8631
        %8746 = vmatprep.subr.bf16.mxu0 0
        %8747 = vmatpush1.bf16.msra.mxu0 %v8632
        %8748 = vmatprep.mubr.bf16.mxu0 %v8452
        %8749 = vmatmul.mubr.bf16.gmra.mrb[0].mxu0 %v8451
        %v8750 = vpop.f32.mrb[0].mxu0
        %v8751 = vadd.f32 %v8711, %v8750
        %v8752 = vpop.f32.mrb[0].mxu0
        %v8753 = vpop.f32.mrb[0].mxu0
        %v8754 = vpop.f32.mrb[0].mxu0
        %8755 = vdwg.mxu0
        %8756 = vmatprep.subr.bf16.mxu0 0
        %8757 = vmatpush1.bf16.msra.mxu0 %v8633
        %8758 = vmatprep.subr.bf16.mxu0 0
        %8759 = vmatpush1.bf16.msra.mxu0 %v8634
        %8760 = vmatprep.subr.bf16.mxu0 0
        %8761 = vmatpush1.bf16.msra.mxu0 %v8635
        %8762 = vmatprep.subr.bf16.mxu0 0
        %8763 = vmatpush1.bf16.msra.mxu0 %v8636
        %8764 = vmatprep.subr.bf16.mxu0 0
        %8765 = vmatpush1.bf16.msra.mxu0 0
        %8766 = vmatprep.subr.bf16.mxu0 0
        %8767 = vmatpush1.bf16.msra.mxu0 0
        %8768 = vmatprep.subr.bf16.mxu0 0
        %8769 = vmatpush1.bf16.msra.mxu0 0
        %8770 = vmatprep.subr.bf16.mxu0 0
        %8771 = vmatpush1.bf16.msra.mxu0 0
        %8772 = vmatprep.subr.bf16.mxu0 0
        %8773 = vmatpush1.bf16.msra.mxu0 0
        %8774 = vmatprep.subr.bf16.mxu0 0
        %8775 = vmatpush1.bf16.msra.mxu0 0
        %8776 = vmatprep.subr.bf16.mxu0 0
        %8777 = vmatpush1.bf16.msra.mxu0 0
        %8778 = vmatprep.subr.bf16.mxu0 0
        %8779 = vmatpush1.bf16.msra.mxu0 0
        %8780 = vmatprep.subr.bf16.mxu0 0
        %8781 = vmatpush1.bf16.msra.mxu0 0
        %8782 = vmatprep.subr.bf16.mxu0 0
        %8783 = vmatpush1.bf16.msra.mxu0 0
        %8784 = vmatprep.subr.bf16.mxu0 0
        %8785 = vmatpush1.bf16.msra.mxu0 0
        %8786 = vmatprep.subr.bf16.mxu0 0
        %8787 = vmatpush1.bf16.msra.mxu0 0
        %8788 = vmatprep.mubr.bf16.mxu0 0
        %8789 = vmatmul.mubr.bf16.gmra.mrb[0].mxu0 %v8674
        %v8790 = vpop.f32.mrb[0].mxu0
        %v8791 = vadd.f32 %v8751, %v8790
        %v8792 = vpop.f32.mrb[0].mxu0
        %v8793 = vpop.f32.mrb[0].mxu0
        %v8794 = vpop.f32.mrb[0].mxu0
        %8795 = vdwg.mxu0
        %v8796 = vmax.f32 %v8791, 0.0
        %vm8797 = vcmask 1043456
        %v8798 = vsel %vm8797, %v8796, 0.0
        %v8799 = vrot.slane %v8798, 4
        %v8800 = vadd.f32 %v8798, %v8799
        %v8801 = vrot.slane %v8800, 2
        %v8802 = vadd.f32 %v8800, %v8801
        %v8803 = vrot.slane %v8802, 1
        %v8804 = vadd.f32 %v8802, %v8803
        %v8805 = vrcp.pop 4.0
        %v8806 = vmul.f32 %v8804, %v8805
        %v8807 = vpack.c.bf16 %v8806, %v8806
        %v8808 = vld [vmem:[%s9] sm:$0xf]
        %v8809 = vld [vmem:[%s9 + $0x4] sm:$0xf]
        %v8810 = vld [vmem:[%s9 + $0x8] sm:$0xf]
        %v8811 = vld [vmem:[%s9 + $0xc] sm:$0xf]
        %v8812 = vld [vmem:[%s9 + $0x10] sm:$0xf]
        %v8813 = vld [vmem:[%s9 + $0x14] sm:$0xf]
        %v8814 = vld [vmem:[%s9 + $0x18] sm:$0xf]
        %v8815 = vld [vmem:[%s9 + $0x1c] sm:$0xf]
        %v8816 = vld [vmem:[%s9 + $0x20] sm:$0xf]
        %v8817 = vld [vmem:[%s9 + $0x24] sm:$0xf]
        %v8818 = vld [vmem:[%s9 + $0x28] sm:$0xf]
        %v8819 = vld [vmem:[%s9 + $0x2c] sm:$0xf]
        %v8820 = vld [vmem:[%s9 + $0x30] sm:$0xf]
        %v8821 = vld [vmem:[%s9 + $0x34] sm:$0xf]
        %v8822 = vld [vmem:[%s9 + $0x38] sm:$0xf]
        %v8823 = vld [vmem:[%s9 + $0x3c] sm:$0xf]
        %v8824 = vld [vmem:[%s10] sm:$0x1]
        %v8841 = vunpack.c.l.b16 %v8808
        %v8842 = vunpack.c.l.b16 %v8809
        %v8843 = vunpack.c.l.b16 %v8810
        %v8844 = vunpack.c.l.b16 %v8811
        %v8845 = vunpack.c.l.b16 %v8812
        %v8846 = vunpack.c.l.b16 %v8813
        %v8847 = vunpack.c.l.b16 %v8814
        %v8848 = vunpack.c.l.b16 %v8815
        %v8849 = vunpack.c.l.b16 %v8816
        %v8850 = vunpack.c.l.b16 %v8817
        %v8851 = vunpack.c.l.b16 %v8818
        %v8852 = vunpack.c.l.b16 %v8819
        %v8853 = vunpack.c.l.b16 %v8820
        %v8854 = vunpack.c.l.b16 %v8821
        %v8855 = vunpack.c.l.b16 %v8822
        %v8856 = vunpack.c.l.b16 %v8823
        %v8857 = vpack.c.b16 %v8842, %v8841
        %v8858 = vpack.c.b16 %v8844, %v8843
        %v8859 = vpack.c.b16 %v8846, %v8845
        %v8860 = vpack.c.b16 %v8848, %v8847
        %v8861 = vpack.c.b16 %v8850, %v8849
        %v8862 = vpack.c.b16 %v8852, %v8851
        %v8863 = vpack.c.b16 %v8854, %v8853
        %v8864 = vpack.c.b16 %v8856, %v8855
        %8873 = vmatprep.subr.bf16.mxu0 0
        %8874 = vmatpush1.bf16.msra.mxu0 %v8857
        %8875 = vmatprep.subr.bf16.mxu0 0
        %8876 = vmatpush1.bf16.msra.mxu0 %v8858
        %8877 = vmatprep.subr.bf16.mxu0 0
        %8878 = vmatpush1.bf16.msra.mxu0 %v8859
        %8879 = vmatprep.subr.bf16.mxu0 0
        %8880 = vmatpush1.bf16.msra.mxu0 %v8860
        %8881 = vmatprep.subr.bf16.mxu0 0
        %8882 = vmatpush1.bf16.msra.mxu0 %v8861
        %8883 = vmatprep.subr.bf16.mxu0 0
        %8884 = vmatpush1.bf16.msra.mxu0 %v8862
        %8885 = vmatprep.subr.bf16.mxu0 0
        %8886 = vmatpush1.bf16.msra.mxu0 %v8863
        %8887 = vmatprep.subr.bf16.mxu0 0
        %8888 = vmatpush1.bf16.msra.mxu0 %v8864
        %8889 = vmatprep.subr.bf16.mxu0 0
        %8890 = vmatpush1.bf16.msra.mxu0 0
        %8891 = vmatprep.subr.bf16.mxu0 0
        %8892 = vmatpush1.bf16.msra.mxu0 0
        %8893 = vmatprep.subr.bf16.mxu0 0
        %8894 = vmatpush1.bf16.msra.mxu0 0
        %8895 = vmatprep.subr.bf16.mxu0 0
        %8896 = vmatpush1.bf16.msra.mxu0 0
        %8897 = vmatprep.subr.bf16.mxu0 0
        %8898 = vmatpush1.bf16.msra.mxu0 0
        %8899 = vmatprep.subr.bf16.mxu0 0
        %8900 = vmatpush1.bf16.msra.mxu0 0
        %8901 = vmatprep.subr.bf16.mxu0 0
        %8902 = vmatpush1.bf16.msra.mxu0 0
        %8903 = vmatprep.subr.bf16.mxu0 0
        %8904 = vmatpush1.bf16.msra.mxu0 0
        %8905 = vmatprep.mubr.bf16.mxu0 0
        %8906 = vmatmul.mubr.bf16.gmra.mrb[0].mxu0 %v8807
        %v8907 = vpop.f32.mrb[0].mxu0
        %v8908 = vadd.f32 %v8824, %v8907
        %v8909 = vpop.f32.mrb[0].mxu0
        %v8910 = vpop.f32.mrb[0].mxu0
        %v8911 = vpop.f32.mrb[0].mxu0
        %8912 = vdwg.mxu0
        %8913 = vst [vmem:[%s378] sm:$0x1] %v8908
        %s8914 = sand.u32 %s269, 1
        %s8915 = scalar_lea.sflag [#allocation6], %s8914
        %s8916 = sand.u32 %s269, 1
        %s8917 = scalar_lea.vmem [#allocation5], %s8916
        // Predicated region
        $region65: #{small_cnn_forward.1} parent=63 // pred_check
          %p8918 = pneg %p279
        $region66: #{small_cnn_forward.1} parent=63 // pred_check_branch
          %8920 = sbr.rel (%p8918) target = $region68
        $region67: #{small_cnn_forward.1} parent=63 // pred_region
          %s8922 = ssub.s32 16, 16
          %8923 = vsyncadd %s8915, %s8922
          %s8924 = smul.addr %s25, 16
          %s8925 = scalar_lea.hbm %s11, %s8924
          %s8927 = sshll.u32 %s8917, 4
          %s8928 = int_to_ptr.vmem [resolvable:$true] %s8927
          %8930 = dma.vmem_to_hbm [thread:$0]  %s8928, 16, %s8925, %s8915
        $region68: #{small_cnn_forward.1} parent=63 // pred_fallthru
          _
      $region64: #{small_cnn_forward.1} parent=5 // pred_fallthru
        _
      %p8931 = scmp.le.s32.totalorder 2, %s20
      // Predicated region
      $region69: #{small_cnn_forward.1} parent=5 // pred_check
        %p8932 = pneg %p8931
      $region70: #{small_cnn_forward.1} parent=5 // pred_check_branch
        %8934 = sbr.rel (%p8932) target = $region72
      $region71: #{small_cnn_forward.1} parent=5 // pred_region
        %s8935 = ssub.s32 %s20, 2
        // Predicated region
        $region73: #{small_cnn_forward.1} parent=71 // pred_check
          %p8936 = pneg %p285
        $region74: #{small_cnn_forward.1} parent=71 // pred_check_branch
          %8938 = sbr.rel (%p8936) target = $region76
        $region75: #{small_cnn_forward.1} parent=71 // pred_region
          %s8939 = sand.u32 %s270, 1
          %s8940 = scalar_lea.sflag [#allocation6], %s8939
          %s8941 = sand.u32 %s270, 1
          %s8942 = scalar_lea.vmem [#allocation5], %s8941
          %8943 = dma.done %s8940, 16
        $region76: #{small_cnn_forward.1} parent=71 // pred_fallthru
          _
      $region72: #{small_cnn_forward.1} parent=5 // pred_fallthru
        _
    $region6: #{small_cnn_forward.1} parent=1 // loop_footer
      %s24 = sadd.s32 1, %s20
    $region7: #{small_cnn_forward.1} parent=1 // loop_footer_branch
      %19 = sbr.rel target = $region3
    $region8: #{small_cnn_forward.1} parent=1 // loop_exit
      _
    %8944 = vsyncpa [#allocation6], 1
    %s8945 = scalar_lea.sflag [#allocation6], 1
    %8946 = vsyncpa %s8945, 1

</llo_original>
